<compile_context>
chip_gen: v6e
topology: v6e:2x2x1
jax: 0.10.0
libtpu: 0.0.40
codegen_flags: <defaults>
</compile_context>

<pallas_src>
import jax
import jax.numpy as jnp
from jax.experimental import pallas as pl
from jax.experimental.pallas import tpu as pltpu

# ----------------------------- configuration -------------------------------
B = 2              # batch
C = 3              # image channels
IMG = 16           # image height/width
PATCH = 8          # patch size
N_PATCHES = (IMG // PATCH) ** 2          # 4
SEQ = N_PATCHES + 1                      # 5 (CLS + patches)
D = 32             # embed_dim
HEADS = 4
DH = D // HEADS
MLP = 4 * D
DEPTH = 2
NUM_CLUSTERS = 8
EPS = 1e-6         # LayerNorm eps (timm/BEiT default)


# ----------------------------- fused Pallas kernel ---------------------------
def _fused_kernel(patches_ref, pw_ref, pb_ref, clspos_ref, ln_ref,
                  wqkv_ref, bqkv_ref, wo_ref, bo_ref,
                  w1_ref, b1_ref, w2_ref, b2_ref,
                  norm_ref, proto_ref,
                  cls_out_ref, scores_ref):
    f32 = jnp.float32

    def layernorm(z, w, b):
        mu = jnp.mean(z, axis=-1, keepdims=True)
        var = jnp.mean(jnp.square(z - mu), axis=-1, keepdims=True)
        return (z - mu) * jax.lax.rsqrt(var + EPS) * w + b

    # ---- patch embedding + CLS token + positional embedding ----
    pe = jnp.dot(patches_ref[...], pw_ref[...],
                 preferred_element_type=f32) + pb_ref[...]        # (B*N, D)
    clspos = clspos_ref[...]                                      # (SEQ, D): row0 = cls+pos0
    parts = []
    zero_row = jnp.zeros((1, D), f32)
    for b in range(B):
        parts.append(zero_row)
        parts.append(pe[b * N_PATCHES:(b + 1) * N_PATCHES, :])
    x = jnp.concatenate(parts, axis=0) + jnp.concatenate([clspos] * B, axis=0)  # (B*SEQ, D)
    # bool_masked_pos is all-False in the PyTorch forward -> mask_token is a no-op.

    scale = DH ** -0.5
    for d in range(DEPTH):                                        # static unroll over depth
        lnp = ln_ref[d]                                           # (4, D)
        wqkv = wqkv_ref[d]                                        # (D, 3D)
        bqkv = bqkv_ref[d]                                        # (1, 3D)
        wo = wo_ref[d]                                            # (D, D)
        bo = bo_ref[d]                                            # (1, D)
        w1 = w1_ref[d]                                            # (D, MLP)
        b1 = b1_ref[d]                                            # (1, MLP)
        w2 = w2_ref[d]                                            # (MLP, D)
        b2 = b2_ref[d]                                            # (1, D)

        # --- pre-LN multi-head attention (fused QKV matmul) ---
        xn = layernorm(x, lnp[0:1, :], lnp[1:2, :])               # (B*SEQ, D)
        qkv = jnp.dot(xn, wqkv, preferred_element_type=f32) + bqkv  # (B*SEQ, 3D)
        qkv3 = qkv.reshape(B, SEQ, 3 * D)

        attn_acc = jnp.zeros((B * SEQ, D), f32)
        for h in range(HEADS):                                    # static unroll over heads
            qh = qkv3[:, :, h * DH:(h + 1) * DH] * scale          # (B, SEQ, DH)
            kh = qkv3[:, :, D + h * DH:D + (h + 1) * DH]
            vh = qkv3[:, :, 2 * D + h * DH:2 * D + (h + 1) * DH]
            s = jnp.einsum('bqd,bkd->bqk', qh, kh,
                           preferred_element_type=f32)            # (B, SEQ, SEQ)
            s = s - jnp.max(s, axis=-1, keepdims=True)
            p = jnp.exp(s)
            p = p / jnp.sum(p, axis=-1, keepdims=True)
            oh = jnp.einsum('bqk,bkd->bqd', p, vh,
                            preferred_element_type=f32)           # (B, SEQ, DH)
            # accumulate the output projection per head (sublane slice of Wo),
            # no lane-axis concatenation of 8-lane pieces.
            attn_acc = attn_acc + jnp.dot(oh.reshape(B * SEQ, DH),
                                          wo[h * DH:(h + 1) * DH, :],
                                          preferred_element_type=f32)
        x = x + attn_acc + bo

        # --- pre-LN MLP ---
        xn2 = layernorm(x, lnp[2:3, :], lnp[3:4, :])
        h1 = jnp.dot(xn2, w1, preferred_element_type=f32) + b1
        # TODO(synk): PyTorch nn.GELU default is exact erf; using tanh approximation here.
        h1 = jax.nn.gelu(h1, approximate=True)
        h2 = jnp.dot(h1, w2, preferred_element_type=f32) + b2
        x = x + h2

    # ---- final LayerNorm on CLS rows only, L2 normalize, cluster scores ----
    cls_rows = jnp.concatenate([x[b * SEQ:b * SEQ + 1, :] for b in range(B)],
                               axis=0)                            # (B, D)
    nwb = norm_ref[...]                                           # (2, D)
    cn = layernorm(cls_rows, nwb[0:1, :], nwb[1:2, :])
    inv_norm = jax.lax.rsqrt(jnp.sum(cn * cn, axis=-1, keepdims=True))
    cls_n = cn * inv_norm
    cls_out_ref[...] = cls_n
    # cluster_scores = cls_token @ prototypes.T  (contract last dims, no host transpose)
    scores_ref[...] = jax.lax.dot_general(
        cls_n, proto_ref[...], (((1,), (1,)), ((), ())),
        preferred_element_type=f32)


# ----------------------------- pallas_call wrapper ---------------------------
def _full_spec(shape):
    n = len(shape)
    return pl.BlockSpec(shape, lambda i, n=n: (0,) * n)


def fused_forward(patches, p):
    args = (patches, p['patch_w'], p['patch_b'], p['cls_pos'], p['ln'],
            p['w_qkv'], p['b_qkv'], p['w_o'], p['b_o'],
            p['w_fc1'], p['b_fc1'], p['w_fc2'], p['b_fc2'],
            p['norm'], p['prototypes'])
    cls_n, scores = pl.pallas_call(
        _fused_kernel,
        out_shape=(jax.ShapeDtypeStruct((B, D), jnp.float32),
                   jax.ShapeDtypeStruct((B, NUM_CLUSTERS), jnp.float32)),
        grid=(1,),
        in_specs=[_full_spec(a.shape) for a in args],
        out_specs=(_full_spec((B, D)), _full_spec((B, NUM_CLUSTERS))),
        compiler_params=pltpu.CompilerParams(dimension_semantics=("arbitrary",)),
    )(*args)
    return cls_n, scores


# ----------------------------- parameters -----------------------------------
def init_params(key):
    keys = iter(jax.random.split(key, 128))

    def nrm(shape, std=0.02):
        return (std * jax.random.normal(next(keys), shape)).astype(jnp.float32)

    cls_token = nrm((1, D))
    pos_embed = nrm((SEQ, D))
    # precombine: row0 = cls_token + pos_embed[0]; rows 1.. = pos_embed[1..]
    cls_pos = jnp.concatenate([pos_embed[0:1] + cls_token, pos_embed[1:]], axis=0)

    ln_one = jnp.stack([jnp.ones((D,), jnp.float32), jnp.zeros((D,), jnp.float32),
                        jnp.ones((D,), jnp.float32), jnp.zeros((D,), jnp.float32)])  # (4, D)

    params = {
        'patch_w': nrm((C * PATCH * PATCH, D)),          # Conv2d(3,D,P,P) as matmul
        'patch_b': jnp.zeros((1, D), jnp.float32),
        'cls_pos': cls_pos,                              # (SEQ, D)
        'ln': jnp.tile(ln_one[None], (DEPTH, 1, 1)),     # (DEPTH, 4, D): ln1w, ln1b, ln2w, ln2b
        'w_qkv': jnp.stack([jnp.concatenate([nrm((D, D)), nrm((D, D)), nrm((D, D))],
                                            axis=1) for _ in range(DEPTH)]),  # (DEPTH, D, 3D)
        'b_qkv': jnp.zeros((DEPTH, 1, 3 * D), jnp.float32),   # BEiT k-bias is None -> 0
        'w_o': jnp.stack([nrm((D, D)) for _ in range(DEPTH)]),
        'b_o': jnp.zeros((DEPTH, 1, D), jnp.float32),
        'w_fc1': jnp.stack([nrm((D, MLP)) for _ in range(DEPTH)]),
        'b_fc1': jnp.zeros((DEPTH, 1, MLP), jnp.float32),
        'w_fc2': jnp.stack([nrm((MLP, D)) for _ in range(DEPTH)]),
        'b_fc2': jnp.zeros((DEPTH, 1, D), jnp.float32),
        'norm': jnp.stack([jnp.ones((D,), jnp.float32),
                           jnp.zeros((D,), jnp.float32)]),     # final LN (2, D)
        'prototypes': nrm((NUM_CLUSTERS, D)),                  # cluster_prototypes buffer
    }
    return params


# ----------------------------- forward ---------------------------------------
def _extract_patches(image):
    # NCHW -> [B*N, C*P*P], channel-major like Conv2d weights (glue reshape)
    Bq, Cc, H, W = image.shape
    x = image.reshape(Bq, Cc, H // PATCH, PATCH, W // PATCH, PATCH)
    x = x.transpose(0, 2, 4, 1, 3, 5).reshape(Bq * N_PATCHES, Cc * PATCH * PATCH)
    return x


def image_cluster_forward(image, params):
    """ImageCluster.forward: L2-normalized CLS token of the (synthetic) BEiT-v2 teacher."""
    # TODO(synk): BEiT-v2 shared relative-position bias + frozen pretrained weights not
    # modeled; synthetic absolute pos embed + random weights stand in for the checkpoint.
    patches = _extract_patches(image)
    cls_token, _ = fused_forward(patches, params)
    return cls_token


def get_cluster(image, params):
    patches = _extract_patches(image)
    cls_token, scores = fused_forward(patches, params)
    return {'cluster_idx': jnp.argmax(scores, axis=-1),
            'cluster_dist': scores,
            'cls_token': cls_token}


# ----------------------------- main -------------------------------------------
if __name__ == "__main__":
    key = jax.random.PRNGKey(0)
    pkey, xkey = jax.random.split(key)
    params = init_params(pkey)
    image = jax.random.normal(xkey, (B, C, IMG, IMG), dtype=jnp.float32)

    cls_token = jax.block_until_ready(image_cluster_forward(image, params))
    assert cls_token.shape == (B, D)
    # sanity: rows are unit-norm
    norms = jnp.linalg.norm(cls_token, axis=-1)
    assert bool(jnp.all(jnp.abs(norms - 1.0) < 1e-3))

    out = get_cluster(image, params)
    jax.block_until_ready(out['cluster_dist'])
    assert out['cluster_dist'].shape == (B, NUM_CLUSTERS)
    assert out['cluster_idx'].shape == (B,)

    print("KERNEL_OK")
</pallas_src>

<mosaic_0001>
module attributes {stable_mosaic.version = 11 : i64} {
  func.func @_fused_kernel(%arg0: i32, %arg1: memref<8x192xf32, #tpu.memory_space<vmem>>, %arg2: memref<192x32xf32, #tpu.memory_space<vmem>>, %arg3: memref<1x32xf32, #tpu.memory_space<vmem>>, %arg4: memref<5x32xf32, #tpu.memory_space<vmem>>, %arg5: memref<2x4x32xf32, #tpu.memory_space<vmem>>, %arg6: memref<2x32x96xf32, #tpu.memory_space<vmem>>, %arg7: memref<2x1x96xf32, #tpu.memory_space<vmem>>, %arg8: memref<2x32x32xf32, #tpu.memory_space<vmem>>, %arg9: memref<2x1x32xf32, #tpu.memory_space<vmem>>, %arg10: memref<2x32x128xf32, #tpu.memory_space<vmem>>, %arg11: memref<2x1x128xf32, #tpu.memory_space<vmem>>, %arg12: memref<2x128x32xf32, #tpu.memory_space<vmem>>, %arg13: memref<2x1x32xf32, #tpu.memory_space<vmem>>, %arg14: memref<2x32xf32, #tpu.memory_space<vmem>>, %arg15: memref<8x32xf32, #tpu.memory_space<vmem>>, %arg16: memref<2x32xf32, #tpu.memory_space<vmem>>, %arg17: memref<2x8xf32, #tpu.memory_space<vmem>>) attributes {dimension_semantics = [#tpu.dimension_semantics<arbitrary>], iteration_bounds = array<i64: 1>, scalar_prefetch = 0 : i64, scratch_operands = 0 : i64, tpu.core_type = #tpu.core_type<tc>, window_params = [{pipeline_mode = #tpu.pipeline_mode<synchronous>, transform_indices = @transform_0, window_bounds = array<i64: 8, 192>}, {pipeline_mode = #tpu.pipeline_mode<synchronous>, transform_indices = @transform_1, window_bounds = array<i64: 192, 32>}, {pipeline_mode = #tpu.pipeline_mode<synchronous>, transform_indices = @transform_2, window_bounds = array<i64: 1, 32>}, {pipeline_mode = #tpu.pipeline_mode<synchronous>, transform_indices = @transform_3, window_bounds = array<i64: 5, 32>}, {pipeline_mode = #tpu.pipeline_mode<synchronous>, transform_indices = @transform_4, window_bounds = array<i64: 2, 4, 32>}, {pipeline_mode = #tpu.pipeline_mode<synchronous>, transform_indices = @transform_5, window_bounds = array<i64: 2, 32, 96>}, {pipeline_mode = #tpu.pipeline_mode<synchronous>, transform_indices = @transform_6, window_bounds = array<i64: 2, 1, 96>}, {pipeline_mode = #tpu.pipeline_mode<synchronous>, transform_indices = @transform_7, window_bounds = array<i64: 2, 32, 32>}, {pipeline_mode = #tpu.pipeline_mode<synchronous>, transform_indices = @transform_8, window_bounds = array<i64: 2, 1, 32>}, {pipeline_mode = #tpu.pipeline_mode<synchronous>, transform_indices = @transform_9, window_bounds = array<i64: 2, 32, 128>}, {pipeline_mode = #tpu.pipeline_mode<synchronous>, transform_indices = @transform_10, window_bounds = array<i64: 2, 1, 128>}, {pipeline_mode = #tpu.pipeline_mode<synchronous>, transform_indices = @transform_11, window_bounds = array<i64: 2, 128, 32>}, {pipeline_mode = #tpu.pipeline_mode<synchronous>, transform_indices = @transform_12, window_bounds = array<i64: 2, 1, 32>}, {pipeline_mode = #tpu.pipeline_mode<synchronous>, transform_indices = @transform_13, window_bounds = array<i64: 2, 32>}, {pipeline_mode = #tpu.pipeline_mode<synchronous>, transform_indices = @transform_14, window_bounds = array<i64: 8, 32>}, {pipeline_mode = #tpu.pipeline_mode<synchronous>, transform_indices = @transform_15, window_bounds = array<i64: 2, 32>}, {pipeline_mode = #tpu.pipeline_mode<synchronous>, transform_indices = @transform_16, window_bounds = array<i64: 2, 8>}]} {
    %c0 = arith.constant 0 : index
    %c0_0 = arith.constant 0 : index
    %0 = vector.load %arg1[%c0, %c0_0] : memref<8x192xf32, #tpu.memory_space<vmem>>, vector<8x192xf32>
    %c0_1 = arith.constant 0 : index
    %c0_2 = arith.constant 0 : index
    %1 = vector.load %arg2[%c0_1, %c0_2] : memref<192x32xf32, #tpu.memory_space<vmem>>, vector<192x32xf32>
    %cst = arith.constant dense<0.000000e+00> : vector<8x32xf32>
    %2 = tpu.matmul %0, %1, %cst {dimension_numbers = #tpu.dot_dimension_numbers<[1], [0], [0], [1], [0, 0, 1, 1], [], []>} : vector<8x192xf32>, vector<192x32xf32>, vector<8x32xf32> -> vector<8x32xf32>
    %c0_3 = arith.constant 0 : index
    %c0_4 = arith.constant 0 : index
    %3 = vector.load %arg3[%c0_3, %c0_4] : memref<1x32xf32, #tpu.memory_space<vmem>>, vector<1x32xf32>
    %4 = vector.broadcast %3 : vector<1x32xf32> to vector<8x32xf32>
    %5 = arith.addf %2, %4 : vector<8x32xf32>
    %c0_5 = arith.constant 0 : index
    %c0_6 = arith.constant 0 : index
    %6 = vector.load %arg4[%c0_5, %c0_6] : memref<5x32xf32, #tpu.memory_space<vmem>>, vector<5x32xf32>
    %cst_7 = arith.constant 0.000000e+00 : f32
    %7 = vector.broadcast %cst_7 : f32 to vector<1x32xf32>
    %8 = vector.extract_strided_slice %5 {offsets = [0, 0], sizes = [4, 32], strides = [1, 1]} : vector<8x32xf32> to vector<4x32xf32>
    %9 = vector.extract_strided_slice %5 {offsets = [4, 0], sizes = [4, 32], strides = [1, 1]} : vector<8x32xf32> to vector<4x32xf32>
    %10 = tpu.concatenate %7, %8, %7, %9 in 0 : vector<1x32xf32>, vector<4x32xf32>, vector<1x32xf32>, vector<4x32xf32> -> vector<10x32xf32>
    %11 = tpu.concatenate %6, %6 in 0 : vector<5x32xf32>, vector<5x32xf32> -> vector<10x32xf32>
    %12 = arith.addf %10, %11 : vector<10x32xf32>
    %c0_8 = arith.constant 0 : index
    %c0_9 = arith.constant 0 : index
    %c0_10 = arith.constant 0 : index
    %13 = vector.load %arg5[%c0_8, %c0_9, %c0_10] : memref<2x4x32xf32, #tpu.memory_space<vmem>>, vector<1x4x32xf32>
    %14 = vector.shape_cast %13 : vector<1x4x32xf32> to vector<4x32xf32>
    %c0_11 = arith.constant 0 : index
    %c0_12 = arith.constant 0 : index
    %c0_13 = arith.constant 0 : index
    %15 = vector.load %arg6[%c0_11, %c0_12, %c0_13] : memref<2x32x96xf32, #tpu.memory_space<vmem>>, vector<1x32x96xf32>
    %16 = vector.shape_cast %15 : vector<1x32x96xf32> to vector<32x96xf32>
    %c0_14 = arith.constant 0 : index
    %c0_15 = arith.constant 0 : index
    %c0_16 = arith.constant 0 : index
    %17 = vector.load %arg7[%c0_14, %c0_15, %c0_16] : memref<2x1x96xf32, #tpu.memory_space<vmem>>, vector<1x1x96xf32>
    %18 = vector.shape_cast %17 : vector<1x1x96xf32> to vector<1x96xf32>
    %c0_17 = arith.constant 0 : index
    %c0_18 = arith.constant 0 : index
    %c0_19 = arith.constant 0 : index
    %19 = vector.load %arg8[%c0_17, %c0_18, %c0_19] : memref<2x32x32xf32, #tpu.memory_space<vmem>>, vector<1x32x32xf32>
    %20 = vector.shape_cast %19 : vector<1x32x32xf32> to vector<32x32xf32>
    %c0_20 = arith.constant 0 : index
    %c0_21 = arith.constant 0 : index
    %c0_22 = arith.constant 0 : index
    %21 = vector.load %arg9[%c0_20, %c0_21, %c0_22] : memref<2x1x32xf32, #tpu.memory_space<vmem>>, vector<1x1x32xf32>
    %22 = vector.shape_cast %21 : vector<1x1x32xf32> to vector<1x32xf32>
    %c0_23 = arith.constant 0 : index
    %c0_24 = arith.constant 0 : index
    %c0_25 = arith.constant 0 : index
    %23 = vector.load %arg10[%c0_23, %c0_24, %c0_25] : memref<2x32x128xf32, #tpu.memory_space<vmem>>, vector<1x32x128xf32>
    %24 = vector.shape_cast %23 : vector<1x32x128xf32> to vector<32x128xf32>
    %c0_26 = arith.constant 0 : index
    %c0_27 = arith.constant 0 : index
    %c0_28 = arith.constant 0 : index
    %25 = vector.load %arg11[%c0_26, %c0_27, %c0_28] : memref<2x1x128xf32, #tpu.memory_space<vmem>>, vector<1x1x128xf32>
    %26 = vector.shape_cast %25 : vector<1x1x128xf32> to vector<1x128xf32>
    %c0_29 = arith.constant 0 : index
    %c0_30 = arith.constant 0 : index
    %c0_31 = arith.constant 0 : index
    %27 = vector.load %arg12[%c0_29, %c0_30, %c0_31] : memref<2x128x32xf32, #tpu.memory_space<vmem>>, vector<1x128x32xf32>
    %28 = vector.shape_cast %27 : vector<1x128x32xf32> to vector<128x32xf32>
    %c0_32 = arith.constant 0 : index
    %c0_33 = arith.constant 0 : index
    %c0_34 = arith.constant 0 : index
    %29 = vector.load %arg13[%c0_32, %c0_33, %c0_34] : memref<2x1x32xf32, #tpu.memory_space<vmem>>, vector<1x1x32xf32>
    %30 = vector.shape_cast %29 : vector<1x1x32xf32> to vector<1x32xf32>
    %31 = vector.extract_strided_slice %14 {offsets = [0, 0], sizes = [1, 32], strides = [1, 1]} : vector<4x32xf32> to vector<1x32xf32>
    %32 = vector.extract_strided_slice %14 {offsets = [1, 0], sizes = [1, 32], strides = [1, 1]} : vector<4x32xf32> to vector<1x32xf32>
    %cst_35 = arith.constant dense<0.000000e+00> : vector<10xf32>
    %33 = vector.multi_reduction <add>, %12, %cst_35 [1] : vector<10x32xf32> to vector<10xf32>
    %34 = vector.shape_cast %33 : vector<10xf32> to vector<10x1xf32>
    %cst_36 = arith.constant 3.200000e+01 : f32
    %35 = vector.broadcast %cst_36 : f32 to vector<10x1xf32>
    %36 = arith.divf %34, %35 : vector<10x1xf32>
    %37 = vector.broadcast %36 : vector<10x1xf32> to vector<10x32xf32>
    %38 = arith.subf %12, %37 : vector<10x32xf32>
    %39 = arith.mulf %38, %38 : vector<10x32xf32>
    %cst_37 = arith.constant dense<0.000000e+00> : vector<10xf32>
    %40 = vector.multi_reduction <add>, %39, %cst_37 [1] : vector<10x32xf32> to vector<10xf32>
    %41 = vector.shape_cast %40 : vector<10xf32> to vector<10x1xf32>
    %cst_38 = arith.constant 3.200000e+01 : f32
    %42 = vector.broadcast %cst_38 : f32 to vector<10x1xf32>
    %43 = arith.divf %41, %42 : vector<10x1xf32>
    %44 = vector.broadcast %36 : vector<10x1xf32> to vector<10x32xf32>
    %45 = arith.subf %12, %44 : vector<10x32xf32>
    %cst_39 = arith.constant 9.99999997E-7 : f32
    %46 = vector.broadcast %cst_39 : f32 to vector<10x1xf32>
    %47 = arith.addf %43, %46 : vector<10x1xf32>
    %48 = math.rsqrt %47 : vector<10x1xf32>
    %49 = vector.broadcast %48 : vector<10x1xf32> to vector<10x32xf32>
    %50 = arith.mulf %45, %49 : vector<10x32xf32>
    %51 = vector.broadcast %31 : vector<1x32xf32> to vector<10x32xf32>
    %52 = arith.mulf %50, %51 : vector<10x32xf32>
    %53 = vector.broadcast %32 : vector<1x32xf32> to vector<10x32xf32>
    %54 = arith.addf %52, %53 : vector<10x32xf32>
    %cst_40 = arith.constant dense<0.000000e+00> : vector<10x96xf32>
    %55 = tpu.matmul %54, %16, %cst_40 {dimension_numbers = #tpu.dot_dimension_numbers<[1], [0], [0], [1], [0, 0, 1, 1], [], []>} : vector<10x32xf32>, vector<32x96xf32>, vector<10x96xf32> -> vector<10x96xf32>
    %56 = vector.broadcast %18 : vector<1x96xf32> to vector<10x96xf32>
    %57 = arith.addf %55, %56 : vector<10x96xf32>
    %58 = vector.shape_cast %57 : vector<10x96xf32> to vector<2x5x96xf32>
    %cst_41 = arith.constant 0.000000e+00 : f32
    %59 = vector.broadcast %cst_41 : f32 to vector<10x32xf32>
    %60 = vector.extract_strided_slice %58 {offsets = [0, 0, 0], sizes = [2, 5, 8], strides = [1, 1, 1]} : vector<2x5x96xf32> to vector<2x5x8xf32>
    %cst_42 = arith.constant 0.353553385 : f32
    %61 = vector.broadcast %cst_42 : f32 to vector<2x5x8xf32>
    %62 = arith.mulf %60, %61 : vector<2x5x8xf32>
    %63 = vector.extract_strided_slice %58 {offsets = [0, 0, 32], sizes = [2, 5, 8], strides = [1, 1, 1]} : vector<2x5x96xf32> to vector<2x5x8xf32>
    %64 = vector.extract_strided_slice %58 {offsets = [0, 0, 64], sizes = [2, 5, 8], strides = [1, 1, 1]} : vector<2x5x96xf32> to vector<2x5x8xf32>
    "tpu.trace_start"() <{level = 10 : i32, message = "bqd,bkd->bqk"}> : () -> ()
    %cst_43 = arith.constant dense<0.000000e+00> : vector<2x5x5xf32>
    %65 = tpu.matmul %62, %63, %cst_43 {dimension_numbers = #tpu.dot_dimension_numbers<[2], [2], [1], [1], [0, 0, 0, 1, 1, 1], [0], [0]>} : vector<2x5x8xf32>, vector<2x5x8xf32>, vector<2x5x5xf32> -> vector<2x5x5xf32>
    "tpu.trace_stop"() : () -> ()
    %cst_44 = arith.constant dense<0xFF800000> : vector<2x5xf32>
    %66 = vector.multi_reduction <maximumf>, %65, %cst_44 [2] : vector<2x5x5xf32> to vector<2x5xf32>
    %67 = vector.shape_cast %66 : vector<2x5xf32> to vector<2x5x1xf32>
    %68 = vector.broadcast %67 : vector<2x5x1xf32> to vector<2x5x5xf32>
    %69 = arith.subf %65, %68 : vector<2x5x5xf32>
    %70 = math.exp %69 : vector<2x5x5xf32>
    %cst_45 = arith.constant dense<0.000000e+00> : vector<2x5xf32>
    %71 = vector.multi_reduction <add>, %70, %cst_45 [2] : vector<2x5x5xf32> to vector<2x5xf32>
    %72 = vector.shape_cast %71 : vector<2x5xf32> to vector<2x5x1xf32>
    %73 = vector.broadcast %72 : vector<2x5x1xf32> to vector<2x5x5xf32>
    %74 = arith.divf %70, %73 : vector<2x5x5xf32>
    "tpu.trace_start"() <{level = 10 : i32, message = "bqk,bkd->bqd"}> : () -> ()
    %cst_46 = arith.constant dense<0.000000e+00> : vector<2x5x8xf32>
    %75 = tpu.matmul %74, %64, %cst_46 {dimension_numbers = #tpu.dot_dimension_numbers<[2], [1], [1], [2], [0, 0, 0, 1, 1, 2], [0], [0]>} : vector<2x5x5xf32>, vector<2x5x8xf32>, vector<2x5x8xf32> -> vector<2x5x8xf32>
    "tpu.trace_stop"() : () -> ()
    %76 = vector.shape_cast %75 : vector<2x5x8xf32> to vector<10x8xf32>
    %77 = vector.extract_strided_slice %20 {offsets = [0, 0], sizes = [8, 32], strides = [1, 1]} : vector<32x32xf32> to vector<8x32xf32>
    %cst_47 = arith.constant dense<0.000000e+00> : vector<10x32xf32>
    %78 = tpu.matmul %76, %77, %cst_47 {dimension_numbers = #tpu.dot_dimension_numbers<[1], [0], [0], [1], [0, 0, 1, 1], [], []>} : vector<10x8xf32>, vector<8x32xf32>, vector<10x32xf32> -> vector<10x32xf32>
    %79 = arith.addf %59, %78 : vector<10x32xf32>
    %80 = vector.extract_strided_slice %58 {offsets = [0, 0, 8], sizes = [2, 5, 8], strides = [1, 1, 1]} : vector<2x5x96xf32> to vector<2x5x8xf32>
    %cst_48 = arith.constant 0.353553385 : f32
    %81 = vector.broadcast %cst_48 : f32 to vector<2x5x8xf32>
    %82 = arith.mulf %80, %81 : vector<2x5x8xf32>
    %83 = vector.extract_strided_slice %58 {offsets = [0, 0, 40], sizes = [2, 5, 8], strides = [1, 1, 1]} : vector<2x5x96xf32> to vector<2x5x8xf32>
    %84 = vector.extract_strided_slice %58 {offsets = [0, 0, 72], sizes = [2, 5, 8], strides = [1, 1, 1]} : vector<2x5x96xf32> to vector<2x5x8xf32>
    "tpu.trace_start"() <{level = 10 : i32, message = "bqd,bkd->bqk"}> : () -> ()
    %cst_49 = arith.constant dense<0.000000e+00> : vector<2x5x5xf32>
    %85 = tpu.matmul %82, %83, %cst_49 {dimension_numbers = #tpu.dot_dimension_numbers<[2], [2], [1], [1], [0, 0, 0, 1, 1, 1], [0], [0]>} : vector<2x5x8xf32>, vector<2x5x8xf32>, vector<2x5x5xf32> -> vector<2x5x5xf32>
    "tpu.trace_stop"() : () -> ()
    %cst_50 = arith.constant dense<0xFF800000> : vector<2x5xf32>
    %86 = vector.multi_reduction <maximumf>, %85, %cst_50 [2] : vector<2x5x5xf32> to vector<2x5xf32>
    %87 = vector.shape_cast %86 : vector<2x5xf32> to vector<2x5x1xf32>
    %88 = vector.broadcast %87 : vector<2x5x1xf32> to vector<2x5x5xf32>
    %89 = arith.subf %85, %88 : vector<2x5x5xf32>
    %90 = math.exp %89 : vector<2x5x5xf32>
    %cst_51 = arith.constant dense<0.000000e+00> : vector<2x5xf32>
    %91 = vector.multi_reduction <add>, %90, %cst_51 [2] : vector<2x5x5xf32> to vector<2x5xf32>
    %92 = vector.shape_cast %91 : vector<2x5xf32> to vector<2x5x1xf32>
    %93 = vector.broadcast %92 : vector<2x5x1xf32> to vector<2x5x5xf32>
    %94 = arith.divf %90, %93 : vector<2x5x5xf32>
    "tpu.trace_start"() <{level = 10 : i32, message = "bqk,bkd->bqd"}> : () -> ()
    %cst_52 = arith.constant dense<0.000000e+00> : vector<2x5x8xf32>
    %95 = tpu.matmul %94, %84, %cst_52 {dimension_numbers = #tpu.dot_dimension_numbers<[2], [1], [1], [2], [0, 0, 0, 1, 1, 2], [0], [0]>} : vector<2x5x5xf32>, vector<2x5x8xf32>, vector<2x5x8xf32> -> vector<2x5x8xf32>
    "tpu.trace_stop"() : () -> ()
    %96 = vector.shape_cast %95 : vector<2x5x8xf32> to vector<10x8xf32>
    %97 = vector.extract_strided_slice %20 {offsets = [8, 0], sizes = [8, 32], strides = [1, 1]} : vector<32x32xf32> to vector<8x32xf32>
    %cst_53 = arith.constant dense<0.000000e+00> : vector<10x32xf32>
    %98 = tpu.matmul %96, %97, %cst_53 {dimension_numbers = #tpu.dot_dimension_numbers<[1], [0], [0], [1], [0, 0, 1, 1], [], []>} : vector<10x8xf32>, vector<8x32xf32>, vector<10x32xf32> -> vector<10x32xf32>
    %99 = arith.addf %79, %98 : vector<10x32xf32>
    %100 = vector.extract_strided_slice %58 {offsets = [0, 0, 16], sizes = [2, 5, 8], strides = [1, 1, 1]} : vector<2x5x96xf32> to vector<2x5x8xf32>
    %cst_54 = arith.constant 0.353553385 : f32
    %101 = vector.broadcast %cst_54 : f32 to vector<2x5x8xf32>
    %102 = arith.mulf %100, %101 : vector<2x5x8xf32>
    %103 = vector.extract_strided_slice %58 {offsets = [0, 0, 48], sizes = [2, 5, 8], strides = [1, 1, 1]} : vector<2x5x96xf32> to vector<2x5x8xf32>
    %104 = vector.extract_strided_slice %58 {offsets = [0, 0, 80], sizes = [2, 5, 8], strides = [1, 1, 1]} : vector<2x5x96xf32> to vector<2x5x8xf32>
    "tpu.trace_start"() <{level = 10 : i32, message = "bqd,bkd->bqk"}> : () -> ()
    %cst_55 = arith.constant dense<0.000000e+00> : vector<2x5x5xf32>
    %105 = tpu.matmul %102, %103, %cst_55 {dimension_numbers = #tpu.dot_dimension_numbers<[2], [2], [1], [1], [0, 0, 0, 1, 1, 1], [0], [0]>} : vector<2x5x8xf32>, vector<2x5x8xf32>, vector<2x5x5xf32> -> vector<2x5x5xf32>
    "tpu.trace_stop"() : () -> ()
    %cst_56 = arith.constant dense<0xFF800000> : vector<2x5xf32>
    %106 = vector.multi_reduction <maximumf>, %105, %cst_56 [2] : vector<2x5x5xf32> to vector<2x5xf32>
    %107 = vector.shape_cast %106 : vector<2x5xf32> to vector<2x5x1xf32>
    %108 = vector.broadcast %107 : vector<2x5x1xf32> to vector<2x5x5xf32>
    %109 = arith.subf %105, %108 : vector<2x5x5xf32>
    %110 = math.exp %109 : vector<2x5x5xf32>
    %cst_57 = arith.constant dense<0.000000e+00> : vector<2x5xf32>
    %111 = vector.multi_reduction <add>, %110, %cst_57 [2] : vector<2x5x5xf32> to vector<2x5xf32>
    %112 = vector.shape_cast %111 : vector<2x5xf32> to vector<2x5x1xf32>
    %113 = vector.broadcast %112 : vector<2x5x1xf32> to vector<2x5x5xf32>
    %114 = arith.divf %110, %113 : vector<2x5x5xf32>
    "tpu.trace_start"() <{level = 10 : i32, message = "bqk,bkd->bqd"}> : () -> ()
    %cst_58 = arith.constant dense<0.000000e+00> : vector<2x5x8xf32>
    %115 = tpu.matmul %114, %104, %cst_58 {dimension_numbers = #tpu.dot_dimension_numbers<[2], [1], [1], [2], [0, 0, 0, 1, 1, 2], [0], [0]>} : vector<2x5x5xf32>, vector<2x5x8xf32>, vector<2x5x8xf32> -> vector<2x5x8xf32>
    "tpu.trace_stop"() : () -> ()
    %116 = vector.shape_cast %115 : vector<2x5x8xf32> to vector<10x8xf32>
    %117 = vector.extract_strided_slice %20 {offsets = [16, 0], sizes = [8, 32], strides = [1, 1]} : vector<32x32xf32> to vector<8x32xf32>
    %cst_59 = arith.constant dense<0.000000e+00> : vector<10x32xf32>
    %118 = tpu.matmul %116, %117, %cst_59 {dimension_numbers = #tpu.dot_dimension_numbers<[1], [0], [0], [1], [0, 0, 1, 1], [], []>} : vector<10x8xf32>, vector<8x32xf32>, vector<10x32xf32> -> vector<10x32xf32>
    %119 = arith.addf %99, %118 : vector<10x32xf32>
    %120 = vector.extract_strided_slice %58 {offsets = [0, 0, 24], sizes = [2, 5, 8], strides = [1, 1, 1]} : vector<2x5x96xf32> to vector<2x5x8xf32>
    %cst_60 = arith.constant 0.353553385 : f32
    %121 = vector.broadcast %cst_60 : f32 to vector<2x5x8xf32>
    %122 = arith.mulf %120, %121 : vector<2x5x8xf32>
    %123 = vector.extract_strided_slice %58 {offsets = [0, 0, 56], sizes = [2, 5, 8], strides = [1, 1, 1]} : vector<2x5x96xf32> to vector<2x5x8xf32>
    %124 = vector.extract_strided_slice %58 {offsets = [0, 0, 88], sizes = [2, 5, 8], strides = [1, 1, 1]} : vector<2x5x96xf32> to vector<2x5x8xf32>
    "tpu.trace_start"() <{level = 10 : i32, message = "bqd,bkd->bqk"}> : () -> ()
    %cst_61 = arith.constant dense<0.000000e+00> : vector<2x5x5xf32>
    %125 = tpu.matmul %122, %123, %cst_61 {dimension_numbers = #tpu.dot_dimension_numbers<[2], [2], [1], [1], [0, 0, 0, 1, 1, 1], [0], [0]>} : vector<2x5x8xf32>, vector<2x5x8xf32>, vector<2x5x5xf32> -> vector<2x5x5xf32>
    "tpu.trace_stop"() : () -> ()
    %cst_62 = arith.constant dense<0xFF800000> : vector<2x5xf32>
    %126 = vector.multi_reduction <maximumf>, %125, %cst_62 [2] : vector<2x5x5xf32> to vector<2x5xf32>
    %127 = vector.shape_cast %126 : vector<2x5xf32> to vector<2x5x1xf32>
    %128 = vector.broadcast %127 : vector<2x5x1xf32> to vector<2x5x5xf32>
    %129 = arith.subf %125, %128 : vector<2x5x5xf32>
    %130 = math.exp %129 : vector<2x5x5xf32>
    %cst_63 = arith.constant dense<0.000000e+00> : vector<2x5xf32>
    %131 = vector.multi_reduction <add>, %130, %cst_63 [2] : vector<2x5x5xf32> to vector<2x5xf32>
    %132 = vector.shape_cast %131 : vector<2x5xf32> to vector<2x5x1xf32>
    %133 = vector.broadcast %132 : vector<2x5x1xf32> to vector<2x5x5xf32>
    %134 = arith.divf %130, %133 : vector<2x5x5xf32>
    "tpu.trace_start"() <{level = 10 : i32, message = "bqk,bkd->bqd"}> : () -> ()
    %cst_64 = arith.constant dense<0.000000e+00> : vector<2x5x8xf32>
    %135 = tpu.matmul %134, %124, %cst_64 {dimension_numbers = #tpu.dot_dimension_numbers<[2], [1], [1], [2], [0, 0, 0, 1, 1, 2], [0], [0]>} : vector<2x5x5xf32>, vector<2x5x8xf32>, vector<2x5x8xf32> -> vector<2x5x8xf32>
    "tpu.trace_stop"() : () -> ()
    %136 = vector.shape_cast %135 : vector<2x5x8xf32> to vector<10x8xf32>
    %137 = vector.extract_strided_slice %20 {offsets = [24, 0], sizes = [8, 32], strides = [1, 1]} : vector<32x32xf32> to vector<8x32xf32>
    %cst_65 = arith.constant dense<0.000000e+00> : vector<10x32xf32>
    %138 = tpu.matmul %136, %137, %cst_65 {dimension_numbers = #tpu.dot_dimension_numbers<[1], [0], [0], [1], [0, 0, 1, 1], [], []>} : vector<10x8xf32>, vector<8x32xf32>, vector<10x32xf32> -> vector<10x32xf32>
    %139 = arith.addf %119, %138 : vector<10x32xf32>
    %140 = arith.addf %12, %139 : vector<10x32xf32>
    %141 = vector.broadcast %22 : vector<1x32xf32> to vector<10x32xf32>
    %142 = arith.addf %140, %141 : vector<10x32xf32>
    %143 = vector.extract_strided_slice %14 {offsets = [2, 0], sizes = [1, 32], strides = [1, 1]} : vector<4x32xf32> to vector<1x32xf32>
    %144 = vector.extract_strided_slice %14 {offsets = [3, 0], sizes = [1, 32], strides = [1, 1]} : vector<4x32xf32> to vector<1x32xf32>
    %cst_66 = arith.constant dense<0.000000e+00> : vector<10xf32>
    %145 = vector.multi_reduction <add>, %142, %cst_66 [1] : vector<10x32xf32> to vector<10xf32>
    %146 = vector.shape_cast %145 : vector<10xf32> to vector<10x1xf32>
    %cst_67 = arith.constant 3.200000e+01 : f32
    %147 = vector.broadcast %cst_67 : f32 to vector<10x1xf32>
    %148 = arith.divf %146, %147 : vector<10x1xf32>
    %149 = vector.broadcast %148 : vector<10x1xf32> to vector<10x32xf32>
    %150 = arith.subf %142, %149 : vector<10x32xf32>
    %151 = arith.mulf %150, %150 : vector<10x32xf32>
    %cst_68 = arith.constant dense<0.000000e+00> : vector<10xf32>
    %152 = vector.multi_reduction <add>, %151, %cst_68 [1] : vector<10x32xf32> to vector<10xf32>
    %153 = vector.shape_cast %152 : vector<10xf32> to vector<10x1xf32>
    %cst_69 = arith.constant 3.200000e+01 : f32
    %154 = vector.broadcast %cst_69 : f32 to vector<10x1xf32>
    %155 = arith.divf %153, %154 : vector<10x1xf32>
    %156 = vector.broadcast %148 : vector<10x1xf32> to vector<10x32xf32>
    %157 = arith.subf %142, %156 : vector<10x32xf32>
    %cst_70 = arith.constant 9.99999997E-7 : f32
    %158 = vector.broadcast %cst_70 : f32 to vector<10x1xf32>
    %159 = arith.addf %155, %158 : vector<10x1xf32>
    %160 = math.rsqrt %159 : vector<10x1xf32>
    %161 = vector.broadcast %160 : vector<10x1xf32> to vector<10x32xf32>
    %162 = arith.mulf %157, %161 : vector<10x32xf32>
    %163 = vector.broadcast %143 : vector<1x32xf32> to vector<10x32xf32>
    %164 = arith.mulf %162, %163 : vector<10x32xf32>
    %165 = vector.broadcast %144 : vector<1x32xf32> to vector<10x32xf32>
    %166 = arith.addf %164, %165 : vector<10x32xf32>
    %cst_71 = arith.constant dense<0.000000e+00> : vector<10x128xf32>
    %167 = tpu.matmul %166, %24, %cst_71 {dimension_numbers = #tpu.dot_dimension_numbers<[1], [0], [0], [1], [0, 0, 1, 1], [], []>} : vector<10x32xf32>, vector<32x128xf32>, vector<10x128xf32> -> vector<10x128xf32>
    %168 = vector.broadcast %26 : vector<1x128xf32> to vector<10x128xf32>
    %169 = arith.addf %167, %168 : vector<10x128xf32>
    %170 = arith.mulf %169, %169 : vector<10x128xf32>
    %171 = arith.mulf %169, %170 : vector<10x128xf32>
    %cst_72 = arith.constant 4.471500e-02 : f32
    %172 = vector.broadcast %cst_72 : f32 to vector<10x128xf32>
    %173 = arith.mulf %172, %171 : vector<10x128xf32>
    %174 = arith.addf %169, %173 : vector<10x128xf32>
    %cst_73 = arith.constant 0.797884583 : f32
    %175 = vector.broadcast %cst_73 : f32 to vector<10x128xf32>
    %176 = arith.mulf %175, %174 : vector<10x128xf32>
    %177 = math.tanh %176 : vector<10x128xf32>
    %cst_74 = arith.constant 1.000000e+00 : f32
    %178 = vector.broadcast %cst_74 : f32 to vector<10x128xf32>
    %179 = arith.addf %178, %177 : vector<10x128xf32>
    %cst_75 = arith.constant 5.000000e-01 : f32
    %180 = vector.broadcast %cst_75 : f32 to vector<10x128xf32>
    %181 = arith.mulf %180, %179 : vector<10x128xf32>
    %182 = arith.mulf %169, %181 : vector<10x128xf32>
    %cst_76 = arith.constant dense<0.000000e+00> : vector<10x32xf32>
    %183 = tpu.matmul %182, %28, %cst_76 {dimension_numbers = #tpu.dot_dimension_numbers<[1], [0], [0], [1], [0, 0, 1, 1], [], []>} : vector<10x128xf32>, vector<128x32xf32>, vector<10x32xf32> -> vector<10x32xf32>
    %184 = vector.broadcast %30 : vector<1x32xf32> to vector<10x32xf32>
    %185 = arith.addf %183, %184 : vector<10x32xf32>
    %186 = arith.addf %142, %185 : vector<10x32xf32>
    %c1 = arith.constant 1 : index
    %c0_77 = arith.constant 0 : index
    %c0_78 = arith.constant 0 : index
    %187 = vector.load %arg5[%c1, %c0_77, %c0_78] : memref<2x4x32xf32, #tpu.memory_space<vmem>>, vector<1x4x32xf32>
    %188 = vector.shape_cast %187 : vector<1x4x32xf32> to vector<4x32xf32>
    %c1_79 = arith.constant 1 : index
    %c0_80 = arith.constant 0 : index
    %c0_81 = arith.constant 0 : index
    %189 = vector.load %arg6[%c1_79, %c0_80, %c0_81] : memref<2x32x96xf32, #tpu.memory_space<vmem>>, vector<1x32x96xf32>
    %190 = vector.shape_cast %189 : vector<1x32x96xf32> to vector<32x96xf32>
    %c1_82 = arith.constant 1 : index
    %c0_83 = arith.constant 0 : index
    %c0_84 = arith.constant 0 : index
    %191 = vector.load %arg7[%c1_82, %c0_83, %c0_84] : memref<2x1x96xf32, #tpu.memory_space<vmem>>, vector<1x1x96xf32>
    %192 = vector.shape_cast %191 : vector<1x1x96xf32> to vector<1x96xf32>
    %c1_85 = arith.constant 1 : index
    %c0_86 = arith.constant 0 : index
    %c0_87 = arith.constant 0 : index
    %193 = vector.load %arg8[%c1_85, %c0_86, %c0_87] : memref<2x32x32xf32, #tpu.memory_space<vmem>>, vector<1x32x32xf32>
    %194 = vector.shape_cast %193 : vector<1x32x32xf32> to vector<32x32xf32>
    %c1_88 = arith.constant 1 : index
    %c0_89 = arith.constant 0 : index
    %c0_90 = arith.constant 0 : index
    %195 = vector.load %arg9[%c1_88, %c0_89, %c0_90] : memref<2x1x32xf32, #tpu.memory_space<vmem>>, vector<1x1x32xf32>
    %196 = vector.shape_cast %195 : vector<1x1x32xf32> to vector<1x32xf32>
    %c1_91 = arith.constant 1 : index
    %c0_92 = arith.constant 0 : index
    %c0_93 = arith.constant 0 : index
    %197 = vector.load %arg10[%c1_91, %c0_92, %c0_93] : memref<2x32x128xf32, #tpu.memory_space<vmem>>, vector<1x32x128xf32>
    %198 = vector.shape_cast %197 : vector<1x32x128xf32> to vector<32x128xf32>
    %c1_94 = arith.constant 1 : index
    %c0_95 = arith.constant 0 : index
    %c0_96 = arith.constant 0 : index
    %199 = vector.load %arg11[%c1_94, %c0_95, %c0_96] : memref<2x1x128xf32, #tpu.memory_space<vmem>>, vector<1x1x128xf32>
    %200 = vector.shape_cast %199 : vector<1x1x128xf32> to vector<1x128xf32>
    %c1_97 = arith.constant 1 : index
    %c0_98 = arith.constant 0 : index
    %c0_99 = arith.constant 0 : index
    %201 = vector.load %arg12[%c1_97, %c0_98, %c0_99] : memref<2x128x32xf32, #tpu.memory_space<vmem>>, vector<1x128x32xf32>
    %202 = vector.shape_cast %201 : vector<1x128x32xf32> to vector<128x32xf32>
    %c1_100 = arith.constant 1 : index
    %c0_101 = arith.constant 0 : index
    %c0_102 = arith.constant 0 : index
    %203 = vector.load %arg13[%c1_100, %c0_101, %c0_102] : memref<2x1x32xf32, #tpu.memory_space<vmem>>, vector<1x1x32xf32>
    %204 = vector.shape_cast %203 : vector<1x1x32xf32> to vector<1x32xf32>
    %205 = vector.extract_strided_slice %188 {offsets = [0, 0], sizes = [1, 32], strides = [1, 1]} : vector<4x32xf32> to vector<1x32xf32>
    %206 = vector.extract_strided_slice %188 {offsets = [1, 0], sizes = [1, 32], strides = [1, 1]} : vector<4x32xf32> to vector<1x32xf32>
    %cst_103 = arith.constant dense<0.000000e+00> : vector<10xf32>
    %207 = vector.multi_reduction <add>, %186, %cst_103 [1] : vector<10x32xf32> to vector<10xf32>
    %208 = vector.shape_cast %207 : vector<10xf32> to vector<10x1xf32>
    %cst_104 = arith.constant 3.200000e+01 : f32
    %209 = vector.broadcast %cst_104 : f32 to vector<10x1xf32>
    %210 = arith.divf %208, %209 : vector<10x1xf32>
    %211 = vector.broadcast %210 : vector<10x1xf32> to vector<10x32xf32>
    %212 = arith.subf %186, %211 : vector<10x32xf32>
    %213 = arith.mulf %212, %212 : vector<10x32xf32>
    %cst_105 = arith.constant dense<0.000000e+00> : vector<10xf32>
    %214 = vector.multi_reduction <add>, %213, %cst_105 [1] : vector<10x32xf32> to vector<10xf32>
    %215 = vector.shape_cast %214 : vector<10xf32> to vector<10x1xf32>
    %cst_106 = arith.constant 3.200000e+01 : f32
    %216 = vector.broadcast %cst_106 : f32 to vector<10x1xf32>
    %217 = arith.divf %215, %216 : vector<10x1xf32>
    %218 = vector.broadcast %210 : vector<10x1xf32> to vector<10x32xf32>
    %219 = arith.subf %186, %218 : vector<10x32xf32>
    %cst_107 = arith.constant 9.99999997E-7 : f32
    %220 = vector.broadcast %cst_107 : f32 to vector<10x1xf32>
    %221 = arith.addf %217, %220 : vector<10x1xf32>
    %222 = math.rsqrt %221 : vector<10x1xf32>
    %223 = vector.broadcast %222 : vector<10x1xf32> to vector<10x32xf32>
    %224 = arith.mulf %219, %223 : vector<10x32xf32>
    %225 = vector.broadcast %205 : vector<1x32xf32> to vector<10x32xf32>
    %226 = arith.mulf %224, %225 : vector<10x32xf32>
    %227 = vector.broadcast %206 : vector<1x32xf32> to vector<10x32xf32>
    %228 = arith.addf %226, %227 : vector<10x32xf32>
    %cst_108 = arith.constant dense<0.000000e+00> : vector<10x96xf32>
    %229 = tpu.matmul %228, %190, %cst_108 {dimension_numbers = #tpu.dot_dimension_numbers<[1], [0], [0], [1], [0, 0, 1, 1], [], []>} : vector<10x32xf32>, vector<32x96xf32>, vector<10x96xf32> -> vector<10x96xf32>
    %230 = vector.broadcast %192 : vector<1x96xf32> to vector<10x96xf32>
    %231 = arith.addf %229, %230 : vector<10x96xf32>
    %232 = vector.shape_cast %231 : vector<10x96xf32> to vector<2x5x96xf32>
    %cst_109 = arith.constant 0.000000e+00 : f32
    %233 = vector.broadcast %cst_109 : f32 to vector<10x32xf32>
    %234 = vector.extract_strided_slice %232 {offsets = [0, 0, 0], sizes = [2, 5, 8], strides = [1, 1, 1]} : vector<2x5x96xf32> to vector<2x5x8xf32>
    %cst_110 = arith.constant 0.353553385 : f32
    %235 = vector.broadcast %cst_110 : f32 to vector<2x5x8xf32>
    %236 = arith.mulf %234, %235 : vector<2x5x8xf32>
    %237 = vector.extract_strided_slice %232 {offsets = [0, 0, 32], sizes = [2, 5, 8], strides = [1, 1, 1]} : vector<2x5x96xf32> to vector<2x5x8xf32>
    %238 = vector.extract_strided_slice %232 {offsets = [0, 0, 64], sizes = [2, 5, 8], strides = [1, 1, 1]} : vector<2x5x96xf32> to vector<2x5x8xf32>
    "tpu.trace_start"() <{level = 10 : i32, message = "bqd,bkd->bqk"}> : () -> ()
    %cst_111 = arith.constant dense<0.000000e+00> : vector<2x5x5xf32>
    %239 = tpu.matmul %236, %237, %cst_111 {dimension_numbers = #tpu.dot_dimension_numbers<[2], [2], [1], [1], [0, 0, 0, 1, 1, 1], [0], [0]>} : vector<2x5x8xf32>, vector<2x5x8xf32>, vector<2x5x5xf32> -> vector<2x5x5xf32>
    "tpu.trace_stop"() : () -> ()
    %cst_112 = arith.constant dense<0xFF800000> : vector<2x5xf32>
    %240 = vector.multi_reduction <maximumf>, %239, %cst_112 [2] : vector<2x5x5xf32> to vector<2x5xf32>
    %241 = vector.shape_cast %240 : vector<2x5xf32> to vector<2x5x1xf32>
    %242 = vector.broadcast %241 : vector<2x5x1xf32> to vector<2x5x5xf32>
    %243 = arith.subf %239, %242 : vector<2x5x5xf32>
    %244 = math.exp %243 : vector<2x5x5xf32>
    %cst_113 = arith.constant dense<0.000000e+00> : vector<2x5xf32>
    %245 = vector.multi_reduction <add>, %244, %cst_113 [2] : vector<2x5x5xf32> to vector<2x5xf32>
    %246 = vector.shape_cast %245 : vector<2x5xf32> to vector<2x5x1xf32>
    %247 = vector.broadcast %246 : vector<2x5x1xf32> to vector<2x5x5xf32>
    %248 = arith.divf %244, %247 : vector<2x5x5xf32>
    "tpu.trace_start"() <{level = 10 : i32, message = "bqk,bkd->bqd"}> : () -> ()
    %cst_114 = arith.constant dense<0.000000e+00> : vector<2x5x8xf32>
    %249 = tpu.matmul %248, %238, %cst_114 {dimension_numbers = #tpu.dot_dimension_numbers<[2], [1], [1], [2], [0, 0, 0, 1, 1, 2], [0], [0]>} : vector<2x5x5xf32>, vector<2x5x8xf32>, vector<2x5x8xf32> -> vector<2x5x8xf32>
    "tpu.trace_stop"() : () -> ()
    %250 = vector.shape_cast %249 : vector<2x5x8xf32> to vector<10x8xf32>
    %251 = vector.extract_strided_slice %194 {offsets = [0, 0], sizes = [8, 32], strides = [1, 1]} : vector<32x32xf32> to vector<8x32xf32>
    %cst_115 = arith.constant dense<0.000000e+00> : vector<10x32xf32>
    %252 = tpu.matmul %250, %251, %cst_115 {dimension_numbers = #tpu.dot_dimension_numbers<[1], [0], [0], [1], [0, 0, 1, 1], [], []>} : vector<10x8xf32>, vector<8x32xf32>, vector<10x32xf32> -> vector<10x32xf32>
    %253 = arith.addf %233, %252 : vector<10x32xf32>
    %254 = vector.extract_strided_slice %232 {offsets = [0, 0, 8], sizes = [2, 5, 8], strides = [1, 1, 1]} : vector<2x5x96xf32> to vector<2x5x8xf32>
    %cst_116 = arith.constant 0.353553385 : f32
    %255 = vector.broadcast %cst_116 : f32 to vector<2x5x8xf32>
    %256 = arith.mulf %254, %255 : vector<2x5x8xf32>
    %257 = vector.extract_strided_slice %232 {offsets = [0, 0, 40], sizes = [2, 5, 8], strides = [1, 1, 1]} : vector<2x5x96xf32> to vector<2x5x8xf32>
    %258 = vector.extract_strided_slice %232 {offsets = [0, 0, 72], sizes = [2, 5, 8], strides = [1, 1, 1]} : vector<2x5x96xf32> to vector<2x5x8xf32>
    "tpu.trace_start"() <{level = 10 : i32, message = "bqd,bkd->bqk"}> : () -> ()
    %cst_117 = arith.constant dense<0.000000e+00> : vector<2x5x5xf32>
    %259 = tpu.matmul %256, %257, %cst_117 {dimension_numbers = #tpu.dot_dimension_numbers<[2], [2], [1], [1], [0, 0, 0, 1, 1, 1], [0], [0]>} : vector<2x5x8xf32>, vector<2x5x8xf32>, vector<2x5x5xf32> -> vector<2x5x5xf32>
    "tpu.trace_stop"() : () -> ()
    %cst_118 = arith.constant dense<0xFF800000> : vector<2x5xf32>
    %260 = vector.multi_reduction <maximumf>, %259, %cst_118 [2] : vector<2x5x5xf32> to vector<2x5xf32>
    %261 = vector.shape_cast %260 : vector<2x5xf32> to vector<2x5x1xf32>
    %262 = vector.broadcast %261 : vector<2x5x1xf32> to vector<2x5x5xf32>
    %263 = arith.subf %259, %262 : vector<2x5x5xf32>
    %264 = math.exp %263 : vector<2x5x5xf32>
    %cst_119 = arith.constant dense<0.000000e+00> : vector<2x5xf32>
    %265 = vector.multi_reduction <add>, %264, %cst_119 [2] : vector<2x5x5xf32> to vector<2x5xf32>
    %266 = vector.shape_cast %265 : vector<2x5xf32> to vector<2x5x1xf32>
    %267 = vector.broadcast %266 : vector<2x5x1xf32> to vector<2x5x5xf32>
    %268 = arith.divf %264, %267 : vector<2x5x5xf32>
    "tpu.trace_start"() <{level = 10 : i32, message = "bqk,bkd->bqd"}> : () -> ()
    %cst_120 = arith.constant dense<0.000000e+00> : vector<2x5x8xf32>
    %269 = tpu.matmul %268, %258, %cst_120 {dimension_numbers = #tpu.dot_dimension_numbers<[2], [1], [1], [2], [0, 0, 0, 1, 1, 2], [0], [0]>} : vector<2x5x5xf32>, vector<2x5x8xf32>, vector<2x5x8xf32> -> vector<2x5x8xf32>
    "tpu.trace_stop"() : () -> ()
    %270 = vector.shape_cast %269 : vector<2x5x8xf32> to vector<10x8xf32>
    %271 = vector.extract_strided_slice %194 {offsets = [8, 0], sizes = [8, 32], strides = [1, 1]} : vector<32x32xf32> to vector<8x32xf32>
    %cst_121 = arith.constant dense<0.000000e+00> : vector<10x32xf32>
    %272 = tpu.matmul %270, %271, %cst_121 {dimension_numbers = #tpu.dot_dimension_numbers<[1], [0], [0], [1], [0, 0, 1, 1], [], []>} : vector<10x8xf32>, vector<8x32xf32>, vector<10x32xf32> -> vector<10x32xf32>
    %273 = arith.addf %253, %272 : vector<10x32xf32>
    %274 = vector.extract_strided_slice %232 {offsets = [0, 0, 16], sizes = [2, 5, 8], strides = [1, 1, 1]} : vector<2x5x96xf32> to vector<2x5x8xf32>
    %cst_122 = arith.constant 0.353553385 : f32
    %275 = vector.broadcast %cst_122 : f32 to vector<2x5x8xf32>
    %276 = arith.mulf %274, %275 : vector<2x5x8xf32>
    %277 = vector.extract_strided_slice %232 {offsets = [0, 0, 48], sizes = [2, 5, 8], strides = [1, 1, 1]} : vector<2x5x96xf32> to vector<2x5x8xf32>
    %278 = vector.extract_strided_slice %232 {offsets = [0, 0, 80], sizes = [2, 5, 8], strides = [1, 1, 1]} : vector<2x5x96xf32> to vector<2x5x8xf32>
    "tpu.trace_start"() <{level = 10 : i32, message = "bqd,bkd->bqk"}> : () -> ()
    %cst_123 = arith.constant dense<0.000000e+00> : vector<2x5x5xf32>
    %279 = tpu.matmul %276, %277, %cst_123 {dimension_numbers = #tpu.dot_dimension_numbers<[2], [2], [1], [1], [0, 0, 0, 1, 1, 1], [0], [0]>} : vector<2x5x8xf32>, vector<2x5x8xf32>, vector<2x5x5xf32> -> vector<2x5x5xf32>
    "tpu.trace_stop"() : () -> ()
    %cst_124 = arith.constant dense<0xFF800000> : vector<2x5xf32>
    %280 = vector.multi_reduction <maximumf>, %279, %cst_124 [2] : vector<2x5x5xf32> to vector<2x5xf32>
    %281 = vector.shape_cast %280 : vector<2x5xf32> to vector<2x5x1xf32>
    %282 = vector.broadcast %281 : vector<2x5x1xf32> to vector<2x5x5xf32>
    %283 = arith.subf %279, %282 : vector<2x5x5xf32>
    %284 = math.exp %283 : vector<2x5x5xf32>
    %cst_125 = arith.constant dense<0.000000e+00> : vector<2x5xf32>
    %285 = vector.multi_reduction <add>, %284, %cst_125 [2] : vector<2x5x5xf32> to vector<2x5xf32>
    %286 = vector.shape_cast %285 : vector<2x5xf32> to vector<2x5x1xf32>
    %287 = vector.broadcast %286 : vector<2x5x1xf32> to vector<2x5x5xf32>
    %288 = arith.divf %284, %287 : vector<2x5x5xf32>
    "tpu.trace_start"() <{level = 10 : i32, message = "bqk,bkd->bqd"}> : () -> ()
    %cst_126 = arith.constant dense<0.000000e+00> : vector<2x5x8xf32>
    %289 = tpu.matmul %288, %278, %cst_126 {dimension_numbers = #tpu.dot_dimension_numbers<[2], [1], [1], [2], [0, 0, 0, 1, 1, 2], [0], [0]>} : vector<2x5x5xf32>, vector<2x5x8xf32>, vector<2x5x8xf32> -> vector<2x5x8xf32>
    "tpu.trace_stop"() : () -> ()
    %290 = vector.shape_cast %289 : vector<2x5x8xf32> to vector<10x8xf32>
    %291 = vector.extract_strided_slice %194 {offsets = [16, 0], sizes = [8, 32], strides = [1, 1]} : vector<32x32xf32> to vector<8x32xf32>
    %cst_127 = arith.constant dense<0.000000e+00> : vector<10x32xf32>
    %292 = tpu.matmul %290, %291, %cst_127 {dimension_numbers = #tpu.dot_dimension_numbers<[1], [0], [0], [1], [0, 0, 1, 1], [], []>} : vector<10x8xf32>, vector<8x32xf32>, vector<10x32xf32> -> vector<10x32xf32>
    %293 = arith.addf %273, %292 : vector<10x32xf32>
    %294 = vector.extract_strided_slice %232 {offsets = [0, 0, 24], sizes = [2, 5, 8], strides = [1, 1, 1]} : vector<2x5x96xf32> to vector<2x5x8xf32>
    %cst_128 = arith.constant 0.353553385 : f32
    %295 = vector.broadcast %cst_128 : f32 to vector<2x5x8xf32>
    %296 = arith.mulf %294, %295 : vector<2x5x8xf32>
    %297 = vector.extract_strided_slice %232 {offsets = [0, 0, 56], sizes = [2, 5, 8], strides = [1, 1, 1]} : vector<2x5x96xf32> to vector<2x5x8xf32>
    %298 = vector.extract_strided_slice %232 {offsets = [0, 0, 88], sizes = [2, 5, 8], strides = [1, 1, 1]} : vector<2x5x96xf32> to vector<2x5x8xf32>
    "tpu.trace_start"() <{level = 10 : i32, message = "bqd,bkd->bqk"}> : () -> ()
    %cst_129 = arith.constant dense<0.000000e+00> : vector<2x5x5xf32>
    %299 = tpu.matmul %296, %297, %cst_129 {dimension_numbers = #tpu.dot_dimension_numbers<[2], [2], [1], [1], [0, 0, 0, 1, 1, 1], [0], [0]>} : vector<2x5x8xf32>, vector<2x5x8xf32>, vector<2x5x5xf32> -> vector<2x5x5xf32>
    "tpu.trace_stop"() : () -> ()
    %cst_130 = arith.constant dense<0xFF800000> : vector<2x5xf32>
    %300 = vector.multi_reduction <maximumf>, %299, %cst_130 [2] : vector<2x5x5xf32> to vector<2x5xf32>
    %301 = vector.shape_cast %300 : vector<2x5xf32> to vector<2x5x1xf32>
    %302 = vector.broadcast %301 : vector<2x5x1xf32> to vector<2x5x5xf32>
    %303 = arith.subf %299, %302 : vector<2x5x5xf32>
    %304 = math.exp %303 : vector<2x5x5xf32>
    %cst_131 = arith.constant dense<0.000000e+00> : vector<2x5xf32>
    %305 = vector.multi_reduction <add>, %304, %cst_131 [2] : vector<2x5x5xf32> to vector<2x5xf32>
    %306 = vector.shape_cast %305 : vector<2x5xf32> to vector<2x5x1xf32>
    %307 = vector.broadcast %306 : vector<2x5x1xf32> to vector<2x5x5xf32>
    %308 = arith.divf %304, %307 : vector<2x5x5xf32>
    "tpu.trace_start"() <{level = 10 : i32, message = "bqk,bkd->bqd"}> : () -> ()
    %cst_132 = arith.constant dense<0.000000e+00> : vector<2x5x8xf32>
    %309 = tpu.matmul %308, %298, %cst_132 {dimension_numbers = #tpu.dot_dimension_numbers<[2], [1], [1], [2], [0, 0, 0, 1, 1, 2], [0], [0]>} : vector<2x5x5xf32>, vector<2x5x8xf32>, vector<2x5x8xf32> -> vector<2x5x8xf32>
    "tpu.trace_stop"() : () -> ()
    %310 = vector.shape_cast %309 : vector<2x5x8xf32> to vector<10x8xf32>
    %311 = vector.extract_strided_slice %194 {offsets = [24, 0], sizes = [8, 32], strides = [1, 1]} : vector<32x32xf32> to vector<8x32xf32>
    %cst_133 = arith.constant dense<0.000000e+00> : vector<10x32xf32>
    %312 = tpu.matmul %310, %311, %cst_133 {dimension_numbers = #tpu.dot_dimension_numbers<[1], [0], [0], [1], [0, 0, 1, 1], [], []>} : vector<10x8xf32>, vector<8x32xf32>, vector<10x32xf32> -> vector<10x32xf32>
    %313 = arith.addf %293, %312 : vector<10x32xf32>
    %314 = arith.addf %186, %313 : vector<10x32xf32>
    %315 = vector.broadcast %196 : vector<1x32xf32> to vector<10x32xf32>
    %316 = arith.addf %314, %315 : vector<10x32xf32>
    %317 = vector.extract_strided_slice %188 {offsets = [2, 0], sizes = [1, 32], strides = [1, 1]} : vector<4x32xf32> to vector<1x32xf32>
    %318 = vector.extract_strided_slice %188 {offsets = [3, 0], sizes = [1, 32], strides = [1, 1]} : vector<4x32xf32> to vector<1x32xf32>
    %cst_134 = arith.constant dense<0.000000e+00> : vector<10xf32>
    %319 = vector.multi_reduction <add>, %316, %cst_134 [1] : vector<10x32xf32> to vector<10xf32>
    %320 = vector.shape_cast %319 : vector<10xf32> to vector<10x1xf32>
    %cst_135 = arith.constant 3.200000e+01 : f32
    %321 = vector.broadcast %cst_135 : f32 to vector<10x1xf32>
    %322 = arith.divf %320, %321 : vector<10x1xf32>
    %323 = vector.broadcast %322 : vector<10x1xf32> to vector<10x32xf32>
    %324 = arith.subf %316, %323 : vector<10x32xf32>
    %325 = arith.mulf %324, %324 : vector<10x32xf32>
    %cst_136 = arith.constant dense<0.000000e+00> : vector<10xf32>
    %326 = vector.multi_reduction <add>, %325, %cst_136 [1] : vector<10x32xf32> to vector<10xf32>
    %327 = vector.shape_cast %326 : vector<10xf32> to vector<10x1xf32>
    %cst_137 = arith.constant 3.200000e+01 : f32
    %328 = vector.broadcast %cst_137 : f32 to vector<10x1xf32>
    %329 = arith.divf %327, %328 : vector<10x1xf32>
    %330 = vector.broadcast %322 : vector<10x1xf32> to vector<10x32xf32>
    %331 = arith.subf %316, %330 : vector<10x32xf32>
    %cst_138 = arith.constant 9.99999997E-7 : f32
    %332 = vector.broadcast %cst_138 : f32 to vector<10x1xf32>
    %333 = arith.addf %329, %332 : vector<10x1xf32>
    %334 = math.rsqrt %333 : vector<10x1xf32>
    %335 = vector.broadcast %334 : vector<10x1xf32> to vector<10x32xf32>
    %336 = arith.mulf %331, %335 : vector<10x32xf32>
    %337 = vector.broadcast %317 : vector<1x32xf32> to vector<10x32xf32>
    %338 = arith.mulf %336, %337 : vector<10x32xf32>
    %339 = vector.broadcast %318 : vector<1x32xf32> to vector<10x32xf32>
    %340 = arith.addf %338, %339 : vector<10x32xf32>
    %cst_139 = arith.constant dense<0.000000e+00> : vector<10x128xf32>
    %341 = tpu.matmul %340, %198, %cst_139 {dimension_numbers = #tpu.dot_dimension_numbers<[1], [0], [0], [1], [0, 0, 1, 1], [], []>} : vector<10x32xf32>, vector<32x128xf32>, vector<10x128xf32> -> vector<10x128xf32>
    %342 = vector.broadcast %200 : vector<1x128xf32> to vector<10x128xf32>
    %343 = arith.addf %341, %342 : vector<10x128xf32>
    %344 = arith.mulf %343, %343 : vector<10x128xf32>
    %345 = arith.mulf %343, %344 : vector<10x128xf32>
    %cst_140 = arith.constant 4.471500e-02 : f32
    %346 = vector.broadcast %cst_140 : f32 to vector<10x128xf32>
    %347 = arith.mulf %346, %345 : vector<10x128xf32>
    %348 = arith.addf %343, %347 : vector<10x128xf32>
    %cst_141 = arith.constant 0.797884583 : f32
    %349 = vector.broadcast %cst_141 : f32 to vector<10x128xf32>
    %350 = arith.mulf %349, %348 : vector<10x128xf32>
    %351 = math.tanh %350 : vector<10x128xf32>
    %cst_142 = arith.constant 1.000000e+00 : f32
    %352 = vector.broadcast %cst_142 : f32 to vector<10x128xf32>
    %353 = arith.addf %352, %351 : vector<10x128xf32>
    %cst_143 = arith.constant 5.000000e-01 : f32
    %354 = vector.broadcast %cst_143 : f32 to vector<10x128xf32>
    %355 = arith.mulf %354, %353 : vector<10x128xf32>
    %356 = arith.mulf %343, %355 : vector<10x128xf32>
    %cst_144 = arith.constant dense<0.000000e+00> : vector<10x32xf32>
    %357 = tpu.matmul %356, %202, %cst_144 {dimension_numbers = #tpu.dot_dimension_numbers<[1], [0], [0], [1], [0, 0, 1, 1], [], []>} : vector<10x128xf32>, vector<128x32xf32>, vector<10x32xf32> -> vector<10x32xf32>
    %358 = vector.broadcast %204 : vector<1x32xf32> to vector<10x32xf32>
    %359 = arith.addf %357, %358 : vector<10x32xf32>
    %360 = arith.addf %316, %359 : vector<10x32xf32>
    %361 = vector.extract_strided_slice %360 {offsets = [0, 0], sizes = [1, 32], strides = [1, 1]} : vector<10x32xf32> to vector<1x32xf32>
    %362 = vector.extract_strided_slice %360 {offsets = [5, 0], sizes = [1, 32], strides = [1, 1]} : vector<10x32xf32> to vector<1x32xf32>
    %363 = tpu.concatenate %361, %362 in 0 : vector<1x32xf32>, vector<1x32xf32> -> vector<2x32xf32>
    %c0_145 = arith.constant 0 : index
    %c0_146 = arith.constant 0 : index
    %364 = vector.load %arg14[%c0_145, %c0_146] : memref<2x32xf32, #tpu.memory_space<vmem>>, vector<2x32xf32>
    %365 = vector.extract_strided_slice %364 {offsets = [0, 0], sizes = [1, 32], strides = [1, 1]} : vector<2x32xf32> to vector<1x32xf32>
    %366 = vector.extract_strided_slice %364 {offsets = [1, 0], sizes = [1, 32], strides = [1, 1]} : vector<2x32xf32> to vector<1x32xf32>
    %cst_147 = arith.constant dense<0.000000e+00> : vector<2xf32>
    %367 = vector.multi_reduction <add>, %363, %cst_147 [1] : vector<2x32xf32> to vector<2xf32>
    %368 = vector.shape_cast %367 : vector<2xf32> to vector<2x1xf32>
    %cst_148 = arith.constant 3.200000e+01 : f32
    %369 = vector.broadcast %cst_148 : f32 to vector<2x1xf32>
    %370 = arith.divf %368, %369 : vector<2x1xf32>
    %371 = vector.broadcast %370 : vector<2x1xf32> to vector<2x32xf32>
    %372 = arith.subf %363, %371 : vector<2x32xf32>
    %373 = arith.mulf %372, %372 : vector<2x32xf32>
    %cst_149 = arith.constant dense<0.000000e+00> : vector<2xf32>
    %374 = vector.multi_reduction <add>, %373, %cst_149 [1] : vector<2x32xf32> to vector<2xf32>
    %375 = vector.shape_cast %374 : vector<2xf32> to vector<2x1xf32>
    %cst_150 = arith.constant 3.200000e+01 : f32
    %376 = vector.broadcast %cst_150 : f32 to vector<2x1xf32>
    %377 = arith.divf %375, %376 : vector<2x1xf32>
    %378 = vector.broadcast %370 : vector<2x1xf32> to vector<2x32xf32>
    %379 = arith.subf %363, %378 : vector<2x32xf32>
    %cst_151 = arith.constant 9.99999997E-7 : f32
    %380 = vector.broadcast %cst_151 : f32 to vector<2x1xf32>
    %381 = arith.addf %377, %380 : vector<2x1xf32>
    %382 = math.rsqrt %381 : vector<2x1xf32>
    %383 = vector.broadcast %382 : vector<2x1xf32> to vector<2x32xf32>
    %384 = arith.mulf %379, %383 : vector<2x32xf32>
    %385 = vector.broadcast %365 : vector<1x32xf32> to vector<2x32xf32>
    %386 = arith.mulf %384, %385 : vector<2x32xf32>
    %387 = vector.broadcast %366 : vector<1x32xf32> to vector<2x32xf32>
    %388 = arith.addf %386, %387 : vector<2x32xf32>
    %389 = arith.mulf %388, %388 : vector<2x32xf32>
    %cst_152 = arith.constant dense<0.000000e+00> : vector<2xf32>
    %390 = vector.multi_reduction <add>, %389, %cst_152 [1] : vector<2x32xf32> to vector<2xf32>
    %391 = vector.shape_cast %390 : vector<2xf32> to vector<2x1xf32>
    %392 = math.rsqrt %391 : vector<2x1xf32>
    %393 = vector.broadcast %392 : vector<2x1xf32> to vector<2x32xf32>
    %394 = arith.mulf %388, %393 : vector<2x32xf32>
    %c0_153 = arith.constant 0 : index
    %c0_154 = arith.constant 0 : index
    %395 = vector.load %arg16[%c0_153, %c0_154] : memref<2x32xf32, #tpu.memory_space<vmem>>, vector<2x32xf32>
    tpu.vector_store %arg16[%c0_153, %c0_154], %394 {strides = array<i32>} : memref<2x32xf32, #tpu.memory_space<vmem>>, vector<2x32xf32>,
    %c0_155 = arith.constant 0 : index
    %c0_156 = arith.constant 0 : index
    %396 = vector.load %arg15[%c0_155, %c0_156] : memref<8x32xf32, #tpu.memory_space<vmem>>, vector<8x32xf32>
    %cst_157 = arith.constant dense<0.000000e+00> : vector<2x8xf32>
    %397 = tpu.matmul %394, %396, %cst_157 {dimension_numbers = #tpu.dot_dimension_numbers<[1], [1], [0], [0], [0, 0, 1, 0], [], []>} : vector<2x32xf32>, vector<8x32xf32>, vector<2x8xf32> -> vector<2x8xf32>
    %c0_158 = arith.constant 0 : index
    %c0_159 = arith.constant 0 : index
    %398 = vector.load %arg17[%c0_158, %c0_159] : memref<2x8xf32, #tpu.memory_space<vmem>>, vector<2x8xf32>
    tpu.vector_store %arg17[%c0_158, %c0_159], %397 {strides = array<i32>} : memref<2x8xf32, #tpu.memory_space<vmem>>, vector<2x8xf32>,
    return
  }
  func.func @transform_0(%arg0: i32) -> (i32, i32) {
    %c0_i32 = arith.constant 0 : i32
    %c0_i32_0 = arith.constant 0 : i32
    %c0_i32_1 = arith.constant 0 : i32
    return %c0_i32, %c0_i32_0 : i32, i32
  }
  func.func @transform_1(%arg0: i32) -> (i32, i32) {
    %c0_i32 = arith.constant 0 : i32
    %c0_i32_0 = arith.constant 0 : i32
    %c0_i32_1 = arith.constant 0 : i32
    return %c0_i32, %c0_i32_0 : i32, i32
  }
  func.func @transform_2(%arg0: i32) -> (i32, i32) {
    %c0_i32 = arith.constant 0 : i32
    %c0_i32_0 = arith.constant 0 : i32
    %c0_i32_1 = arith.constant 0 : i32
    return %c0_i32, %c0_i32_0 : i32, i32
  }
  func.func @transform_3(%arg0: i32) -> (i32, i32) {
    %c0_i32 = arith.constant 0 : i32
    %c0_i32_0 = arith.constant 0 : i32
    %c0_i32_1 = arith.constant 0 : i32
    return %c0_i32, %c0_i32_0 : i32, i32
  }
  func.func @transform_4(%arg0: i32) -> (i32, i32, i32) {
    %c0_i32 = arith.constant 0 : i32
    %c0_i32_0 = arith.constant 0 : i32
    %c0_i32_1 = arith.constant 0 : i32
    %c0_i32_2 = arith.constant 0 : i32
    return %c0_i32, %c0_i32_0, %c0_i32_1 : i32, i32, i32
  }
  func.func @transform_5(%arg0: i32) -> (i32, i32, i32) {
    %c0_i32 = arith.constant 0 : i32
    %c0_i32_0 = arith.constant 0 : i32
    %c0_i32_1 = arith.constant 0 : i32
    %c0_i32_2 = arith.constant 0 : i32
    return %c0_i32, %c0_i32_0, %c0_i32_1 : i32, i32, i32
  }
  func.func @transform_6(%arg0: i32) -> (i32, i32, i32) {
    %c0_i32 = arith.constant 0 : i32
    %c0_i32_0 = arith.constant 0 : i32
    %c0_i32_1 = arith.constant 0 : i32
    %c0_i32_2 = arith.constant 0 : i32
    return %c0_i32, %c0_i32_0, %c0_i32_1 : i32, i32, i32
  }
  func.func @transform_7(%arg0: i32) -> (i32, i32, i32) {
    %c0_i32 = arith.constant 0 : i32
    %c0_i32_0 = arith.constant 0 : i32
    %c0_i32_1 = arith.constant 0 : i32
    %c0_i32_2 = arith.constant 0 : i32
    return %c0_i32, %c0_i32_0, %c0_i32_1 : i32, i32, i32
  }
  func.func @transform_8(%arg0: i32) -> (i32, i32, i32) {
    %c0_i32 = arith.constant 0 : i32
    %c0_i32_0 = arith.constant 0 : i32
    %c0_i32_1 = arith.constant 0 : i32
    %c0_i32_2 = arith.constant 0 : i32
    return %c0_i32, %c0_i32_0, %c0_i32_1 : i32, i32, i32
  }
  func.func @transform_9(%arg0: i32) -> (i32, i32, i32) {
    %c0_i32 = arith.constant 0 : i32
    %c0_i32_0 = arith.constant 0 : i32
    %c0_i32_1 = arith.constant 0 : i32
    %c0_i32_2 = arith.constant 0 : i32
    return %c0_i32, %c0_i32_0, %c0_i32_1 : i32, i32, i32
  }
  func.func @transform_10(%arg0: i32) -> (i32, i32, i32) {
    %c0_i32 = arith.constant 0 : i32
    %c0_i32_0 = arith.constant 0 : i32
    %c0_i32_1 = arith.constant 0 : i32
    %c0_i32_2 = arith.constant 0 : i32
    return %c0_i32, %c0_i32_0, %c0_i32_1 : i32, i32, i32
  }
  func.func @transform_11(%arg0: i32) -> (i32, i32, i32) {
    %c0_i32 = arith.constant 0 : i32
    %c0_i32_0 = arith.constant 0 : i32
    %c0_i32_1 = arith.constant 0 : i32
    %c0_i32_2 = arith.constant 0 : i32
    return %c0_i32, %c0_i32_0, %c0_i32_1 : i32, i32, i32
  }
  func.func @transform_12(%arg0: i32) -> (i32, i32, i32) {
    %c0_i32 = arith.constant 0 : i32
    %c0_i32_0 = arith.constant 0 : i32
    %c0_i32_1 = arith.constant 0 : i32
    %c0_i32_2 = arith.constant 0 : i32
    return %c0_i32, %c0_i32_0, %c0_i32_1 : i32, i32, i32
  }
  func.func @transform_13(%arg0: i32) -> (i32, i32) {
    %c0_i32 = arith.constant 0 : i32
    %c0_i32_0 = arith.constant 0 : i32
    %c0_i32_1 = arith.constant 0 : i32
    return %c0_i32, %c0_i32_0 : i32, i32
  }
  func.func @transform_14(%arg0: i32) -> (i32, i32) {
    %c0_i32 = arith.constant 0 : i32
    %c0_i32_0 = arith.constant 0 : i32
    %c0_i32_1 = arith.constant 0 : i32
    return %c0_i32, %c0_i32_0 : i32, i32
  }
  func.func @transform_15(%arg0: i32) -> (i32, i32) {
    %c0_i32 = arith.constant 0 : i32
    %c0_i32_0 = arith.constant 0 : i32
    %c0_i32_1 = arith.constant 0 : i32
    return %c0_i32, %c0_i32_0 : i32, i32
  }
  func.func @transform_16(%arg0: i32) -> (i32, i32) {
    %c0_i32 = arith.constant 0 : i32
    %c0_i32_0 = arith.constant 0 : i32
    %c0_i32_1 = arith.constant 0 : i32
    return %c0_i32, %c0_i32_0 : i32, i32
  }
}

</mosaic_0001>

<llo_original>
// kernel: tpu_custom_call.1
$region0: #{tpu_custom_call.1}
  #allocation0 [shape = 'u32[]', space=smem, size = 0x4, offset = 0x4, fixed_abs, tag = 'smem constant byte address 0x4 - core index']
  #allocation1 [shape = 'u32[144,128]{1,0:T(1,128)}', space=vmem, size = 0x12000, scoped, tag = 'internal scratch']
  %s0 = inlined_call_operand.vmem [shape: f32[8,192], index: 0, kind: input, shape index: {}]
  %s1 = inlined_call_operand.vmem [shape: f32[192,32], index: 1, kind: input, shape index: {}]
  %s2 = inlined_call_operand.vmem [shape: f32[1,32], index: 2, kind: input, shape index: {}]
  %s3 = inlined_call_operand.vmem [shape: f32[5,32], index: 3, kind: input, shape index: {}]
  %s4 = inlined_call_operand.vmem [shape: f32[2,4,32], index: 4, kind: input, shape index: {}]
  %s5 = inlined_call_operand.vmem [shape: f32[2,32,96], index: 5, kind: input, shape index: {}]
  %s6 = inlined_call_operand.vmem [shape: f32[2,1,96], index: 6, kind: input, shape index: {}]
  %s7 = inlined_call_operand.vmem [shape: f32[2,32,32], index: 7, kind: input, shape index: {}]
  %s8 = inlined_call_operand.vmem [shape: f32[2,1,32], index: 8, kind: input, shape index: {}]
  %s9 = inlined_call_operand.vmem [shape: f32[2,32,128], index: 9, kind: input, shape index: {}]
  %s10 = inlined_call_operand.vmem [shape: f32[2,1,128], index: 10, kind: input, shape index: {}]
  %s11 = inlined_call_operand.vmem [shape: f32[2,128,32], index: 11, kind: input, shape index: {}]
  %s12 = inlined_call_operand.vmem [shape: f32[2,1,32], index: 12, kind: input, shape index: {}]
  %s13 = inlined_call_operand.vmem [shape: f32[2,32], index: 13, kind: input, shape index: {}]
  %s14 = inlined_call_operand.vmem [shape: f32[8,32], index: 14, kind: input, shape index: {}]
  %s15 = inlined_call_operand.hbm [shape: f32[2,32], index: 15, kind: output, shape index: {0}]
  %s16 = inlined_call_operand.hbm [shape: f32[2,8], index: 16, kind: output, shape index: {1}]
  %17 = xla_tuple %s15, %s16
  %s18 = sld [smem:[#allocation0]]
  $region78: #{tpu_custom_call.1} parent=0
    _
  %s20 = ssub.s32 1, %s18
  %s21 = scalar_select 0, %s20, %s18
  $region1: #{tpu_custom_call.1} parent=0
    #allocation2 [shape = 'u8[1024]{0}', space=vmem, size = 0x400, scoped, tag = 'output window, operand 0, single buffered']
    #allocation3 [shape = 's32[1]{0}', space=sflag, size = 0x4, scoped, tag = 'scoped memory for tpu_custom_call.1']
    #allocation4 [shape = 'u8[1024]{0}', space=vmem, size = 0x400, scoped, tag = 'output window, operand 1, single buffered']
    #allocation5 [shape = 's32[1]{0}', space=sflag, size = 0x4, scoped, tag = 'scoped memory for tpu_custom_call.1']
    %22 = vsyncpa [#allocation3], 0
    %23 = vsyncpa [#allocation5], 0
    // Predicated region
    $region2: #{tpu_custom_call.1} parent=1 // pred_check
      _
    $region3: #{tpu_custom_call.1} parent=1 // pred_check_branch
      %25 = sbr.rel (0) target = $region5
    $region4: #{tpu_custom_call.1} parent=1 // pred_region
      _
    $region5: #{tpu_custom_call.1} parent=1 // pred_fallthru
      _
    // Predicated region
    $region6: #{tpu_custom_call.1} parent=1 // pred_check
      _
    $region7: #{tpu_custom_call.1} parent=1 // pred_check_branch
      %27 = sbr.rel (0) target = $region9
    $region8: #{tpu_custom_call.1} parent=1 // pred_region
      _
    $region9: #{tpu_custom_call.1} parent=1 // pred_fallthru
      _
    // Predicated region
    $region10: #{tpu_custom_call.1} parent=1 // pred_check
      _
    $region11: #{tpu_custom_call.1} parent=1 // pred_check_branch
      %29 = sbr.rel (0) target = $region13
    $region12: #{tpu_custom_call.1} parent=1 // pred_region
      _
    $region13: #{tpu_custom_call.1} parent=1 // pred_fallthru
      _
    // Predicated region
    $region14: #{tpu_custom_call.1} parent=1 // pred_check
      _
    $region15: #{tpu_custom_call.1} parent=1 // pred_check_branch
      %31 = sbr.rel (0) target = $region17
    $region16: #{tpu_custom_call.1} parent=1 // pred_region
      _
    $region17: #{tpu_custom_call.1} parent=1 // pred_fallthru
      _
    // Predicated region
    $region18: #{tpu_custom_call.1} parent=1 // pred_check
      _
    $region19: #{tpu_custom_call.1} parent=1 // pred_check_branch
      %33 = sbr.rel (0) target = $region21
    $region20: #{tpu_custom_call.1} parent=1 // pred_region
      _
    $region21: #{tpu_custom_call.1} parent=1 // pred_fallthru
      _
    // Predicated region
    $region22: #{tpu_custom_call.1} parent=1 // pred_check
      _
    $region23: #{tpu_custom_call.1} parent=1 // pred_check_branch
      %35 = sbr.rel (0) target = $region25
    $region24: #{tpu_custom_call.1} parent=1 // pred_region
      _
    $region25: #{tpu_custom_call.1} parent=1 // pred_fallthru
      _
    // Predicated region
    $region26: #{tpu_custom_call.1} parent=1 // pred_check
      _
    $region27: #{tpu_custom_call.1} parent=1 // pred_check_branch
      %37 = sbr.rel (0) target = $region29
    $region28: #{tpu_custom_call.1} parent=1 // pred_region
      _
    $region29: #{tpu_custom_call.1} parent=1 // pred_fallthru
      _
    // Predicated region
    $region30: #{tpu_custom_call.1} parent=1 // pred_check
      _
    $region31: #{tpu_custom_call.1} parent=1 // pred_check_branch
      %39 = sbr.rel (0) target = $region33
    $region32: #{tpu_custom_call.1} parent=1 // pred_region
      _
    $region33: #{tpu_custom_call.1} parent=1 // pred_fallthru
      _
    // Predicated region
    $region34: #{tpu_custom_call.1} parent=1 // pred_check
      _
    $region35: #{tpu_custom_call.1} parent=1 // pred_check_branch
      %41 = sbr.rel (0) target = $region37
    $region36: #{tpu_custom_call.1} parent=1 // pred_region
      _
    $region37: #{tpu_custom_call.1} parent=1 // pred_fallthru
      _
    // Predicated region
    $region38: #{tpu_custom_call.1} parent=1 // pred_check
      _
    $region39: #{tpu_custom_call.1} parent=1 // pred_check_branch
      %43 = sbr.rel (0) target = $region41
    $region40: #{tpu_custom_call.1} parent=1 // pred_region
      _
    $region41: #{tpu_custom_call.1} parent=1 // pred_fallthru
      _
    // Predicated region
    $region42: #{tpu_custom_call.1} parent=1 // pred_check
      _
    $region43: #{tpu_custom_call.1} parent=1 // pred_check_branch
      %45 = sbr.rel (0) target = $region45
    $region44: #{tpu_custom_call.1} parent=1 // pred_region
      _
    $region45: #{tpu_custom_call.1} parent=1 // pred_fallthru
      _
    // Predicated region
    $region46: #{tpu_custom_call.1} parent=1 // pred_check
      _
    $region47: #{tpu_custom_call.1} parent=1 // pred_check_branch
      %47 = sbr.rel (0) target = $region49
    $region48: #{tpu_custom_call.1} parent=1 // pred_region
      _
    $region49: #{tpu_custom_call.1} parent=1 // pred_fallthru
      _
    // Predicated region
    $region50: #{tpu_custom_call.1} parent=1 // pred_check
      _
    $region51: #{tpu_custom_call.1} parent=1 // pred_check_branch
      %49 = sbr.rel (0) target = $region53
    $region52: #{tpu_custom_call.1} parent=1 // pred_region
      _
    $region53: #{tpu_custom_call.1} parent=1 // pred_fallthru
      _
    // Predicated region
    $region54: #{tpu_custom_call.1} parent=1 // pred_check
      _
    $region55: #{tpu_custom_call.1} parent=1 // pred_check_branch
      %51 = sbr.rel (0) target = $region57
    $region56: #{tpu_custom_call.1} parent=1 // pred_region
      _
    $region57: #{tpu_custom_call.1} parent=1 // pred_fallthru
      _
    // Predicated region
    $region58: #{tpu_custom_call.1} parent=1 // pred_check
      _
    $region59: #{tpu_custom_call.1} parent=1 // pred_check_branch
      %53 = sbr.rel (0) target = $region61
    $region60: #{tpu_custom_call.1} parent=1 // pred_region
      _
    $region61: #{tpu_custom_call.1} parent=1 // pred_fallthru
      _
    %v54 = vld [vmem:[%s0] sm:$0xff]
    %v55 = vld [vmem:[%s0 + $0x8] sm:$0xff]
    %v56 = vld [vmem:[%s1] sm:$0xff]
    %v57 = vld [vmem:[%s1 + $0x8] sm:$0xff]
    %v58 = vld [vmem:[%s1 + $0x10] sm:$0xff]
    %v59 = vld [vmem:[%s1 + $0x18] sm:$0xff]
    %v60 = vld [vmem:[%s1 + $0x20] sm:$0xff]
    %v61 = vld [vmem:[%s1 + $0x28] sm:$0xff]
    %v62 = vld [vmem:[%s1 + $0x30] sm:$0xff]
    %v63 = vld [vmem:[%s1 + $0x38] sm:$0xff]
    %v64 = vld [vmem:[%s1 + $0x40] sm:$0xff]
    %v65 = vld [vmem:[%s1 + $0x48] sm:$0xff]
    %v66 = vld [vmem:[%s1 + $0x50] sm:$0xff]
    %v67 = vld [vmem:[%s1 + $0x58] sm:$0xff]
    %v68 = vld [vmem:[%s1 + $0x60] sm:$0xff]
    %v69 = vld [vmem:[%s1 + $0x68] sm:$0xff]
    %v70 = vld [vmem:[%s1 + $0x70] sm:$0xff]
    %v71 = vld [vmem:[%s1 + $0x78] sm:$0xff]
    %v72 = vld [vmem:[%s1 + $0x80] sm:$0xff]
    %v73 = vld [vmem:[%s1 + $0x88] sm:$0xff]
    %v74 = vld [vmem:[%s1 + $0x90] sm:$0xff]
    %v75 = vld [vmem:[%s1 + $0x98] sm:$0xff]
    %v76 = vld [vmem:[%s1 + $0xa0] sm:$0xff]
    %v77 = vld [vmem:[%s1 + $0xa8] sm:$0xff]
    %v78 = vld [vmem:[%s1 + $0xb0] sm:$0xff]
    %v79 = vld [vmem:[%s1 + $0xb8] sm:$0xff]
    %v80 = vld [vmem:[%s2] sm:$0x1]
    %v82 = vlaneseq
    %v83 = vshrl.u32 %v82, 7
    %v84 = vsub.s32 0, %v83
    %v85 = vrot.slane %v80, %v84
    %vm87 = vcmask 523264
    %v89 = vsel %vm87, %v55, 0
    %91 = vmatprep.subr.mxu0 0.0
    %92 = vmatpush1.msra.mxu0 %v71
    %93 = vmatprep.subr.mxu0 0.0
    %94 = vmatpush1.msra.mxu0 %v70
    %95 = vmatprep.subr.mxu0 0.0
    %96 = vmatpush1.msra.mxu0 %v69
    %97 = vmatprep.subr.mxu0 0.0
    %98 = vmatpush1.msra.mxu0 %v68
    %99 = vmatprep.subr.mxu0 0.0
    %100 = vmatpush1.msra.mxu0 %v67
    %101 = vmatprep.subr.mxu0 0.0
    %102 = vmatpush1.msra.mxu0 %v66
    %103 = vmatprep.subr.mxu0 0.0
    %104 = vmatpush1.msra.mxu0 %v65
    %105 = vmatprep.subr.mxu0 0.0
    %106 = vmatpush1.msra.mxu0 %v64
    %107 = vmatprep.subr.mxu0 0.0
    %108 = vmatpush1.msra.mxu0 %v63
    %109 = vmatprep.subr.mxu0 0.0
    %110 = vmatpush1.msra.mxu0 %v62
    %111 = vmatprep.subr.mxu0 0.0
    %112 = vmatpush1.msra.mxu0 %v61
    %113 = vmatprep.subr.mxu0 0.0
    %114 = vmatpush1.msra.mxu0 %v60
    %115 = vmatprep.subr.mxu0 0.0
    %116 = vmatpush1.msra.mxu0 %v59
    %117 = vmatprep.subr.mxu0 0.0
    %118 = vmatpush1.msra.mxu0 %v58
    %119 = vmatprep.subr.mxu0 0.0
    %120 = vmatpush1.msra.mxu0 %v57
    %121 = vmatprep.subr.mxu0 0.0
    %122 = vmatpush1.msra.mxu0 %v56
    %123 = vmatprep.subr.mxu0 0.0
    %124 = vmatpush2.msra.mxu0 0.0
    %125 = vmatprep.subr.mxu0 0.0
    %126 = vmatpush2.msra.mxu0 0.0
    %127 = vmatprep.subr.mxu0 0.0
    %128 = vmatpush2.msra.mxu0 0.0
    %129 = vmatprep.subr.mxu0 0.0
    %130 = vmatpush2.msra.mxu0 0.0
    %131 = vmatprep.subr.mxu0 0.0
    %132 = vmatpush2.msra.mxu0 0.0
    %133 = vmatprep.subr.mxu0 0.0
    %134 = vmatpush2.msra.mxu0 0.0
    %135 = vmatprep.subr.mxu0 0.0
    %136 = vmatpush2.msra.mxu0 0.0
    %137 = vmatprep.subr.mxu0 0.0
    %138 = vmatpush2.msra.mxu0 0.0
    %139 = vmatprep.subr.mxu0 0.0
    %140 = vmatpush2.msra.mxu0 %v79
    %141 = vmatprep.subr.mxu0 0.0
    %142 = vmatpush2.msra.mxu0 %v78
    %143 = vmatprep.subr.mxu0 0.0
    %144 = vmatpush2.msra.mxu0 %v77
    %145 = vmatprep.subr.mxu0 0.0
    %146 = vmatpush2.msra.mxu0 %v76
    %147 = vmatprep.subr.mxu0 0.0
    %148 = vmatpush2.msra.mxu0 %v75
    %149 = vmatprep.subr.mxu0 0.0
    %150 = vmatpush2.msra.mxu0 %v74
    %151 = vmatprep.subr.mxu0 0.0
    %152 = vmatpush2.msra.mxu0 %v73
    %153 = vmatprep.subr.mxu0 0.0
    %154 = vmatpush2.msra.mxu0 %v72
    %155 = vmatprep.mubr.f32.mxu0 %v89
    %156 = vmatmul.mubr.f32.gmra.mxu0 %v54
    %v157 = vpop.f32.mrf.mxu0
    %v158 = vadd.f32 %v85, %v157
    %v159 = vpop.f32.mrf.mxu0
    %160 = vdwg.mxu0
    %v161 = vld [vmem:[%s3] sm:$0x1f]
    %v163 = vrot.slane %v158, 7
    %v165 = vrot.slane %v158, 6
    %vm167 = vcmask 1040384
    %v168 = vsel %vm167, 0.0, %v163
    %vm169 = vcmask 1044480
    %v170 = vsel %vm169, %v168, 0.0
    %vm171 = vcmask 1045504
    %v172 = vsel %vm171, %v170, %v165
    %v174 = vrot.slane %v161, 3
    %v176 = vsel %vm169, %v161, %v174
    %v177 = vadd.f32 %v172, %v176
    %v178 = vadd.f32 %v165, %v174
    %v179 = vld [vmem:[%s4] sm:$0xf]
    %v180 = vld [vmem:[%s5] sm:$0xff]
    %v181 = vld [vmem:[%s5 + $0x8] sm:$0xff]
    %v182 = vld [vmem:[%s5 + $0x10] sm:$0xff]
    %v183 = vld [vmem:[%s5 + $0x18] sm:$0xff]
    %v184 = vld [vmem:[%s6] sm:$0x1]
    %v185 = vld [vmem:[%s7] sm:$0xff]
    %v186 = vld [vmem:[%s7 + $0x8] sm:$0xff]
    %v187 = vld [vmem:[%s7 + $0x10] sm:$0xff]
    %v188 = vld [vmem:[%s7 + $0x18] sm:$0xff]
    %v189 = vld [vmem:[%s8] sm:$0x1]
    %v190 = vld [vmem:[%s9] sm:$0xff]
    %v191 = vld [vmem:[%s9 + $0x8] sm:$0xff]
    %v192 = vld [vmem:[%s9 + $0x10] sm:$0xff]
    %v193 = vld [vmem:[%s9 + $0x18] sm:$0xff]
    %v194 = vld [vmem:[%s10] sm:$0x1]
    %v195 = vld [vmem:[%s11] sm:$0xff]
    %v196 = vld [vmem:[%s11 + $0x8] sm:$0xff]
    %v197 = vld [vmem:[%s11 + $0x10] sm:$0xff]
    %v198 = vld [vmem:[%s11 + $0x18] sm:$0xff]
    %v199 = vld [vmem:[%s11 + $0x20] sm:$0xff]
    %v200 = vld [vmem:[%s11 + $0x28] sm:$0xff]
    %v201 = vld [vmem:[%s11 + $0x30] sm:$0xff]
    %v202 = vld [vmem:[%s11 + $0x38] sm:$0xff]
    %v203 = vld [vmem:[%s11 + $0x40] sm:$0xff]
    %v204 = vld [vmem:[%s11 + $0x48] sm:$0xff]
    %v205 = vld [vmem:[%s11 + $0x50] sm:$0xff]
    %v206 = vld [vmem:[%s11 + $0x58] sm:$0xff]
    %v207 = vld [vmem:[%s11 + $0x60] sm:$0xff]
    %v208 = vld [vmem:[%s11 + $0x68] sm:$0xff]
    %v209 = vld [vmem:[%s11 + $0x70] sm:$0xff]
    %v210 = vld [vmem:[%s11 + $0x78] sm:$0xff]
    %v211 = vld [vmem:[%s12] sm:$0x1]
    %vm212 = vcmask 261120
    %v213 = vsel %vm212, %v177, 0.0
    %214 = vadd.xlane.f32.xlu0 %v213
    %v215 = vpop.xlane.xlu0 %214
    %vm216 = vcmask 254976
    %v217 = vsel %vm216, %v178, 0.0
    %218 = vadd.xlane.f32.xlu0 %v217
    %v219 = vpop.xlane.xlu0 %218
    %v220 = vrcp.pop 32.0
    %v221 = vmul.f32 %v215, %v220
    %v222 = vmul.f32 %v219, %v220
    %v223 = vsub.f32 %v177, %v221
    %v224 = vsub.f32 %v178, %v222
    %v225 = vmul.f32 %v223, %v223
    %v226 = vmul.f32 %v224, %v224
    %v227 = vsel %vm212, %v225, 0.0
    %228 = vadd.xlane.f32.xlu0 %v227
    %v229 = vpop.xlane.xlu0 %228
    %v230 = vsel %vm216, %v226, 0.0
    %231 = vadd.xlane.f32.xlu0 %v230
    %v232 = vpop.xlane.xlu0 %231
    %v233 = vmul.f32 %v229, %v220
    %v234 = vmul.f32 %v232, %v220
    %v235 = vadd.f32 %v233, 1e-06
    %v236 = vadd.f32 %v234, 1e-06
    %v237 = vrsqrt.pop %v235
    %v238 = vrsqrt.pop %v236
    %v239 = vmul.f32 %v223, %v237
    %v240 = vmul.f32 %v224, %v238
    %v241 = vlaneseq
    %v242 = vshrl.u32 %v241, 7
    %v243 = vsub.s32 0, %v242
    %v244 = vrot.slane %v179, %v243
    %v245 = vmul.f32 %v239, %v244
    %v246 = vmul.f32 %v240, %v244
    %v247 = vlaneseq
    %v248 = vshrl.u32 %v247, 7
    %v249 = vsub.s32 1, %v248
    %v250 = vrot.slane %v179, %v249
    %v251 = vadd.f32 %v245, %v250
    %v252 = vadd.f32 %v246, %v250
    %v254 = vlaneseq
    %v255 = vshrl.u32 %v254, 7
    %v256 = vsub.s32 0, %v255
    %v257 = vrot.slane %v184, %v256
    %v260 = vsel %vm212, %v251, 0
    %v263 = vsel %vm212, %v252, 0
    %265 = vmatprep.subr.mxu0 0.0
    %266 = vmatpush1.msra.mxu0 0.0
    %267 = vmatprep.subr.mxu0 0.0
    %268 = vmatpush1.msra.mxu0 0.0
    %269 = vmatprep.subr.mxu0 0.0
    %270 = vmatpush1.msra.mxu0 0.0
    %271 = vmatprep.subr.mxu0 0.0
    %272 = vmatpush1.msra.mxu0 0.0
    %273 = vmatprep.subr.mxu0 0.0
    %274 = vmatpush1.msra.mxu0 0.0
    %275 = vmatprep.subr.mxu0 0.0
    %276 = vmatpush1.msra.mxu0 0.0
    %277 = vmatprep.subr.mxu0 0.0
    %278 = vmatpush1.msra.mxu0 0.0
    %279 = vmatprep.subr.mxu0 0.0
    %280 = vmatpush1.msra.mxu0 0.0
    %281 = vmatprep.subr.mxu0 0.0
    %282 = vmatpush1.msra.mxu0 0.0
    %283 = vmatprep.subr.mxu0 0.0
    %284 = vmatpush1.msra.mxu0 0.0
    %285 = vmatprep.subr.mxu0 0.0
    %286 = vmatpush1.msra.mxu0 0.0
    %287 = vmatprep.subr.mxu0 0.0
    %288 = vmatpush1.msra.mxu0 0.0
    %289 = vmatprep.subr.mxu0 0.0
    %290 = vmatpush1.msra.mxu0 %v183
    %291 = vmatprep.subr.mxu0 0.0
    %292 = vmatpush1.msra.mxu0 %v182
    %293 = vmatprep.subr.mxu0 0.0
    %294 = vmatpush1.msra.mxu0 %v181
    %295 = vmatprep.subr.mxu0 0.0
    %296 = vmatpush1.msra.mxu0 %v180
    %297 = vmatprep.subr.mxu0 0.0
    %298 = vmatpush2.msra.mxu0 0.0
    %299 = vmatprep.subr.mxu0 0.0
    %300 = vmatpush2.msra.mxu0 0.0
    %301 = vmatprep.subr.mxu0 0.0
    %302 = vmatpush2.msra.mxu0 0.0
    %303 = vmatprep.subr.mxu0 0.0
    %304 = vmatpush2.msra.mxu0 0.0
    %305 = vmatprep.subr.mxu0 0.0
    %306 = vmatpush2.msra.mxu0 0.0
    %307 = vmatprep.subr.mxu0 0.0
    %308 = vmatpush2.msra.mxu0 0.0
    %309 = vmatprep.subr.mxu0 0.0
    %310 = vmatpush2.msra.mxu0 0.0
    %311 = vmatprep.subr.mxu0 0.0
    %312 = vmatpush2.msra.mxu0 0.0
    %313 = vmatprep.subr.mxu0 0.0
    %314 = vmatpush2.msra.mxu0 0.0
    %315 = vmatprep.subr.mxu0 0.0
    %316 = vmatpush2.msra.mxu0 0.0
    %317 = vmatprep.subr.mxu0 0.0
    %318 = vmatpush2.msra.mxu0 0.0
    %319 = vmatprep.subr.mxu0 0.0
    %320 = vmatpush2.msra.mxu0 0.0
    %321 = vmatprep.subr.mxu0 0.0
    %322 = vmatpush2.msra.mxu0 0.0
    %323 = vmatprep.subr.mxu0 0.0
    %324 = vmatpush2.msra.mxu0 0.0
    %325 = vmatprep.subr.mxu0 0.0
    %326 = vmatpush2.msra.mxu0 0.0
    %327 = vmatprep.subr.mxu0 0.0
    %328 = vmatpush2.msra.mxu0 0.0
    %329 = vmatprep.mubr.f32.mxu0 0.0
    %330 = vmatmul.mubr.f32.gmra.mxu0 %v260
    %v331 = vpop.f32.mrf.mxu0
    %v332 = vadd.f32 %v257, %v331
    %v333 = vpop.f32.mrf.mxu0
    %334 = vmatprep.mubr.f32.mxu0 0.0
    %335 = vmatmul.mubr.f32.gmra.mxu0 %v263
    %v336 = vpop.f32.mrf.mxu0
    %v337 = vadd.f32 %v257, %v336
    %v338 = vpop.f32.mrf.mxu0
    %339 = vdwg.mxu0
    %v342 = vcombine.high %v332, %v332
    %v344 = vunpack.c.l.s4 1966171168
    %v345 = vunpack.c.0.s8 %v344
    %v346 = vlaneseq
    %v347 = vshrl.u32 %v346, 7
    %v348 = vsub.s32 %v345, %v347
    %v349 = vrot.slane %v332, %v348
    %v351 = vunpack.c.l.s4 1966171168
    %v352 = vunpack.c.0.s8 %v351
    %v353 = vlaneseq
    %v354 = vshrl.u32 %v353, 7
    %v355 = vsub.s32 %v352, %v354
    %v356 = vrot.slane %v342, %v355
    %v357 = vcombine.high %v349, %v349
    %v358 = vcombine.high %v356, %v356
    %v360 = vunpack.c.l.s4 1966171168
    %v361 = vunpack.c.0.s8 %v360
    %v362 = vlaneseq
    %v363 = vshrl.u32 %v362, 7
    %v364 = vsub.s32 %v361, %v363
    %v365 = vrot.slane %v349, %v364
    %v367 = vunpack.c.l.s4 1966171168
    %v368 = vunpack.c.0.s8 %v367
    %v369 = vlaneseq
    %v370 = vshrl.u32 %v369, 7
    %v371 = vsub.s32 %v368, %v370
    %v372 = vrot.slane %v356, %v371
    %v374 = vunpack.c.l.s4 1966171168
    %v375 = vunpack.c.0.s8 %v374
    %v376 = vlaneseq
    %v377 = vshrl.u32 %v376, 7
    %v378 = vsub.s32 %v375, %v377
    %v379 = vrot.slane %v357, %v378
    %v381 = vunpack.c.l.s4 1966171168
    %v382 = vunpack.c.0.s8 %v381
    %v383 = vlaneseq
    %v384 = vshrl.u32 %v383, 7
    %v385 = vsub.s32 %v382, %v384
    %v386 = vrot.slane %v358, %v385
    %v387 = vcombine.high %v365, %v365
    %v388 = vcombine.high %v372, %v372
    %v389 = vcombine.high %v379, %v379
    %v390 = vcombine.high %v386, %v386
    %v392 = vunpack.c.l.s4 1966171168
    %v393 = vunpack.c.0.s8 %v392
    %v394 = vlaneseq
    %v395 = vshrl.u32 %v394, 7
    %v396 = vsub.s32 %v393, %v395
    %v397 = vrot.slane %v337, %v396
    %v398 = vcombine.high %v397, %v397
    %v400 = vunpack.c.l.s4 1966171168
    %v401 = vunpack.c.0.s8 %v400
    %v402 = vlaneseq
    %v403 = vshrl.u32 %v402, 7
    %v404 = vsub.s32 %v401, %v403
    %v405 = vrot.slane %v397, %v404
    %v407 = vunpack.c.l.s4 1966171168
    %v408 = vunpack.c.0.s8 %v407
    %v409 = vlaneseq
    %v410 = vshrl.u32 %v409, 7
    %v411 = vsub.s32 %v408, %v410
    %v412 = vrot.slane %v398, %v411
    %v423 = vmul.f32 %v365, 0.35355338
    %v424 = vmul.f32 %v379, 0.35355338
    %v425 = vmul.f32 %v387, 0.35355338
    %v426 = vmul.f32 %v389, 0.35355338
    %v427 = vmul.f32 %v372, 0.35355338
    %v428 = vmul.f32 %v386, 0.35355338
    %v429 = vmul.f32 %v388, 0.35355338
    %v430 = vmul.f32 %v390, 0.35355338
    %v431 = vmul.f32 %v405, 0.35355338
    %v432 = vmul.f32 %v412, 0.35355338
    %v438 = vcombine.low %v423, %v424
    %v439 = vcombine.low %v425, %v426
    %v441 = vunpack.c.l.s4 1966171168
    %v442 = vunpack.c.0.s8 %v441
    %v443 = vlaneseq
    %v444 = vshrl.u32 %v443, 7
    %v445 = vsub.s32 %v442, %v444
    %v446 = vrot.slane %v438, %v445
    %v448 = vunpack.c.l.s4 1966171168
    %v449 = vunpack.c.0.s8 %v448
    %v450 = vlaneseq
    %v451 = vshrl.u32 %v450, 7
    %v452 = vsub.s32 %v449, %v451
    %v453 = vrot.slane %v439, %v452
    %v455 = vunpack.c.l.s4 1966171168
    %v456 = vunpack.c.0.s8 %v455
    %v457 = vlaneseq
    %v458 = vshrl.u32 %v457, 7
    %v459 = vsub.s32 %v456, %v458
    %v460 = vrot.slane %v427, %v459
    %v461 = vcombine.low %v446, %v453
    %v463 = vunpack.c.l.s4 1966171168
    %v464 = vunpack.c.0.s8 %v463
    %v465 = vlaneseq
    %v466 = vshrl.u32 %v465, 7
    %v467 = vsub.s32 %v464, %v466
    %v468 = vrot.slane %v461, %v467
    %v470 = vunpack.c.l.s4 1966171168
    %v471 = vunpack.c.0.s8 %v470
    %v472 = vlaneseq
    %v473 = vshrl.u32 %v472, 7
    %v474 = vsub.s32 %v471, %v473
    %v475 = vrot.slane %v460, %v474
    %v476 = vcombine.low %v468, %v475
    %v477 = vcombine.low %v365, %v379
    %v478 = vcombine.low %v387, %v389
    %v480 = vunpack.c.l.s4 1966171168
    %v481 = vunpack.c.0.s8 %v480
    %v482 = vlaneseq
    %v483 = vshrl.u32 %v482, 7
    %v484 = vsub.s32 %v481, %v483
    %v485 = vrot.slane %v477, %v484
    %v487 = vunpack.c.l.s4 1966171168
    %v488 = vunpack.c.0.s8 %v487
    %v489 = vlaneseq
    %v490 = vshrl.u32 %v489, 7
    %v491 = vsub.s32 %v488, %v490
    %v492 = vrot.slane %v478, %v491
    %v494 = vunpack.c.l.s4 1966171168
    %v495 = vunpack.c.0.s8 %v494
    %v496 = vlaneseq
    %v497 = vshrl.u32 %v496, 7
    %v498 = vsub.s32 %v495, %v497
    %v499 = vrot.slane %v372, %v498
    %v500 = vcombine.low %v485, %v492
    %v502 = vunpack.c.l.s4 1966171168
    %v503 = vunpack.c.0.s8 %v502
    %v504 = vlaneseq
    %v505 = vshrl.u32 %v504, 7
    %v506 = vsub.s32 %v503, %v505
    %v507 = vrot.slane %v500, %v506
    %v509 = vunpack.c.l.s4 1966171168
    %v510 = vunpack.c.0.s8 %v509
    %v511 = vlaneseq
    %v512 = vshrl.u32 %v511, 7
    %v513 = vsub.s32 %v510, %v512
    %v514 = vrot.slane %v499, %v513
    %v515 = vcombine.low %v507, %v514
    %516 = vrot.lane.b32.xlu0 %v515, 96
    %v517 = vpop.permute.xlu0 %516
    %vm518 = vcmask 64512
    %v519 = vsel %vm518, %v476, 0
    %v521 = vsel %vm518, %v517, 0
    %523 = vmatprep.subr.mxu0 0.0
    %524 = vmatpush1.xpose.msra.mxu0 0.0
    %525 = vmatprep.subr.mxu0 0.0
    %526 = vmatpush1.xpose.msra.mxu0 0.0
    %527 = vmatprep.subr.mxu0 0.0
    %528 = vmatpush1.xpose.msra.mxu0 0.0
    %529 = vmatprep.subr.mxu0 0.0
    %530 = vmatpush1.xpose.msra.mxu0 0.0
    %531 = vmatprep.subr.mxu0 0.0
    %532 = vmatpush1.xpose.msra.mxu0 0.0
    %533 = vmatprep.subr.mxu0 0.0
    %534 = vmatpush1.xpose.msra.mxu0 0.0
    %535 = vmatprep.subr.mxu0 0.0
    %536 = vmatpush1.xpose.msra.mxu0 0.0
    %537 = vmatprep.subr.mxu0 0.0
    %538 = vmatpush1.xpose.msra.mxu0 0.0
    %539 = vmatprep.subr.mxu0 0.0
    %540 = vmatpush1.xpose.msra.mxu0 0.0
    %541 = vmatprep.subr.mxu0 0.0
    %542 = vmatpush1.xpose.msra.mxu0 0.0
    %543 = vmatprep.subr.mxu0 0.0
    %544 = vmatpush1.xpose.msra.mxu0 0.0
    %545 = vmatprep.subr.mxu0 0.0
    %546 = vmatpush1.xpose.msra.mxu0 0.0
    %547 = vmatprep.subr.mxu0 0.0
    %548 = vmatpush1.xpose.msra.mxu0 0.0
    %549 = vmatprep.subr.mxu0 0.0
    %550 = vmatpush1.xpose.msra.mxu0 0.0
    %551 = vmatprep.subr.mxu0 0.0
    %552 = vmatpush1.xpose.msra.mxu0 0.0
    %553 = vmatprep.subr.mxu0 0.0
    %554 = vmatpush1.xpose.msra.mxu0 %v521
    %555 = vmatprep.subr.mxu0 0.0
    %556 = vmatpush2.xpose.msra.mxu0 0.0
    %557 = vmatprep.subr.mxu0 0.0
    %558 = vmatpush2.xpose.msra.mxu0 0.0
    %559 = vmatprep.subr.mxu0 0.0
    %560 = vmatpush2.xpose.msra.mxu0 0.0
    %561 = vmatprep.subr.mxu0 0.0
    %562 = vmatpush2.xpose.msra.mxu0 0.0
    %563 = vmatprep.subr.mxu0 0.0
    %564 = vmatpush2.xpose.msra.mxu0 0.0
    %565 = vmatprep.subr.mxu0 0.0
    %566 = vmatpush2.xpose.msra.mxu0 0.0
    %567 = vmatprep.subr.mxu0 0.0
    %568 = vmatpush2.xpose.msra.mxu0 0.0
    %569 = vmatprep.subr.mxu0 0.0
    %570 = vmatpush2.xpose.msra.mxu0 0.0
    %571 = vmatprep.subr.mxu0 0.0
    %572 = vmatpush2.xpose.msra.mxu0 0.0
    %573 = vmatprep.subr.mxu0 0.0
    %574 = vmatpush2.xpose.msra.mxu0 0.0
    %575 = vmatprep.subr.mxu0 0.0
    %576 = vmatpush2.xpose.msra.mxu0 0.0
    %577 = vmatprep.subr.mxu0 0.0
    %578 = vmatpush2.xpose.msra.mxu0 0.0
    %579 = vmatprep.subr.mxu0 0.0
    %580 = vmatpush2.xpose.msra.mxu0 0.0
    %581 = vmatprep.subr.mxu0 0.0
    %582 = vmatpush2.xpose.msra.mxu0 0.0
    %583 = vmatprep.subr.mxu0 0.0
    %584 = vmatpush2.xpose.msra.mxu0 0.0
    %585 = vmatprep.subr.mxu0 0.0
    %586 = vmatpush2.xpose.msra.mxu0 0.0
    %587 = vmatprep.mubr.f32.mxu0 0.0
    %588 = vmatmul.mubr.f32.gmra.mxu0 %v519
    %v589 = vpop.f32.mrf.mxu0
    %v590 = vadd.f32 0.0, %v589
    %v591 = vpop.f32.mrf.mxu0
    %592 = vdwg.mxu0
    %v598 = vcombine.low %v428, %v429
    %v599 = vcombine.low %v430, %v431
    %v601 = vunpack.c.l.s4 1966171168
    %v602 = vunpack.c.0.s8 %v601
    %v603 = vlaneseq
    %v604 = vshrl.u32 %v603, 7
    %v605 = vsub.s32 %v602, %v604
    %v606 = vrot.slane %v598, %v605
    %v608 = vunpack.c.l.s4 1966171168
    %v609 = vunpack.c.0.s8 %v608
    %v610 = vlaneseq
    %v611 = vshrl.u32 %v610, 7
    %v612 = vsub.s32 %v609, %v611
    %v613 = vrot.slane %v599, %v612
    %v615 = vunpack.c.l.s4 1966171168
    %v616 = vunpack.c.0.s8 %v615
    %v617 = vlaneseq
    %v618 = vshrl.u32 %v617, 7
    %v619 = vsub.s32 %v616, %v618
    %v620 = vrot.slane %v432, %v619
    %v621 = vcombine.low %v606, %v613
    %v623 = vunpack.c.l.s4 1966171168
    %v624 = vunpack.c.0.s8 %v623
    %v625 = vlaneseq
    %v626 = vshrl.u32 %v625, 7
    %v627 = vsub.s32 %v624, %v626
    %v628 = vrot.slane %v621, %v627
    %v630 = vunpack.c.l.s4 1966171168
    %v631 = vunpack.c.0.s8 %v630
    %v632 = vlaneseq
    %v633 = vshrl.u32 %v632, 7
    %v634 = vsub.s32 %v631, %v633
    %v635 = vrot.slane %v620, %v634
    %v636 = vcombine.low %v628, %v635
    %v637 = vcombine.low %v386, %v388
    %v638 = vcombine.low %v390, %v405
    %v640 = vunpack.c.l.s4 1966171168
    %v641 = vunpack.c.0.s8 %v640
    %v642 = vlaneseq
    %v643 = vshrl.u32 %v642, 7
    %v644 = vsub.s32 %v641, %v643
    %v645 = vrot.slane %v637, %v644
    %v647 = vunpack.c.l.s4 1966171168
    %v648 = vunpack.c.0.s8 %v647
    %v649 = vlaneseq
    %v650 = vshrl.u32 %v649, 7
    %v651 = vsub.s32 %v648, %v650
    %v652 = vrot.slane %v638, %v651
    %v654 = vunpack.c.l.s4 1966171168
    %v655 = vunpack.c.0.s8 %v654
    %v656 = vlaneseq
    %v657 = vshrl.u32 %v656, 7
    %v658 = vsub.s32 %v655, %v657
    %v659 = vrot.slane %v412, %v658
    %v660 = vcombine.low %v645, %v652
    %v662 = vunpack.c.l.s4 1966171168
    %v663 = vunpack.c.0.s8 %v662
    %v664 = vlaneseq
    %v665 = vshrl.u32 %v664, 7
    %v666 = vsub.s32 %v663, %v665
    %v667 = vrot.slane %v660, %v666
    %v669 = vunpack.c.l.s4 1966171168
    %v670 = vunpack.c.0.s8 %v669
    %v671 = vlaneseq
    %v672 = vshrl.u32 %v671, 7
    %v673 = vsub.s32 %v670, %v672
    %v674 = vrot.slane %v659, %v673
    %v675 = vcombine.low %v667, %v674
    %676 = vrot.lane.b32.xlu0 %v675, 96
    %v677 = vpop.permute.xlu0 %676
    %v678 = vsel %vm518, %v636, 0
    %v680 = vsel %vm518, %v677, 0
    %682 = vmatprep.subr.mxu0 0.0
    %683 = vmatpush1.xpose.msra.mxu0 0.0
    %684 = vmatprep.subr.mxu0 0.0
    %685 = vmatpush1.xpose.msra.mxu0 0.0
    %686 = vmatprep.subr.mxu0 0.0
    %687 = vmatpush1.xpose.msra.mxu0 0.0
    %688 = vmatprep.subr.mxu0 0.0
    %689 = vmatpush1.xpose.msra.mxu0 0.0
    %690 = vmatprep.subr.mxu0 0.0
    %691 = vmatpush1.xpose.msra.mxu0 0.0
    %692 = vmatprep.subr.mxu0 0.0
    %693 = vmatpush1.xpose.msra.mxu0 0.0
    %694 = vmatprep.subr.mxu0 0.0
    %695 = vmatpush1.xpose.msra.mxu0 0.0
    %696 = vmatprep.subr.mxu0 0.0
    %697 = vmatpush1.xpose.msra.mxu0 0.0
    %698 = vmatprep.subr.mxu0 0.0
    %699 = vmatpush1.xpose.msra.mxu0 0.0
    %700 = vmatprep.subr.mxu0 0.0
    %701 = vmatpush1.xpose.msra.mxu0 0.0
    %702 = vmatprep.subr.mxu0 0.0
    %703 = vmatpush1.xpose.msra.mxu0 0.0
    %704 = vmatprep.subr.mxu0 0.0
    %705 = vmatpush1.xpose.msra.mxu0 0.0
    %706 = vmatprep.subr.mxu0 0.0
    %707 = vmatpush1.xpose.msra.mxu0 0.0
    %708 = vmatprep.subr.mxu0 0.0
    %709 = vmatpush1.xpose.msra.mxu0 0.0
    %710 = vmatprep.subr.mxu0 0.0
    %711 = vmatpush1.xpose.msra.mxu0 0.0
    %712 = vmatprep.subr.mxu0 0.0
    %713 = vmatpush1.xpose.msra.mxu0 %v680
    %714 = vmatprep.subr.mxu0 0.0
    %715 = vmatpush2.xpose.msra.mxu0 0.0
    %716 = vmatprep.subr.mxu0 0.0
    %717 = vmatpush2.xpose.msra.mxu0 0.0
    %718 = vmatprep.subr.mxu0 0.0
    %719 = vmatpush2.xpose.msra.mxu0 0.0
    %720 = vmatprep.subr.mxu0 0.0
    %721 = vmatpush2.xpose.msra.mxu0 0.0
    %722 = vmatprep.subr.mxu0 0.0
    %723 = vmatpush2.xpose.msra.mxu0 0.0
    %724 = vmatprep.subr.mxu0 0.0
    %725 = vmatpush2.xpose.msra.mxu0 0.0
    %726 = vmatprep.subr.mxu0 0.0
    %727 = vmatpush2.xpose.msra.mxu0 0.0
    %728 = vmatprep.subr.mxu0 0.0
    %729 = vmatpush2.xpose.msra.mxu0 0.0
    %730 = vmatprep.subr.mxu0 0.0
    %731 = vmatpush2.xpose.msra.mxu0 0.0
    %732 = vmatprep.subr.mxu0 0.0
    %733 = vmatpush2.xpose.msra.mxu0 0.0
    %734 = vmatprep.subr.mxu0 0.0
    %735 = vmatpush2.xpose.msra.mxu0 0.0
    %736 = vmatprep.subr.mxu0 0.0
    %737 = vmatpush2.xpose.msra.mxu0 0.0
    %738 = vmatprep.subr.mxu0 0.0
    %739 = vmatpush2.xpose.msra.mxu0 0.0
    %740 = vmatprep.subr.mxu0 0.0
    %741 = vmatpush2.xpose.msra.mxu0 0.0
    %742 = vmatprep.subr.mxu0 0.0
    %743 = vmatpush2.xpose.msra.mxu0 0.0
    %744 = vmatprep.subr.mxu0 0.0
    %745 = vmatpush2.xpose.msra.mxu0 0.0
    %746 = vmatprep.mubr.f32.mxu0 0.0
    %747 = vmatmul.mubr.f32.gmra.mxu0 %v678
    %v748 = vpop.f32.mrf.mxu0
    %v749 = vadd.f32 0.0, %v748
    %v750 = vpop.f32.mrf.mxu0
    %751 = vdwg.mxu0
    %vm752 = vcmask 36864
    %v753 = vsel %vm752, %v590, -inf
    %754 = vmax.xlane.f32.xlu0 %v753
    %v755 = vpop.xlane.xlu0 %754
    %v756 = vsel %vm752, %v749, -inf
    %757 = vmax.xlane.f32.xlu0 %v756
    %v758 = vpop.xlane.xlu0 %757
    %v759 = vsub.f32 %v590, %v755
    %v760 = vsub.f32 %v749, %v758
    %v761 = vmul.f32 %v759, 1.442695
    %v762 = vpow.pop %v761
    %v763 = vmul.f32 %v760, 1.442695
    %v764 = vpow.pop %v763
    %v765 = vsel %vm752, %v762, 0.0
    %766 = vadd.xlane.f32.xlu0 %v765
    %v767 = vpop.xlane.xlu0 %766
    %v768 = vsel %vm752, %v764, 0.0
    %769 = vadd.xlane.f32.xlu0 %v768
    %v770 = vpop.xlane.xlu0 %769
    %v771 = vrcp.pop %v767
    %v772 = vmul.f32 %v762, %v771
    %v773 = vrcp.pop %v770
    %v774 = vmul.f32 %v764, %v773
    %775 = vrot.lane.b32.xlu0 %v515, 64
    %v776 = vpop.permute.xlu0 %775
    %vm777 = vcmask 39936
    %v779 = vsel %vm777, %v772, 0
    %v781 = vsel %vm169, %v776, 0
    %783 = vmatprep.subr.mxu0 0.0
    %784 = vmatpush1.msra.mxu0 0.0
    %785 = vmatprep.subr.mxu0 0.0
    %786 = vmatpush1.msra.mxu0 0.0
    %787 = vmatprep.subr.mxu0 0.0
    %788 = vmatpush1.msra.mxu0 0.0
    %789 = vmatprep.subr.mxu0 0.0
    %790 = vmatpush1.msra.mxu0 0.0
    %791 = vmatprep.subr.mxu0 0.0
    %792 = vmatpush1.msra.mxu0 0.0
    %793 = vmatprep.subr.mxu0 0.0
    %794 = vmatpush1.msra.mxu0 0.0
    %795 = vmatprep.subr.mxu0 0.0
    %796 = vmatpush1.msra.mxu0 0.0
    %797 = vmatprep.subr.mxu0 0.0
    %798 = vmatpush1.msra.mxu0 0.0
    %799 = vmatprep.subr.mxu0 0.0
    %800 = vmatpush1.msra.mxu0 0.0
    %801 = vmatprep.subr.mxu0 0.0
    %802 = vmatpush1.msra.mxu0 0.0
    %803 = vmatprep.subr.mxu0 0.0
    %804 = vmatpush1.msra.mxu0 0.0
    %805 = vmatprep.subr.mxu0 0.0
    %806 = vmatpush1.msra.mxu0 0.0
    %807 = vmatprep.subr.mxu0 0.0
    %808 = vmatpush1.msra.mxu0 0.0
    %809 = vmatprep.subr.mxu0 0.0
    %810 = vmatpush1.msra.mxu0 0.0
    %811 = vmatprep.subr.mxu0 0.0
    %812 = vmatpush1.msra.mxu0 0.0
    %813 = vmatprep.subr.mxu0 0.0
    %814 = vmatpush1.msra.mxu0 %v781
    %815 = vmatprep.subr.mxu0 0.0
    %816 = vmatpush2.msra.mxu0 0.0
    %817 = vmatprep.subr.mxu0 0.0
    %818 = vmatpush2.msra.mxu0 0.0
    %819 = vmatprep.subr.mxu0 0.0
    %820 = vmatpush2.msra.mxu0 0.0
    %821 = vmatprep.subr.mxu0 0.0
    %822 = vmatpush2.msra.mxu0 0.0
    %823 = vmatprep.subr.mxu0 0.0
    %824 = vmatpush2.msra.mxu0 0.0
    %825 = vmatprep.subr.mxu0 0.0
    %826 = vmatpush2.msra.mxu0 0.0
    %827 = vmatprep.subr.mxu0 0.0
    %828 = vmatpush2.msra.mxu0 0.0
    %829 = vmatprep.subr.mxu0 0.0
    %830 = vmatpush2.msra.mxu0 0.0
    %831 = vmatprep.subr.mxu0 0.0
    %832 = vmatpush2.msra.mxu0 0.0
    %833 = vmatprep.subr.mxu0 0.0
    %834 = vmatpush2.msra.mxu0 0.0
    %835 = vmatprep.subr.mxu0 0.0
    %836 = vmatpush2.msra.mxu0 0.0
    %837 = vmatprep.subr.mxu0 0.0
    %838 = vmatpush2.msra.mxu0 0.0
    %839 = vmatprep.subr.mxu0 0.0
    %840 = vmatpush2.msra.mxu0 0.0
    %841 = vmatprep.subr.mxu0 0.0
    %842 = vmatpush2.msra.mxu0 0.0
    %843 = vmatprep.subr.mxu0 0.0
    %844 = vmatpush2.msra.mxu0 0.0
    %845 = vmatprep.subr.mxu0 0.0
    %846 = vmatpush2.msra.mxu0 0.0
    %847 = vmatprep.mubr.f32.mxu0 0.0
    %848 = vmatmul.mubr.f32.gmra.mxu0 %v779
    %v849 = vpop.f32.mrf.mxu0
    %v850 = vadd.f32 0.0, %v849
    %v851 = vpop.f32.mrf.mxu0
    %852 = vdwg.mxu0
    %853 = vrot.lane.b32.xlu0 %v675, 64
    %v854 = vpop.permute.xlu0 %853
    %v856 = vsel %vm777, %v774, 0
    %v858 = vsel %vm169, %v854, 0
    %860 = vmatprep.subr.mxu0 0.0
    %861 = vmatpush1.msra.mxu0 0.0
    %862 = vmatprep.subr.mxu0 0.0
    %863 = vmatpush1.msra.mxu0 0.0
    %864 = vmatprep.subr.mxu0 0.0
    %865 = vmatpush1.msra.mxu0 0.0
    %866 = vmatprep.subr.mxu0 0.0
    %867 = vmatpush1.msra.mxu0 0.0
    %868 = vmatprep.subr.mxu0 0.0
    %869 = vmatpush1.msra.mxu0 0.0
    %870 = vmatprep.subr.mxu0 0.0
    %871 = vmatpush1.msra.mxu0 0.0
    %872 = vmatprep.subr.mxu0 0.0
    %873 = vmatpush1.msra.mxu0 0.0
    %874 = vmatprep.subr.mxu0 0.0
    %875 = vmatpush1.msra.mxu0 0.0
    %876 = vmatprep.subr.mxu0 0.0
    %877 = vmatpush1.msra.mxu0 0.0
    %878 = vmatprep.subr.mxu0 0.0
    %879 = vmatpush1.msra.mxu0 0.0
    %880 = vmatprep.subr.mxu0 0.0
    %881 = vmatpush1.msra.mxu0 0.0
    %882 = vmatprep.subr.mxu0 0.0
    %883 = vmatpush1.msra.mxu0 0.0
    %884 = vmatprep.subr.mxu0 0.0
    %885 = vmatpush1.msra.mxu0 0.0
    %886 = vmatprep.subr.mxu0 0.0
    %887 = vmatpush1.msra.mxu0 0.0
    %888 = vmatprep.subr.mxu0 0.0
    %889 = vmatpush1.msra.mxu0 0.0
    %890 = vmatprep.subr.mxu0 0.0
    %891 = vmatpush1.msra.mxu0 %v858
    %892 = vmatprep.subr.mxu0 0.0
    %893 = vmatpush2.msra.mxu0 0.0
    %894 = vmatprep.subr.mxu0 0.0
    %895 = vmatpush2.msra.mxu0 0.0
    %896 = vmatprep.subr.mxu0 0.0
    %897 = vmatpush2.msra.mxu0 0.0
    %898 = vmatprep.subr.mxu0 0.0
    %899 = vmatpush2.msra.mxu0 0.0
    %900 = vmatprep.subr.mxu0 0.0
    %901 = vmatpush2.msra.mxu0 0.0
    %902 = vmatprep.subr.mxu0 0.0
    %903 = vmatpush2.msra.mxu0 0.0
    %904 = vmatprep.subr.mxu0 0.0
    %905 = vmatpush2.msra.mxu0 0.0
    %906 = vmatprep.subr.mxu0 0.0
    %907 = vmatpush2.msra.mxu0 0.0
    %908 = vmatprep.subr.mxu0 0.0
    %909 = vmatpush2.msra.mxu0 0.0
    %910 = vmatprep.subr.mxu0 0.0
    %911 = vmatpush2.msra.mxu0 0.0
    %912 = vmatprep.subr.mxu0 0.0
    %913 = vmatpush2.msra.mxu0 0.0
    %914 = vmatprep.subr.mxu0 0.0
    %915 = vmatpush2.msra.mxu0 0.0
    %916 = vmatprep.subr.mxu0 0.0
    %917 = vmatpush2.msra.mxu0 0.0
    %918 = vmatprep.subr.mxu0 0.0
    %919 = vmatpush2.msra.mxu0 0.0
    %920 = vmatprep.subr.mxu0 0.0
    %921 = vmatpush2.msra.mxu0 0.0
    %922 = vmatprep.subr.mxu0 0.0
    %923 = vmatpush2.msra.mxu0 0.0
    %924 = vmatprep.mubr.f32.mxu0 0.0
    %925 = vmatmul.mubr.f32.gmra.mxu0 %v856
    %v926 = vpop.f32.mrf.mxu0
    %v927 = vadd.f32 0.0, %v926
    %v928 = vpop.f32.mrf.mxu0
    %929 = vdwg.mxu0
    %v932 = vcombine.high %v850, %v850
    %v934 = vunpack.c.l.s4 1966171168
    %v935 = vunpack.c.0.s8 %v934
    %v936 = vlaneseq
    %v937 = vshrl.u32 %v936, 7
    %v938 = vsub.s32 %v935, %v937
    %v939 = vrot.slane %v850, %v938
    %v941 = vunpack.c.l.s4 1966171168
    %v942 = vunpack.c.0.s8 %v941
    %v943 = vlaneseq
    %v944 = vshrl.u32 %v943, 7
    %v945 = vsub.s32 %v942, %v944
    %v946 = vrot.slane %v932, %v945
    %v947 = vcombine.high %v939, %v939
    %v949 = vunpack.c.l.s4 1966171168
    %v950 = vunpack.c.0.s8 %v949
    %v951 = vlaneseq
    %v952 = vshrl.u32 %v951, 7
    %v953 = vsub.s32 %v950, %v952
    %v954 = vrot.slane %v939, %v953
    %v956 = vunpack.c.l.s4 1966171168
    %v957 = vunpack.c.0.s8 %v956
    %v958 = vlaneseq
    %v959 = vshrl.u32 %v958, 7
    %v960 = vsub.s32 %v957, %v959
    %v961 = vrot.slane %v946, %v960
    %v963 = vunpack.c.l.s4 1966171168
    %v964 = vunpack.c.0.s8 %v963
    %v965 = vlaneseq
    %v966 = vshrl.u32 %v965, 7
    %v967 = vsub.s32 %v964, %v966
    %v968 = vrot.slane %v947, %v967
    %v969 = vcombine.high %v954, %v954
    %v970 = vcombine.high %v968, %v968
    %v971 = vcombine.high %v927, %v927
    %v973 = vunpack.c.l.s4 1966171168
    %v974 = vunpack.c.0.s8 %v973
    %v975 = vlaneseq
    %v976 = vshrl.u32 %v975, 7
    %v977 = vsub.s32 %v974, %v976
    %v978 = vrot.slane %v927, %v977
    %v980 = vunpack.c.l.s4 1966171168
    %v981 = vunpack.c.0.s8 %v980
    %v982 = vlaneseq
    %v983 = vshrl.u32 %v982, 7
    %v984 = vsub.s32 %v981, %v983
    %v985 = vrot.slane %v971, %v984
    %v986 = vcombine.high %v978, %v978
    %v988 = vunpack.c.l.s4 1966171168
    %v989 = vunpack.c.0.s8 %v988
    %v990 = vlaneseq
    %v991 = vshrl.u32 %v990, 7
    %v992 = vsub.s32 %v989, %v991
    %v993 = vrot.slane %v978, %v992
    %v995 = vunpack.c.l.s4 1966171168
    %v996 = vunpack.c.0.s8 %v995
    %v997 = vlaneseq
    %v998 = vshrl.u32 %v997, 7
    %v999 = vsub.s32 %v996, %v998
    %v1000 = vrot.slane %v985, %v999
    %v1002 = vunpack.c.l.s4 1966171168
    %v1003 = vunpack.c.0.s8 %v1002
    %v1004 = vlaneseq
    %v1005 = vshrl.u32 %v1004, 7
    %v1006 = vsub.s32 %v1003, %v1005
    %v1007 = vrot.slane %v986, %v1006
    %v1008 = vcombine.high %v993, %v993
    %v1009 = vcombine.high %v1007, %v1007
    %1010 = vrot.lane.b32.xlu0 %v476, 120
    %v1011 = vpop.permute.xlu0 %1010
    %1012 = vrot.lane.b32.xlu0 %v515, 88
    %v1013 = vpop.permute.xlu0 %1012
    %v1014 = vsel %vm518, %v1011, 0
    %v1016 = vsel %vm518, %v1013, 0
    %1018 = vmatprep.subr.mxu0 0.0
    %1019 = vmatpush1.xpose.msra.mxu0 0.0
    %1020 = vmatprep.subr.mxu0 0.0
    %1021 = vmatpush1.xpose.msra.mxu0 0.0
    %1022 = vmatprep.subr.mxu0 0.0
    %1023 = vmatpush1.xpose.msra.mxu0 0.0
    %1024 = vmatprep.subr.mxu0 0.0
    %1025 = vmatpush1.xpose.msra.mxu0 0.0
    %1026 = vmatprep.subr.mxu0 0.0
    %1027 = vmatpush1.xpose.msra.mxu0 0.0
    %1028 = vmatprep.subr.mxu0 0.0
    %1029 = vmatpush1.xpose.msra.mxu0 0.0
    %1030 = vmatprep.subr.mxu0 0.0
    %1031 = vmatpush1.xpose.msra.mxu0 0.0
    %1032 = vmatprep.subr.mxu0 0.0
    %1033 = vmatpush1.xpose.msra.mxu0 0.0
    %1034 = vmatprep.subr.mxu0 0.0
    %1035 = vmatpush1.xpose.msra.mxu0 0.0
    %1036 = vmatprep.subr.mxu0 0.0
    %1037 = vmatpush1.xpose.msra.mxu0 0.0
    %1038 = vmatprep.subr.mxu0 0.0
    %1039 = vmatpush1.xpose.msra.mxu0 0.0
    %1040 = vmatprep.subr.mxu0 0.0
    %1041 = vmatpush1.xpose.msra.mxu0 0.0
    %1042 = vmatprep.subr.mxu0 0.0
    %1043 = vmatpush1.xpose.msra.mxu0 0.0
    %1044 = vmatprep.subr.mxu0 0.0
    %1045 = vmatpush1.xpose.msra.mxu0 0.0
    %1046 = vmatprep.subr.mxu0 0.0
    %1047 = vmatpush1.xpose.msra.mxu0 0.0
    %1048 = vmatprep.subr.mxu0 0.0
    %1049 = vmatpush1.xpose.msra.mxu0 %v1016
    %1050 = vmatprep.subr.mxu0 0.0
    %1051 = vmatpush2.xpose.msra.mxu0 0.0
    %1052 = vmatprep.subr.mxu0 0.0
    %1053 = vmatpush2.xpose.msra.mxu0 0.0
    %1054 = vmatprep.subr.mxu0 0.0
    %1055 = vmatpush2.xpose.msra.mxu0 0.0
    %1056 = vmatprep.subr.mxu0 0.0
    %1057 = vmatpush2.xpose.msra.mxu0 0.0
    %1058 = vmatprep.subr.mxu0 0.0
    %1059 = vmatpush2.xpose.msra.mxu0 0.0
    %1060 = vmatprep.subr.mxu0 0.0
    %1061 = vmatpush2.xpose.msra.mxu0 0.0
    %1062 = vmatprep.subr.mxu0 0.0
    %1063 = vmatpush2.xpose.msra.mxu0 0.0
    %1064 = vmatprep.subr.mxu0 0.0
    %1065 = vmatpush2.xpose.msra.mxu0 0.0
    %1066 = vmatprep.subr.mxu0 0.0
    %1067 = vmatpush2.xpose.msra.mxu0 0.0
    %1068 = vmatprep.subr.mxu0 0.0
    %1069 = vmatpush2.xpose.msra.mxu0 0.0
    %1070 = vmatprep.subr.mxu0 0.0
    %1071 = vmatpush2.xpose.msra.mxu0 0.0
    %1072 = vmatprep.subr.mxu0 0.0
    %1073 = vmatpush2.xpose.msra.mxu0 0.0
    %1074 = vmatprep.subr.mxu0 0.0
    %1075 = vmatpush2.xpose.msra.mxu0 0.0
    %1076 = vmatprep.subr.mxu0 0.0
    %1077 = vmatpush2.xpose.msra.mxu0 0.0
    %1078 = vmatprep.subr.mxu0 0.0
    %1079 = vmatpush2.xpose.msra.mxu0 0.0
    %1080 = vmatprep.subr.mxu0 0.0
    %1081 = vmatpush2.xpose.msra.mxu0 0.0
    %1082 = vmatprep.mubr.f32.mxu0 0.0
    %1083 = vmatmul.mubr.f32.gmra.mxu0 %v1014
    %v1084 = vpop.f32.mrf.mxu0
    %v1085 = vadd.f32 0.0, %v1084
    %v1086 = vpop.f32.mrf.mxu0
    %1087 = vdwg.mxu0
    %1088 = vrot.lane.b32.xlu0 %v636, 120
    %v1089 = vpop.permute.xlu0 %1088
    %1090 = vrot.lane.b32.xlu0 %v675, 88
    %v1091 = vpop.permute.xlu0 %1090
    %v1092 = vsel %vm518, %v1089, 0
    %v1094 = vsel %vm518, %v1091, 0
    %1096 = vmatprep.subr.mxu0 0.0
    %1097 = vmatpush1.xpose.msra.mxu0 0.0
    %1098 = vmatprep.subr.mxu0 0.0
    %1099 = vmatpush1.xpose.msra.mxu0 0.0
    %1100 = vmatprep.subr.mxu0 0.0
    %1101 = vmatpush1.xpose.msra.mxu0 0.0
    %1102 = vmatprep.subr.mxu0 0.0
    %1103 = vmatpush1.xpose.msra.mxu0 0.0
    %1104 = vmatprep.subr.mxu0 0.0
    %1105 = vmatpush1.xpose.msra.mxu0 0.0
    %1106 = vmatprep.subr.mxu0 0.0
    %1107 = vmatpush1.xpose.msra.mxu0 0.0
    %1108 = vmatprep.subr.mxu0 0.0
    %1109 = vmatpush1.xpose.msra.mxu0 0.0
    %1110 = vmatprep.subr.mxu0 0.0
    %1111 = vmatpush1.xpose.msra.mxu0 0.0
    %1112 = vmatprep.subr.mxu0 0.0
    %1113 = vmatpush1.xpose.msra.mxu0 0.0
    %1114 = vmatprep.subr.mxu0 0.0
    %1115 = vmatpush1.xpose.msra.mxu0 0.0
    %1116 = vmatprep.subr.mxu0 0.0
    %1117 = vmatpush1.xpose.msra.mxu0 0.0
    %1118 = vmatprep.subr.mxu0 0.0
    %1119 = vmatpush1.xpose.msra.mxu0 0.0
    %1120 = vmatprep.subr.mxu0 0.0
    %1121 = vmatpush1.xpose.msra.mxu0 0.0
    %1122 = vmatprep.subr.mxu0 0.0
    %1123 = vmatpush1.xpose.msra.mxu0 0.0
    %1124 = vmatprep.subr.mxu0 0.0
    %1125 = vmatpush1.xpose.msra.mxu0 0.0
    %1126 = vmatprep.subr.mxu0 0.0
    %1127 = vmatpush1.xpose.msra.mxu0 %v1094
    %1128 = vmatprep.subr.mxu0 0.0
    %1129 = vmatpush2.xpose.msra.mxu0 0.0
    %1130 = vmatprep.subr.mxu0 0.0
    %1131 = vmatpush2.xpose.msra.mxu0 0.0
    %1132 = vmatprep.subr.mxu0 0.0
    %1133 = vmatpush2.xpose.msra.mxu0 0.0
    %1134 = vmatprep.subr.mxu0 0.0
    %1135 = vmatpush2.xpose.msra.mxu0 0.0
    %1136 = vmatprep.subr.mxu0 0.0
    %1137 = vmatpush2.xpose.msra.mxu0 0.0
    %1138 = vmatprep.subr.mxu0 0.0
    %1139 = vmatpush2.xpose.msra.mxu0 0.0
    %1140 = vmatprep.subr.mxu0 0.0
    %1141 = vmatpush2.xpose.msra.mxu0 0.0
    %1142 = vmatprep.subr.mxu0 0.0
    %1143 = vmatpush2.xpose.msra.mxu0 0.0
    %1144 = vmatprep.subr.mxu0 0.0
    %1145 = vmatpush2.xpose.msra.mxu0 0.0
    %1146 = vmatprep.subr.mxu0 0.0
    %1147 = vmatpush2.xpose.msra.mxu0 0.0
    %1148 = vmatprep.subr.mxu0 0.0
    %1149 = vmatpush2.xpose.msra.mxu0 0.0
    %1150 = vmatprep.subr.mxu0 0.0
    %1151 = vmatpush2.xpose.msra.mxu0 0.0
    %1152 = vmatprep.subr.mxu0 0.0
    %1153 = vmatpush2.xpose.msra.mxu0 0.0
    %1154 = vmatprep.subr.mxu0 0.0
    %1155 = vmatpush2.xpose.msra.mxu0 0.0
    %1156 = vmatprep.subr.mxu0 0.0
    %1157 = vmatpush2.xpose.msra.mxu0 0.0
    %1158 = vmatprep.subr.mxu0 0.0
    %1159 = vmatpush2.xpose.msra.mxu0 0.0
    %1160 = vmatprep.mubr.f32.mxu0 0.0
    %1161 = vmatmul.mubr.f32.gmra.mxu0 %v1092
    %v1162 = vpop.f32.mrf.mxu0
    %v1163 = vadd.f32 0.0, %v1162
    %v1164 = vpop.f32.mrf.mxu0
    %1165 = vdwg.mxu0
    %v1166 = vsel %vm752, %v1085, -inf
    %1167 = vmax.xlane.f32.xlu0 %v1166
    %v1168 = vpop.xlane.xlu0 %1167
    %v1169 = vsel %vm752, %v1163, -inf
    %1170 = vmax.xlane.f32.xlu0 %v1169
    %v1171 = vpop.xlane.xlu0 %1170
    %v1172 = vsub.f32 %v1085, %v1168
    %v1173 = vsub.f32 %v1163, %v1171
    %v1174 = vmul.f32 %v1172, 1.442695
    %v1175 = vpow.pop %v1174
    %v1176 = vmul.f32 %v1173, 1.442695
    %v1177 = vpow.pop %v1176
    %v1178 = vsel %vm752, %v1175, 0.0
    %1179 = vadd.xlane.f32.xlu0 %v1178
    %v1180 = vpop.xlane.xlu0 %1179
    %v1181 = vsel %vm752, %v1177, 0.0
    %1182 = vadd.xlane.f32.xlu0 %v1181
    %v1183 = vpop.xlane.xlu0 %1182
    %v1184 = vrcp.pop %v1180
    %v1185 = vmul.f32 %v1175, %v1184
    %v1186 = vrcp.pop %v1183
    %v1187 = vmul.f32 %v1177, %v1186
    %1188 = vrot.lane.b32.xlu0 %v515, 56
    %v1189 = vpop.permute.xlu0 %1188
    %v1191 = vsel %vm777, %v1185, 0
    %v1193 = vsel %vm169, %v1189, 0
    %1195 = vmatprep.subr.mxu0 0.0
    %1196 = vmatpush1.msra.mxu0 0.0
    %1197 = vmatprep.subr.mxu0 0.0
    %1198 = vmatpush1.msra.mxu0 0.0
    %1199 = vmatprep.subr.mxu0 0.0
    %1200 = vmatpush1.msra.mxu0 0.0
    %1201 = vmatprep.subr.mxu0 0.0
    %1202 = vmatpush1.msra.mxu0 0.0
    %1203 = vmatprep.subr.mxu0 0.0
    %1204 = vmatpush1.msra.mxu0 0.0
    %1205 = vmatprep.subr.mxu0 0.0
    %1206 = vmatpush1.msra.mxu0 0.0
    %1207 = vmatprep.subr.mxu0 0.0
    %1208 = vmatpush1.msra.mxu0 0.0
    %1209 = vmatprep.subr.mxu0 0.0
    %1210 = vmatpush1.msra.mxu0 0.0
    %1211 = vmatprep.subr.mxu0 0.0
    %1212 = vmatpush1.msra.mxu0 0.0
    %1213 = vmatprep.subr.mxu0 0.0
    %1214 = vmatpush1.msra.mxu0 0.0
    %1215 = vmatprep.subr.mxu0 0.0
    %1216 = vmatpush1.msra.mxu0 0.0
    %1217 = vmatprep.subr.mxu0 0.0
    %1218 = vmatpush1.msra.mxu0 0.0
    %1219 = vmatprep.subr.mxu0 0.0
    %1220 = vmatpush1.msra.mxu0 0.0
    %1221 = vmatprep.subr.mxu0 0.0
    %1222 = vmatpush1.msra.mxu0 0.0
    %1223 = vmatprep.subr.mxu0 0.0
    %1224 = vmatpush1.msra.mxu0 0.0
    %1225 = vmatprep.subr.mxu0 0.0
    %1226 = vmatpush1.msra.mxu0 %v1193
    %1227 = vmatprep.subr.mxu0 0.0
    %1228 = vmatpush2.msra.mxu0 0.0
    %1229 = vmatprep.subr.mxu0 0.0
    %1230 = vmatpush2.msra.mxu0 0.0
    %1231 = vmatprep.subr.mxu0 0.0
    %1232 = vmatpush2.msra.mxu0 0.0
    %1233 = vmatprep.subr.mxu0 0.0
    %1234 = vmatpush2.msra.mxu0 0.0
    %1235 = vmatprep.subr.mxu0 0.0
    %1236 = vmatpush2.msra.mxu0 0.0
    %1237 = vmatprep.subr.mxu0 0.0
    %1238 = vmatpush2.msra.mxu0 0.0
    %1239 = vmatprep.subr.mxu0 0.0
    %1240 = vmatpush2.msra.mxu0 0.0
    %1241 = vmatprep.subr.mxu0 0.0
    %1242 = vmatpush2.msra.mxu0 0.0
    %1243 = vmatprep.subr.mxu0 0.0
    %1244 = vmatpush2.msra.mxu0 0.0
    %1245 = vmatprep.subr.mxu0 0.0
    %1246 = vmatpush2.msra.mxu0 0.0
    %1247 = vmatprep.subr.mxu0 0.0
    %1248 = vmatpush2.msra.mxu0 0.0
    %1249 = vmatprep.subr.mxu0 0.0
    %1250 = vmatpush2.msra.mxu0 0.0
    %1251 = vmatprep.subr.mxu0 0.0
    %1252 = vmatpush2.msra.mxu0 0.0
    %1253 = vmatprep.subr.mxu0 0.0
    %1254 = vmatpush2.msra.mxu0 0.0
    %1255 = vmatprep.subr.mxu0 0.0
    %1256 = vmatpush2.msra.mxu0 0.0
    %1257 = vmatprep.subr.mxu0 0.0
    %1258 = vmatpush2.msra.mxu0 0.0
    %1259 = vmatprep.mubr.f32.mxu0 0.0
    %1260 = vmatmul.mubr.f32.gmra.mxu0 %v1191
    %v1261 = vpop.f32.mrf.mxu0
    %v1262 = vadd.f32 0.0, %v1261
    %v1263 = vpop.f32.mrf.mxu0
    %1264 = vdwg.mxu0
    %1265 = vrot.lane.b32.xlu0 %v675, 56
    %v1266 = vpop.permute.xlu0 %1265
    %v1268 = vsel %vm777, %v1187, 0
    %v1270 = vsel %vm169, %v1266, 0
    %1272 = vmatprep.subr.mxu0 0.0
    %1273 = vmatpush1.msra.mxu0 0.0
    %1274 = vmatprep.subr.mxu0 0.0
    %1275 = vmatpush1.msra.mxu0 0.0
    %1276 = vmatprep.subr.mxu0 0.0
    %1277 = vmatpush1.msra.mxu0 0.0
    %1278 = vmatprep.subr.mxu0 0.0
    %1279 = vmatpush1.msra.mxu0 0.0
    %1280 = vmatprep.subr.mxu0 0.0
    %1281 = vmatpush1.msra.mxu0 0.0
    %1282 = vmatprep.subr.mxu0 0.0
    %1283 = vmatpush1.msra.mxu0 0.0
    %1284 = vmatprep.subr.mxu0 0.0
    %1285 = vmatpush1.msra.mxu0 0.0
    %1286 = vmatprep.subr.mxu0 0.0
    %1287 = vmatpush1.msra.mxu0 0.0
    %1288 = vmatprep.subr.mxu0 0.0
    %1289 = vmatpush1.msra.mxu0 0.0
    %1290 = vmatprep.subr.mxu0 0.0
    %1291 = vmatpush1.msra.mxu0 0.0
    %1292 = vmatprep.subr.mxu0 0.0
    %1293 = vmatpush1.msra.mxu0 0.0
    %1294 = vmatprep.subr.mxu0 0.0
    %1295 = vmatpush1.msra.mxu0 0.0
    %1296 = vmatprep.subr.mxu0 0.0
    %1297 = vmatpush1.msra.mxu0 0.0
    %1298 = vmatprep.subr.mxu0 0.0
    %1299 = vmatpush1.msra.mxu0 0.0
    %1300 = vmatprep.subr.mxu0 0.0
    %1301 = vmatpush1.msra.mxu0 0.0
    %1302 = vmatprep.subr.mxu0 0.0
    %1303 = vmatpush1.msra.mxu0 %v1270
    %1304 = vmatprep.subr.mxu0 0.0
    %1305 = vmatpush2.msra.mxu0 0.0
    %1306 = vmatprep.subr.mxu0 0.0
    %1307 = vmatpush2.msra.mxu0 0.0
    %1308 = vmatprep.subr.mxu0 0.0
    %1309 = vmatpush2.msra.mxu0 0.0
    %1310 = vmatprep.subr.mxu0 0.0
    %1311 = vmatpush2.msra.mxu0 0.0
    %1312 = vmatprep.subr.mxu0 0.0
    %1313 = vmatpush2.msra.mxu0 0.0
    %1314 = vmatprep.subr.mxu0 0.0
    %1315 = vmatpush2.msra.mxu0 0.0
    %1316 = vmatprep.subr.mxu0 0.0
    %1317 = vmatpush2.msra.mxu0 0.0
    %1318 = vmatprep.subr.mxu0 0.0
    %1319 = vmatpush2.msra.mxu0 0.0
    %1320 = vmatprep.subr.mxu0 0.0
    %1321 = vmatpush2.msra.mxu0 0.0
    %1322 = vmatprep.subr.mxu0 0.0
    %1323 = vmatpush2.msra.mxu0 0.0
    %1324 = vmatprep.subr.mxu0 0.0
    %1325 = vmatpush2.msra.mxu0 0.0
    %1326 = vmatprep.subr.mxu0 0.0
    %1327 = vmatpush2.msra.mxu0 0.0
    %1328 = vmatprep.subr.mxu0 0.0
    %1329 = vmatpush2.msra.mxu0 0.0
    %1330 = vmatprep.subr.mxu0 0.0
    %1331 = vmatpush2.msra.mxu0 0.0
    %1332 = vmatprep.subr.mxu0 0.0
    %1333 = vmatpush2.msra.mxu0 0.0
    %1334 = vmatprep.subr.mxu0 0.0
    %1335 = vmatpush2.msra.mxu0 0.0
    %1336 = vmatprep.mubr.f32.mxu0 0.0
    %1337 = vmatmul.mubr.f32.gmra.mxu0 %v1268
    %v1338 = vpop.f32.mrf.mxu0
    %v1339 = vadd.f32 0.0, %v1338
    %v1340 = vpop.f32.mrf.mxu0
    %1341 = vdwg.mxu0
    %v1344 = vcombine.high %v1262, %v1262
    %v1346 = vunpack.c.l.s4 1966171168
    %v1347 = vunpack.c.0.s8 %v1346
    %v1348 = vlaneseq
    %v1349 = vshrl.u32 %v1348, 7
    %v1350 = vsub.s32 %v1347, %v1349
    %v1351 = vrot.slane %v1262, %v1350
    %v1353 = vunpack.c.l.s4 1966171168
    %v1354 = vunpack.c.0.s8 %v1353
    %v1355 = vlaneseq
    %v1356 = vshrl.u32 %v1355, 7
    %v1357 = vsub.s32 %v1354, %v1356
    %v1358 = vrot.slane %v1344, %v1357
    %v1359 = vcombine.high %v1351, %v1351
    %v1361 = vunpack.c.l.s4 1966171168
    %v1362 = vunpack.c.0.s8 %v1361
    %v1363 = vlaneseq
    %v1364 = vshrl.u32 %v1363, 7
    %v1365 = vsub.s32 %v1362, %v1364
    %v1366 = vrot.slane %v1351, %v1365
    %v1368 = vunpack.c.l.s4 1966171168
    %v1369 = vunpack.c.0.s8 %v1368
    %v1370 = vlaneseq
    %v1371 = vshrl.u32 %v1370, 7
    %v1372 = vsub.s32 %v1369, %v1371
    %v1373 = vrot.slane %v1358, %v1372
    %v1375 = vunpack.c.l.s4 1966171168
    %v1376 = vunpack.c.0.s8 %v1375
    %v1377 = vlaneseq
    %v1378 = vshrl.u32 %v1377, 7
    %v1379 = vsub.s32 %v1376, %v1378
    %v1380 = vrot.slane %v1359, %v1379
    %v1381 = vcombine.high %v1366, %v1366
    %v1382 = vcombine.high %v1380, %v1380
    %v1383 = vcombine.high %v1339, %v1339
    %v1385 = vunpack.c.l.s4 1966171168
    %v1386 = vunpack.c.0.s8 %v1385
    %v1387 = vlaneseq
    %v1388 = vshrl.u32 %v1387, 7
    %v1389 = vsub.s32 %v1386, %v1388
    %v1390 = vrot.slane %v1339, %v1389
    %v1392 = vunpack.c.l.s4 1966171168
    %v1393 = vunpack.c.0.s8 %v1392
    %v1394 = vlaneseq
    %v1395 = vshrl.u32 %v1394, 7
    %v1396 = vsub.s32 %v1393, %v1395
    %v1397 = vrot.slane %v1383, %v1396
    %v1398 = vcombine.high %v1390, %v1390
    %v1400 = vunpack.c.l.s4 1966171168
    %v1401 = vunpack.c.0.s8 %v1400
    %v1402 = vlaneseq
    %v1403 = vshrl.u32 %v1402, 7
    %v1404 = vsub.s32 %v1401, %v1403
    %v1405 = vrot.slane %v1390, %v1404
    %v1407 = vunpack.c.l.s4 1966171168
    %v1408 = vunpack.c.0.s8 %v1407
    %v1409 = vlaneseq
    %v1410 = vshrl.u32 %v1409, 7
    %v1411 = vsub.s32 %v1408, %v1410
    %v1412 = vrot.slane %v1397, %v1411
    %v1414 = vunpack.c.l.s4 1966171168
    %v1415 = vunpack.c.0.s8 %v1414
    %v1416 = vlaneseq
    %v1417 = vshrl.u32 %v1416, 7
    %v1418 = vsub.s32 %v1415, %v1417
    %v1419 = vrot.slane %v1398, %v1418
    %v1420 = vcombine.high %v1405, %v1405
    %v1421 = vcombine.high %v1419, %v1419
    %v1422 = vcombine.low %v1366, %v1380
    %v1423 = vcombine.low %v1381, %v1382
    %v1424 = vcombine.low %v1373, %v1405
    %v1425 = vcombine.low %v1419, %v1420
    %v1427 = vunpack.c.l.s4 1966171168
    %v1428 = vunpack.c.0.s8 %v1427
    %v1429 = vlaneseq
    %v1430 = vshrl.u32 %v1429, 7
    %v1431 = vsub.s32 %v1428, %v1430
    %v1432 = vrot.slane %v1422, %v1431
    %v1434 = vunpack.c.l.s4 1966171168
    %v1435 = vunpack.c.0.s8 %v1434
    %v1436 = vlaneseq
    %v1437 = vshrl.u32 %v1436, 7
    %v1438 = vsub.s32 %v1435, %v1437
    %v1439 = vrot.slane %v1423, %v1438
    %v1441 = vunpack.c.l.s4 1966171168
    %v1442 = vunpack.c.0.s8 %v1441
    %v1443 = vlaneseq
    %v1444 = vshrl.u32 %v1443, 7
    %v1445 = vsub.s32 %v1442, %v1444
    %v1446 = vrot.slane %v1424, %v1445
    %v1448 = vunpack.c.l.s4 1966171168
    %v1449 = vunpack.c.0.s8 %v1448
    %v1450 = vlaneseq
    %v1451 = vshrl.u32 %v1450, 7
    %v1452 = vsub.s32 %v1449, %v1451
    %v1453 = vrot.slane %v1425, %v1452
    %v1454 = vcombine.low %v1432, %v1439
    %v1455 = vcombine.low %v1446, %v1453
    %v1457 = vunpack.c.l.s4 1966171168
    %v1458 = vunpack.c.0.s8 %v1457
    %v1459 = vlaneseq
    %v1460 = vshrl.u32 %v1459, 7
    %v1461 = vsub.s32 %v1458, %v1460
    %v1462 = vrot.slane %v1454, %v1461
    %v1464 = vunpack.c.l.s4 1966171168
    %v1465 = vunpack.c.0.s8 %v1464
    %v1466 = vlaneseq
    %v1467 = vshrl.u32 %v1466, 7
    %v1468 = vsub.s32 %v1465, %v1467
    %v1469 = vrot.slane %v1455, %v1468
    %v1470 = vcombine.low %v1462, %v1469
    %v1471 = vcombine.low %v1421, %v1412
    %v1473 = vunpack.c.l.s4 1966171168
    %v1474 = vunpack.c.0.s8 %v1473
    %v1475 = vlaneseq
    %v1476 = vshrl.u32 %v1475, 7
    %v1477 = vsub.s32 %v1474, %v1476
    %v1478 = vrot.slane %v1471, %v1477
    %v1480 = vunpack.c.l.s4 1966171168
    %v1481 = vunpack.c.0.s8 %v1480
    %v1482 = vlaneseq
    %v1483 = vshrl.u32 %v1482, 7
    %v1484 = vsub.s32 %v1481, %v1483
    %v1485 = vrot.slane %v1478, %v1484
    %v1486 = vsel %vm518, %v1470, 0
    %v1488 = vsel %vm518, %v1485, 0
    %1490 = vmatprep.subr.mxu0 0.0
    %1491 = vmatpush1.msra.mxu0 0.0
    %1492 = vmatprep.subr.mxu0 0.0
    %1493 = vmatpush1.msra.mxu0 0.0
    %1494 = vmatprep.subr.mxu0 0.0
    %1495 = vmatpush1.msra.mxu0 0.0
    %1496 = vmatprep.subr.mxu0 0.0
    %1497 = vmatpush1.msra.mxu0 0.0
    %1498 = vmatprep.subr.mxu0 0.0
    %1499 = vmatpush1.msra.mxu0 0.0
    %1500 = vmatprep.subr.mxu0 0.0
    %1501 = vmatpush1.msra.mxu0 0.0
    %1502 = vmatprep.subr.mxu0 0.0
    %1503 = vmatpush1.msra.mxu0 0.0
    %1504 = vmatprep.subr.mxu0 0.0
    %1505 = vmatpush1.msra.mxu0 0.0
    %1506 = vmatprep.subr.mxu0 0.0
    %1507 = vmatpush1.msra.mxu0 0.0
    %1508 = vmatprep.subr.mxu0 0.0
    %1509 = vmatpush1.msra.mxu0 0.0
    %1510 = vmatprep.subr.mxu0 0.0
    %1511 = vmatpush1.msra.mxu0 0.0
    %1512 = vmatprep.subr.mxu0 0.0
    %1513 = vmatpush1.msra.mxu0 0.0
    %1514 = vmatprep.subr.mxu0 0.0
    %1515 = vmatpush1.msra.mxu0 0.0
    %1516 = vmatprep.subr.mxu0 0.0
    %1517 = vmatpush1.msra.mxu0 0.0
    %1518 = vmatprep.subr.mxu0 0.0
    %1519 = vmatpush1.msra.mxu0 0.0
    %1520 = vmatprep.subr.mxu0 0.0
    %1521 = vmatpush1.msra.mxu0 %v186
    %1522 = vmatprep.subr.mxu0 0.0
    %1523 = vmatpush2.msra.mxu0 0.0
    %1524 = vmatprep.subr.mxu0 0.0
    %1525 = vmatpush2.msra.mxu0 0.0
    %1526 = vmatprep.subr.mxu0 0.0
    %1527 = vmatpush2.msra.mxu0 0.0
    %1528 = vmatprep.subr.mxu0 0.0
    %1529 = vmatpush2.msra.mxu0 0.0
    %1530 = vmatprep.subr.mxu0 0.0
    %1531 = vmatpush2.msra.mxu0 0.0
    %1532 = vmatprep.subr.mxu0 0.0
    %1533 = vmatpush2.msra.mxu0 0.0
    %1534 = vmatprep.subr.mxu0 0.0
    %1535 = vmatpush2.msra.mxu0 0.0
    %1536 = vmatprep.subr.mxu0 0.0
    %1537 = vmatpush2.msra.mxu0 0.0
    %1538 = vmatprep.subr.mxu0 0.0
    %1539 = vmatpush2.msra.mxu0 0.0
    %1540 = vmatprep.subr.mxu0 0.0
    %1541 = vmatpush2.msra.mxu0 0.0
    %1542 = vmatprep.subr.mxu0 0.0
    %1543 = vmatpush2.msra.mxu0 0.0
    %1544 = vmatprep.subr.mxu0 0.0
    %1545 = vmatpush2.msra.mxu0 0.0
    %1546 = vmatprep.subr.mxu0 0.0
    %1547 = vmatpush2.msra.mxu0 0.0
    %1548 = vmatprep.subr.mxu0 0.0
    %1549 = vmatpush2.msra.mxu0 0.0
    %1550 = vmatprep.subr.mxu0 0.0
    %1551 = vmatpush2.msra.mxu0 0.0
    %1552 = vmatprep.subr.mxu0 0.0
    %1553 = vmatpush2.msra.mxu0 0.0
    %1554 = vmatprep.mubr.f32.mxu0 0.0
    %1555 = vmatmul.mubr.f32.gmra.mxu0 %v1486
    %v1556 = vpop.f32.mrf.mxu0
    %v1557 = vadd.f32 0.0, %v1556
    %v1558 = vpop.f32.mrf.mxu0
    %1559 = vmatprep.mubr.f32.mxu0 0.0
    %1560 = vmatmul.mubr.f32.gmra.mxu0 %v1488
    %v1561 = vpop.f32.mrf.mxu0
    %v1562 = vadd.f32 0.0, %v1561
    %v1563 = vpop.f32.mrf.mxu0
    %1564 = vdwg.mxu0
    %v1565 = vcombine.low %v954, %v968
    %v1566 = vcombine.low %v969, %v970
    %v1567 = vcombine.low %v961, %v993
    %v1568 = vcombine.low %v1007, %v1008
    %v1570 = vunpack.c.l.s4 1966171168
    %v1571 = vunpack.c.0.s8 %v1570
    %v1572 = vlaneseq
    %v1573 = vshrl.u32 %v1572, 7
    %v1574 = vsub.s32 %v1571, %v1573
    %v1575 = vrot.slane %v1565, %v1574
    %v1577 = vunpack.c.l.s4 1966171168
    %v1578 = vunpack.c.0.s8 %v1577
    %v1579 = vlaneseq
    %v1580 = vshrl.u32 %v1579, 7
    %v1581 = vsub.s32 %v1578, %v1580
    %v1582 = vrot.slane %v1566, %v1581
    %v1584 = vunpack.c.l.s4 1966171168
    %v1585 = vunpack.c.0.s8 %v1584
    %v1586 = vlaneseq
    %v1587 = vshrl.u32 %v1586, 7
    %v1588 = vsub.s32 %v1585, %v1587
    %v1589 = vrot.slane %v1567, %v1588
    %v1591 = vunpack.c.l.s4 1966171168
    %v1592 = vunpack.c.0.s8 %v1591
    %v1593 = vlaneseq
    %v1594 = vshrl.u32 %v1593, 7
    %v1595 = vsub.s32 %v1592, %v1594
    %v1596 = vrot.slane %v1568, %v1595
    %v1597 = vcombine.low %v1575, %v1582
    %v1598 = vcombine.low %v1589, %v1596
    %v1600 = vunpack.c.l.s4 1966171168
    %v1601 = vunpack.c.0.s8 %v1600
    %v1602 = vlaneseq
    %v1603 = vshrl.u32 %v1602, 7
    %v1604 = vsub.s32 %v1601, %v1603
    %v1605 = vrot.slane %v1597, %v1604
    %v1607 = vunpack.c.l.s4 1966171168
    %v1608 = vunpack.c.0.s8 %v1607
    %v1609 = vlaneseq
    %v1610 = vshrl.u32 %v1609, 7
    %v1611 = vsub.s32 %v1608, %v1610
    %v1612 = vrot.slane %v1598, %v1611
    %v1613 = vcombine.low %v1605, %v1612
    %v1614 = vcombine.low %v1009, %v1000
    %v1616 = vunpack.c.l.s4 1966171168
    %v1617 = vunpack.c.0.s8 %v1616
    %v1618 = vlaneseq
    %v1619 = vshrl.u32 %v1618, 7
    %v1620 = vsub.s32 %v1617, %v1619
    %v1621 = vrot.slane %v1614, %v1620
    %v1623 = vunpack.c.l.s4 1966171168
    %v1624 = vunpack.c.0.s8 %v1623
    %v1625 = vlaneseq
    %v1626 = vshrl.u32 %v1625, 7
    %v1627 = vsub.s32 %v1624, %v1626
    %v1628 = vrot.slane %v1621, %v1627
    %v1629 = vsel %vm518, %v1613, 0
    %v1631 = vsel %vm518, %v1628, 0
    %1633 = vmatprep.subr.mxu0 0.0
    %1634 = vmatpush1.msra.mxu0 0.0
    %1635 = vmatprep.subr.mxu0 0.0
    %1636 = vmatpush1.msra.mxu0 0.0
    %1637 = vmatprep.subr.mxu0 0.0
    %1638 = vmatpush1.msra.mxu0 0.0
    %1639 = vmatprep.subr.mxu0 0.0
    %1640 = vmatpush1.msra.mxu0 0.0
    %1641 = vmatprep.subr.mxu0 0.0
    %1642 = vmatpush1.msra.mxu0 0.0
    %1643 = vmatprep.subr.mxu0 0.0
    %1644 = vmatpush1.msra.mxu0 0.0
    %1645 = vmatprep.subr.mxu0 0.0
    %1646 = vmatpush1.msra.mxu0 0.0
    %1647 = vmatprep.subr.mxu0 0.0
    %1648 = vmatpush1.msra.mxu0 0.0
    %1649 = vmatprep.subr.mxu0 0.0
    %1650 = vmatpush1.msra.mxu0 0.0
    %1651 = vmatprep.subr.mxu0 0.0
    %1652 = vmatpush1.msra.mxu0 0.0
    %1653 = vmatprep.subr.mxu0 0.0
    %1654 = vmatpush1.msra.mxu0 0.0
    %1655 = vmatprep.subr.mxu0 0.0
    %1656 = vmatpush1.msra.mxu0 0.0
    %1657 = vmatprep.subr.mxu0 0.0
    %1658 = vmatpush1.msra.mxu0 0.0
    %1659 = vmatprep.subr.mxu0 0.0
    %1660 = vmatpush1.msra.mxu0 0.0
    %1661 = vmatprep.subr.mxu0 0.0
    %1662 = vmatpush1.msra.mxu0 0.0
    %1663 = vmatprep.subr.mxu0 0.0
    %1664 = vmatpush1.msra.mxu0 %v185
    %1665 = vmatprep.subr.mxu0 0.0
    %1666 = vmatpush2.msra.mxu0 0.0
    %1667 = vmatprep.subr.mxu0 0.0
    %1668 = vmatpush2.msra.mxu0 0.0
    %1669 = vmatprep.subr.mxu0 0.0
    %1670 = vmatpush2.msra.mxu0 0.0
    %1671 = vmatprep.subr.mxu0 0.0
    %1672 = vmatpush2.msra.mxu0 0.0
    %1673 = vmatprep.subr.mxu0 0.0
    %1674 = vmatpush2.msra.mxu0 0.0
    %1675 = vmatprep.subr.mxu0 0.0
    %1676 = vmatpush2.msra.mxu0 0.0
    %1677 = vmatprep.subr.mxu0 0.0
    %1678 = vmatpush2.msra.mxu0 0.0
    %1679 = vmatprep.subr.mxu0 0.0
    %1680 = vmatpush2.msra.mxu0 0.0
    %1681 = vmatprep.subr.mxu0 0.0
    %1682 = vmatpush2.msra.mxu0 0.0
    %1683 = vmatprep.subr.mxu0 0.0
    %1684 = vmatpush2.msra.mxu0 0.0
    %1685 = vmatprep.subr.mxu0 0.0
    %1686 = vmatpush2.msra.mxu0 0.0
    %1687 = vmatprep.subr.mxu0 0.0
    %1688 = vmatpush2.msra.mxu0 0.0
    %1689 = vmatprep.subr.mxu0 0.0
    %1690 = vmatpush2.msra.mxu0 0.0
    %1691 = vmatprep.subr.mxu0 0.0
    %1692 = vmatpush2.msra.mxu0 0.0
    %1693 = vmatprep.subr.mxu0 0.0
    %1694 = vmatpush2.msra.mxu0 0.0
    %1695 = vmatprep.subr.mxu0 0.0
    %1696 = vmatpush2.msra.mxu0 0.0
    %1697 = vmatprep.mubr.f32.mxu0 0.0
    %1698 = vmatmul.mubr.f32.gmra.mxu0 %v1629
    %v1699 = vpop.f32.mrf.mxu0
    %v1700 = vadd.f32 %v1557, %v1699
    %v1701 = vpop.f32.mrf.mxu0
    %1702 = vmatprep.mubr.f32.mxu0 0.0
    %1703 = vmatmul.mubr.f32.gmra.mxu0 %v1631
    %v1704 = vpop.f32.mrf.mxu0
    %v1705 = vadd.f32 %v1562, %v1704
    %v1706 = vpop.f32.mrf.mxu0
    %1707 = vdwg.mxu0
    %1708 = vrot.lane.b32.xlu0 %v476, 112
    %v1709 = vpop.permute.xlu0 %1708
    %1710 = vrot.lane.b32.xlu0 %v515, 80
    %v1711 = vpop.permute.xlu0 %1710
    %v1712 = vsel %vm518, %v1709, 0
    %v1714 = vsel %vm518, %v1711, 0
    %1716 = vmatprep.subr.mxu0 0.0
    %1717 = vmatpush1.xpose.msra.mxu0 0.0
    %1718 = vmatprep.subr.mxu0 0.0
    %1719 = vmatpush1.xpose.msra.mxu0 0.0
    %1720 = vmatprep.subr.mxu0 0.0
    %1721 = vmatpush1.xpose.msra.mxu0 0.0
    %1722 = vmatprep.subr.mxu0 0.0
    %1723 = vmatpush1.xpose.msra.mxu0 0.0
    %1724 = vmatprep.subr.mxu0 0.0
    %1725 = vmatpush1.xpose.msra.mxu0 0.0
    %1726 = vmatprep.subr.mxu0 0.0
    %1727 = vmatpush1.xpose.msra.mxu0 0.0
    %1728 = vmatprep.subr.mxu0 0.0
    %1729 = vmatpush1.xpose.msra.mxu0 0.0
    %1730 = vmatprep.subr.mxu0 0.0
    %1731 = vmatpush1.xpose.msra.mxu0 0.0
    %1732 = vmatprep.subr.mxu0 0.0
    %1733 = vmatpush1.xpose.msra.mxu0 0.0
    %1734 = vmatprep.subr.mxu0 0.0
    %1735 = vmatpush1.xpose.msra.mxu0 0.0
    %1736 = vmatprep.subr.mxu0 0.0
    %1737 = vmatpush1.xpose.msra.mxu0 0.0
    %1738 = vmatprep.subr.mxu0 0.0
    %1739 = vmatpush1.xpose.msra.mxu0 0.0
    %1740 = vmatprep.subr.mxu0 0.0
    %1741 = vmatpush1.xpose.msra.mxu0 0.0
    %1742 = vmatprep.subr.mxu0 0.0
    %1743 = vmatpush1.xpose.msra.mxu0 0.0
    %1744 = vmatprep.subr.mxu0 0.0
    %1745 = vmatpush1.xpose.msra.mxu0 0.0
    %1746 = vmatprep.subr.mxu0 0.0
    %1747 = vmatpush1.xpose.msra.mxu0 %v1714
    %1748 = vmatprep.subr.mxu0 0.0
    %1749 = vmatpush2.xpose.msra.mxu0 0.0
    %1750 = vmatprep.subr.mxu0 0.0
    %1751 = vmatpush2.xpose.msra.mxu0 0.0
    %1752 = vmatprep.subr.mxu0 0.0
    %1753 = vmatpush2.xpose.msra.mxu0 0.0
    %1754 = vmatprep.subr.mxu0 0.0
    %1755 = vmatpush2.xpose.msra.mxu0 0.0
    %1756 = vmatprep.subr.mxu0 0.0
    %1757 = vmatpush2.xpose.msra.mxu0 0.0
    %1758 = vmatprep.subr.mxu0 0.0
    %1759 = vmatpush2.xpose.msra.mxu0 0.0
    %1760 = vmatprep.subr.mxu0 0.0
    %1761 = vmatpush2.xpose.msra.mxu0 0.0
    %1762 = vmatprep.subr.mxu0 0.0
    %1763 = vmatpush2.xpose.msra.mxu0 0.0
    %1764 = vmatprep.subr.mxu0 0.0
    %1765 = vmatpush2.xpose.msra.mxu0 0.0
    %1766 = vmatprep.subr.mxu0 0.0
    %1767 = vmatpush2.xpose.msra.mxu0 0.0
    %1768 = vmatprep.subr.mxu0 0.0
    %1769 = vmatpush2.xpose.msra.mxu0 0.0
    %1770 = vmatprep.subr.mxu0 0.0
    %1771 = vmatpush2.xpose.msra.mxu0 0.0
    %1772 = vmatprep.subr.mxu0 0.0
    %1773 = vmatpush2.xpose.msra.mxu0 0.0
    %1774 = vmatprep.subr.mxu0 0.0
    %1775 = vmatpush2.xpose.msra.mxu0 0.0
    %1776 = vmatprep.subr.mxu0 0.0
    %1777 = vmatpush2.xpose.msra.mxu0 0.0
    %1778 = vmatprep.subr.mxu0 0.0
    %1779 = vmatpush2.xpose.msra.mxu0 0.0
    %1780 = vmatprep.mubr.f32.mxu0 0.0
    %1781 = vmatmul.mubr.f32.gmra.mxu0 %v1712
    %v1782 = vpop.f32.mrf.mxu0
    %v1783 = vadd.f32 0.0, %v1782
    %v1784 = vpop.f32.mrf.mxu0
    %1785 = vdwg.mxu0
    %1786 = vrot.lane.b32.xlu0 %v636, 112
    %v1787 = vpop.permute.xlu0 %1786
    %1788 = vrot.lane.b32.xlu0 %v675, 80
    %v1789 = vpop.permute.xlu0 %1788
    %v1790 = vsel %vm518, %v1787, 0
    %v1792 = vsel %vm518, %v1789, 0
    %1794 = vmatprep.subr.mxu0 0.0
    %1795 = vmatpush1.xpose.msra.mxu0 0.0
    %1796 = vmatprep.subr.mxu0 0.0
    %1797 = vmatpush1.xpose.msra.mxu0 0.0
    %1798 = vmatprep.subr.mxu0 0.0
    %1799 = vmatpush1.xpose.msra.mxu0 0.0
    %1800 = vmatprep.subr.mxu0 0.0
    %1801 = vmatpush1.xpose.msra.mxu0 0.0
    %1802 = vmatprep.subr.mxu0 0.0
    %1803 = vmatpush1.xpose.msra.mxu0 0.0
    %1804 = vmatprep.subr.mxu0 0.0
    %1805 = vmatpush1.xpose.msra.mxu0 0.0
    %1806 = vmatprep.subr.mxu0 0.0
    %1807 = vmatpush1.xpose.msra.mxu0 0.0
    %1808 = vmatprep.subr.mxu0 0.0
    %1809 = vmatpush1.xpose.msra.mxu0 0.0
    %1810 = vmatprep.subr.mxu0 0.0
    %1811 = vmatpush1.xpose.msra.mxu0 0.0
    %1812 = vmatprep.subr.mxu0 0.0
    %1813 = vmatpush1.xpose.msra.mxu0 0.0
    %1814 = vmatprep.subr.mxu0 0.0
    %1815 = vmatpush1.xpose.msra.mxu0 0.0
    %1816 = vmatprep.subr.mxu0 0.0
    %1817 = vmatpush1.xpose.msra.mxu0 0.0
    %1818 = vmatprep.subr.mxu0 0.0
    %1819 = vmatpush1.xpose.msra.mxu0 0.0
    %1820 = vmatprep.subr.mxu0 0.0
    %1821 = vmatpush1.xpose.msra.mxu0 0.0
    %1822 = vmatprep.subr.mxu0 0.0
    %1823 = vmatpush1.xpose.msra.mxu0 0.0
    %1824 = vmatprep.subr.mxu0 0.0
    %1825 = vmatpush1.xpose.msra.mxu0 %v1792
    %1826 = vmatprep.subr.mxu0 0.0
    %1827 = vmatpush2.xpose.msra.mxu0 0.0
    %1828 = vmatprep.subr.mxu0 0.0
    %1829 = vmatpush2.xpose.msra.mxu0 0.0
    %1830 = vmatprep.subr.mxu0 0.0
    %1831 = vmatpush2.xpose.msra.mxu0 0.0
    %1832 = vmatprep.subr.mxu0 0.0
    %1833 = vmatpush2.xpose.msra.mxu0 0.0
    %1834 = vmatprep.subr.mxu0 0.0
    %1835 = vmatpush2.xpose.msra.mxu0 0.0
    %1836 = vmatprep.subr.mxu0 0.0
    %1837 = vmatpush2.xpose.msra.mxu0 0.0
    %1838 = vmatprep.subr.mxu0 0.0
    %1839 = vmatpush2.xpose.msra.mxu0 0.0
    %1840 = vmatprep.subr.mxu0 0.0
    %1841 = vmatpush2.xpose.msra.mxu0 0.0
    %1842 = vmatprep.subr.mxu0 0.0
    %1843 = vmatpush2.xpose.msra.mxu0 0.0
    %1844 = vmatprep.subr.mxu0 0.0
    %1845 = vmatpush2.xpose.msra.mxu0 0.0
    %1846 = vmatprep.subr.mxu0 0.0
    %1847 = vmatpush2.xpose.msra.mxu0 0.0
    %1848 = vmatprep.subr.mxu0 0.0
    %1849 = vmatpush2.xpose.msra.mxu0 0.0
    %1850 = vmatprep.subr.mxu0 0.0
    %1851 = vmatpush2.xpose.msra.mxu0 0.0
    %1852 = vmatprep.subr.mxu0 0.0
    %1853 = vmatpush2.xpose.msra.mxu0 0.0
    %1854 = vmatprep.subr.mxu0 0.0
    %1855 = vmatpush2.xpose.msra.mxu0 0.0
    %1856 = vmatprep.subr.mxu0 0.0
    %1857 = vmatpush2.xpose.msra.mxu0 0.0
    %1858 = vmatprep.mubr.f32.mxu0 0.0
    %1859 = vmatmul.mubr.f32.gmra.mxu0 %v1790
    %v1860 = vpop.f32.mrf.mxu0
    %v1861 = vadd.f32 0.0, %v1860
    %v1862 = vpop.f32.mrf.mxu0
    %1863 = vdwg.mxu0
    %v1864 = vsel %vm752, %v1783, -inf
    %1865 = vmax.xlane.f32.xlu0 %v1864
    %v1866 = vpop.xlane.xlu0 %1865
    %v1867 = vsel %vm752, %v1861, -inf
    %1868 = vmax.xlane.f32.xlu0 %v1867
    %v1869 = vpop.xlane.xlu0 %1868
    %v1870 = vsub.f32 %v1783, %v1866
    %v1871 = vsub.f32 %v1861, %v1869
    %v1872 = vmul.f32 %v1870, 1.442695
    %v1873 = vpow.pop %v1872
    %v1874 = vmul.f32 %v1871, 1.442695
    %v1875 = vpow.pop %v1874
    %v1876 = vsel %vm752, %v1873, 0.0
    %1877 = vadd.xlane.f32.xlu0 %v1876
    %v1878 = vpop.xlane.xlu0 %1877
    %v1879 = vsel %vm752, %v1875, 0.0
    %1880 = vadd.xlane.f32.xlu0 %v1879
    %v1881 = vpop.xlane.xlu0 %1880
    %v1882 = vrcp.pop %v1878
    %v1883 = vmul.f32 %v1873, %v1882
    %v1884 = vrcp.pop %v1881
    %v1885 = vmul.f32 %v1875, %v1884
    %1886 = vrot.lane.b32.xlu0 %v515, 48
    %v1887 = vpop.permute.xlu0 %1886
    %v1889 = vsel %vm777, %v1883, 0
    %v1891 = vsel %vm169, %v1887, 0
    %1893 = vmatprep.subr.mxu0 0.0
    %1894 = vmatpush1.msra.mxu0 0.0
    %1895 = vmatprep.subr.mxu0 0.0
    %1896 = vmatpush1.msra.mxu0 0.0
    %1897 = vmatprep.subr.mxu0 0.0
    %1898 = vmatpush1.msra.mxu0 0.0
    %1899 = vmatprep.subr.mxu0 0.0
    %1900 = vmatpush1.msra.mxu0 0.0
    %1901 = vmatprep.subr.mxu0 0.0
    %1902 = vmatpush1.msra.mxu0 0.0
    %1903 = vmatprep.subr.mxu0 0.0
    %1904 = vmatpush1.msra.mxu0 0.0
    %1905 = vmatprep.subr.mxu0 0.0
    %1906 = vmatpush1.msra.mxu0 0.0
    %1907 = vmatprep.subr.mxu0 0.0
    %1908 = vmatpush1.msra.mxu0 0.0
    %1909 = vmatprep.subr.mxu0 0.0
    %1910 = vmatpush1.msra.mxu0 0.0
    %1911 = vmatprep.subr.mxu0 0.0
    %1912 = vmatpush1.msra.mxu0 0.0
    %1913 = vmatprep.subr.mxu0 0.0
    %1914 = vmatpush1.msra.mxu0 0.0
    %1915 = vmatprep.subr.mxu0 0.0
    %1916 = vmatpush1.msra.mxu0 0.0
    %1917 = vmatprep.subr.mxu0 0.0
    %1918 = vmatpush1.msra.mxu0 0.0
    %1919 = vmatprep.subr.mxu0 0.0
    %1920 = vmatpush1.msra.mxu0 0.0
    %1921 = vmatprep.subr.mxu0 0.0
    %1922 = vmatpush1.msra.mxu0 0.0
    %1923 = vmatprep.subr.mxu0 0.0
    %1924 = vmatpush1.msra.mxu0 %v1891
    %1925 = vmatprep.subr.mxu0 0.0
    %1926 = vmatpush2.msra.mxu0 0.0
    %1927 = vmatprep.subr.mxu0 0.0
    %1928 = vmatpush2.msra.mxu0 0.0
    %1929 = vmatprep.subr.mxu0 0.0
    %1930 = vmatpush2.msra.mxu0 0.0
    %1931 = vmatprep.subr.mxu0 0.0
    %1932 = vmatpush2.msra.mxu0 0.0
    %1933 = vmatprep.subr.mxu0 0.0
    %1934 = vmatpush2.msra.mxu0 0.0
    %1935 = vmatprep.subr.mxu0 0.0
    %1936 = vmatpush2.msra.mxu0 0.0
    %1937 = vmatprep.subr.mxu0 0.0
    %1938 = vmatpush2.msra.mxu0 0.0
    %1939 = vmatprep.subr.mxu0 0.0
    %1940 = vmatpush2.msra.mxu0 0.0
    %1941 = vmatprep.subr.mxu0 0.0
    %1942 = vmatpush2.msra.mxu0 0.0
    %1943 = vmatprep.subr.mxu0 0.0
    %1944 = vmatpush2.msra.mxu0 0.0
    %1945 = vmatprep.subr.mxu0 0.0
    %1946 = vmatpush2.msra.mxu0 0.0
    %1947 = vmatprep.subr.mxu0 0.0
    %1948 = vmatpush2.msra.mxu0 0.0
    %1949 = vmatprep.subr.mxu0 0.0
    %1950 = vmatpush2.msra.mxu0 0.0
    %1951 = vmatprep.subr.mxu0 0.0
    %1952 = vmatpush2.msra.mxu0 0.0
    %1953 = vmatprep.subr.mxu0 0.0
    %1954 = vmatpush2.msra.mxu0 0.0
    %1955 = vmatprep.subr.mxu0 0.0
    %1956 = vmatpush2.msra.mxu0 0.0
    %1957 = vmatprep.mubr.f32.mxu0 0.0
    %1958 = vmatmul.mubr.f32.gmra.mxu0 %v1889
    %v1959 = vpop.f32.mrf.mxu0
    %v1960 = vadd.f32 0.0, %v1959
    %v1961 = vpop.f32.mrf.mxu0
    %1962 = vdwg.mxu0
    %1963 = vrot.lane.b32.xlu0 %v675, 48
    %v1964 = vpop.permute.xlu0 %1963
    %v1966 = vsel %vm777, %v1885, 0
    %v1968 = vsel %vm169, %v1964, 0
    %1970 = vmatprep.subr.mxu0 0.0
    %1971 = vmatpush1.msra.mxu0 0.0
    %1972 = vmatprep.subr.mxu0 0.0
    %1973 = vmatpush1.msra.mxu0 0.0
    %1974 = vmatprep.subr.mxu0 0.0
    %1975 = vmatpush1.msra.mxu0 0.0
    %1976 = vmatprep.subr.mxu0 0.0
    %1977 = vmatpush1.msra.mxu0 0.0
    %1978 = vmatprep.subr.mxu0 0.0
    %1979 = vmatpush1.msra.mxu0 0.0
    %1980 = vmatprep.subr.mxu0 0.0
    %1981 = vmatpush1.msra.mxu0 0.0
    %1982 = vmatprep.subr.mxu0 0.0
    %1983 = vmatpush1.msra.mxu0 0.0
    %1984 = vmatprep.subr.mxu0 0.0
    %1985 = vmatpush1.msra.mxu0 0.0
    %1986 = vmatprep.subr.mxu0 0.0
    %1987 = vmatpush1.msra.mxu0 0.0
    %1988 = vmatprep.subr.mxu0 0.0
    %1989 = vmatpush1.msra.mxu0 0.0
    %1990 = vmatprep.subr.mxu0 0.0
    %1991 = vmatpush1.msra.mxu0 0.0
    %1992 = vmatprep.subr.mxu0 0.0
    %1993 = vmatpush1.msra.mxu0 0.0
    %1994 = vmatprep.subr.mxu0 0.0
    %1995 = vmatpush1.msra.mxu0 0.0
    %1996 = vmatprep.subr.mxu0 0.0
    %1997 = vmatpush1.msra.mxu0 0.0
    %1998 = vmatprep.subr.mxu0 0.0
    %1999 = vmatpush1.msra.mxu0 0.0
    %2000 = vmatprep.subr.mxu0 0.0
    %2001 = vmatpush1.msra.mxu0 %v1968
    %2002 = vmatprep.subr.mxu0 0.0
    %2003 = vmatpush2.msra.mxu0 0.0
    %2004 = vmatprep.subr.mxu0 0.0
    %2005 = vmatpush2.msra.mxu0 0.0
    %2006 = vmatprep.subr.mxu0 0.0
    %2007 = vmatpush2.msra.mxu0 0.0
    %2008 = vmatprep.subr.mxu0 0.0
    %2009 = vmatpush2.msra.mxu0 0.0
    %2010 = vmatprep.subr.mxu0 0.0
    %2011 = vmatpush2.msra.mxu0 0.0
    %2012 = vmatprep.subr.mxu0 0.0
    %2013 = vmatpush2.msra.mxu0 0.0
    %2014 = vmatprep.subr.mxu0 0.0
    %2015 = vmatpush2.msra.mxu0 0.0
    %2016 = vmatprep.subr.mxu0 0.0
    %2017 = vmatpush2.msra.mxu0 0.0
    %2018 = vmatprep.subr.mxu0 0.0
    %2019 = vmatpush2.msra.mxu0 0.0
    %2020 = vmatprep.subr.mxu0 0.0
    %2021 = vmatpush2.msra.mxu0 0.0
    %2022 = vmatprep.subr.mxu0 0.0
    %2023 = vmatpush2.msra.mxu0 0.0
    %2024 = vmatprep.subr.mxu0 0.0
    %2025 = vmatpush2.msra.mxu0 0.0
    %2026 = vmatprep.subr.mxu0 0.0
    %2027 = vmatpush2.msra.mxu0 0.0
    %2028 = vmatprep.subr.mxu0 0.0
    %2029 = vmatpush2.msra.mxu0 0.0
    %2030 = vmatprep.subr.mxu0 0.0
    %2031 = vmatpush2.msra.mxu0 0.0
    %2032 = vmatprep.subr.mxu0 0.0
    %2033 = vmatpush2.msra.mxu0 0.0
    %2034 = vmatprep.mubr.f32.mxu0 0.0
    %2035 = vmatmul.mubr.f32.gmra.mxu0 %v1966
    %v2036 = vpop.f32.mrf.mxu0
    %v2037 = vadd.f32 0.0, %v2036
    %v2038 = vpop.f32.mrf.mxu0
    %2039 = vdwg.mxu0
    %v2042 = vcombine.high %v1960, %v1960
    %v2044 = vunpack.c.l.s4 1966171168
    %v2045 = vunpack.c.0.s8 %v2044
    %v2046 = vlaneseq
    %v2047 = vshrl.u32 %v2046, 7
    %v2048 = vsub.s32 %v2045, %v2047
    %v2049 = vrot.slane %v1960, %v2048
    %v2051 = vunpack.c.l.s4 1966171168
    %v2052 = vunpack.c.0.s8 %v2051
    %v2053 = vlaneseq
    %v2054 = vshrl.u32 %v2053, 7
    %v2055 = vsub.s32 %v2052, %v2054
    %v2056 = vrot.slane %v2042, %v2055
    %v2057 = vcombine.high %v2049, %v2049
    %v2059 = vunpack.c.l.s4 1966171168
    %v2060 = vunpack.c.0.s8 %v2059
    %v2061 = vlaneseq
    %v2062 = vshrl.u32 %v2061, 7
    %v2063 = vsub.s32 %v2060, %v2062
    %v2064 = vrot.slane %v2049, %v2063
    %v2066 = vunpack.c.l.s4 1966171168
    %v2067 = vunpack.c.0.s8 %v2066
    %v2068 = vlaneseq
    %v2069 = vshrl.u32 %v2068, 7
    %v2070 = vsub.s32 %v2067, %v2069
    %v2071 = vrot.slane %v2056, %v2070
    %v2073 = vunpack.c.l.s4 1966171168
    %v2074 = vunpack.c.0.s8 %v2073
    %v2075 = vlaneseq
    %v2076 = vshrl.u32 %v2075, 7
    %v2077 = vsub.s32 %v2074, %v2076
    %v2078 = vrot.slane %v2057, %v2077
    %v2079 = vcombine.high %v2064, %v2064
    %v2080 = vcombine.high %v2078, %v2078
    %v2081 = vcombine.high %v2037, %v2037
    %v2083 = vunpack.c.l.s4 1966171168
    %v2084 = vunpack.c.0.s8 %v2083
    %v2085 = vlaneseq
    %v2086 = vshrl.u32 %v2085, 7
    %v2087 = vsub.s32 %v2084, %v2086
    %v2088 = vrot.slane %v2037, %v2087
    %v2090 = vunpack.c.l.s4 1966171168
    %v2091 = vunpack.c.0.s8 %v2090
    %v2092 = vlaneseq
    %v2093 = vshrl.u32 %v2092, 7
    %v2094 = vsub.s32 %v2091, %v2093
    %v2095 = vrot.slane %v2081, %v2094
    %v2096 = vcombine.high %v2088, %v2088
    %v2098 = vunpack.c.l.s4 1966171168
    %v2099 = vunpack.c.0.s8 %v2098
    %v2100 = vlaneseq
    %v2101 = vshrl.u32 %v2100, 7
    %v2102 = vsub.s32 %v2099, %v2101
    %v2103 = vrot.slane %v2088, %v2102
    %v2105 = vunpack.c.l.s4 1966171168
    %v2106 = vunpack.c.0.s8 %v2105
    %v2107 = vlaneseq
    %v2108 = vshrl.u32 %v2107, 7
    %v2109 = vsub.s32 %v2106, %v2108
    %v2110 = vrot.slane %v2095, %v2109
    %v2112 = vunpack.c.l.s4 1966171168
    %v2113 = vunpack.c.0.s8 %v2112
    %v2114 = vlaneseq
    %v2115 = vshrl.u32 %v2114, 7
    %v2116 = vsub.s32 %v2113, %v2115
    %v2117 = vrot.slane %v2096, %v2116
    %v2118 = vcombine.high %v2103, %v2103
    %v2119 = vcombine.high %v2117, %v2117
    %v2120 = vcombine.low %v2064, %v2078
    %v2121 = vcombine.low %v2079, %v2080
    %v2122 = vcombine.low %v2071, %v2103
    %v2123 = vcombine.low %v2117, %v2118
    %v2125 = vunpack.c.l.s4 1966171168
    %v2126 = vunpack.c.0.s8 %v2125
    %v2127 = vlaneseq
    %v2128 = vshrl.u32 %v2127, 7
    %v2129 = vsub.s32 %v2126, %v2128
    %v2130 = vrot.slane %v2120, %v2129
    %v2132 = vunpack.c.l.s4 1966171168
    %v2133 = vunpack.c.0.s8 %v2132
    %v2134 = vlaneseq
    %v2135 = vshrl.u32 %v2134, 7
    %v2136 = vsub.s32 %v2133, %v2135
    %v2137 = vrot.slane %v2121, %v2136
    %v2139 = vunpack.c.l.s4 1966171168
    %v2140 = vunpack.c.0.s8 %v2139
    %v2141 = vlaneseq
    %v2142 = vshrl.u32 %v2141, 7
    %v2143 = vsub.s32 %v2140, %v2142
    %v2144 = vrot.slane %v2122, %v2143
    %v2146 = vunpack.c.l.s4 1966171168
    %v2147 = vunpack.c.0.s8 %v2146
    %v2148 = vlaneseq
    %v2149 = vshrl.u32 %v2148, 7
    %v2150 = vsub.s32 %v2147, %v2149
    %v2151 = vrot.slane %v2123, %v2150
    %v2152 = vcombine.low %v2130, %v2137
    %v2153 = vcombine.low %v2144, %v2151
    %v2155 = vunpack.c.l.s4 1966171168
    %v2156 = vunpack.c.0.s8 %v2155
    %v2157 = vlaneseq
    %v2158 = vshrl.u32 %v2157, 7
    %v2159 = vsub.s32 %v2156, %v2158
    %v2160 = vrot.slane %v2152, %v2159
    %v2162 = vunpack.c.l.s4 1966171168
    %v2163 = vunpack.c.0.s8 %v2162
    %v2164 = vlaneseq
    %v2165 = vshrl.u32 %v2164, 7
    %v2166 = vsub.s32 %v2163, %v2165
    %v2167 = vrot.slane %v2153, %v2166
    %v2168 = vcombine.low %v2160, %v2167
    %v2169 = vcombine.low %v2119, %v2110
    %v2171 = vunpack.c.l.s4 1966171168
    %v2172 = vunpack.c.0.s8 %v2171
    %v2173 = vlaneseq
    %v2174 = vshrl.u32 %v2173, 7
    %v2175 = vsub.s32 %v2172, %v2174
    %v2176 = vrot.slane %v2169, %v2175
    %v2178 = vunpack.c.l.s4 1966171168
    %v2179 = vunpack.c.0.s8 %v2178
    %v2180 = vlaneseq
    %v2181 = vshrl.u32 %v2180, 7
    %v2182 = vsub.s32 %v2179, %v2181
    %v2183 = vrot.slane %v2176, %v2182
    %v2184 = vsel %vm518, %v2168, 0
    %v2186 = vsel %vm518, %v2183, 0
    %2188 = vmatprep.subr.mxu0 0.0
    %2189 = vmatpush1.msra.mxu0 0.0
    %2190 = vmatprep.subr.mxu0 0.0
    %2191 = vmatpush1.msra.mxu0 0.0
    %2192 = vmatprep.subr.mxu0 0.0
    %2193 = vmatpush1.msra.mxu0 0.0
    %2194 = vmatprep.subr.mxu0 0.0
    %2195 = vmatpush1.msra.mxu0 0.0
    %2196 = vmatprep.subr.mxu0 0.0
    %2197 = vmatpush1.msra.mxu0 0.0
    %2198 = vmatprep.subr.mxu0 0.0
    %2199 = vmatpush1.msra.mxu0 0.0
    %2200 = vmatprep.subr.mxu0 0.0
    %2201 = vmatpush1.msra.mxu0 0.0
    %2202 = vmatprep.subr.mxu0 0.0
    %2203 = vmatpush1.msra.mxu0 0.0
    %2204 = vmatprep.subr.mxu0 0.0
    %2205 = vmatpush1.msra.mxu0 0.0
    %2206 = vmatprep.subr.mxu0 0.0
    %2207 = vmatpush1.msra.mxu0 0.0
    %2208 = vmatprep.subr.mxu0 0.0
    %2209 = vmatpush1.msra.mxu0 0.0
    %2210 = vmatprep.subr.mxu0 0.0
    %2211 = vmatpush1.msra.mxu0 0.0
    %2212 = vmatprep.subr.mxu0 0.0
    %2213 = vmatpush1.msra.mxu0 0.0
    %2214 = vmatprep.subr.mxu0 0.0
    %2215 = vmatpush1.msra.mxu0 0.0
    %2216 = vmatprep.subr.mxu0 0.0
    %2217 = vmatpush1.msra.mxu0 0.0
    %2218 = vmatprep.subr.mxu0 0.0
    %2219 = vmatpush1.msra.mxu0 %v187
    %2220 = vmatprep.subr.mxu0 0.0
    %2221 = vmatpush2.msra.mxu0 0.0
    %2222 = vmatprep.subr.mxu0 0.0
    %2223 = vmatpush2.msra.mxu0 0.0
    %2224 = vmatprep.subr.mxu0 0.0
    %2225 = vmatpush2.msra.mxu0 0.0
    %2226 = vmatprep.subr.mxu0 0.0
    %2227 = vmatpush2.msra.mxu0 0.0
    %2228 = vmatprep.subr.mxu0 0.0
    %2229 = vmatpush2.msra.mxu0 0.0
    %2230 = vmatprep.subr.mxu0 0.0
    %2231 = vmatpush2.msra.mxu0 0.0
    %2232 = vmatprep.subr.mxu0 0.0
    %2233 = vmatpush2.msra.mxu0 0.0
    %2234 = vmatprep.subr.mxu0 0.0
    %2235 = vmatpush2.msra.mxu0 0.0
    %2236 = vmatprep.subr.mxu0 0.0
    %2237 = vmatpush2.msra.mxu0 0.0
    %2238 = vmatprep.subr.mxu0 0.0
    %2239 = vmatpush2.msra.mxu0 0.0
    %2240 = vmatprep.subr.mxu0 0.0
    %2241 = vmatpush2.msra.mxu0 0.0
    %2242 = vmatprep.subr.mxu0 0.0
    %2243 = vmatpush2.msra.mxu0 0.0
    %2244 = vmatprep.subr.mxu0 0.0
    %2245 = vmatpush2.msra.mxu0 0.0
    %2246 = vmatprep.subr.mxu0 0.0
    %2247 = vmatpush2.msra.mxu0 0.0
    %2248 = vmatprep.subr.mxu0 0.0
    %2249 = vmatpush2.msra.mxu0 0.0
    %2250 = vmatprep.subr.mxu0 0.0
    %2251 = vmatpush2.msra.mxu0 0.0
    %2252 = vmatprep.mubr.f32.mxu0 0.0
    %2253 = vmatmul.mubr.f32.gmra.mxu0 %v2184
    %v2254 = vpop.f32.mrf.mxu0
    %v2255 = vadd.f32 0.0, %v2254
    %v2256 = vpop.f32.mrf.mxu0
    %2257 = vmatprep.mubr.f32.mxu0 0.0
    %2258 = vmatmul.mubr.f32.gmra.mxu0 %v2186
    %v2259 = vpop.f32.mrf.mxu0
    %v2260 = vadd.f32 0.0, %v2259
    %v2261 = vpop.f32.mrf.mxu0
    %2262 = vdwg.mxu0
    %v2263 = vadd.f32 %v1700, %v2255
    %v2264 = vadd.f32 %v1705, %v2260
    %2265 = vrot.lane.b32.xlu0 %v476, 104
    %v2266 = vpop.permute.xlu0 %2265
    %2267 = vrot.lane.b32.xlu0 %v515, 72
    %v2268 = vpop.permute.xlu0 %2267
    %v2269 = vsel %vm518, %v2266, 0
    %v2271 = vsel %vm518, %v2268, 0
    %2273 = vmatprep.subr.mxu0 0.0
    %2274 = vmatpush1.xpose.msra.mxu0 0.0
    %2275 = vmatprep.subr.mxu0 0.0
    %2276 = vmatpush1.xpose.msra.mxu0 0.0
    %2277 = vmatprep.subr.mxu0 0.0
    %2278 = vmatpush1.xpose.msra.mxu0 0.0
    %2279 = vmatprep.subr.mxu0 0.0
    %2280 = vmatpush1.xpose.msra.mxu0 0.0
    %2281 = vmatprep.subr.mxu0 0.0
    %2282 = vmatpush1.xpose.msra.mxu0 0.0
    %2283 = vmatprep.subr.mxu0 0.0
    %2284 = vmatpush1.xpose.msra.mxu0 0.0
    %2285 = vmatprep.subr.mxu0 0.0
    %2286 = vmatpush1.xpose.msra.mxu0 0.0
    %2287 = vmatprep.subr.mxu0 0.0
    %2288 = vmatpush1.xpose.msra.mxu0 0.0
    %2289 = vmatprep.subr.mxu0 0.0
    %2290 = vmatpush1.xpose.msra.mxu0 0.0
    %2291 = vmatprep.subr.mxu0 0.0
    %2292 = vmatpush1.xpose.msra.mxu0 0.0
    %2293 = vmatprep.subr.mxu0 0.0
    %2294 = vmatpush1.xpose.msra.mxu0 0.0
    %2295 = vmatprep.subr.mxu0 0.0
    %2296 = vmatpush1.xpose.msra.mxu0 0.0
    %2297 = vmatprep.subr.mxu0 0.0
    %2298 = vmatpush1.xpose.msra.mxu0 0.0
    %2299 = vmatprep.subr.mxu0 0.0
    %2300 = vmatpush1.xpose.msra.mxu0 0.0
    %2301 = vmatprep.subr.mxu0 0.0
    %2302 = vmatpush1.xpose.msra.mxu0 0.0
    %2303 = vmatprep.subr.mxu0 0.0
    %2304 = vmatpush1.xpose.msra.mxu0 %v2271
    %2305 = vmatprep.subr.mxu0 0.0
    %2306 = vmatpush2.xpose.msra.mxu0 0.0
    %2307 = vmatprep.subr.mxu0 0.0
    %2308 = vmatpush2.xpose.msra.mxu0 0.0
    %2309 = vmatprep.subr.mxu0 0.0
    %2310 = vmatpush2.xpose.msra.mxu0 0.0
    %2311 = vmatprep.subr.mxu0 0.0
    %2312 = vmatpush2.xpose.msra.mxu0 0.0
    %2313 = vmatprep.subr.mxu0 0.0
    %2314 = vmatpush2.xpose.msra.mxu0 0.0
    %2315 = vmatprep.subr.mxu0 0.0
    %2316 = vmatpush2.xpose.msra.mxu0 0.0
    %2317 = vmatprep.subr.mxu0 0.0
    %2318 = vmatpush2.xpose.msra.mxu0 0.0
    %2319 = vmatprep.subr.mxu0 0.0
    %2320 = vmatpush2.xpose.msra.mxu0 0.0
    %2321 = vmatprep.subr.mxu0 0.0
    %2322 = vmatpush2.xpose.msra.mxu0 0.0
    %2323 = vmatprep.subr.mxu0 0.0
    %2324 = vmatpush2.xpose.msra.mxu0 0.0
    %2325 = vmatprep.subr.mxu0 0.0
    %2326 = vmatpush2.xpose.msra.mxu0 0.0
    %2327 = vmatprep.subr.mxu0 0.0
    %2328 = vmatpush2.xpose.msra.mxu0 0.0
    %2329 = vmatprep.subr.mxu0 0.0
    %2330 = vmatpush2.xpose.msra.mxu0 0.0
    %2331 = vmatprep.subr.mxu0 0.0
    %2332 = vmatpush2.xpose.msra.mxu0 0.0
    %2333 = vmatprep.subr.mxu0 0.0
    %2334 = vmatpush2.xpose.msra.mxu0 0.0
    %2335 = vmatprep.subr.mxu0 0.0
    %2336 = vmatpush2.xpose.msra.mxu0 0.0
    %2337 = vmatprep.mubr.f32.mxu0 0.0
    %2338 = vmatmul.mubr.f32.gmra.mxu0 %v2269
    %v2339 = vpop.f32.mrf.mxu0
    %v2340 = vadd.f32 0.0, %v2339
    %v2341 = vpop.f32.mrf.mxu0
    %2342 = vdwg.mxu0
    %2343 = vrot.lane.b32.xlu0 %v636, 104
    %v2344 = vpop.permute.xlu0 %2343
    %2345 = vrot.lane.b32.xlu0 %v675, 72
    %v2346 = vpop.permute.xlu0 %2345
    %v2347 = vsel %vm518, %v2344, 0
    %v2349 = vsel %vm518, %v2346, 0
    %2351 = vmatprep.subr.mxu0 0.0
    %2352 = vmatpush1.xpose.msra.mxu0 0.0
    %2353 = vmatprep.subr.mxu0 0.0
    %2354 = vmatpush1.xpose.msra.mxu0 0.0
    %2355 = vmatprep.subr.mxu0 0.0
    %2356 = vmatpush1.xpose.msra.mxu0 0.0
    %2357 = vmatprep.subr.mxu0 0.0
    %2358 = vmatpush1.xpose.msra.mxu0 0.0
    %2359 = vmatprep.subr.mxu0 0.0
    %2360 = vmatpush1.xpose.msra.mxu0 0.0
    %2361 = vmatprep.subr.mxu0 0.0
    %2362 = vmatpush1.xpose.msra.mxu0 0.0
    %2363 = vmatprep.subr.mxu0 0.0
    %2364 = vmatpush1.xpose.msra.mxu0 0.0
    %2365 = vmatprep.subr.mxu0 0.0
    %2366 = vmatpush1.xpose.msra.mxu0 0.0
    %2367 = vmatprep.subr.mxu0 0.0
    %2368 = vmatpush1.xpose.msra.mxu0 0.0
    %2369 = vmatprep.subr.mxu0 0.0
    %2370 = vmatpush1.xpose.msra.mxu0 0.0
    %2371 = vmatprep.subr.mxu0 0.0
    %2372 = vmatpush1.xpose.msra.mxu0 0.0
    %2373 = vmatprep.subr.mxu0 0.0
    %2374 = vmatpush1.xpose.msra.mxu0 0.0
    %2375 = vmatprep.subr.mxu0 0.0
    %2376 = vmatpush1.xpose.msra.mxu0 0.0
    %2377 = vmatprep.subr.mxu0 0.0
    %2378 = vmatpush1.xpose.msra.mxu0 0.0
    %2379 = vmatprep.subr.mxu0 0.0
    %2380 = vmatpush1.xpose.msra.mxu0 0.0
    %2381 = vmatprep.subr.mxu0 0.0
    %2382 = vmatpush1.xpose.msra.mxu0 %v2349
    %2383 = vmatprep.subr.mxu0 0.0
    %2384 = vmatpush2.xpose.msra.mxu0 0.0
    %2385 = vmatprep.subr.mxu0 0.0
    %2386 = vmatpush2.xpose.msra.mxu0 0.0
    %2387 = vmatprep.subr.mxu0 0.0
    %2388 = vmatpush2.xpose.msra.mxu0 0.0
    %2389 = vmatprep.subr.mxu0 0.0
    %2390 = vmatpush2.xpose.msra.mxu0 0.0
    %2391 = vmatprep.subr.mxu0 0.0
    %2392 = vmatpush2.xpose.msra.mxu0 0.0
    %2393 = vmatprep.subr.mxu0 0.0
    %2394 = vmatpush2.xpose.msra.mxu0 0.0
    %2395 = vmatprep.subr.mxu0 0.0
    %2396 = vmatpush2.xpose.msra.mxu0 0.0
    %2397 = vmatprep.subr.mxu0 0.0
    %2398 = vmatpush2.xpose.msra.mxu0 0.0
    %2399 = vmatprep.subr.mxu0 0.0
    %2400 = vmatpush2.xpose.msra.mxu0 0.0
    %2401 = vmatprep.subr.mxu0 0.0
    %2402 = vmatpush2.xpose.msra.mxu0 0.0
    %2403 = vmatprep.subr.mxu0 0.0
    %2404 = vmatpush2.xpose.msra.mxu0 0.0
    %2405 = vmatprep.subr.mxu0 0.0
    %2406 = vmatpush2.xpose.msra.mxu0 0.0
    %2407 = vmatprep.subr.mxu0 0.0
    %2408 = vmatpush2.xpose.msra.mxu0 0.0
    %2409 = vmatprep.subr.mxu0 0.0
    %2410 = vmatpush2.xpose.msra.mxu0 0.0
    %2411 = vmatprep.subr.mxu0 0.0
    %2412 = vmatpush2.xpose.msra.mxu0 0.0
    %2413 = vmatprep.subr.mxu0 0.0
    %2414 = vmatpush2.xpose.msra.mxu0 0.0
    %2415 = vmatprep.mubr.f32.mxu0 0.0
    %2416 = vmatmul.mubr.f32.gmra.mxu0 %v2347
    %v2417 = vpop.f32.mrf.mxu0
    %v2418 = vadd.f32 0.0, %v2417
    %v2419 = vpop.f32.mrf.mxu0
    %2420 = vdwg.mxu0
    %v2421 = vsel %vm752, %v2340, -inf
    %2422 = vmax.xlane.f32.xlu0 %v2421
    %v2423 = vpop.xlane.xlu0 %2422
    %v2424 = vsel %vm752, %v2418, -inf
    %2425 = vmax.xlane.f32.xlu0 %v2424
    %v2426 = vpop.xlane.xlu0 %2425
    %v2427 = vsub.f32 %v2340, %v2423
    %v2428 = vsub.f32 %v2418, %v2426
    %v2429 = vmul.f32 %v2427, 1.442695
    %v2430 = vpow.pop %v2429
    %v2431 = vmul.f32 %v2428, 1.442695
    %v2432 = vpow.pop %v2431
    %v2433 = vsel %vm752, %v2430, 0.0
    %2434 = vadd.xlane.f32.xlu0 %v2433
    %v2435 = vpop.xlane.xlu0 %2434
    %v2436 = vsel %vm752, %v2432, 0.0
    %2437 = vadd.xlane.f32.xlu0 %v2436
    %v2438 = vpop.xlane.xlu0 %2437
    %v2439 = vrcp.pop %v2435
    %v2440 = vmul.f32 %v2430, %v2439
    %v2441 = vrcp.pop %v2438
    %v2442 = vmul.f32 %v2432, %v2441
    %2443 = vrot.lane.b32.xlu0 %v515, 40
    %v2444 = vpop.permute.xlu0 %2443
    %v2446 = vsel %vm777, %v2440, 0
    %v2448 = vsel %vm169, %v2444, 0
    %2450 = vmatprep.subr.mxu0 0.0
    %2451 = vmatpush1.msra.mxu0 0.0
    %2452 = vmatprep.subr.mxu0 0.0
    %2453 = vmatpush1.msra.mxu0 0.0
    %2454 = vmatprep.subr.mxu0 0.0
    %2455 = vmatpush1.msra.mxu0 0.0
    %2456 = vmatprep.subr.mxu0 0.0
    %2457 = vmatpush1.msra.mxu0 0.0
    %2458 = vmatprep.subr.mxu0 0.0
    %2459 = vmatpush1.msra.mxu0 0.0
    %2460 = vmatprep.subr.mxu0 0.0
    %2461 = vmatpush1.msra.mxu0 0.0
    %2462 = vmatprep.subr.mxu0 0.0
    %2463 = vmatpush1.msra.mxu0 0.0
    %2464 = vmatprep.subr.mxu0 0.0
    %2465 = vmatpush1.msra.mxu0 0.0
    %2466 = vmatprep.subr.mxu0 0.0
    %2467 = vmatpush1.msra.mxu0 0.0
    %2468 = vmatprep.subr.mxu0 0.0
    %2469 = vmatpush1.msra.mxu0 0.0
    %2470 = vmatprep.subr.mxu0 0.0
    %2471 = vmatpush1.msra.mxu0 0.0
    %2472 = vmatprep.subr.mxu0 0.0
    %2473 = vmatpush1.msra.mxu0 0.0
    %2474 = vmatprep.subr.mxu0 0.0
    %2475 = vmatpush1.msra.mxu0 0.0
    %2476 = vmatprep.subr.mxu0 0.0
    %2477 = vmatpush1.msra.mxu0 0.0
    %2478 = vmatprep.subr.mxu0 0.0
    %2479 = vmatpush1.msra.mxu0 0.0
    %2480 = vmatprep.subr.mxu0 0.0
    %2481 = vmatpush1.msra.mxu0 %v2448
    %2482 = vmatprep.subr.mxu0 0.0
    %2483 = vmatpush2.msra.mxu0 0.0
    %2484 = vmatprep.subr.mxu0 0.0
    %2485 = vmatpush2.msra.mxu0 0.0
    %2486 = vmatprep.subr.mxu0 0.0
    %2487 = vmatpush2.msra.mxu0 0.0
    %2488 = vmatprep.subr.mxu0 0.0
    %2489 = vmatpush2.msra.mxu0 0.0
    %2490 = vmatprep.subr.mxu0 0.0
    %2491 = vmatpush2.msra.mxu0 0.0
    %2492 = vmatprep.subr.mxu0 0.0
    %2493 = vmatpush2.msra.mxu0 0.0
    %2494 = vmatprep.subr.mxu0 0.0
    %2495 = vmatpush2.msra.mxu0 0.0
    %2496 = vmatprep.subr.mxu0 0.0
    %2497 = vmatpush2.msra.mxu0 0.0
    %2498 = vmatprep.subr.mxu0 0.0
    %2499 = vmatpush2.msra.mxu0 0.0
    %2500 = vmatprep.subr.mxu0 0.0
    %2501 = vmatpush2.msra.mxu0 0.0
    %2502 = vmatprep.subr.mxu0 0.0
    %2503 = vmatpush2.msra.mxu0 0.0
    %2504 = vmatprep.subr.mxu0 0.0
    %2505 = vmatpush2.msra.mxu0 0.0
    %2506 = vmatprep.subr.mxu0 0.0
    %2507 = vmatpush2.msra.mxu0 0.0
    %2508 = vmatprep.subr.mxu0 0.0
    %2509 = vmatpush2.msra.mxu0 0.0
    %2510 = vmatprep.subr.mxu0 0.0
    %2511 = vmatpush2.msra.mxu0 0.0
    %2512 = vmatprep.subr.mxu0 0.0
    %2513 = vmatpush2.msra.mxu0 0.0
    %2514 = vmatprep.mubr.f32.mxu0 0.0
    %2515 = vmatmul.mubr.f32.gmra.mxu0 %v2446
    %v2516 = vpop.f32.mrf.mxu0
    %v2517 = vadd.f32 0.0, %v2516
    %v2518 = vpop.f32.mrf.mxu0
    %2519 = vdwg.mxu0
    %2520 = vrot.lane.b32.xlu0 %v675, 40
    %v2521 = vpop.permute.xlu0 %2520
    %v2523 = vsel %vm777, %v2442, 0
    %v2525 = vsel %vm169, %v2521, 0
    %2527 = vmatprep.subr.mxu0 0.0
    %2528 = vmatpush1.msra.mxu0 0.0
    %2529 = vmatprep.subr.mxu0 0.0
    %2530 = vmatpush1.msra.mxu0 0.0
    %2531 = vmatprep.subr.mxu0 0.0
    %2532 = vmatpush1.msra.mxu0 0.0
    %2533 = vmatprep.subr.mxu0 0.0
    %2534 = vmatpush1.msra.mxu0 0.0
    %2535 = vmatprep.subr.mxu0 0.0
    %2536 = vmatpush1.msra.mxu0 0.0
    %2537 = vmatprep.subr.mxu0 0.0
    %2538 = vmatpush1.msra.mxu0 0.0
    %2539 = vmatprep.subr.mxu0 0.0
    %2540 = vmatpush1.msra.mxu0 0.0
    %2541 = vmatprep.subr.mxu0 0.0
    %2542 = vmatpush1.msra.mxu0 0.0
    %2543 = vmatprep.subr.mxu0 0.0
    %2544 = vmatpush1.msra.mxu0 0.0
    %2545 = vmatprep.subr.mxu0 0.0
    %2546 = vmatpush1.msra.mxu0 0.0
    %2547 = vmatprep.subr.mxu0 0.0
    %2548 = vmatpush1.msra.mxu0 0.0
    %2549 = vmatprep.subr.mxu0 0.0
    %2550 = vmatpush1.msra.mxu0 0.0
    %2551 = vmatprep.subr.mxu0 0.0
    %2552 = vmatpush1.msra.mxu0 0.0
    %2553 = vmatprep.subr.mxu0 0.0
    %2554 = vmatpush1.msra.mxu0 0.0
    %2555 = vmatprep.subr.mxu0 0.0
    %2556 = vmatpush1.msra.mxu0 0.0
    %2557 = vmatprep.subr.mxu0 0.0
    %2558 = vmatpush1.msra.mxu0 %v2525
    %2559 = vmatprep.subr.mxu0 0.0
    %2560 = vmatpush2.msra.mxu0 0.0
    %2561 = vmatprep.subr.mxu0 0.0
    %2562 = vmatpush2.msra.mxu0 0.0
    %2563 = vmatprep.subr.mxu0 0.0
    %2564 = vmatpush2.msra.mxu0 0.0
    %2565 = vmatprep.subr.mxu0 0.0
    %2566 = vmatpush2.msra.mxu0 0.0
    %2567 = vmatprep.subr.mxu0 0.0
    %2568 = vmatpush2.msra.mxu0 0.0
    %2569 = vmatprep.subr.mxu0 0.0
    %2570 = vmatpush2.msra.mxu0 0.0
    %2571 = vmatprep.subr.mxu0 0.0
    %2572 = vmatpush2.msra.mxu0 0.0
    %2573 = vmatprep.subr.mxu0 0.0
    %2574 = vmatpush2.msra.mxu0 0.0
    %2575 = vmatprep.subr.mxu0 0.0
    %2576 = vmatpush2.msra.mxu0 0.0
    %2577 = vmatprep.subr.mxu0 0.0
    %2578 = vmatpush2.msra.mxu0 0.0
    %2579 = vmatprep.subr.mxu0 0.0
    %2580 = vmatpush2.msra.mxu0 0.0
    %2581 = vmatprep.subr.mxu0 0.0
    %2582 = vmatpush2.msra.mxu0 0.0
    %2583 = vmatprep.subr.mxu0 0.0
    %2584 = vmatpush2.msra.mxu0 0.0
    %2585 = vmatprep.subr.mxu0 0.0
    %2586 = vmatpush2.msra.mxu0 0.0
    %2587 = vmatprep.subr.mxu0 0.0
    %2588 = vmatpush2.msra.mxu0 0.0
    %2589 = vmatprep.subr.mxu0 0.0
    %2590 = vmatpush2.msra.mxu0 0.0
    %2591 = vmatprep.mubr.f32.mxu0 0.0
    %2592 = vmatmul.mubr.f32.gmra.mxu0 %v2523
    %v2593 = vpop.f32.mrf.mxu0
    %v2594 = vadd.f32 0.0, %v2593
    %v2595 = vpop.f32.mrf.mxu0
    %2596 = vdwg.mxu0
    %v2599 = vcombine.high %v2517, %v2517
    %v2601 = vunpack.c.l.s4 1966171168
    %v2602 = vunpack.c.0.s8 %v2601
    %v2603 = vlaneseq
    %v2604 = vshrl.u32 %v2603, 7
    %v2605 = vsub.s32 %v2602, %v2604
    %v2606 = vrot.slane %v2517, %v2605
    %v2608 = vunpack.c.l.s4 1966171168
    %v2609 = vunpack.c.0.s8 %v2608
    %v2610 = vlaneseq
    %v2611 = vshrl.u32 %v2610, 7
    %v2612 = vsub.s32 %v2609, %v2611
    %v2613 = vrot.slane %v2599, %v2612
    %v2614 = vcombine.high %v2606, %v2606
    %v2616 = vunpack.c.l.s4 1966171168
    %v2617 = vunpack.c.0.s8 %v2616
    %v2618 = vlaneseq
    %v2619 = vshrl.u32 %v2618, 7
    %v2620 = vsub.s32 %v2617, %v2619
    %v2621 = vrot.slane %v2606, %v2620
    %v2623 = vunpack.c.l.s4 1966171168
    %v2624 = vunpack.c.0.s8 %v2623
    %v2625 = vlaneseq
    %v2626 = vshrl.u32 %v2625, 7
    %v2627 = vsub.s32 %v2624, %v2626
    %v2628 = vrot.slane %v2613, %v2627
    %v2630 = vunpack.c.l.s4 1966171168
    %v2631 = vunpack.c.0.s8 %v2630
    %v2632 = vlaneseq
    %v2633 = vshrl.u32 %v2632, 7
    %v2634 = vsub.s32 %v2631, %v2633
    %v2635 = vrot.slane %v2614, %v2634
    %v2636 = vcombine.high %v2621, %v2621
    %v2637 = vcombine.high %v2635, %v2635
    %v2638 = vcombine.high %v2594, %v2594
    %v2640 = vunpack.c.l.s4 1966171168
    %v2641 = vunpack.c.0.s8 %v2640
    %v2642 = vlaneseq
    %v2643 = vshrl.u32 %v2642, 7
    %v2644 = vsub.s32 %v2641, %v2643
    %v2645 = vrot.slane %v2594, %v2644
    %v2647 = vunpack.c.l.s4 1966171168
    %v2648 = vunpack.c.0.s8 %v2647
    %v2649 = vlaneseq
    %v2650 = vshrl.u32 %v2649, 7
    %v2651 = vsub.s32 %v2648, %v2650
    %v2652 = vrot.slane %v2638, %v2651
    %v2653 = vcombine.high %v2645, %v2645
    %v2655 = vunpack.c.l.s4 1966171168
    %v2656 = vunpack.c.0.s8 %v2655
    %v2657 = vlaneseq
    %v2658 = vshrl.u32 %v2657, 7
    %v2659 = vsub.s32 %v2656, %v2658
    %v2660 = vrot.slane %v2645, %v2659
    %v2662 = vunpack.c.l.s4 1966171168
    %v2663 = vunpack.c.0.s8 %v2662
    %v2664 = vlaneseq
    %v2665 = vshrl.u32 %v2664, 7
    %v2666 = vsub.s32 %v2663, %v2665
    %v2667 = vrot.slane %v2652, %v2666
    %v2669 = vunpack.c.l.s4 1966171168
    %v2670 = vunpack.c.0.s8 %v2669
    %v2671 = vlaneseq
    %v2672 = vshrl.u32 %v2671, 7
    %v2673 = vsub.s32 %v2670, %v2672
    %v2674 = vrot.slane %v2653, %v2673
    %v2675 = vcombine.high %v2660, %v2660
    %v2676 = vcombine.high %v2674, %v2674
    %v2677 = vcombine.low %v2621, %v2635
    %v2678 = vcombine.low %v2636, %v2637
    %v2679 = vcombine.low %v2628, %v2660
    %v2680 = vcombine.low %v2674, %v2675
    %v2682 = vunpack.c.l.s4 1966171168
    %v2683 = vunpack.c.0.s8 %v2682
    %v2684 = vlaneseq
    %v2685 = vshrl.u32 %v2684, 7
    %v2686 = vsub.s32 %v2683, %v2685
    %v2687 = vrot.slane %v2677, %v2686
    %v2689 = vunpack.c.l.s4 1966171168
    %v2690 = vunpack.c.0.s8 %v2689
    %v2691 = vlaneseq
    %v2692 = vshrl.u32 %v2691, 7
    %v2693 = vsub.s32 %v2690, %v2692
    %v2694 = vrot.slane %v2678, %v2693
    %v2696 = vunpack.c.l.s4 1966171168
    %v2697 = vunpack.c.0.s8 %v2696
    %v2698 = vlaneseq
    %v2699 = vshrl.u32 %v2698, 7
    %v2700 = vsub.s32 %v2697, %v2699
    %v2701 = vrot.slane %v2679, %v2700
    %v2703 = vunpack.c.l.s4 1966171168
    %v2704 = vunpack.c.0.s8 %v2703
    %v2705 = vlaneseq
    %v2706 = vshrl.u32 %v2705, 7
    %v2707 = vsub.s32 %v2704, %v2706
    %v2708 = vrot.slane %v2680, %v2707
    %v2709 = vcombine.low %v2687, %v2694
    %v2710 = vcombine.low %v2701, %v2708
    %v2712 = vunpack.c.l.s4 1966171168
    %v2713 = vunpack.c.0.s8 %v2712
    %v2714 = vlaneseq
    %v2715 = vshrl.u32 %v2714, 7
    %v2716 = vsub.s32 %v2713, %v2715
    %v2717 = vrot.slane %v2709, %v2716
    %v2719 = vunpack.c.l.s4 1966171168
    %v2720 = vunpack.c.0.s8 %v2719
    %v2721 = vlaneseq
    %v2722 = vshrl.u32 %v2721, 7
    %v2723 = vsub.s32 %v2720, %v2722
    %v2724 = vrot.slane %v2710, %v2723
    %v2725 = vcombine.low %v2717, %v2724
    %v2726 = vcombine.low %v2676, %v2667
    %v2728 = vunpack.c.l.s4 1966171168
    %v2729 = vunpack.c.0.s8 %v2728
    %v2730 = vlaneseq
    %v2731 = vshrl.u32 %v2730, 7
    %v2732 = vsub.s32 %v2729, %v2731
    %v2733 = vrot.slane %v2726, %v2732
    %v2735 = vunpack.c.l.s4 1966171168
    %v2736 = vunpack.c.0.s8 %v2735
    %v2737 = vlaneseq
    %v2738 = vshrl.u32 %v2737, 7
    %v2739 = vsub.s32 %v2736, %v2738
    %v2740 = vrot.slane %v2733, %v2739
    %v2741 = vsel %vm518, %v2725, 0
    %v2743 = vsel %vm518, %v2740, 0
    %2745 = vmatprep.subr.mxu0 0.0
    %2746 = vmatpush1.msra.mxu0 0.0
    %2747 = vmatprep.subr.mxu0 0.0
    %2748 = vmatpush1.msra.mxu0 0.0
    %2749 = vmatprep.subr.mxu0 0.0
    %2750 = vmatpush1.msra.mxu0 0.0
    %2751 = vmatprep.subr.mxu0 0.0
    %2752 = vmatpush1.msra.mxu0 0.0
    %2753 = vmatprep.subr.mxu0 0.0
    %2754 = vmatpush1.msra.mxu0 0.0
    %2755 = vmatprep.subr.mxu0 0.0
    %2756 = vmatpush1.msra.mxu0 0.0
    %2757 = vmatprep.subr.mxu0 0.0
    %2758 = vmatpush1.msra.mxu0 0.0
    %2759 = vmatprep.subr.mxu0 0.0
    %2760 = vmatpush1.msra.mxu0 0.0
    %2761 = vmatprep.subr.mxu0 0.0
    %2762 = vmatpush1.msra.mxu0 0.0
    %2763 = vmatprep.subr.mxu0 0.0
    %2764 = vmatpush1.msra.mxu0 0.0
    %2765 = vmatprep.subr.mxu0 0.0
    %2766 = vmatpush1.msra.mxu0 0.0
    %2767 = vmatprep.subr.mxu0 0.0
    %2768 = vmatpush1.msra.mxu0 0.0
    %2769 = vmatprep.subr.mxu0 0.0
    %2770 = vmatpush1.msra.mxu0 0.0
    %2771 = vmatprep.subr.mxu0 0.0
    %2772 = vmatpush1.msra.mxu0 0.0
    %2773 = vmatprep.subr.mxu0 0.0
    %2774 = vmatpush1.msra.mxu0 0.0
    %2775 = vmatprep.subr.mxu0 0.0
    %2776 = vmatpush1.msra.mxu0 %v188
    %2777 = vmatprep.subr.mxu0 0.0
    %2778 = vmatpush2.msra.mxu0 0.0
    %2779 = vmatprep.subr.mxu0 0.0
    %2780 = vmatpush2.msra.mxu0 0.0
    %2781 = vmatprep.subr.mxu0 0.0
    %2782 = vmatpush2.msra.mxu0 0.0
    %2783 = vmatprep.subr.mxu0 0.0
    %2784 = vmatpush2.msra.mxu0 0.0
    %2785 = vmatprep.subr.mxu0 0.0
    %2786 = vmatpush2.msra.mxu0 0.0
    %2787 = vmatprep.subr.mxu0 0.0
    %2788 = vmatpush2.msra.mxu0 0.0
    %2789 = vmatprep.subr.mxu0 0.0
    %2790 = vmatpush2.msra.mxu0 0.0
    %2791 = vmatprep.subr.mxu0 0.0
    %2792 = vmatpush2.msra.mxu0 0.0
    %2793 = vmatprep.subr.mxu0 0.0
    %2794 = vmatpush2.msra.mxu0 0.0
    %2795 = vmatprep.subr.mxu0 0.0
    %2796 = vmatpush2.msra.mxu0 0.0
    %2797 = vmatprep.subr.mxu0 0.0
    %2798 = vmatpush2.msra.mxu0 0.0
    %2799 = vmatprep.subr.mxu0 0.0
    %2800 = vmatpush2.msra.mxu0 0.0
    %2801 = vmatprep.subr.mxu0 0.0
    %2802 = vmatpush2.msra.mxu0 0.0
    %2803 = vmatprep.subr.mxu0 0.0
    %2804 = vmatpush2.msra.mxu0 0.0
    %2805 = vmatprep.subr.mxu0 0.0
    %2806 = vmatpush2.msra.mxu0 0.0
    %2807 = vmatprep.subr.mxu0 0.0
    %2808 = vmatpush2.msra.mxu0 0.0
    %2809 = vmatprep.mubr.f32.mxu0 0.0
    %2810 = vmatmul.mubr.f32.gmra.mxu0 %v2741
    %v2811 = vpop.f32.mrf.mxu0
    %v2812 = vadd.f32 0.0, %v2811
    %v2813 = vpop.f32.mrf.mxu0
    %2814 = vmatprep.mubr.f32.mxu0 0.0
    %2815 = vmatmul.mubr.f32.gmra.mxu0 %v2743
    %v2816 = vpop.f32.mrf.mxu0
    %v2817 = vadd.f32 0.0, %v2816
    %v2818 = vpop.f32.mrf.mxu0
    %2819 = vdwg.mxu0
    %v2820 = vadd.f32 %v2263, %v2812
    %v2821 = vadd.f32 %v2264, %v2817
    %v2822 = vadd.f32 %v177, %v2820
    %v2823 = vadd.f32 %v178, %v2821
    %v2825 = vlaneseq
    %v2826 = vshrl.u32 %v2825, 7
    %v2827 = vsub.s32 0, %v2826
    %v2828 = vrot.slane %v189, %v2827
    %v2830 = vadd.f32 %v2822, %v2828
    %v2831 = vadd.f32 %v2823, %v2828
    %v2832 = vsel %vm212, %v2830, 0.0
    %2833 = vadd.xlane.f32.xlu0 %v2832
    %v2834 = vpop.xlane.xlu0 %2833
    %v2835 = vsel %vm216, %v2831, 0.0
    %2836 = vadd.xlane.f32.xlu0 %v2835
    %v2837 = vpop.xlane.xlu0 %2836
    %v2838 = vmul.f32 %v2834, %v220
    %v2839 = vmul.f32 %v2837, %v220
    %v2840 = vsub.f32 %v2830, %v2838
    %v2841 = vsub.f32 %v2831, %v2839
    %v2842 = vmul.f32 %v2840, %v2840
    %v2843 = vmul.f32 %v2841, %v2841
    %v2844 = vsel %vm212, %v2842, 0.0
    %2845 = vadd.xlane.f32.xlu0 %v2844
    %v2846 = vpop.xlane.xlu0 %2845
    %v2847 = vsel %vm216, %v2843, 0.0
    %2848 = vadd.xlane.f32.xlu0 %v2847
    %v2849 = vpop.xlane.xlu0 %2848
    %v2850 = vmul.f32 %v2846, %v220
    %v2851 = vmul.f32 %v2849, %v220
    %v2852 = vadd.f32 %v2850, 1e-06
    %v2853 = vadd.f32 %v2851, 1e-06
    %v2854 = vrsqrt.pop %v2852
    %v2855 = vrsqrt.pop %v2853
    %v2856 = vmul.f32 %v2840, %v2854
    %v2857 = vmul.f32 %v2841, %v2855
    %v2858 = vlaneseq
    %v2859 = vshrl.u32 %v2858, 7
    %v2860 = vsub.s32 2, %v2859
    %v2861 = vrot.slane %v179, %v2860
    %v2862 = vmul.f32 %v2856, %v2861
    %v2863 = vmul.f32 %v2857, %v2861
    %v2864 = vlaneseq
    %v2865 = vshrl.u32 %v2864, 7
    %v2866 = vsub.s32 3, %v2865
    %v2867 = vrot.slane %v179, %v2866
    %v2868 = vadd.f32 %v2862, %v2867
    %v2869 = vadd.f32 %v2863, %v2867
    %v2871 = vlaneseq
    %v2872 = vshrl.u32 %v2871, 7
    %v2873 = vsub.s32 0, %v2872
    %v2874 = vrot.slane %v194, %v2873
    %v2877 = vsel %vm212, %v2868, 0
    %v2880 = vsel %vm212, %v2869, 0
    %2882 = vmatprep.subr.mxu0 0.0
    %2883 = vmatpush1.msra.mxu0 0.0
    %2884 = vmatprep.subr.mxu0 0.0
    %2885 = vmatpush1.msra.mxu0 0.0
    %2886 = vmatprep.subr.mxu0 0.0
    %2887 = vmatpush1.msra.mxu0 0.0
    %2888 = vmatprep.subr.mxu0 0.0
    %2889 = vmatpush1.msra.mxu0 0.0
    %2890 = vmatprep.subr.mxu0 0.0
    %2891 = vmatpush1.msra.mxu0 0.0
    %2892 = vmatprep.subr.mxu0 0.0
    %2893 = vmatpush1.msra.mxu0 0.0
    %2894 = vmatprep.subr.mxu0 0.0
    %2895 = vmatpush1.msra.mxu0 0.0
    %2896 = vmatprep.subr.mxu0 0.0
    %2897 = vmatpush1.msra.mxu0 0.0
    %2898 = vmatprep.subr.mxu0 0.0
    %2899 = vmatpush1.msra.mxu0 0.0
    %2900 = vmatprep.subr.mxu0 0.0
    %2901 = vmatpush1.msra.mxu0 0.0
    %2902 = vmatprep.subr.mxu0 0.0
    %2903 = vmatpush1.msra.mxu0 0.0
    %2904 = vmatprep.subr.mxu0 0.0
    %2905 = vmatpush1.msra.mxu0 0.0
    %2906 = vmatprep.subr.mxu0 0.0
    %2907 = vmatpush1.msra.mxu0 %v193
    %2908 = vmatprep.subr.mxu0 0.0
    %2909 = vmatpush1.msra.mxu0 %v192
    %2910 = vmatprep.subr.mxu0 0.0
    %2911 = vmatpush1.msra.mxu0 %v191
    %2912 = vmatprep.subr.mxu0 0.0
    %2913 = vmatpush1.msra.mxu0 %v190
    %2914 = vmatprep.subr.mxu0 0.0
    %2915 = vmatpush2.msra.mxu0 0.0
    %2916 = vmatprep.subr.mxu0 0.0
    %2917 = vmatpush2.msra.mxu0 0.0
    %2918 = vmatprep.subr.mxu0 0.0
    %2919 = vmatpush2.msra.mxu0 0.0
    %2920 = vmatprep.subr.mxu0 0.0
    %2921 = vmatpush2.msra.mxu0 0.0
    %2922 = vmatprep.subr.mxu0 0.0
    %2923 = vmatpush2.msra.mxu0 0.0
    %2924 = vmatprep.subr.mxu0 0.0
    %2925 = vmatpush2.msra.mxu0 0.0
    %2926 = vmatprep.subr.mxu0 0.0
    %2927 = vmatpush2.msra.mxu0 0.0
    %2928 = vmatprep.subr.mxu0 0.0
    %2929 = vmatpush2.msra.mxu0 0.0
    %2930 = vmatprep.subr.mxu0 0.0
    %2931 = vmatpush2.msra.mxu0 0.0
    %2932 = vmatprep.subr.mxu0 0.0
    %2933 = vmatpush2.msra.mxu0 0.0
    %2934 = vmatprep.subr.mxu0 0.0
    %2935 = vmatpush2.msra.mxu0 0.0
    %2936 = vmatprep.subr.mxu0 0.0
    %2937 = vmatpush2.msra.mxu0 0.0
    %2938 = vmatprep.subr.mxu0 0.0
    %2939 = vmatpush2.msra.mxu0 0.0
    %2940 = vmatprep.subr.mxu0 0.0
    %2941 = vmatpush2.msra.mxu0 0.0
    %2942 = vmatprep.subr.mxu0 0.0
    %2943 = vmatpush2.msra.mxu0 0.0
    %2944 = vmatprep.subr.mxu0 0.0
    %2945 = vmatpush2.msra.mxu0 0.0
    %2946 = vmatprep.mubr.f32.mxu0 0.0
    %2947 = vmatmul.mubr.f32.gmra.mxu0 %v2877
    %v2948 = vpop.f32.mrf.mxu0
    %v2949 = vadd.f32 %v2874, %v2948
    %v2950 = vpop.f32.mrf.mxu0
    %2951 = vmatprep.mubr.f32.mxu0 0.0
    %2952 = vmatmul.mubr.f32.gmra.mxu0 %v2880
    %v2953 = vpop.f32.mrf.mxu0
    %v2954 = vadd.f32 %v2874, %v2953
    %v2955 = vpop.f32.mrf.mxu0
    %2956 = vdwg.mxu0
    %v2957 = vmul.f32 %v2949, %v2949
    %v2958 = vmul.f32 %v2954, %v2954
    %v2959 = vmul.f32 %v2949, %v2957
    %v2960 = vmul.f32 %v2954, %v2958
    %v2961 = vmul.f32 %v2959, 0.044715
    %v2962 = vmul.f32 %v2960, 0.044715
    %v2963 = vadd.f32 %v2949, %v2961
    %v2964 = vadd.f32 %v2954, %v2962
    %v2965 = vmul.f32 %v2963, 0.7978846
    %v2966 = vmul.f32 %v2964, 0.7978846
    %v2967 = vtanh.pop %v2965
    %v2968 = vtanh.pop %v2966
    %v2969 = vadd.f32 %v2967, 1.0
    %v2970 = vadd.f32 %v2968, 1.0
    %v2971 = vmul.f32 %v2969, 0.5
    %v2972 = vmul.f32 %v2970, 0.5
    %v2973 = vmul.f32 %v2949, %v2971
    %v2974 = vmul.f32 %v2954, %v2972
    %v2976 = vlaneseq
    %v2977 = vshrl.u32 %v2976, 7
    %v2978 = vsub.s32 0, %v2977
    %v2979 = vrot.slane %v211, %v2978
    %2981 = vmatprep.subr.mxu0 0.0
    %2982 = vmatpush1.msra.mxu0 %v210
    %2983 = vmatprep.subr.mxu0 0.0
    %2984 = vmatpush1.msra.mxu0 %v209
    %2985 = vmatprep.subr.mxu0 0.0
    %2986 = vmatpush1.msra.mxu0 %v208
    %2987 = vmatprep.subr.mxu0 0.0
    %2988 = vmatpush1.msra.mxu0 %v207
    %2989 = vmatprep.subr.mxu0 0.0
    %2990 = vmatpush1.msra.mxu0 %v206
    %2991 = vmatprep.subr.mxu0 0.0
    %2992 = vmatpush1.msra.mxu0 %v205
    %2993 = vmatprep.subr.mxu0 0.0
    %2994 = vmatpush1.msra.mxu0 %v204
    %2995 = vmatprep.subr.mxu0 0.0
    %2996 = vmatpush1.msra.mxu0 %v203
    %2997 = vmatprep.subr.mxu0 0.0
    %2998 = vmatpush1.msra.mxu0 %v202
    %2999 = vmatprep.subr.mxu0 0.0
    %3000 = vmatpush1.msra.mxu0 %v201
    %3001 = vmatprep.subr.mxu0 0.0
    %3002 = vmatpush1.msra.mxu0 %v200
    %3003 = vmatprep.subr.mxu0 0.0
    %3004 = vmatpush1.msra.mxu0 %v199
    %3005 = vmatprep.subr.mxu0 0.0
    %3006 = vmatpush1.msra.mxu0 %v198
    %3007 = vmatprep.subr.mxu0 0.0
    %3008 = vmatpush1.msra.mxu0 %v197
    %3009 = vmatprep.subr.mxu0 0.0
    %3010 = vmatpush1.msra.mxu0 %v196
    %3011 = vmatprep.subr.mxu0 0.0
    %3012 = vmatpush1.msra.mxu0 %v195
    %3013 = vmatprep.subr.mxu0 0.0
    %3014 = vmatpush2.msra.mxu0 0.0
    %3015 = vmatprep.subr.mxu0 0.0
    %3016 = vmatpush2.msra.mxu0 0.0
    %3017 = vmatprep.subr.mxu0 0.0
    %3018 = vmatpush2.msra.mxu0 0.0
    %3019 = vmatprep.subr.mxu0 0.0
    %3020 = vmatpush2.msra.mxu0 0.0
    %3021 = vmatprep.subr.mxu0 0.0
    %3022 = vmatpush2.msra.mxu0 0.0
    %3023 = vmatprep.subr.mxu0 0.0
    %3024 = vmatpush2.msra.mxu0 0.0
    %3025 = vmatprep.subr.mxu0 0.0
    %3026 = vmatpush2.msra.mxu0 0.0
    %3027 = vmatprep.subr.mxu0 0.0
    %3028 = vmatpush2.msra.mxu0 0.0
    %3029 = vmatprep.subr.mxu0 0.0
    %3030 = vmatpush2.msra.mxu0 0.0
    %3031 = vmatprep.subr.mxu0 0.0
    %3032 = vmatpush2.msra.mxu0 0.0
    %3033 = vmatprep.subr.mxu0 0.0
    %3034 = vmatpush2.msra.mxu0 0.0
    %3035 = vmatprep.subr.mxu0 0.0
    %3036 = vmatpush2.msra.mxu0 0.0
    %3037 = vmatprep.subr.mxu0 0.0
    %3038 = vmatpush2.msra.mxu0 0.0
    %3039 = vmatprep.subr.mxu0 0.0
    %3040 = vmatpush2.msra.mxu0 0.0
    %3041 = vmatprep.subr.mxu0 0.0
    %3042 = vmatpush2.msra.mxu0 0.0
    %3043 = vmatprep.subr.mxu0 0.0
    %3044 = vmatpush2.msra.mxu0 0.0
    %3045 = vmatprep.mubr.f32.mxu0 0.0
    %3046 = vmatmul.mubr.f32.gmra.mxu0 %v2973
    %v3047 = vpop.f32.mrf.mxu0
    %v3048 = vadd.f32 %v2979, %v3047
    %v3049 = vpop.f32.mrf.mxu0
    %3050 = vmatprep.mubr.f32.mxu0 0.0
    %3051 = vmatmul.mubr.f32.gmra.mxu0 %v2974
    %v3052 = vpop.f32.mrf.mxu0
    %v3053 = vadd.f32 %v2979, %v3052
    %v3054 = vpop.f32.mrf.mxu0
    %3055 = vdwg.mxu0
    %v3056 = vadd.f32 %v2830, %v3048
    %v3057 = vadd.f32 %v2831, %v3053
    %s3058 = scalar_lea.vmem %s4, 4
    %v3059 = vld [vmem:[%s3058] sm:$0xf]
    %s3060 = scalar_lea.vmem %s5, 32
    %v3061 = vld [vmem:[%s3060] sm:$0xff]
    %v3062 = vld [vmem:[%s3060 + $0x8] sm:$0xff]
    %v3063 = vld [vmem:[%s3060 + $0x10] sm:$0xff]
    %v3064 = vld [vmem:[%s3060 + $0x18] sm:$0xff]
    %s3065 = scalar_lea.vmem %s6, 1
    %v3066 = vld [vmem:[%s3065] sm:$0x1]
    %s3067 = scalar_lea.vmem %s7, 32
    %v3068 = vld [vmem:[%s3067] sm:$0xff]
    %v3069 = vld [vmem:[%s3067 + $0x8] sm:$0xff]
    %v3070 = vld [vmem:[%s3067 + $0x10] sm:$0xff]
    %v3071 = vld [vmem:[%s3067 + $0x18] sm:$0xff]
    %s3072 = scalar_lea.vmem %s8, 1
    %v3073 = vld [vmem:[%s3072] sm:$0x1]
    %s3074 = scalar_lea.vmem %s9, 32
    %v3075 = vld [vmem:[%s3074] sm:$0xff]
    %v3076 = vld [vmem:[%s3074 + $0x8] sm:$0xff]
    %v3077 = vld [vmem:[%s3074 + $0x10] sm:$0xff]
    %v3078 = vld [vmem:[%s3074 + $0x18] sm:$0xff]
    %s3079 = scalar_lea.vmem %s10, 1
    %v3080 = vld [vmem:[%s3079] sm:$0x1]
    %s3081 = scalar_lea.vmem %s11, 128
    %v3082 = vld [vmem:[%s3081] sm:$0xff]
    %v3083 = vld [vmem:[%s3081 + $0x8] sm:$0xff]
    %v3084 = vld [vmem:[%s3081 + $0x10] sm:$0xff]
    %v3085 = vld [vmem:[%s3081 + $0x18] sm:$0xff]
    %v3086 = vld [vmem:[%s3081 + $0x20] sm:$0xff]
    %v3087 = vld [vmem:[%s3081 + $0x28] sm:$0xff]
    %v3088 = vld [vmem:[%s3081 + $0x30] sm:$0xff]
    %v3089 = vld [vmem:[%s3081 + $0x38] sm:$0xff]
    %v3090 = vld [vmem:[%s3081 + $0x40] sm:$0xff]
    %v3091 = vld [vmem:[%s3081 + $0x48] sm:$0xff]
    %v3092 = vld [vmem:[%s3081 + $0x50] sm:$0xff]
    %v3093 = vld [vmem:[%s3081 + $0x58] sm:$0xff]
    %v3094 = vld [vmem:[%s3081 + $0x60] sm:$0xff]
    %v3095 = vld [vmem:[%s3081 + $0x68] sm:$0xff]
    %v3096 = vld [vmem:[%s3081 + $0x70] sm:$0xff]
    %v3097 = vld [vmem:[%s3081 + $0x78] sm:$0xff]
    %s3098 = scalar_lea.vmem %s12, 1
    %v3099 = vld [vmem:[%s3098] sm:$0x1]
    %v3100 = vsel %vm212, %v3056, 0.0
    %3101 = vadd.xlane.f32.xlu0 %v3100
    %v3102 = vpop.xlane.xlu0 %3101
    %v3103 = vsel %vm216, %v3057, 0.0
    %3104 = vadd.xlane.f32.xlu0 %v3103
    %v3105 = vpop.xlane.xlu0 %3104
    %v3106 = vmul.f32 %v3102, %v220
    %v3107 = vmul.f32 %v3105, %v220
    %v3108 = vsub.f32 %v3056, %v3106
    %v3109 = vsub.f32 %v3057, %v3107
    %v3110 = vmul.f32 %v3108, %v3108
    %v3111 = vmul.f32 %v3109, %v3109
    %v3112 = vsel %vm212, %v3110, 0.0
    %3113 = vadd.xlane.f32.xlu0 %v3112
    %v3114 = vpop.xlane.xlu0 %3113
    %v3115 = vsel %vm216, %v3111, 0.0
    %3116 = vadd.xlane.f32.xlu0 %v3115
    %v3117 = vpop.xlane.xlu0 %3116
    %v3118 = vmul.f32 %v3114, %v220
    %v3119 = vmul.f32 %v3117, %v220
    %v3120 = vadd.f32 %v3118, 1e-06
    %v3121 = vadd.f32 %v3119, 1e-06
    %v3122 = vrsqrt.pop %v3120
    %v3123 = vrsqrt.pop %v3121
    %v3124 = vmul.f32 %v3108, %v3122
    %v3125 = vmul.f32 %v3109, %v3123
    %v3126 = vlaneseq
    %v3127 = vshrl.u32 %v3126, 7
    %v3128 = vsub.s32 0, %v3127
    %v3129 = vrot.slane %v3059, %v3128
    %v3130 = vmul.f32 %v3124, %v3129
    %v3131 = vmul.f32 %v3125, %v3129
    %v3132 = vlaneseq
    %v3133 = vshrl.u32 %v3132, 7
    %v3134 = vsub.s32 1, %v3133
    %v3135 = vrot.slane %v3059, %v3134
    %v3136 = vadd.f32 %v3130, %v3135
    %v3137 = vadd.f32 %v3131, %v3135
    %v3139 = vlaneseq
    %v3140 = vshrl.u32 %v3139, 7
    %v3141 = vsub.s32 0, %v3140
    %v3142 = vrot.slane %v3066, %v3141
    %v3145 = vsel %vm212, %v3136, 0
    %v3148 = vsel %vm212, %v3137, 0
    %3150 = vmatprep.subr.mxu0 0.0
    %3151 = vmatpush1.msra.mxu0 0.0
    %3152 = vmatprep.subr.mxu0 0.0
    %3153 = vmatpush1.msra.mxu0 0.0
    %3154 = vmatprep.subr.mxu0 0.0
    %3155 = vmatpush1.msra.mxu0 0.0
    %3156 = vmatprep.subr.mxu0 0.0
    %3157 = vmatpush1.msra.mxu0 0.0
    %3158 = vmatprep.subr.mxu0 0.0
    %3159 = vmatpush1.msra.mxu0 0.0
    %3160 = vmatprep.subr.mxu0 0.0
    %3161 = vmatpush1.msra.mxu0 0.0
    %3162 = vmatprep.subr.mxu0 0.0
    %3163 = vmatpush1.msra.mxu0 0.0
    %3164 = vmatprep.subr.mxu0 0.0
    %3165 = vmatpush1.msra.mxu0 0.0
    %3166 = vmatprep.subr.mxu0 0.0
    %3167 = vmatpush1.msra.mxu0 0.0
    %3168 = vmatprep.subr.mxu0 0.0
    %3169 = vmatpush1.msra.mxu0 0.0
    %3170 = vmatprep.subr.mxu0 0.0
    %3171 = vmatpush1.msra.mxu0 0.0
    %3172 = vmatprep.subr.mxu0 0.0
    %3173 = vmatpush1.msra.mxu0 0.0
    %3174 = vmatprep.subr.mxu0 0.0
    %3175 = vmatpush1.msra.mxu0 %v3064
    %3176 = vmatprep.subr.mxu0 0.0
    %3177 = vmatpush1.msra.mxu0 %v3063
    %3178 = vmatprep.subr.mxu0 0.0
    %3179 = vmatpush1.msra.mxu0 %v3062
    %3180 = vmatprep.subr.mxu0 0.0
    %3181 = vmatpush1.msra.mxu0 %v3061
    %3182 = vmatprep.subr.mxu0 0.0
    %3183 = vmatpush2.msra.mxu0 0.0
    %3184 = vmatprep.subr.mxu0 0.0
    %3185 = vmatpush2.msra.mxu0 0.0
    %3186 = vmatprep.subr.mxu0 0.0
    %3187 = vmatpush2.msra.mxu0 0.0
    %3188 = vmatprep.subr.mxu0 0.0
    %3189 = vmatpush2.msra.mxu0 0.0
    %3190 = vmatprep.subr.mxu0 0.0
    %3191 = vmatpush2.msra.mxu0 0.0
    %3192 = vmatprep.subr.mxu0 0.0
    %3193 = vmatpush2.msra.mxu0 0.0
    %3194 = vmatprep.subr.mxu0 0.0
    %3195 = vmatpush2.msra.mxu0 0.0
    %3196 = vmatprep.subr.mxu0 0.0
    %3197 = vmatpush2.msra.mxu0 0.0
    %3198 = vmatprep.subr.mxu0 0.0
    %3199 = vmatpush2.msra.mxu0 0.0
    %3200 = vmatprep.subr.mxu0 0.0
    %3201 = vmatpush2.msra.mxu0 0.0
    %3202 = vmatprep.subr.mxu0 0.0
    %3203 = vmatpush2.msra.mxu0 0.0
    %3204 = vmatprep.subr.mxu0 0.0
    %3205 = vmatpush2.msra.mxu0 0.0
    %3206 = vmatprep.subr.mxu0 0.0
    %3207 = vmatpush2.msra.mxu0 0.0
    %3208 = vmatprep.subr.mxu0 0.0
    %3209 = vmatpush2.msra.mxu0 0.0
    %3210 = vmatprep.subr.mxu0 0.0
    %3211 = vmatpush2.msra.mxu0 0.0
    %3212 = vmatprep.subr.mxu0 0.0
    %3213 = vmatpush2.msra.mxu0 0.0
    %3214 = vmatprep.mubr.f32.mxu0 0.0
    %3215 = vmatmul.mubr.f32.gmra.mxu0 %v3145
    %v3216 = vpop.f32.mrf.mxu0
    %v3217 = vadd.f32 %v3142, %v3216
    %v3218 = vpop.f32.mrf.mxu0
    %3219 = vmatprep.mubr.f32.mxu0 0.0
    %3220 = vmatmul.mubr.f32.gmra.mxu0 %v3148
    %v3221 = vpop.f32.mrf.mxu0
    %v3222 = vadd.f32 %v3142, %v3221
    %v3223 = vpop.f32.mrf.mxu0
    %3224 = vdwg.mxu0
    %v3227 = vcombine.high %v3217, %v3217
    %v3229 = vunpack.c.l.s4 1966171168
    %v3230 = vunpack.c.0.s8 %v3229
    %v3231 = vlaneseq
    %v3232 = vshrl.u32 %v3231, 7
    %v3233 = vsub.s32 %v3230, %v3232
    %v3234 = vrot.slane %v3217, %v3233
    %v3236 = vunpack.c.l.s4 1966171168
    %v3237 = vunpack.c.0.s8 %v3236
    %v3238 = vlaneseq
    %v3239 = vshrl.u32 %v3238, 7
    %v3240 = vsub.s32 %v3237, %v3239
    %v3241 = vrot.slane %v3227, %v3240
    %v3242 = vcombine.high %v3234, %v3234
    %v3243 = vcombine.high %v3241, %v3241
    %v3245 = vunpack.c.l.s4 1966171168
    %v3246 = vunpack.c.0.s8 %v3245
    %v3247 = vlaneseq
    %v3248 = vshrl.u32 %v3247, 7
    %v3249 = vsub.s32 %v3246, %v3248
    %v3250 = vrot.slane %v3234, %v3249
    %v3252 = vunpack.c.l.s4 1966171168
    %v3253 = vunpack.c.0.s8 %v3252
    %v3254 = vlaneseq
    %v3255 = vshrl.u32 %v3254, 7
    %v3256 = vsub.s32 %v3253, %v3255
    %v3257 = vrot.slane %v3241, %v3256
    %v3259 = vunpack.c.l.s4 1966171168
    %v3260 = vunpack.c.0.s8 %v3259
    %v3261 = vlaneseq
    %v3262 = vshrl.u32 %v3261, 7
    %v3263 = vsub.s32 %v3260, %v3262
    %v3264 = vrot.slane %v3242, %v3263
    %v3266 = vunpack.c.l.s4 1966171168
    %v3267 = vunpack.c.0.s8 %v3266
    %v3268 = vlaneseq
    %v3269 = vshrl.u32 %v3268, 7
    %v3270 = vsub.s32 %v3267, %v3269
    %v3271 = vrot.slane %v3243, %v3270
    %v3272 = vcombine.high %v3250, %v3250
    %v3273 = vcombine.high %v3257, %v3257
    %v3274 = vcombine.high %v3264, %v3264
    %v3275 = vcombine.high %v3271, %v3271
    %v3277 = vunpack.c.l.s4 1966171168
    %v3278 = vunpack.c.0.s8 %v3277
    %v3279 = vlaneseq
    %v3280 = vshrl.u32 %v3279, 7
    %v3281 = vsub.s32 %v3278, %v3280
    %v3282 = vrot.slane %v3222, %v3281
    %v3283 = vcombine.high %v3282, %v3282
    %v3285 = vunpack.c.l.s4 1966171168
    %v3286 = vunpack.c.0.s8 %v3285
    %v3287 = vlaneseq
    %v3288 = vshrl.u32 %v3287, 7
    %v3289 = vsub.s32 %v3286, %v3288
    %v3290 = vrot.slane %v3282, %v3289
    %v3292 = vunpack.c.l.s4 1966171168
    %v3293 = vunpack.c.0.s8 %v3292
    %v3294 = vlaneseq
    %v3295 = vshrl.u32 %v3294, 7
    %v3296 = vsub.s32 %v3293, %v3295
    %v3297 = vrot.slane %v3283, %v3296
    %v3308 = vmul.f32 %v3250, 0.35355338
    %v3309 = vmul.f32 %v3264, 0.35355338
    %v3310 = vmul.f32 %v3272, 0.35355338
    %v3311 = vmul.f32 %v3274, 0.35355338
    %v3312 = vmul.f32 %v3257, 0.35355338
    %v3313 = vmul.f32 %v3271, 0.35355338
    %v3314 = vmul.f32 %v3273, 0.35355338
    %v3315 = vmul.f32 %v3275, 0.35355338
    %v3316 = vmul.f32 %v3290, 0.35355338
    %v3317 = vmul.f32 %v3297, 0.35355338
    %v3323 = vcombine.low %v3308, %v3309
    %v3324 = vcombine.low %v3310, %v3311
    %v3326 = vunpack.c.l.s4 1966171168
    %v3327 = vunpack.c.0.s8 %v3326
    %v3328 = vlaneseq
    %v3329 = vshrl.u32 %v3328, 7
    %v3330 = vsub.s32 %v3327, %v3329
    %v3331 = vrot.slane %v3323, %v3330
    %v3333 = vunpack.c.l.s4 1966171168
    %v3334 = vunpack.c.0.s8 %v3333
    %v3335 = vlaneseq
    %v3336 = vshrl.u32 %v3335, 7
    %v3337 = vsub.s32 %v3334, %v3336
    %v3338 = vrot.slane %v3324, %v3337
    %v3340 = vunpack.c.l.s4 1966171168
    %v3341 = vunpack.c.0.s8 %v3340
    %v3342 = vlaneseq
    %v3343 = vshrl.u32 %v3342, 7
    %v3344 = vsub.s32 %v3341, %v3343
    %v3345 = vrot.slane %v3312, %v3344
    %v3346 = vcombine.low %v3331, %v3338
    %v3348 = vunpack.c.l.s4 1966171168
    %v3349 = vunpack.c.0.s8 %v3348
    %v3350 = vlaneseq
    %v3351 = vshrl.u32 %v3350, 7
    %v3352 = vsub.s32 %v3349, %v3351
    %v3353 = vrot.slane %v3346, %v3352
    %v3355 = vunpack.c.l.s4 1966171168
    %v3356 = vunpack.c.0.s8 %v3355
    %v3357 = vlaneseq
    %v3358 = vshrl.u32 %v3357, 7
    %v3359 = vsub.s32 %v3356, %v3358
    %v3360 = vrot.slane %v3345, %v3359
    %v3361 = vcombine.low %v3353, %v3360
    %v3362 = vcombine.low %v3250, %v3264
    %v3363 = vcombine.low %v3272, %v3274
    %v3365 = vunpack.c.l.s4 1966171168
    %v3366 = vunpack.c.0.s8 %v3365
    %v3367 = vlaneseq
    %v3368 = vshrl.u32 %v3367, 7
    %v3369 = vsub.s32 %v3366, %v3368
    %v3370 = vrot.slane %v3362, %v3369
    %v3372 = vunpack.c.l.s4 1966171168
    %v3373 = vunpack.c.0.s8 %v3372
    %v3374 = vlaneseq
    %v3375 = vshrl.u32 %v3374, 7
    %v3376 = vsub.s32 %v3373, %v3375
    %v3377 = vrot.slane %v3363, %v3376
    %v3379 = vunpack.c.l.s4 1966171168
    %v3380 = vunpack.c.0.s8 %v3379
    %v3381 = vlaneseq
    %v3382 = vshrl.u32 %v3381, 7
    %v3383 = vsub.s32 %v3380, %v3382
    %v3384 = vrot.slane %v3257, %v3383
    %v3385 = vcombine.low %v3370, %v3377
    %v3387 = vunpack.c.l.s4 1966171168
    %v3388 = vunpack.c.0.s8 %v3387
    %v3389 = vlaneseq
    %v3390 = vshrl.u32 %v3389, 7
    %v3391 = vsub.s32 %v3388, %v3390
    %v3392 = vrot.slane %v3385, %v3391
    %v3394 = vunpack.c.l.s4 1966171168
    %v3395 = vunpack.c.0.s8 %v3394
    %v3396 = vlaneseq
    %v3397 = vshrl.u32 %v3396, 7
    %v3398 = vsub.s32 %v3395, %v3397
    %v3399 = vrot.slane %v3384, %v3398
    %v3400 = vcombine.low %v3392, %v3399
    %3401 = vrot.lane.b32.xlu0 %v3400, 96
    %v3402 = vpop.permute.xlu0 %3401
    %v3403 = vsel %vm518, %v3361, 0
    %v3405 = vsel %vm518, %v3402, 0
    %3407 = vmatprep.subr.mxu0 0.0
    %3408 = vmatpush1.xpose.msra.mxu0 0.0
    %3409 = vmatprep.subr.mxu0 0.0
    %3410 = vmatpush1.xpose.msra.mxu0 0.0
    %3411 = vmatprep.subr.mxu0 0.0
    %3412 = vmatpush1.xpose.msra.mxu0 0.0
    %3413 = vmatprep.subr.mxu0 0.0
    %3414 = vmatpush1.xpose.msra.mxu0 0.0
    %3415 = vmatprep.subr.mxu0 0.0
    %3416 = vmatpush1.xpose.msra.mxu0 0.0
    %3417 = vmatprep.subr.mxu0 0.0
    %3418 = vmatpush1.xpose.msra.mxu0 0.0
    %3419 = vmatprep.subr.mxu0 0.0
    %3420 = vmatpush1.xpose.msra.mxu0 0.0
    %3421 = vmatprep.subr.mxu0 0.0
    %3422 = vmatpush1.xpose.msra.mxu0 0.0
    %3423 = vmatprep.subr.mxu0 0.0
    %3424 = vmatpush1.xpose.msra.mxu0 0.0
    %3425 = vmatprep.subr.mxu0 0.0
    %3426 = vmatpush1.xpose.msra.mxu0 0.0
    %3427 = vmatprep.subr.mxu0 0.0
    %3428 = vmatpush1.xpose.msra.mxu0 0.0
    %3429 = vmatprep.subr.mxu0 0.0
    %3430 = vmatpush1.xpose.msra.mxu0 0.0
    %3431 = vmatprep.subr.mxu0 0.0
    %3432 = vmatpush1.xpose.msra.mxu0 0.0
    %3433 = vmatprep.subr.mxu0 0.0
    %3434 = vmatpush1.xpose.msra.mxu0 0.0
    %3435 = vmatprep.subr.mxu0 0.0
    %3436 = vmatpush1.xpose.msra.mxu0 0.0
    %3437 = vmatprep.subr.mxu0 0.0
    %3438 = vmatpush1.xpose.msra.mxu0 %v3405
    %3439 = vmatprep.subr.mxu0 0.0
    %3440 = vmatpush2.xpose.msra.mxu0 0.0
    %3441 = vmatprep.subr.mxu0 0.0
    %3442 = vmatpush2.xpose.msra.mxu0 0.0
    %3443 = vmatprep.subr.mxu0 0.0
    %3444 = vmatpush2.xpose.msra.mxu0 0.0
    %3445 = vmatprep.subr.mxu0 0.0
    %3446 = vmatpush2.xpose.msra.mxu0 0.0
    %3447 = vmatprep.subr.mxu0 0.0
    %3448 = vmatpush2.xpose.msra.mxu0 0.0
    %3449 = vmatprep.subr.mxu0 0.0
    %3450 = vmatpush2.xpose.msra.mxu0 0.0
    %3451 = vmatprep.subr.mxu0 0.0
    %3452 = vmatpush2.xpose.msra.mxu0 0.0
    %3453 = vmatprep.subr.mxu0 0.0
    %3454 = vmatpush2.xpose.msra.mxu0 0.0
    %3455 = vmatprep.subr.mxu0 0.0
    %3456 = vmatpush2.xpose.msra.mxu0 0.0
    %3457 = vmatprep.subr.mxu0 0.0
    %3458 = vmatpush2.xpose.msra.mxu0 0.0
    %3459 = vmatprep.subr.mxu0 0.0
    %3460 = vmatpush2.xpose.msra.mxu0 0.0
    %3461 = vmatprep.subr.mxu0 0.0
    %3462 = vmatpush2.xpose.msra.mxu0 0.0
    %3463 = vmatprep.subr.mxu0 0.0
    %3464 = vmatpush2.xpose.msra.mxu0 0.0
    %3465 = vmatprep.subr.mxu0 0.0
    %3466 = vmatpush2.xpose.msra.mxu0 0.0
    %3467 = vmatprep.subr.mxu0 0.0
    %3468 = vmatpush2.xpose.msra.mxu0 0.0
    %3469 = vmatprep.subr.mxu0 0.0
    %3470 = vmatpush2.xpose.msra.mxu0 0.0
    %3471 = vmatprep.mubr.f32.mxu0 0.0
    %3472 = vmatmul.mubr.f32.gmra.mxu0 %v3403
    %v3473 = vpop.f32.mrf.mxu0
    %v3474 = vadd.f32 0.0, %v3473
    %v3475 = vpop.f32.mrf.mxu0
    %3476 = vdwg.mxu0
    %v3482 = vcombine.low %v3313, %v3314
    %v3483 = vcombine.low %v3315, %v3316
    %v3485 = vunpack.c.l.s4 1966171168
    %v3486 = vunpack.c.0.s8 %v3485
    %v3487 = vlaneseq
    %v3488 = vshrl.u32 %v3487, 7
    %v3489 = vsub.s32 %v3486, %v3488
    %v3490 = vrot.slane %v3482, %v3489
    %v3492 = vunpack.c.l.s4 1966171168
    %v3493 = vunpack.c.0.s8 %v3492
    %v3494 = vlaneseq
    %v3495 = vshrl.u32 %v3494, 7
    %v3496 = vsub.s32 %v3493, %v3495
    %v3497 = vrot.slane %v3483, %v3496
    %v3499 = vunpack.c.l.s4 1966171168
    %v3500 = vunpack.c.0.s8 %v3499
    %v3501 = vlaneseq
    %v3502 = vshrl.u32 %v3501, 7
    %v3503 = vsub.s32 %v3500, %v3502
    %v3504 = vrot.slane %v3317, %v3503
    %v3505 = vcombine.low %v3490, %v3497
    %v3507 = vunpack.c.l.s4 1966171168
    %v3508 = vunpack.c.0.s8 %v3507
    %v3509 = vlaneseq
    %v3510 = vshrl.u32 %v3509, 7
    %v3511 = vsub.s32 %v3508, %v3510
    %v3512 = vrot.slane %v3505, %v3511
    %v3514 = vunpack.c.l.s4 1966171168
    %v3515 = vunpack.c.0.s8 %v3514
    %v3516 = vlaneseq
    %v3517 = vshrl.u32 %v3516, 7
    %v3518 = vsub.s32 %v3515, %v3517
    %v3519 = vrot.slane %v3504, %v3518
    %v3520 = vcombine.low %v3512, %v3519
    %v3521 = vcombine.low %v3271, %v3273
    %v3522 = vcombine.low %v3275, %v3290
    %v3524 = vunpack.c.l.s4 1966171168
    %v3525 = vunpack.c.0.s8 %v3524
    %v3526 = vlaneseq
    %v3527 = vshrl.u32 %v3526, 7
    %v3528 = vsub.s32 %v3525, %v3527
    %v3529 = vrot.slane %v3521, %v3528
    %v3531 = vunpack.c.l.s4 1966171168
    %v3532 = vunpack.c.0.s8 %v3531
    %v3533 = vlaneseq
    %v3534 = vshrl.u32 %v3533, 7
    %v3535 = vsub.s32 %v3532, %v3534
    %v3536 = vrot.slane %v3522, %v3535
    %v3538 = vunpack.c.l.s4 1966171168
    %v3539 = vunpack.c.0.s8 %v3538
    %v3540 = vlaneseq
    %v3541 = vshrl.u32 %v3540, 7
    %v3542 = vsub.s32 %v3539, %v3541
    %v3543 = vrot.slane %v3297, %v3542
    %v3544 = vcombine.low %v3529, %v3536
    %v3546 = vunpack.c.l.s4 1966171168
    %v3547 = vunpack.c.0.s8 %v3546
    %v3548 = vlaneseq
    %v3549 = vshrl.u32 %v3548, 7
    %v3550 = vsub.s32 %v3547, %v3549
    %v3551 = vrot.slane %v3544, %v3550
    %v3553 = vunpack.c.l.s4 1966171168
    %v3554 = vunpack.c.0.s8 %v3553
    %v3555 = vlaneseq
    %v3556 = vshrl.u32 %v3555, 7
    %v3557 = vsub.s32 %v3554, %v3556
    %v3558 = vrot.slane %v3543, %v3557
    %v3559 = vcombine.low %v3551, %v3558
    %3560 = vrot.lane.b32.xlu0 %v3559, 96
    %v3561 = vpop.permute.xlu0 %3560
    %v3562 = vsel %vm518, %v3520, 0
    %v3564 = vsel %vm518, %v3561, 0
    %3566 = vmatprep.subr.mxu0 0.0
    %3567 = vmatpush1.xpose.msra.mxu0 0.0
    %3568 = vmatprep.subr.mxu0 0.0
    %3569 = vmatpush1.xpose.msra.mxu0 0.0
    %3570 = vmatprep.subr.mxu0 0.0
    %3571 = vmatpush1.xpose.msra.mxu0 0.0
    %3572 = vmatprep.subr.mxu0 0.0
    %3573 = vmatpush1.xpose.msra.mxu0 0.0
    %3574 = vmatprep.subr.mxu0 0.0
    %3575 = vmatpush1.xpose.msra.mxu0 0.0
    %3576 = vmatprep.subr.mxu0 0.0
    %3577 = vmatpush1.xpose.msra.mxu0 0.0
    %3578 = vmatprep.subr.mxu0 0.0
    %3579 = vmatpush1.xpose.msra.mxu0 0.0
    %3580 = vmatprep.subr.mxu0 0.0
    %3581 = vmatpush1.xpose.msra.mxu0 0.0
    %3582 = vmatprep.subr.mxu0 0.0
    %3583 = vmatpush1.xpose.msra.mxu0 0.0
    %3584 = vmatprep.subr.mxu0 0.0
    %3585 = vmatpush1.xpose.msra.mxu0 0.0
    %3586 = vmatprep.subr.mxu0 0.0
    %3587 = vmatpush1.xpose.msra.mxu0 0.0
    %3588 = vmatprep.subr.mxu0 0.0
    %3589 = vmatpush1.xpose.msra.mxu0 0.0
    %3590 = vmatprep.subr.mxu0 0.0
    %3591 = vmatpush1.xpose.msra.mxu0 0.0
    %3592 = vmatprep.subr.mxu0 0.0
    %3593 = vmatpush1.xpose.msra.mxu0 0.0
    %3594 = vmatprep.subr.mxu0 0.0
    %3595 = vmatpush1.xpose.msra.mxu0 0.0
    %3596 = vmatprep.subr.mxu0 0.0
    %3597 = vmatpush1.xpose.msra.mxu0 %v3564
    %3598 = vmatprep.subr.mxu0 0.0
    %3599 = vmatpush2.xpose.msra.mxu0 0.0
    %3600 = vmatprep.subr.mxu0 0.0
    %3601 = vmatpush2.xpose.msra.mxu0 0.0
    %3602 = vmatprep.subr.mxu0 0.0
    %3603 = vmatpush2.xpose.msra.mxu0 0.0
    %3604 = vmatprep.subr.mxu0 0.0
    %3605 = vmatpush2.xpose.msra.mxu0 0.0
    %3606 = vmatprep.subr.mxu0 0.0
    %3607 = vmatpush2.xpose.msra.mxu0 0.0
    %3608 = vmatprep.subr.mxu0 0.0
    %3609 = vmatpush2.xpose.msra.mxu0 0.0
    %3610 = vmatprep.subr.mxu0 0.0
    %3611 = vmatpush2.xpose.msra.mxu0 0.0
    %3612 = vmatprep.subr.mxu0 0.0
    %3613 = vmatpush2.xpose.msra.mxu0 0.0
    %3614 = vmatprep.subr.mxu0 0.0
    %3615 = vmatpush2.xpose.msra.mxu0 0.0
    %3616 = vmatprep.subr.mxu0 0.0
    %3617 = vmatpush2.xpose.msra.mxu0 0.0
    %3618 = vmatprep.subr.mxu0 0.0
    %3619 = vmatpush2.xpose.msra.mxu0 0.0
    %3620 = vmatprep.subr.mxu0 0.0
    %3621 = vmatpush2.xpose.msra.mxu0 0.0
    %3622 = vmatprep.subr.mxu0 0.0
    %3623 = vmatpush2.xpose.msra.mxu0 0.0
    %3624 = vmatprep.subr.mxu0 0.0
    %3625 = vmatpush2.xpose.msra.mxu0 0.0
    %3626 = vmatprep.subr.mxu0 0.0
    %3627 = vmatpush2.xpose.msra.mxu0 0.0
    %3628 = vmatprep.subr.mxu0 0.0
    %3629 = vmatpush2.xpose.msra.mxu0 0.0
    %3630 = vmatprep.mubr.f32.mxu0 0.0
    %3631 = vmatmul.mubr.f32.gmra.mxu0 %v3562
    %v3632 = vpop.f32.mrf.mxu0
    %v3633 = vadd.f32 0.0, %v3632
    %v3634 = vpop.f32.mrf.mxu0
    %3635 = vdwg.mxu0
    %v3636 = vsel %vm752, %v3474, -inf
    %3637 = vmax.xlane.f32.xlu0 %v3636
    %v3638 = vpop.xlane.xlu0 %3637
    %v3639 = vsel %vm752, %v3633, -inf
    %3640 = vmax.xlane.f32.xlu0 %v3639
    %v3641 = vpop.xlane.xlu0 %3640
    %v3642 = vsub.f32 %v3474, %v3638
    %v3643 = vsub.f32 %v3633, %v3641
    %v3644 = vmul.f32 %v3642, 1.442695
    %v3645 = vpow.pop %v3644
    %v3646 = vmul.f32 %v3643, 1.442695
    %v3647 = vpow.pop %v3646
    %v3648 = vsel %vm752, %v3645, 0.0
    %3649 = vadd.xlane.f32.xlu0 %v3648
    %v3650 = vpop.xlane.xlu0 %3649
    %v3651 = vsel %vm752, %v3647, 0.0
    %3652 = vadd.xlane.f32.xlu0 %v3651
    %v3653 = vpop.xlane.xlu0 %3652
    %v3654 = vrcp.pop %v3650
    %v3655 = vmul.f32 %v3645, %v3654
    %v3656 = vrcp.pop %v3653
    %v3657 = vmul.f32 %v3647, %v3656
    %3658 = vrot.lane.b32.xlu0 %v3400, 64
    %v3659 = vpop.permute.xlu0 %3658
    %v3661 = vsel %vm777, %v3655, 0
    %v3663 = vsel %vm169, %v3659, 0
    %3665 = vmatprep.subr.mxu0 0.0
    %3666 = vmatpush1.msra.mxu0 0.0
    %3667 = vmatprep.subr.mxu0 0.0
    %3668 = vmatpush1.msra.mxu0 0.0
    %3669 = vmatprep.subr.mxu0 0.0
    %3670 = vmatpush1.msra.mxu0 0.0
    %3671 = vmatprep.subr.mxu0 0.0
    %3672 = vmatpush1.msra.mxu0 0.0
    %3673 = vmatprep.subr.mxu0 0.0
    %3674 = vmatpush1.msra.mxu0 0.0
    %3675 = vmatprep.subr.mxu0 0.0
    %3676 = vmatpush1.msra.mxu0 0.0
    %3677 = vmatprep.subr.mxu0 0.0
    %3678 = vmatpush1.msra.mxu0 0.0
    %3679 = vmatprep.subr.mxu0 0.0
    %3680 = vmatpush1.msra.mxu0 0.0
    %3681 = vmatprep.subr.mxu0 0.0
    %3682 = vmatpush1.msra.mxu0 0.0
    %3683 = vmatprep.subr.mxu0 0.0
    %3684 = vmatpush1.msra.mxu0 0.0
    %3685 = vmatprep.subr.mxu0 0.0
    %3686 = vmatpush1.msra.mxu0 0.0
    %3687 = vmatprep.subr.mxu0 0.0
    %3688 = vmatpush1.msra.mxu0 0.0
    %3689 = vmatprep.subr.mxu0 0.0
    %3690 = vmatpush1.msra.mxu0 0.0
    %3691 = vmatprep.subr.mxu0 0.0
    %3692 = vmatpush1.msra.mxu0 0.0
    %3693 = vmatprep.subr.mxu0 0.0
    %3694 = vmatpush1.msra.mxu0 0.0
    %3695 = vmatprep.subr.mxu0 0.0
    %3696 = vmatpush1.msra.mxu0 %v3663
    %3697 = vmatprep.subr.mxu0 0.0
    %3698 = vmatpush2.msra.mxu0 0.0
    %3699 = vmatprep.subr.mxu0 0.0
    %3700 = vmatpush2.msra.mxu0 0.0
    %3701 = vmatprep.subr.mxu0 0.0
    %3702 = vmatpush2.msra.mxu0 0.0
    %3703 = vmatprep.subr.mxu0 0.0
    %3704 = vmatpush2.msra.mxu0 0.0
    %3705 = vmatprep.subr.mxu0 0.0
    %3706 = vmatpush2.msra.mxu0 0.0
    %3707 = vmatprep.subr.mxu0 0.0
    %3708 = vmatpush2.msra.mxu0 0.0
    %3709 = vmatprep.subr.mxu0 0.0
    %3710 = vmatpush2.msra.mxu0 0.0
    %3711 = vmatprep.subr.mxu0 0.0
    %3712 = vmatpush2.msra.mxu0 0.0
    %3713 = vmatprep.subr.mxu0 0.0
    %3714 = vmatpush2.msra.mxu0 0.0
    %3715 = vmatprep.subr.mxu0 0.0
    %3716 = vmatpush2.msra.mxu0 0.0
    %3717 = vmatprep.subr.mxu0 0.0
    %3718 = vmatpush2.msra.mxu0 0.0
    %3719 = vmatprep.subr.mxu0 0.0
    %3720 = vmatpush2.msra.mxu0 0.0
    %3721 = vmatprep.subr.mxu0 0.0
    %3722 = vmatpush2.msra.mxu0 0.0
    %3723 = vmatprep.subr.mxu0 0.0
    %3724 = vmatpush2.msra.mxu0 0.0
    %3725 = vmatprep.subr.mxu0 0.0
    %3726 = vmatpush2.msra.mxu0 0.0
    %3727 = vmatprep.subr.mxu0 0.0
    %3728 = vmatpush2.msra.mxu0 0.0
    %3729 = vmatprep.mubr.f32.mxu0 0.0
    %3730 = vmatmul.mubr.f32.gmra.mxu0 %v3661
    %v3731 = vpop.f32.mrf.mxu0
    %v3732 = vadd.f32 0.0, %v3731
    %v3733 = vpop.f32.mrf.mxu0
    %3734 = vdwg.mxu0
    %3735 = vrot.lane.b32.xlu0 %v3559, 64
    %v3736 = vpop.permute.xlu0 %3735
    %v3738 = vsel %vm777, %v3657, 0
    %v3740 = vsel %vm169, %v3736, 0
    %3742 = vmatprep.subr.mxu0 0.0
    %3743 = vmatpush1.msra.mxu0 0.0
    %3744 = vmatprep.subr.mxu0 0.0
    %3745 = vmatpush1.msra.mxu0 0.0
    %3746 = vmatprep.subr.mxu0 0.0
    %3747 = vmatpush1.msra.mxu0 0.0
    %3748 = vmatprep.subr.mxu0 0.0
    %3749 = vmatpush1.msra.mxu0 0.0
    %3750 = vmatprep.subr.mxu0 0.0
    %3751 = vmatpush1.msra.mxu0 0.0
    %3752 = vmatprep.subr.mxu0 0.0
    %3753 = vmatpush1.msra.mxu0 0.0
    %3754 = vmatprep.subr.mxu0 0.0
    %3755 = vmatpush1.msra.mxu0 0.0
    %3756 = vmatprep.subr.mxu0 0.0
    %3757 = vmatpush1.msra.mxu0 0.0
    %3758 = vmatprep.subr.mxu0 0.0
    %3759 = vmatpush1.msra.mxu0 0.0
    %3760 = vmatprep.subr.mxu0 0.0
    %3761 = vmatpush1.msra.mxu0 0.0
    %3762 = vmatprep.subr.mxu0 0.0
    %3763 = vmatpush1.msra.mxu0 0.0
    %3764 = vmatprep.subr.mxu0 0.0
    %3765 = vmatpush1.msra.mxu0 0.0
    %3766 = vmatprep.subr.mxu0 0.0
    %3767 = vmatpush1.msra.mxu0 0.0
    %3768 = vmatprep.subr.mxu0 0.0
    %3769 = vmatpush1.msra.mxu0 0.0
    %3770 = vmatprep.subr.mxu0 0.0
    %3771 = vmatpush1.msra.mxu0 0.0
    %3772 = vmatprep.subr.mxu0 0.0
    %3773 = vmatpush1.msra.mxu0 %v3740
    %3774 = vmatprep.subr.mxu0 0.0
    %3775 = vmatpush2.msra.mxu0 0.0
    %3776 = vmatprep.subr.mxu0 0.0
    %3777 = vmatpush2.msra.mxu0 0.0
    %3778 = vmatprep.subr.mxu0 0.0
    %3779 = vmatpush2.msra.mxu0 0.0
    %3780 = vmatprep.subr.mxu0 0.0
    %3781 = vmatpush2.msra.mxu0 0.0
    %3782 = vmatprep.subr.mxu0 0.0
    %3783 = vmatpush2.msra.mxu0 0.0
    %3784 = vmatprep.subr.mxu0 0.0
    %3785 = vmatpush2.msra.mxu0 0.0
    %3786 = vmatprep.subr.mxu0 0.0
    %3787 = vmatpush2.msra.mxu0 0.0
    %3788 = vmatprep.subr.mxu0 0.0
    %3789 = vmatpush2.msra.mxu0 0.0
    %3790 = vmatprep.subr.mxu0 0.0
    %3791 = vmatpush2.msra.mxu0 0.0
    %3792 = vmatprep.subr.mxu0 0.0
    %3793 = vmatpush2.msra.mxu0 0.0
    %3794 = vmatprep.subr.mxu0 0.0
    %3795 = vmatpush2.msra.mxu0 0.0
    %3796 = vmatprep.subr.mxu0 0.0
    %3797 = vmatpush2.msra.mxu0 0.0
    %3798 = vmatprep.subr.mxu0 0.0
    %3799 = vmatpush2.msra.mxu0 0.0
    %3800 = vmatprep.subr.mxu0 0.0
    %3801 = vmatpush2.msra.mxu0 0.0
    %3802 = vmatprep.subr.mxu0 0.0
    %3803 = vmatpush2.msra.mxu0 0.0
    %3804 = vmatprep.subr.mxu0 0.0
    %3805 = vmatpush2.msra.mxu0 0.0
    %3806 = vmatprep.mubr.f32.mxu0 0.0
    %3807 = vmatmul.mubr.f32.gmra.mxu0 %v3738
    %v3808 = vpop.f32.mrf.mxu0
    %v3809 = vadd.f32 0.0, %v3808
    %v3810 = vpop.f32.mrf.mxu0
    %3811 = vdwg.mxu0
    %v3814 = vcombine.high %v3732, %v3732
    %v3816 = vunpack.c.l.s4 1966171168
    %v3817 = vunpack.c.0.s8 %v3816
    %v3818 = vlaneseq
    %v3819 = vshrl.u32 %v3818, 7
    %v3820 = vsub.s32 %v3817, %v3819
    %v3821 = vrot.slane %v3732, %v3820
    %v3823 = vunpack.c.l.s4 1966171168
    %v3824 = vunpack.c.0.s8 %v3823
    %v3825 = vlaneseq
    %v3826 = vshrl.u32 %v3825, 7
    %v3827 = vsub.s32 %v3824, %v3826
    %v3828 = vrot.slane %v3814, %v3827
    %v3829 = vcombine.high %v3821, %v3821
    %v3831 = vunpack.c.l.s4 1966171168
    %v3832 = vunpack.c.0.s8 %v3831
    %v3833 = vlaneseq
    %v3834 = vshrl.u32 %v3833, 7
    %v3835 = vsub.s32 %v3832, %v3834
    %v3836 = vrot.slane %v3821, %v3835
    %v3838 = vunpack.c.l.s4 1966171168
    %v3839 = vunpack.c.0.s8 %v3838
    %v3840 = vlaneseq
    %v3841 = vshrl.u32 %v3840, 7
    %v3842 = vsub.s32 %v3839, %v3841
    %v3843 = vrot.slane %v3828, %v3842
    %v3845 = vunpack.c.l.s4 1966171168
    %v3846 = vunpack.c.0.s8 %v3845
    %v3847 = vlaneseq
    %v3848 = vshrl.u32 %v3847, 7
    %v3849 = vsub.s32 %v3846, %v3848
    %v3850 = vrot.slane %v3829, %v3849
    %v3851 = vcombine.high %v3836, %v3836
    %v3852 = vcombine.high %v3850, %v3850
    %v3853 = vcombine.high %v3809, %v3809
    %v3855 = vunpack.c.l.s4 1966171168
    %v3856 = vunpack.c.0.s8 %v3855
    %v3857 = vlaneseq
    %v3858 = vshrl.u32 %v3857, 7
    %v3859 = vsub.s32 %v3856, %v3858
    %v3860 = vrot.slane %v3809, %v3859
    %v3862 = vunpack.c.l.s4 1966171168
    %v3863 = vunpack.c.0.s8 %v3862
    %v3864 = vlaneseq
    %v3865 = vshrl.u32 %v3864, 7
    %v3866 = vsub.s32 %v3863, %v3865
    %v3867 = vrot.slane %v3853, %v3866
    %v3868 = vcombine.high %v3860, %v3860
    %v3870 = vunpack.c.l.s4 1966171168
    %v3871 = vunpack.c.0.s8 %v3870
    %v3872 = vlaneseq
    %v3873 = vshrl.u32 %v3872, 7
    %v3874 = vsub.s32 %v3871, %v3873
    %v3875 = vrot.slane %v3860, %v3874
    %v3877 = vunpack.c.l.s4 1966171168
    %v3878 = vunpack.c.0.s8 %v3877
    %v3879 = vlaneseq
    %v3880 = vshrl.u32 %v3879, 7
    %v3881 = vsub.s32 %v3878, %v3880
    %v3882 = vrot.slane %v3867, %v3881
    %v3884 = vunpack.c.l.s4 1966171168
    %v3885 = vunpack.c.0.s8 %v3884
    %v3886 = vlaneseq
    %v3887 = vshrl.u32 %v3886, 7
    %v3888 = vsub.s32 %v3885, %v3887
    %v3889 = vrot.slane %v3868, %v3888
    %v3890 = vcombine.high %v3875, %v3875
    %v3891 = vcombine.high %v3889, %v3889
    %3892 = vrot.lane.b32.xlu0 %v3361, 120
    %v3893 = vpop.permute.xlu0 %3892
    %3894 = vrot.lane.b32.xlu0 %v3400, 88
    %v3895 = vpop.permute.xlu0 %3894
    %v3896 = vsel %vm518, %v3893, 0
    %v3898 = vsel %vm518, %v3895, 0
    %3900 = vmatprep.subr.mxu0 0.0
    %3901 = vmatpush1.xpose.msra.mxu0 0.0
    %3902 = vmatprep.subr.mxu0 0.0
    %3903 = vmatpush1.xpose.msra.mxu0 0.0
    %3904 = vmatprep.subr.mxu0 0.0
    %3905 = vmatpush1.xpose.msra.mxu0 0.0
    %3906 = vmatprep.subr.mxu0 0.0
    %3907 = vmatpush1.xpose.msra.mxu0 0.0
    %3908 = vmatprep.subr.mxu0 0.0
    %3909 = vmatpush1.xpose.msra.mxu0 0.0
    %3910 = vmatprep.subr.mxu0 0.0
    %3911 = vmatpush1.xpose.msra.mxu0 0.0
    %3912 = vmatprep.subr.mxu0 0.0
    %3913 = vmatpush1.xpose.msra.mxu0 0.0
    %3914 = vmatprep.subr.mxu0 0.0
    %3915 = vmatpush1.xpose.msra.mxu0 0.0
    %3916 = vmatprep.subr.mxu0 0.0
    %3917 = vmatpush1.xpose.msra.mxu0 0.0
    %3918 = vmatprep.subr.mxu0 0.0
    %3919 = vmatpush1.xpose.msra.mxu0 0.0
    %3920 = vmatprep.subr.mxu0 0.0
    %3921 = vmatpush1.xpose.msra.mxu0 0.0
    %3922 = vmatprep.subr.mxu0 0.0
    %3923 = vmatpush1.xpose.msra.mxu0 0.0
    %3924 = vmatprep.subr.mxu0 0.0
    %3925 = vmatpush1.xpose.msra.mxu0 0.0
    %3926 = vmatprep.subr.mxu0 0.0
    %3927 = vmatpush1.xpose.msra.mxu0 0.0
    %3928 = vmatprep.subr.mxu0 0.0
    %3929 = vmatpush1.xpose.msra.mxu0 0.0
    %3930 = vmatprep.subr.mxu0 0.0
    %3931 = vmatpush1.xpose.msra.mxu0 %v3898
    %3932 = vmatprep.subr.mxu0 0.0
    %3933 = vmatpush2.xpose.msra.mxu0 0.0
    %3934 = vmatprep.subr.mxu0 0.0
    %3935 = vmatpush2.xpose.msra.mxu0 0.0
    %3936 = vmatprep.subr.mxu0 0.0
    %3937 = vmatpush2.xpose.msra.mxu0 0.0
    %3938 = vmatprep.subr.mxu0 0.0
    %3939 = vmatpush2.xpose.msra.mxu0 0.0
    %3940 = vmatprep.subr.mxu0 0.0
    %3941 = vmatpush2.xpose.msra.mxu0 0.0
    %3942 = vmatprep.subr.mxu0 0.0
    %3943 = vmatpush2.xpose.msra.mxu0 0.0
    %3944 = vmatprep.subr.mxu0 0.0
    %3945 = vmatpush2.xpose.msra.mxu0 0.0
    %3946 = vmatprep.subr.mxu0 0.0
    %3947 = vmatpush2.xpose.msra.mxu0 0.0
    %3948 = vmatprep.subr.mxu0 0.0
    %3949 = vmatpush2.xpose.msra.mxu0 0.0
    %3950 = vmatprep.subr.mxu0 0.0
    %3951 = vmatpush2.xpose.msra.mxu0 0.0
    %3952 = vmatprep.subr.mxu0 0.0
    %3953 = vmatpush2.xpose.msra.mxu0 0.0
    %3954 = vmatprep.subr.mxu0 0.0
    %3955 = vmatpush2.xpose.msra.mxu0 0.0
    %3956 = vmatprep.subr.mxu0 0.0
    %3957 = vmatpush2.xpose.msra.mxu0 0.0
    %3958 = vmatprep.subr.mxu0 0.0
    %3959 = vmatpush2.xpose.msra.mxu0 0.0
    %3960 = vmatprep.subr.mxu0 0.0
    %3961 = vmatpush2.xpose.msra.mxu0 0.0
    %3962 = vmatprep.subr.mxu0 0.0
    %3963 = vmatpush2.xpose.msra.mxu0 0.0
    %3964 = vmatprep.mubr.f32.mxu0 0.0
    %3965 = vmatmul.mubr.f32.gmra.mxu0 %v3896
    %v3966 = vpop.f32.mrf.mxu0
    %v3967 = vadd.f32 0.0, %v3966
    %v3968 = vpop.f32.mrf.mxu0
    %3969 = vdwg.mxu0
    %3970 = vrot.lane.b32.xlu0 %v3520, 120
    %v3971 = vpop.permute.xlu0 %3970
    %3972 = vrot.lane.b32.xlu0 %v3559, 88
    %v3973 = vpop.permute.xlu0 %3972
    %v3974 = vsel %vm518, %v3971, 0
    %v3976 = vsel %vm518, %v3973, 0
    %3978 = vmatprep.subr.mxu0 0.0
    %3979 = vmatpush1.xpose.msra.mxu0 0.0
    %3980 = vmatprep.subr.mxu0 0.0
    %3981 = vmatpush1.xpose.msra.mxu0 0.0
    %3982 = vmatprep.subr.mxu0 0.0
    %3983 = vmatpush1.xpose.msra.mxu0 0.0
    %3984 = vmatprep.subr.mxu0 0.0
    %3985 = vmatpush1.xpose.msra.mxu0 0.0
    %3986 = vmatprep.subr.mxu0 0.0
    %3987 = vmatpush1.xpose.msra.mxu0 0.0
    %3988 = vmatprep.subr.mxu0 0.0
    %3989 = vmatpush1.xpose.msra.mxu0 0.0
    %3990 = vmatprep.subr.mxu0 0.0
    %3991 = vmatpush1.xpose.msra.mxu0 0.0
    %3992 = vmatprep.subr.mxu0 0.0
    %3993 = vmatpush1.xpose.msra.mxu0 0.0
    %3994 = vmatprep.subr.mxu0 0.0
    %3995 = vmatpush1.xpose.msra.mxu0 0.0
    %3996 = vmatprep.subr.mxu0 0.0
    %3997 = vmatpush1.xpose.msra.mxu0 0.0
    %3998 = vmatprep.subr.mxu0 0.0
    %3999 = vmatpush1.xpose.msra.mxu0 0.0
    %4000 = vmatprep.subr.mxu0 0.0
    %4001 = vmatpush1.xpose.msra.mxu0 0.0
    %4002 = vmatprep.subr.mxu0 0.0
    %4003 = vmatpush1.xpose.msra.mxu0 0.0
    %4004 = vmatprep.subr.mxu0 0.0
    %4005 = vmatpush1.xpose.msra.mxu0 0.0
    %4006 = vmatprep.subr.mxu0 0.0
    %4007 = vmatpush1.xpose.msra.mxu0 0.0
    %4008 = vmatprep.subr.mxu0 0.0
    %4009 = vmatpush1.xpose.msra.mxu0 %v3976
    %4010 = vmatprep.subr.mxu0 0.0
    %4011 = vmatpush2.xpose.msra.mxu0 0.0
    %4012 = vmatprep.subr.mxu0 0.0
    %4013 = vmatpush2.xpose.msra.mxu0 0.0
    %4014 = vmatprep.subr.mxu0 0.0
    %4015 = vmatpush2.xpose.msra.mxu0 0.0
    %4016 = vmatprep.subr.mxu0 0.0
    %4017 = vmatpush2.xpose.msra.mxu0 0.0
    %4018 = vmatprep.subr.mxu0 0.0
    %4019 = vmatpush2.xpose.msra.mxu0 0.0
    %4020 = vmatprep.subr.mxu0 0.0
    %4021 = vmatpush2.xpose.msra.mxu0 0.0
    %4022 = vmatprep.subr.mxu0 0.0
    %4023 = vmatpush2.xpose.msra.mxu0 0.0
    %4024 = vmatprep.subr.mxu0 0.0
    %4025 = vmatpush2.xpose.msra.mxu0 0.0
    %4026 = vmatprep.subr.mxu0 0.0
    %4027 = vmatpush2.xpose.msra.mxu0 0.0
    %4028 = vmatprep.subr.mxu0 0.0
    %4029 = vmatpush2.xpose.msra.mxu0 0.0
    %4030 = vmatprep.subr.mxu0 0.0
    %4031 = vmatpush2.xpose.msra.mxu0 0.0
    %4032 = vmatprep.subr.mxu0 0.0
    %4033 = vmatpush2.xpose.msra.mxu0 0.0
    %4034 = vmatprep.subr.mxu0 0.0
    %4035 = vmatpush2.xpose.msra.mxu0 0.0
    %4036 = vmatprep.subr.mxu0 0.0
    %4037 = vmatpush2.xpose.msra.mxu0 0.0
    %4038 = vmatprep.subr.mxu0 0.0
    %4039 = vmatpush2.xpose.msra.mxu0 0.0
    %4040 = vmatprep.subr.mxu0 0.0
    %4041 = vmatpush2.xpose.msra.mxu0 0.0
    %4042 = vmatprep.mubr.f32.mxu0 0.0
    %4043 = vmatmul.mubr.f32.gmra.mxu0 %v3974
    %v4044 = vpop.f32.mrf.mxu0
    %v4045 = vadd.f32 0.0, %v4044
    %v4046 = vpop.f32.mrf.mxu0
    %4047 = vdwg.mxu0
    %v4048 = vsel %vm752, %v3967, -inf
    %4049 = vmax.xlane.f32.xlu0 %v4048
    %v4050 = vpop.xlane.xlu0 %4049
    %v4051 = vsel %vm752, %v4045, -inf
    %4052 = vmax.xlane.f32.xlu0 %v4051
    %v4053 = vpop.xlane.xlu0 %4052
    %v4054 = vsub.f32 %v3967, %v4050
    %v4055 = vsub.f32 %v4045, %v4053
    %v4056 = vmul.f32 %v4054, 1.442695
    %v4057 = vpow.pop %v4056
    %v4058 = vmul.f32 %v4055, 1.442695
    %v4059 = vpow.pop %v4058
    %v4060 = vsel %vm752, %v4057, 0.0
    %4061 = vadd.xlane.f32.xlu0 %v4060
    %v4062 = vpop.xlane.xlu0 %4061
    %v4063 = vsel %vm752, %v4059, 0.0
    %4064 = vadd.xlane.f32.xlu0 %v4063
    %v4065 = vpop.xlane.xlu0 %4064
    %v4066 = vrcp.pop %v4062
    %v4067 = vmul.f32 %v4057, %v4066
    %v4068 = vrcp.pop %v4065
    %v4069 = vmul.f32 %v4059, %v4068
    %4070 = vrot.lane.b32.xlu0 %v3400, 56
    %v4071 = vpop.permute.xlu0 %4070
    %v4073 = vsel %vm777, %v4067, 0
    %v4075 = vsel %vm169, %v4071, 0
    %4077 = vmatprep.subr.mxu0 0.0
    %4078 = vmatpush1.msra.mxu0 0.0
    %4079 = vmatprep.subr.mxu0 0.0
    %4080 = vmatpush1.msra.mxu0 0.0
    %4081 = vmatprep.subr.mxu0 0.0
    %4082 = vmatpush1.msra.mxu0 0.0
    %4083 = vmatprep.subr.mxu0 0.0
    %4084 = vmatpush1.msra.mxu0 0.0
    %4085 = vmatprep.subr.mxu0 0.0
    %4086 = vmatpush1.msra.mxu0 0.0
    %4087 = vmatprep.subr.mxu0 0.0
    %4088 = vmatpush1.msra.mxu0 0.0
    %4089 = vmatprep.subr.mxu0 0.0
    %4090 = vmatpush1.msra.mxu0 0.0
    %4091 = vmatprep.subr.mxu0 0.0
    %4092 = vmatpush1.msra.mxu0 0.0
    %4093 = vmatprep.subr.mxu0 0.0
    %4094 = vmatpush1.msra.mxu0 0.0
    %4095 = vmatprep.subr.mxu0 0.0
    %4096 = vmatpush1.msra.mxu0 0.0
    %4097 = vmatprep.subr.mxu0 0.0
    %4098 = vmatpush1.msra.mxu0 0.0
    %4099 = vmatprep.subr.mxu0 0.0
    %4100 = vmatpush1.msra.mxu0 0.0
    %4101 = vmatprep.subr.mxu0 0.0
    %4102 = vmatpush1.msra.mxu0 0.0
    %4103 = vmatprep.subr.mxu0 0.0
    %4104 = vmatpush1.msra.mxu0 0.0
    %4105 = vmatprep.subr.mxu0 0.0
    %4106 = vmatpush1.msra.mxu0 0.0
    %4107 = vmatprep.subr.mxu0 0.0
    %4108 = vmatpush1.msra.mxu0 %v4075
    %4109 = vmatprep.subr.mxu0 0.0
    %4110 = vmatpush2.msra.mxu0 0.0
    %4111 = vmatprep.subr.mxu0 0.0
    %4112 = vmatpush2.msra.mxu0 0.0
    %4113 = vmatprep.subr.mxu0 0.0
    %4114 = vmatpush2.msra.mxu0 0.0
    %4115 = vmatprep.subr.mxu0 0.0
    %4116 = vmatpush2.msra.mxu0 0.0
    %4117 = vmatprep.subr.mxu0 0.0
    %4118 = vmatpush2.msra.mxu0 0.0
    %4119 = vmatprep.subr.mxu0 0.0
    %4120 = vmatpush2.msra.mxu0 0.0
    %4121 = vmatprep.subr.mxu0 0.0
    %4122 = vmatpush2.msra.mxu0 0.0
    %4123 = vmatprep.subr.mxu0 0.0
    %4124 = vmatpush2.msra.mxu0 0.0
    %4125 = vmatprep.subr.mxu0 0.0
    %4126 = vmatpush2.msra.mxu0 0.0
    %4127 = vmatprep.subr.mxu0 0.0
    %4128 = vmatpush2.msra.mxu0 0.0
    %4129 = vmatprep.subr.mxu0 0.0
    %4130 = vmatpush2.msra.mxu0 0.0
    %4131 = vmatprep.subr.mxu0 0.0
    %4132 = vmatpush2.msra.mxu0 0.0
    %4133 = vmatprep.subr.mxu0 0.0
    %4134 = vmatpush2.msra.mxu0 0.0
    %4135 = vmatprep.subr.mxu0 0.0
    %4136 = vmatpush2.msra.mxu0 0.0
    %4137 = vmatprep.subr.mxu0 0.0
    %4138 = vmatpush2.msra.mxu0 0.0
    %4139 = vmatprep.subr.mxu0 0.0
    %4140 = vmatpush2.msra.mxu0 0.0
    %4141 = vmatprep.mubr.f32.mxu0 0.0
    %4142 = vmatmul.mubr.f32.gmra.mxu0 %v4073
    %v4143 = vpop.f32.mrf.mxu0
    %v4144 = vadd.f32 0.0, %v4143
    %v4145 = vpop.f32.mrf.mxu0
    %4146 = vdwg.mxu0
    %4147 = vrot.lane.b32.xlu0 %v3559, 56
    %v4148 = vpop.permute.xlu0 %4147
    %v4150 = vsel %vm777, %v4069, 0
    %v4152 = vsel %vm169, %v4148, 0
    %4154 = vmatprep.subr.mxu0 0.0
    %4155 = vmatpush1.msra.mxu0 0.0
    %4156 = vmatprep.subr.mxu0 0.0
    %4157 = vmatpush1.msra.mxu0 0.0
    %4158 = vmatprep.subr.mxu0 0.0
    %4159 = vmatpush1.msra.mxu0 0.0
    %4160 = vmatprep.subr.mxu0 0.0
    %4161 = vmatpush1.msra.mxu0 0.0
    %4162 = vmatprep.subr.mxu0 0.0
    %4163 = vmatpush1.msra.mxu0 0.0
    %4164 = vmatprep.subr.mxu0 0.0
    %4165 = vmatpush1.msra.mxu0 0.0
    %4166 = vmatprep.subr.mxu0 0.0
    %4167 = vmatpush1.msra.mxu0 0.0
    %4168 = vmatprep.subr.mxu0 0.0
    %4169 = vmatpush1.msra.mxu0 0.0
    %4170 = vmatprep.subr.mxu0 0.0
    %4171 = vmatpush1.msra.mxu0 0.0
    %4172 = vmatprep.subr.mxu0 0.0
    %4173 = vmatpush1.msra.mxu0 0.0
    %4174 = vmatprep.subr.mxu0 0.0
    %4175 = vmatpush1.msra.mxu0 0.0
    %4176 = vmatprep.subr.mxu0 0.0
    %4177 = vmatpush1.msra.mxu0 0.0
    %4178 = vmatprep.subr.mxu0 0.0
    %4179 = vmatpush1.msra.mxu0 0.0
    %4180 = vmatprep.subr.mxu0 0.0
    %4181 = vmatpush1.msra.mxu0 0.0
    %4182 = vmatprep.subr.mxu0 0.0
    %4183 = vmatpush1.msra.mxu0 0.0
    %4184 = vmatprep.subr.mxu0 0.0
    %4185 = vmatpush1.msra.mxu0 %v4152
    %4186 = vmatprep.subr.mxu0 0.0
    %4187 = vmatpush2.msra.mxu0 0.0
    %4188 = vmatprep.subr.mxu0 0.0
    %4189 = vmatpush2.msra.mxu0 0.0
    %4190 = vmatprep.subr.mxu0 0.0
    %4191 = vmatpush2.msra.mxu0 0.0
    %4192 = vmatprep.subr.mxu0 0.0
    %4193 = vmatpush2.msra.mxu0 0.0
    %4194 = vmatprep.subr.mxu0 0.0
    %4195 = vmatpush2.msra.mxu0 0.0
    %4196 = vmatprep.subr.mxu0 0.0
    %4197 = vmatpush2.msra.mxu0 0.0
    %4198 = vmatprep.subr.mxu0 0.0
    %4199 = vmatpush2.msra.mxu0 0.0
    %4200 = vmatprep.subr.mxu0 0.0
    %4201 = vmatpush2.msra.mxu0 0.0
    %4202 = vmatprep.subr.mxu0 0.0
    %4203 = vmatpush2.msra.mxu0 0.0
    %4204 = vmatprep.subr.mxu0 0.0
    %4205 = vmatpush2.msra.mxu0 0.0
    %4206 = vmatprep.subr.mxu0 0.0
    %4207 = vmatpush2.msra.mxu0 0.0
    %4208 = vmatprep.subr.mxu0 0.0
    %4209 = vmatpush2.msra.mxu0 0.0
    %4210 = vmatprep.subr.mxu0 0.0
    %4211 = vmatpush2.msra.mxu0 0.0
    %4212 = vmatprep.subr.mxu0 0.0
    %4213 = vmatpush2.msra.mxu0 0.0
    %4214 = vmatprep.subr.mxu0 0.0
    %4215 = vmatpush2.msra.mxu0 0.0
    %4216 = vmatprep.subr.mxu0 0.0
    %4217 = vmatpush2.msra.mxu0 0.0
    %4218 = vmatprep.mubr.f32.mxu0 0.0
    %4219 = vmatmul.mubr.f32.gmra.mxu0 %v4150
    %v4220 = vpop.f32.mrf.mxu0
    %v4221 = vadd.f32 0.0, %v4220
    %v4222 = vpop.f32.mrf.mxu0
    %4223 = vdwg.mxu0
    %v4226 = vcombine.high %v4144, %v4144
    %v4228 = vunpack.c.l.s4 1966171168
    %v4229 = vunpack.c.0.s8 %v4228
    %v4230 = vlaneseq
    %v4231 = vshrl.u32 %v4230, 7
    %v4232 = vsub.s32 %v4229, %v4231
    %v4233 = vrot.slane %v4144, %v4232
    %v4235 = vunpack.c.l.s4 1966171168
    %v4236 = vunpack.c.0.s8 %v4235
    %v4237 = vlaneseq
    %v4238 = vshrl.u32 %v4237, 7
    %v4239 = vsub.s32 %v4236, %v4238
    %v4240 = vrot.slane %v4226, %v4239
    %v4241 = vcombine.high %v4233, %v4233
    %v4243 = vunpack.c.l.s4 1966171168
    %v4244 = vunpack.c.0.s8 %v4243
    %v4245 = vlaneseq
    %v4246 = vshrl.u32 %v4245, 7
    %v4247 = vsub.s32 %v4244, %v4246
    %v4248 = vrot.slane %v4233, %v4247
    %v4250 = vunpack.c.l.s4 1966171168
    %v4251 = vunpack.c.0.s8 %v4250
    %v4252 = vlaneseq
    %v4253 = vshrl.u32 %v4252, 7
    %v4254 = vsub.s32 %v4251, %v4253
    %v4255 = vrot.slane %v4240, %v4254
    %v4257 = vunpack.c.l.s4 1966171168
    %v4258 = vunpack.c.0.s8 %v4257
    %v4259 = vlaneseq
    %v4260 = vshrl.u32 %v4259, 7
    %v4261 = vsub.s32 %v4258, %v4260
    %v4262 = vrot.slane %v4241, %v4261
    %v4263 = vcombine.high %v4248, %v4248
    %v4264 = vcombine.high %v4262, %v4262
    %v4265 = vcombine.high %v4221, %v4221
    %v4267 = vunpack.c.l.s4 1966171168
    %v4268 = vunpack.c.0.s8 %v4267
    %v4269 = vlaneseq
    %v4270 = vshrl.u32 %v4269, 7
    %v4271 = vsub.s32 %v4268, %v4270
    %v4272 = vrot.slane %v4221, %v4271
    %v4274 = vunpack.c.l.s4 1966171168
    %v4275 = vunpack.c.0.s8 %v4274
    %v4276 = vlaneseq
    %v4277 = vshrl.u32 %v4276, 7
    %v4278 = vsub.s32 %v4275, %v4277
    %v4279 = vrot.slane %v4265, %v4278
    %v4280 = vcombine.high %v4272, %v4272
    %v4282 = vunpack.c.l.s4 1966171168
    %v4283 = vunpack.c.0.s8 %v4282
    %v4284 = vlaneseq
    %v4285 = vshrl.u32 %v4284, 7
    %v4286 = vsub.s32 %v4283, %v4285
    %v4287 = vrot.slane %v4272, %v4286
    %v4289 = vunpack.c.l.s4 1966171168
    %v4290 = vunpack.c.0.s8 %v4289
    %v4291 = vlaneseq
    %v4292 = vshrl.u32 %v4291, 7
    %v4293 = vsub.s32 %v4290, %v4292
    %v4294 = vrot.slane %v4279, %v4293
    %v4296 = vunpack.c.l.s4 1966171168
    %v4297 = vunpack.c.0.s8 %v4296
    %v4298 = vlaneseq
    %v4299 = vshrl.u32 %v4298, 7
    %v4300 = vsub.s32 %v4297, %v4299
    %v4301 = vrot.slane %v4280, %v4300
    %v4302 = vcombine.high %v4287, %v4287
    %v4303 = vcombine.high %v4301, %v4301
    %v4304 = vcombine.low %v4248, %v4262
    %v4305 = vcombine.low %v4263, %v4264
    %v4306 = vcombine.low %v4255, %v4287
    %v4307 = vcombine.low %v4301, %v4302
    %v4309 = vunpack.c.l.s4 1966171168
    %v4310 = vunpack.c.0.s8 %v4309
    %v4311 = vlaneseq
    %v4312 = vshrl.u32 %v4311, 7
    %v4313 = vsub.s32 %v4310, %v4312
    %v4314 = vrot.slane %v4304, %v4313
    %v4316 = vunpack.c.l.s4 1966171168
    %v4317 = vunpack.c.0.s8 %v4316
    %v4318 = vlaneseq
    %v4319 = vshrl.u32 %v4318, 7
    %v4320 = vsub.s32 %v4317, %v4319
    %v4321 = vrot.slane %v4305, %v4320
    %v4323 = vunpack.c.l.s4 1966171168
    %v4324 = vunpack.c.0.s8 %v4323
    %v4325 = vlaneseq
    %v4326 = vshrl.u32 %v4325, 7
    %v4327 = vsub.s32 %v4324, %v4326
    %v4328 = vrot.slane %v4306, %v4327
    %v4330 = vunpack.c.l.s4 1966171168
    %v4331 = vunpack.c.0.s8 %v4330
    %v4332 = vlaneseq
    %v4333 = vshrl.u32 %v4332, 7
    %v4334 = vsub.s32 %v4331, %v4333
    %v4335 = vrot.slane %v4307, %v4334
    %v4336 = vcombine.low %v4314, %v4321
    %v4337 = vcombine.low %v4328, %v4335
    %v4339 = vunpack.c.l.s4 1966171168
    %v4340 = vunpack.c.0.s8 %v4339
    %v4341 = vlaneseq
    %v4342 = vshrl.u32 %v4341, 7
    %v4343 = vsub.s32 %v4340, %v4342
    %v4344 = vrot.slane %v4336, %v4343
    %v4346 = vunpack.c.l.s4 1966171168
    %v4347 = vunpack.c.0.s8 %v4346
    %v4348 = vlaneseq
    %v4349 = vshrl.u32 %v4348, 7
    %v4350 = vsub.s32 %v4347, %v4349
    %v4351 = vrot.slane %v4337, %v4350
    %v4352 = vcombine.low %v4344, %v4351
    %v4353 = vcombine.low %v4303, %v4294
    %v4355 = vunpack.c.l.s4 1966171168
    %v4356 = vunpack.c.0.s8 %v4355
    %v4357 = vlaneseq
    %v4358 = vshrl.u32 %v4357, 7
    %v4359 = vsub.s32 %v4356, %v4358
    %v4360 = vrot.slane %v4353, %v4359
    %v4362 = vunpack.c.l.s4 1966171168
    %v4363 = vunpack.c.0.s8 %v4362
    %v4364 = vlaneseq
    %v4365 = vshrl.u32 %v4364, 7
    %v4366 = vsub.s32 %v4363, %v4365
    %v4367 = vrot.slane %v4360, %v4366
    %v4368 = vsel %vm518, %v4352, 0
    %v4370 = vsel %vm518, %v4367, 0
    %4372 = vmatprep.subr.mxu0 0.0
    %4373 = vmatpush1.msra.mxu0 0.0
    %4374 = vmatprep.subr.mxu0 0.0
    %4375 = vmatpush1.msra.mxu0 0.0
    %4376 = vmatprep.subr.mxu0 0.0
    %4377 = vmatpush1.msra.mxu0 0.0
    %4378 = vmatprep.subr.mxu0 0.0
    %4379 = vmatpush1.msra.mxu0 0.0
    %4380 = vmatprep.subr.mxu0 0.0
    %4381 = vmatpush1.msra.mxu0 0.0
    %4382 = vmatprep.subr.mxu0 0.0
    %4383 = vmatpush1.msra.mxu0 0.0
    %4384 = vmatprep.subr.mxu0 0.0
    %4385 = vmatpush1.msra.mxu0 0.0
    %4386 = vmatprep.subr.mxu0 0.0
    %4387 = vmatpush1.msra.mxu0 0.0
    %4388 = vmatprep.subr.mxu0 0.0
    %4389 = vmatpush1.msra.mxu0 0.0
    %4390 = vmatprep.subr.mxu0 0.0
    %4391 = vmatpush1.msra.mxu0 0.0
    %4392 = vmatprep.subr.mxu0 0.0
    %4393 = vmatpush1.msra.mxu0 0.0
    %4394 = vmatprep.subr.mxu0 0.0
    %4395 = vmatpush1.msra.mxu0 0.0
    %4396 = vmatprep.subr.mxu0 0.0
    %4397 = vmatpush1.msra.mxu0 0.0
    %4398 = vmatprep.subr.mxu0 0.0
    %4399 = vmatpush1.msra.mxu0 0.0
    %4400 = vmatprep.subr.mxu0 0.0
    %4401 = vmatpush1.msra.mxu0 0.0
    %4402 = vmatprep.subr.mxu0 0.0
    %4403 = vmatpush1.msra.mxu0 %v3069
    %4404 = vmatprep.subr.mxu0 0.0
    %4405 = vmatpush2.msra.mxu0 0.0
    %4406 = vmatprep.subr.mxu0 0.0
    %4407 = vmatpush2.msra.mxu0 0.0
    %4408 = vmatprep.subr.mxu0 0.0
    %4409 = vmatpush2.msra.mxu0 0.0
    %4410 = vmatprep.subr.mxu0 0.0
    %4411 = vmatpush2.msra.mxu0 0.0
    %4412 = vmatprep.subr.mxu0 0.0
    %4413 = vmatpush2.msra.mxu0 0.0
    %4414 = vmatprep.subr.mxu0 0.0
    %4415 = vmatpush2.msra.mxu0 0.0
    %4416 = vmatprep.subr.mxu0 0.0
    %4417 = vmatpush2.msra.mxu0 0.0
    %4418 = vmatprep.subr.mxu0 0.0
    %4419 = vmatpush2.msra.mxu0 0.0
    %4420 = vmatprep.subr.mxu0 0.0
    %4421 = vmatpush2.msra.mxu0 0.0
    %4422 = vmatprep.subr.mxu0 0.0
    %4423 = vmatpush2.msra.mxu0 0.0
    %4424 = vmatprep.subr.mxu0 0.0
    %4425 = vmatpush2.msra.mxu0 0.0
    %4426 = vmatprep.subr.mxu0 0.0
    %4427 = vmatpush2.msra.mxu0 0.0
    %4428 = vmatprep.subr.mxu0 0.0
    %4429 = vmatpush2.msra.mxu0 0.0
    %4430 = vmatprep.subr.mxu0 0.0
    %4431 = vmatpush2.msra.mxu0 0.0
    %4432 = vmatprep.subr.mxu0 0.0
    %4433 = vmatpush2.msra.mxu0 0.0
    %4434 = vmatprep.subr.mxu0 0.0
    %4435 = vmatpush2.msra.mxu0 0.0
    %4436 = vmatprep.mubr.f32.mxu0 0.0
    %4437 = vmatmul.mubr.f32.gmra.mxu0 %v4368
    %v4438 = vpop.f32.mrf.mxu0
    %v4439 = vadd.f32 0.0, %v4438
    %v4440 = vpop.f32.mrf.mxu0
    %4441 = vmatprep.mubr.f32.mxu0 0.0
    %4442 = vmatmul.mubr.f32.gmra.mxu0 %v4370
    %v4443 = vpop.f32.mrf.mxu0
    %v4444 = vadd.f32 0.0, %v4443
    %v4445 = vpop.f32.mrf.mxu0
    %4446 = vdwg.mxu0
    %v4447 = vcombine.low %v3836, %v3850
    %v4448 = vcombine.low %v3851, %v3852
    %v4449 = vcombine.low %v3843, %v3875
    %v4450 = vcombine.low %v3889, %v3890
    %v4452 = vunpack.c.l.s4 1966171168
    %v4453 = vunpack.c.0.s8 %v4452
    %v4454 = vlaneseq
    %v4455 = vshrl.u32 %v4454, 7
    %v4456 = vsub.s32 %v4453, %v4455
    %v4457 = vrot.slane %v4447, %v4456
    %v4459 = vunpack.c.l.s4 1966171168
    %v4460 = vunpack.c.0.s8 %v4459
    %v4461 = vlaneseq
    %v4462 = vshrl.u32 %v4461, 7
    %v4463 = vsub.s32 %v4460, %v4462
    %v4464 = vrot.slane %v4448, %v4463
    %v4466 = vunpack.c.l.s4 1966171168
    %v4467 = vunpack.c.0.s8 %v4466
    %v4468 = vlaneseq
    %v4469 = vshrl.u32 %v4468, 7
    %v4470 = vsub.s32 %v4467, %v4469
    %v4471 = vrot.slane %v4449, %v4470
    %v4473 = vunpack.c.l.s4 1966171168
    %v4474 = vunpack.c.0.s8 %v4473
    %v4475 = vlaneseq
    %v4476 = vshrl.u32 %v4475, 7
    %v4477 = vsub.s32 %v4474, %v4476
    %v4478 = vrot.slane %v4450, %v4477
    %v4479 = vcombine.low %v4457, %v4464
    %v4480 = vcombine.low %v4471, %v4478
    %v4482 = vunpack.c.l.s4 1966171168
    %v4483 = vunpack.c.0.s8 %v4482
    %v4484 = vlaneseq
    %v4485 = vshrl.u32 %v4484, 7
    %v4486 = vsub.s32 %v4483, %v4485
    %v4487 = vrot.slane %v4479, %v4486
    %v4489 = vunpack.c.l.s4 1966171168
    %v4490 = vunpack.c.0.s8 %v4489
    %v4491 = vlaneseq
    %v4492 = vshrl.u32 %v4491, 7
    %v4493 = vsub.s32 %v4490, %v4492
    %v4494 = vrot.slane %v4480, %v4493
    %v4495 = vcombine.low %v4487, %v4494
    %v4496 = vcombine.low %v3891, %v3882
    %v4498 = vunpack.c.l.s4 1966171168
    %v4499 = vunpack.c.0.s8 %v4498
    %v4500 = vlaneseq
    %v4501 = vshrl.u32 %v4500, 7
    %v4502 = vsub.s32 %v4499, %v4501
    %v4503 = vrot.slane %v4496, %v4502
    %v4505 = vunpack.c.l.s4 1966171168
    %v4506 = vunpack.c.0.s8 %v4505
    %v4507 = vlaneseq
    %v4508 = vshrl.u32 %v4507, 7
    %v4509 = vsub.s32 %v4506, %v4508
    %v4510 = vrot.slane %v4503, %v4509
    %v4511 = vsel %vm518, %v4495, 0
    %v4513 = vsel %vm518, %v4510, 0
    %4515 = vmatprep.subr.mxu0 0.0
    %4516 = vmatpush1.msra.mxu0 0.0
    %4517 = vmatprep.subr.mxu0 0.0
    %4518 = vmatpush1.msra.mxu0 0.0
    %4519 = vmatprep.subr.mxu0 0.0
    %4520 = vmatpush1.msra.mxu0 0.0
    %4521 = vmatprep.subr.mxu0 0.0
    %4522 = vmatpush1.msra.mxu0 0.0
    %4523 = vmatprep.subr.mxu0 0.0
    %4524 = vmatpush1.msra.mxu0 0.0
    %4525 = vmatprep.subr.mxu0 0.0
    %4526 = vmatpush1.msra.mxu0 0.0
    %4527 = vmatprep.subr.mxu0 0.0
    %4528 = vmatpush1.msra.mxu0 0.0
    %4529 = vmatprep.subr.mxu0 0.0
    %4530 = vmatpush1.msra.mxu0 0.0
    %4531 = vmatprep.subr.mxu0 0.0
    %4532 = vmatpush1.msra.mxu0 0.0
    %4533 = vmatprep.subr.mxu0 0.0
    %4534 = vmatpush1.msra.mxu0 0.0
    %4535 = vmatprep.subr.mxu0 0.0
    %4536 = vmatpush1.msra.mxu0 0.0
    %4537 = vmatprep.subr.mxu0 0.0
    %4538 = vmatpush1.msra.mxu0 0.0
    %4539 = vmatprep.subr.mxu0 0.0
    %4540 = vmatpush1.msra.mxu0 0.0
    %4541 = vmatprep.subr.mxu0 0.0
    %4542 = vmatpush1.msra.mxu0 0.0
    %4543 = vmatprep.subr.mxu0 0.0
    %4544 = vmatpush1.msra.mxu0 0.0
    %4545 = vmatprep.subr.mxu0 0.0
    %4546 = vmatpush1.msra.mxu0 %v3068
    %4547 = vmatprep.subr.mxu0 0.0
    %4548 = vmatpush2.msra.mxu0 0.0
    %4549 = vmatprep.subr.mxu0 0.0
    %4550 = vmatpush2.msra.mxu0 0.0
    %4551 = vmatprep.subr.mxu0 0.0
    %4552 = vmatpush2.msra.mxu0 0.0
    %4553 = vmatprep.subr.mxu0 0.0
    %4554 = vmatpush2.msra.mxu0 0.0
    %4555 = vmatprep.subr.mxu0 0.0
    %4556 = vmatpush2.msra.mxu0 0.0
    %4557 = vmatprep.subr.mxu0 0.0
    %4558 = vmatpush2.msra.mxu0 0.0
    %4559 = vmatprep.subr.mxu0 0.0
    %4560 = vmatpush2.msra.mxu0 0.0
    %4561 = vmatprep.subr.mxu0 0.0
    %4562 = vmatpush2.msra.mxu0 0.0
    %4563 = vmatprep.subr.mxu0 0.0
    %4564 = vmatpush2.msra.mxu0 0.0
    %4565 = vmatprep.subr.mxu0 0.0
    %4566 = vmatpush2.msra.mxu0 0.0
    %4567 = vmatprep.subr.mxu0 0.0
    %4568 = vmatpush2.msra.mxu0 0.0
    %4569 = vmatprep.subr.mxu0 0.0
    %4570 = vmatpush2.msra.mxu0 0.0
    %4571 = vmatprep.subr.mxu0 0.0
    %4572 = vmatpush2.msra.mxu0 0.0
    %4573 = vmatprep.subr.mxu0 0.0
    %4574 = vmatpush2.msra.mxu0 0.0
    %4575 = vmatprep.subr.mxu0 0.0
    %4576 = vmatpush2.msra.mxu0 0.0
    %4577 = vmatprep.subr.mxu0 0.0
    %4578 = vmatpush2.msra.mxu0 0.0
    %4579 = vmatprep.mubr.f32.mxu0 0.0
    %4580 = vmatmul.mubr.f32.gmra.mxu0 %v4511
    %v4581 = vpop.f32.mrf.mxu0
    %v4582 = vadd.f32 %v4439, %v4581
    %v4583 = vpop.f32.mrf.mxu0
    %4584 = vmatprep.mubr.f32.mxu0 0.0
    %4585 = vmatmul.mubr.f32.gmra.mxu0 %v4513
    %v4586 = vpop.f32.mrf.mxu0
    %v4587 = vadd.f32 %v4444, %v4586
    %v4588 = vpop.f32.mrf.mxu0
    %4589 = vdwg.mxu0
    %4590 = vrot.lane.b32.xlu0 %v3361, 112
    %v4591 = vpop.permute.xlu0 %4590
    %4592 = vrot.lane.b32.xlu0 %v3400, 80
    %v4593 = vpop.permute.xlu0 %4592
    %v4594 = vsel %vm518, %v4591, 0
    %v4596 = vsel %vm518, %v4593, 0
    %4598 = vmatprep.subr.mxu0 0.0
    %4599 = vmatpush1.xpose.msra.mxu0 0.0
    %4600 = vmatprep.subr.mxu0 0.0
    %4601 = vmatpush1.xpose.msra.mxu0 0.0
    %4602 = vmatprep.subr.mxu0 0.0
    %4603 = vmatpush1.xpose.msra.mxu0 0.0
    %4604 = vmatprep.subr.mxu0 0.0
    %4605 = vmatpush1.xpose.msra.mxu0 0.0
    %4606 = vmatprep.subr.mxu0 0.0
    %4607 = vmatpush1.xpose.msra.mxu0 0.0
    %4608 = vmatprep.subr.mxu0 0.0
    %4609 = vmatpush1.xpose.msra.mxu0 0.0
    %4610 = vmatprep.subr.mxu0 0.0
    %4611 = vmatpush1.xpose.msra.mxu0 0.0
    %4612 = vmatprep.subr.mxu0 0.0
    %4613 = vmatpush1.xpose.msra.mxu0 0.0
    %4614 = vmatprep.subr.mxu0 0.0
    %4615 = vmatpush1.xpose.msra.mxu0 0.0
    %4616 = vmatprep.subr.mxu0 0.0
    %4617 = vmatpush1.xpose.msra.mxu0 0.0
    %4618 = vmatprep.subr.mxu0 0.0
    %4619 = vmatpush1.xpose.msra.mxu0 0.0
    %4620 = vmatprep.subr.mxu0 0.0
    %4621 = vmatpush1.xpose.msra.mxu0 0.0
    %4622 = vmatprep.subr.mxu0 0.0
    %4623 = vmatpush1.xpose.msra.mxu0 0.0
    %4624 = vmatprep.subr.mxu0 0.0
    %4625 = vmatpush1.xpose.msra.mxu0 0.0
    %4626 = vmatprep.subr.mxu0 0.0
    %4627 = vmatpush1.xpose.msra.mxu0 0.0
    %4628 = vmatprep.subr.mxu0 0.0
    %4629 = vmatpush1.xpose.msra.mxu0 %v4596
    %4630 = vmatprep.subr.mxu0 0.0
    %4631 = vmatpush2.xpose.msra.mxu0 0.0
    %4632 = vmatprep.subr.mxu0 0.0
    %4633 = vmatpush2.xpose.msra.mxu0 0.0
    %4634 = vmatprep.subr.mxu0 0.0
    %4635 = vmatpush2.xpose.msra.mxu0 0.0
    %4636 = vmatprep.subr.mxu0 0.0
    %4637 = vmatpush2.xpose.msra.mxu0 0.0
    %4638 = vmatprep.subr.mxu0 0.0
    %4639 = vmatpush2.xpose.msra.mxu0 0.0
    %4640 = vmatprep.subr.mxu0 0.0
    %4641 = vmatpush2.xpose.msra.mxu0 0.0
    %4642 = vmatprep.subr.mxu0 0.0
    %4643 = vmatpush2.xpose.msra.mxu0 0.0
    %4644 = vmatprep.subr.mxu0 0.0
    %4645 = vmatpush2.xpose.msra.mxu0 0.0
    %4646 = vmatprep.subr.mxu0 0.0
    %4647 = vmatpush2.xpose.msra.mxu0 0.0
    %4648 = vmatprep.subr.mxu0 0.0
    %4649 = vmatpush2.xpose.msra.mxu0 0.0
    %4650 = vmatprep.subr.mxu0 0.0
    %4651 = vmatpush2.xpose.msra.mxu0 0.0
    %4652 = vmatprep.subr.mxu0 0.0
    %4653 = vmatpush2.xpose.msra.mxu0 0.0
    %4654 = vmatprep.subr.mxu0 0.0
    %4655 = vmatpush2.xpose.msra.mxu0 0.0
    %4656 = vmatprep.subr.mxu0 0.0
    %4657 = vmatpush2.xpose.msra.mxu0 0.0
    %4658 = vmatprep.subr.mxu0 0.0
    %4659 = vmatpush2.xpose.msra.mxu0 0.0
    %4660 = vmatprep.subr.mxu0 0.0
    %4661 = vmatpush2.xpose.msra.mxu0 0.0
    %4662 = vmatprep.mubr.f32.mxu0 0.0
    %4663 = vmatmul.mubr.f32.gmra.mxu0 %v4594
    %v4664 = vpop.f32.mrf.mxu0
    %v4665 = vadd.f32 0.0, %v4664
    %v4666 = vpop.f32.mrf.mxu0
    %4667 = vdwg.mxu0
    %4668 = vrot.lane.b32.xlu0 %v3520, 112
    %v4669 = vpop.permute.xlu0 %4668
    %4670 = vrot.lane.b32.xlu0 %v3559, 80
    %v4671 = vpop.permute.xlu0 %4670
    %v4672 = vsel %vm518, %v4669, 0
    %v4674 = vsel %vm518, %v4671, 0
    %4676 = vmatprep.subr.mxu0 0.0
    %4677 = vmatpush1.xpose.msra.mxu0 0.0
    %4678 = vmatprep.subr.mxu0 0.0
    %4679 = vmatpush1.xpose.msra.mxu0 0.0
    %4680 = vmatprep.subr.mxu0 0.0
    %4681 = vmatpush1.xpose.msra.mxu0 0.0
    %4682 = vmatprep.subr.mxu0 0.0
    %4683 = vmatpush1.xpose.msra.mxu0 0.0
    %4684 = vmatprep.subr.mxu0 0.0
    %4685 = vmatpush1.xpose.msra.mxu0 0.0
    %4686 = vmatprep.subr.mxu0 0.0
    %4687 = vmatpush1.xpose.msra.mxu0 0.0
    %4688 = vmatprep.subr.mxu0 0.0
    %4689 = vmatpush1.xpose.msra.mxu0 0.0
    %4690 = vmatprep.subr.mxu0 0.0
    %4691 = vmatpush1.xpose.msra.mxu0 0.0
    %4692 = vmatprep.subr.mxu0 0.0
    %4693 = vmatpush1.xpose.msra.mxu0 0.0
    %4694 = vmatprep.subr.mxu0 0.0
    %4695 = vmatpush1.xpose.msra.mxu0 0.0
    %4696 = vmatprep.subr.mxu0 0.0
    %4697 = vmatpush1.xpose.msra.mxu0 0.0
    %4698 = vmatprep.subr.mxu0 0.0
    %4699 = vmatpush1.xpose.msra.mxu0 0.0
    %4700 = vmatprep.subr.mxu0 0.0
    %4701 = vmatpush1.xpose.msra.mxu0 0.0
    %4702 = vmatprep.subr.mxu0 0.0
    %4703 = vmatpush1.xpose.msra.mxu0 0.0
    %4704 = vmatprep.subr.mxu0 0.0
    %4705 = vmatpush1.xpose.msra.mxu0 0.0
    %4706 = vmatprep.subr.mxu0 0.0
    %4707 = vmatpush1.xpose.msra.mxu0 %v4674
    %4708 = vmatprep.subr.mxu0 0.0
    %4709 = vmatpush2.xpose.msra.mxu0 0.0
    %4710 = vmatprep.subr.mxu0 0.0
    %4711 = vmatpush2.xpose.msra.mxu0 0.0
    %4712 = vmatprep.subr.mxu0 0.0
    %4713 = vmatpush2.xpose.msra.mxu0 0.0
    %4714 = vmatprep.subr.mxu0 0.0
    %4715 = vmatpush2.xpose.msra.mxu0 0.0
    %4716 = vmatprep.subr.mxu0 0.0
    %4717 = vmatpush2.xpose.msra.mxu0 0.0
    %4718 = vmatprep.subr.mxu0 0.0
    %4719 = vmatpush2.xpose.msra.mxu0 0.0
    %4720 = vmatprep.subr.mxu0 0.0
    %4721 = vmatpush2.xpose.msra.mxu0 0.0
    %4722 = vmatprep.subr.mxu0 0.0
    %4723 = vmatpush2.xpose.msra.mxu0 0.0
    %4724 = vmatprep.subr.mxu0 0.0
    %4725 = vmatpush2.xpose.msra.mxu0 0.0
    %4726 = vmatprep.subr.mxu0 0.0
    %4727 = vmatpush2.xpose.msra.mxu0 0.0
    %4728 = vmatprep.subr.mxu0 0.0
    %4729 = vmatpush2.xpose.msra.mxu0 0.0
    %4730 = vmatprep.subr.mxu0 0.0
    %4731 = vmatpush2.xpose.msra.mxu0 0.0
    %4732 = vmatprep.subr.mxu0 0.0
    %4733 = vmatpush2.xpose.msra.mxu0 0.0
    %4734 = vmatprep.subr.mxu0 0.0
    %4735 = vmatpush2.xpose.msra.mxu0 0.0
    %4736 = vmatprep.subr.mxu0 0.0
    %4737 = vmatpush2.xpose.msra.mxu0 0.0
    %4738 = vmatprep.subr.mxu0 0.0
    %4739 = vmatpush2.xpose.msra.mxu0 0.0
    %4740 = vmatprep.mubr.f32.mxu0 0.0
    %4741 = vmatmul.mubr.f32.gmra.mxu0 %v4672
    %v4742 = vpop.f32.mrf.mxu0
    %v4743 = vadd.f32 0.0, %v4742
    %v4744 = vpop.f32.mrf.mxu0
    %4745 = vdwg.mxu0
    %v4746 = vsel %vm752, %v4665, -inf
    %4747 = vmax.xlane.f32.xlu0 %v4746
    %v4748 = vpop.xlane.xlu0 %4747
    %v4749 = vsel %vm752, %v4743, -inf
    %4750 = vmax.xlane.f32.xlu0 %v4749
    %v4751 = vpop.xlane.xlu0 %4750
    %v4752 = vsub.f32 %v4665, %v4748
    %v4753 = vsub.f32 %v4743, %v4751
    %v4754 = vmul.f32 %v4752, 1.442695
    %v4755 = vpow.pop %v4754
    %v4756 = vmul.f32 %v4753, 1.442695
    %v4757 = vpow.pop %v4756
    %v4758 = vsel %vm752, %v4755, 0.0
    %4759 = vadd.xlane.f32.xlu0 %v4758
    %v4760 = vpop.xlane.xlu0 %4759
    %v4761 = vsel %vm752, %v4757, 0.0
    %4762 = vadd.xlane.f32.xlu0 %v4761
    %v4763 = vpop.xlane.xlu0 %4762
    %v4764 = vrcp.pop %v4760
    %v4765 = vmul.f32 %v4755, %v4764
    %v4766 = vrcp.pop %v4763
    %v4767 = vmul.f32 %v4757, %v4766
    %4768 = vrot.lane.b32.xlu0 %v3400, 48
    %v4769 = vpop.permute.xlu0 %4768
    %v4771 = vsel %vm777, %v4765, 0
    %v4773 = vsel %vm169, %v4769, 0
    %4775 = vmatprep.subr.mxu0 0.0
    %4776 = vmatpush1.msra.mxu0 0.0
    %4777 = vmatprep.subr.mxu0 0.0
    %4778 = vmatpush1.msra.mxu0 0.0
    %4779 = vmatprep.subr.mxu0 0.0
    %4780 = vmatpush1.msra.mxu0 0.0
    %4781 = vmatprep.subr.mxu0 0.0
    %4782 = vmatpush1.msra.mxu0 0.0
    %4783 = vmatprep.subr.mxu0 0.0
    %4784 = vmatpush1.msra.mxu0 0.0
    %4785 = vmatprep.subr.mxu0 0.0
    %4786 = vmatpush1.msra.mxu0 0.0
    %4787 = vmatprep.subr.mxu0 0.0
    %4788 = vmatpush1.msra.mxu0 0.0
    %4789 = vmatprep.subr.mxu0 0.0
    %4790 = vmatpush1.msra.mxu0 0.0
    %4791 = vmatprep.subr.mxu0 0.0
    %4792 = vmatpush1.msra.mxu0 0.0
    %4793 = vmatprep.subr.mxu0 0.0
    %4794 = vmatpush1.msra.mxu0 0.0
    %4795 = vmatprep.subr.mxu0 0.0
    %4796 = vmatpush1.msra.mxu0 0.0
    %4797 = vmatprep.subr.mxu0 0.0
    %4798 = vmatpush1.msra.mxu0 0.0
    %4799 = vmatprep.subr.mxu0 0.0
    %4800 = vmatpush1.msra.mxu0 0.0
    %4801 = vmatprep.subr.mxu0 0.0
    %4802 = vmatpush1.msra.mxu0 0.0
    %4803 = vmatprep.subr.mxu0 0.0
    %4804 = vmatpush1.msra.mxu0 0.0
    %4805 = vmatprep.subr.mxu0 0.0
    %4806 = vmatpush1.msra.mxu0 %v4773
    %4807 = vmatprep.subr.mxu0 0.0
    %4808 = vmatpush2.msra.mxu0 0.0
    %4809 = vmatprep.subr.mxu0 0.0
    %4810 = vmatpush2.msra.mxu0 0.0
    %4811 = vmatprep.subr.mxu0 0.0
    %4812 = vmatpush2.msra.mxu0 0.0
    %4813 = vmatprep.subr.mxu0 0.0
    %4814 = vmatpush2.msra.mxu0 0.0
    %4815 = vmatprep.subr.mxu0 0.0
    %4816 = vmatpush2.msra.mxu0 0.0
    %4817 = vmatprep.subr.mxu0 0.0
    %4818 = vmatpush2.msra.mxu0 0.0
    %4819 = vmatprep.subr.mxu0 0.0
    %4820 = vmatpush2.msra.mxu0 0.0
    %4821 = vmatprep.subr.mxu0 0.0
    %4822 = vmatpush2.msra.mxu0 0.0
    %4823 = vmatprep.subr.mxu0 0.0
    %4824 = vmatpush2.msra.mxu0 0.0
    %4825 = vmatprep.subr.mxu0 0.0
    %4826 = vmatpush2.msra.mxu0 0.0
    %4827 = vmatprep.subr.mxu0 0.0
    %4828 = vmatpush2.msra.mxu0 0.0
    %4829 = vmatprep.subr.mxu0 0.0
    %4830 = vmatpush2.msra.mxu0 0.0
    %4831 = vmatprep.subr.mxu0 0.0
    %4832 = vmatpush2.msra.mxu0 0.0
    %4833 = vmatprep.subr.mxu0 0.0
    %4834 = vmatpush2.msra.mxu0 0.0
    %4835 = vmatprep.subr.mxu0 0.0
    %4836 = vmatpush2.msra.mxu0 0.0
    %4837 = vmatprep.subr.mxu0 0.0
    %4838 = vmatpush2.msra.mxu0 0.0
    %4839 = vmatprep.mubr.f32.mxu0 0.0
    %4840 = vmatmul.mubr.f32.gmra.mxu0 %v4771
    %v4841 = vpop.f32.mrf.mxu0
    %v4842 = vadd.f32 0.0, %v4841
    %v4843 = vpop.f32.mrf.mxu0
    %4844 = vdwg.mxu0
    %4845 = vrot.lane.b32.xlu0 %v3559, 48
    %v4846 = vpop.permute.xlu0 %4845
    %v4848 = vsel %vm777, %v4767, 0
    %v4850 = vsel %vm169, %v4846, 0
    %4852 = vmatprep.subr.mxu0 0.0
    %4853 = vmatpush1.msra.mxu0 0.0
    %4854 = vmatprep.subr.mxu0 0.0
    %4855 = vmatpush1.msra.mxu0 0.0
    %4856 = vmatprep.subr.mxu0 0.0
    %4857 = vmatpush1.msra.mxu0 0.0
    %4858 = vmatprep.subr.mxu0 0.0
    %4859 = vmatpush1.msra.mxu0 0.0
    %4860 = vmatprep.subr.mxu0 0.0
    %4861 = vmatpush1.msra.mxu0 0.0
    %4862 = vmatprep.subr.mxu0 0.0
    %4863 = vmatpush1.msra.mxu0 0.0
    %4864 = vmatprep.subr.mxu0 0.0
    %4865 = vmatpush1.msra.mxu0 0.0
    %4866 = vmatprep.subr.mxu0 0.0
    %4867 = vmatpush1.msra.mxu0 0.0
    %4868 = vmatprep.subr.mxu0 0.0
    %4869 = vmatpush1.msra.mxu0 0.0
    %4870 = vmatprep.subr.mxu0 0.0
    %4871 = vmatpush1.msra.mxu0 0.0
    %4872 = vmatprep.subr.mxu0 0.0
    %4873 = vmatpush1.msra.mxu0 0.0
    %4874 = vmatprep.subr.mxu0 0.0
    %4875 = vmatpush1.msra.mxu0 0.0
    %4876 = vmatprep.subr.mxu0 0.0
    %4877 = vmatpush1.msra.mxu0 0.0
    %4878 = vmatprep.subr.mxu0 0.0
    %4879 = vmatpush1.msra.mxu0 0.0
    %4880 = vmatprep.subr.mxu0 0.0
    %4881 = vmatpush1.msra.mxu0 0.0
    %4882 = vmatprep.subr.mxu0 0.0
    %4883 = vmatpush1.msra.mxu0 %v4850
    %4884 = vmatprep.subr.mxu0 0.0
    %4885 = vmatpush2.msra.mxu0 0.0
    %4886 = vmatprep.subr.mxu0 0.0
    %4887 = vmatpush2.msra.mxu0 0.0
    %4888 = vmatprep.subr.mxu0 0.0
    %4889 = vmatpush2.msra.mxu0 0.0
    %4890 = vmatprep.subr.mxu0 0.0
    %4891 = vmatpush2.msra.mxu0 0.0
    %4892 = vmatprep.subr.mxu0 0.0
    %4893 = vmatpush2.msra.mxu0 0.0
    %4894 = vmatprep.subr.mxu0 0.0
    %4895 = vmatpush2.msra.mxu0 0.0
    %4896 = vmatprep.subr.mxu0 0.0
    %4897 = vmatpush2.msra.mxu0 0.0
    %4898 = vmatprep.subr.mxu0 0.0
    %4899 = vmatpush2.msra.mxu0 0.0
    %4900 = vmatprep.subr.mxu0 0.0
    %4901 = vmatpush2.msra.mxu0 0.0
    %4902 = vmatprep.subr.mxu0 0.0
    %4903 = vmatpush2.msra.mxu0 0.0
    %4904 = vmatprep.subr.mxu0 0.0
    %4905 = vmatpush2.msra.mxu0 0.0
    %4906 = vmatprep.subr.mxu0 0.0
    %4907 = vmatpush2.msra.mxu0 0.0
    %4908 = vmatprep.subr.mxu0 0.0
    %4909 = vmatpush2.msra.mxu0 0.0
    %4910 = vmatprep.subr.mxu0 0.0
    %4911 = vmatpush2.msra.mxu0 0.0
    %4912 = vmatprep.subr.mxu0 0.0
    %4913 = vmatpush2.msra.mxu0 0.0
    %4914 = vmatprep.subr.mxu0 0.0
    %4915 = vmatpush2.msra.mxu0 0.0
    %4916 = vmatprep.mubr.f32.mxu0 0.0
    %4917 = vmatmul.mubr.f32.gmra.mxu0 %v4848
    %v4918 = vpop.f32.mrf.mxu0
    %v4919 = vadd.f32 0.0, %v4918
    %v4920 = vpop.f32.mrf.mxu0
    %4921 = vdwg.mxu0
    %v4924 = vcombine.high %v4842, %v4842
    %v4926 = vunpack.c.l.s4 1966171168
    %v4927 = vunpack.c.0.s8 %v4926
    %v4928 = vlaneseq
    %v4929 = vshrl.u32 %v4928, 7
    %v4930 = vsub.s32 %v4927, %v4929
    %v4931 = vrot.slane %v4842, %v4930
    %v4933 = vunpack.c.l.s4 1966171168
    %v4934 = vunpack.c.0.s8 %v4933
    %v4935 = vlaneseq
    %v4936 = vshrl.u32 %v4935, 7
    %v4937 = vsub.s32 %v4934, %v4936
    %v4938 = vrot.slane %v4924, %v4937
    %v4939 = vcombine.high %v4931, %v4931
    %v4941 = vunpack.c.l.s4 1966171168
    %v4942 = vunpack.c.0.s8 %v4941
    %v4943 = vlaneseq
    %v4944 = vshrl.u32 %v4943, 7
    %v4945 = vsub.s32 %v4942, %v4944
    %v4946 = vrot.slane %v4931, %v4945
    %v4948 = vunpack.c.l.s4 1966171168
    %v4949 = vunpack.c.0.s8 %v4948
    %v4950 = vlaneseq
    %v4951 = vshrl.u32 %v4950, 7
    %v4952 = vsub.s32 %v4949, %v4951
    %v4953 = vrot.slane %v4938, %v4952
    %v4955 = vunpack.c.l.s4 1966171168
    %v4956 = vunpack.c.0.s8 %v4955
    %v4957 = vlaneseq
    %v4958 = vshrl.u32 %v4957, 7
    %v4959 = vsub.s32 %v4956, %v4958
    %v4960 = vrot.slane %v4939, %v4959
    %v4961 = vcombine.high %v4946, %v4946
    %v4962 = vcombine.high %v4960, %v4960
    %v4963 = vcombine.high %v4919, %v4919
    %v4965 = vunpack.c.l.s4 1966171168
    %v4966 = vunpack.c.0.s8 %v4965
    %v4967 = vlaneseq
    %v4968 = vshrl.u32 %v4967, 7
    %v4969 = vsub.s32 %v4966, %v4968
    %v4970 = vrot.slane %v4919, %v4969
    %v4972 = vunpack.c.l.s4 1966171168
    %v4973 = vunpack.c.0.s8 %v4972
    %v4974 = vlaneseq
    %v4975 = vshrl.u32 %v4974, 7
    %v4976 = vsub.s32 %v4973, %v4975
    %v4977 = vrot.slane %v4963, %v4976
    %v4978 = vcombine.high %v4970, %v4970
    %v4980 = vunpack.c.l.s4 1966171168
    %v4981 = vunpack.c.0.s8 %v4980
    %v4982 = vlaneseq
    %v4983 = vshrl.u32 %v4982, 7
    %v4984 = vsub.s32 %v4981, %v4983
    %v4985 = vrot.slane %v4970, %v4984
    %v4987 = vunpack.c.l.s4 1966171168
    %v4988 = vunpack.c.0.s8 %v4987
    %v4989 = vlaneseq
    %v4990 = vshrl.u32 %v4989, 7
    %v4991 = vsub.s32 %v4988, %v4990
    %v4992 = vrot.slane %v4977, %v4991
    %v4994 = vunpack.c.l.s4 1966171168
    %v4995 = vunpack.c.0.s8 %v4994
    %v4996 = vlaneseq
    %v4997 = vshrl.u32 %v4996, 7
    %v4998 = vsub.s32 %v4995, %v4997
    %v4999 = vrot.slane %v4978, %v4998
    %v5000 = vcombine.high %v4985, %v4985
    %v5001 = vcombine.high %v4999, %v4999
    %v5002 = vcombine.low %v4946, %v4960
    %v5003 = vcombine.low %v4961, %v4962
    %v5004 = vcombine.low %v4953, %v4985
    %v5005 = vcombine.low %v4999, %v5000
    %v5007 = vunpack.c.l.s4 1966171168
    %v5008 = vunpack.c.0.s8 %v5007
    %v5009 = vlaneseq
    %v5010 = vshrl.u32 %v5009, 7
    %v5011 = vsub.s32 %v5008, %v5010
    %v5012 = vrot.slane %v5002, %v5011
    %v5014 = vunpack.c.l.s4 1966171168
    %v5015 = vunpack.c.0.s8 %v5014
    %v5016 = vlaneseq
    %v5017 = vshrl.u32 %v5016, 7
    %v5018 = vsub.s32 %v5015, %v5017
    %v5019 = vrot.slane %v5003, %v5018
    %v5021 = vunpack.c.l.s4 1966171168
    %v5022 = vunpack.c.0.s8 %v5021
    %v5023 = vlaneseq
    %v5024 = vshrl.u32 %v5023, 7
    %v5025 = vsub.s32 %v5022, %v5024
    %v5026 = vrot.slane %v5004, %v5025
    %v5028 = vunpack.c.l.s4 1966171168
    %v5029 = vunpack.c.0.s8 %v5028
    %v5030 = vlaneseq
    %v5031 = vshrl.u32 %v5030, 7
    %v5032 = vsub.s32 %v5029, %v5031
    %v5033 = vrot.slane %v5005, %v5032
    %v5034 = vcombine.low %v5012, %v5019
    %v5035 = vcombine.low %v5026, %v5033
    %v5037 = vunpack.c.l.s4 1966171168
    %v5038 = vunpack.c.0.s8 %v5037
    %v5039 = vlaneseq
    %v5040 = vshrl.u32 %v5039, 7
    %v5041 = vsub.s32 %v5038, %v5040
    %v5042 = vrot.slane %v5034, %v5041
    %v5044 = vunpack.c.l.s4 1966171168
    %v5045 = vunpack.c.0.s8 %v5044
    %v5046 = vlaneseq
    %v5047 = vshrl.u32 %v5046, 7
    %v5048 = vsub.s32 %v5045, %v5047
    %v5049 = vrot.slane %v5035, %v5048
    %v5050 = vcombine.low %v5042, %v5049
    %v5051 = vcombine.low %v5001, %v4992
    %v5053 = vunpack.c.l.s4 1966171168
    %v5054 = vunpack.c.0.s8 %v5053
    %v5055 = vlaneseq
    %v5056 = vshrl.u32 %v5055, 7
    %v5057 = vsub.s32 %v5054, %v5056
    %v5058 = vrot.slane %v5051, %v5057
    %v5060 = vunpack.c.l.s4 1966171168
    %v5061 = vunpack.c.0.s8 %v5060
    %v5062 = vlaneseq
    %v5063 = vshrl.u32 %v5062, 7
    %v5064 = vsub.s32 %v5061, %v5063
    %v5065 = vrot.slane %v5058, %v5064
    %v5066 = vsel %vm518, %v5050, 0
    %v5068 = vsel %vm518, %v5065, 0
    %5070 = vmatprep.subr.mxu0 0.0
    %5071 = vmatpush1.msra.mxu0 0.0
    %5072 = vmatprep.subr.mxu0 0.0
    %5073 = vmatpush1.msra.mxu0 0.0
    %5074 = vmatprep.subr.mxu0 0.0
    %5075 = vmatpush1.msra.mxu0 0.0
    %5076 = vmatprep.subr.mxu0 0.0
    %5077 = vmatpush1.msra.mxu0 0.0
    %5078 = vmatprep.subr.mxu0 0.0
    %5079 = vmatpush1.msra.mxu0 0.0
    %5080 = vmatprep.subr.mxu0 0.0
    %5081 = vmatpush1.msra.mxu0 0.0
    %5082 = vmatprep.subr.mxu0 0.0
    %5083 = vmatpush1.msra.mxu0 0.0
    %5084 = vmatprep.subr.mxu0 0.0
    %5085 = vmatpush1.msra.mxu0 0.0
    %5086 = vmatprep.subr.mxu0 0.0
    %5087 = vmatpush1.msra.mxu0 0.0
    %5088 = vmatprep.subr.mxu0 0.0
    %5089 = vmatpush1.msra.mxu0 0.0
    %5090 = vmatprep.subr.mxu0 0.0
    %5091 = vmatpush1.msra.mxu0 0.0
    %5092 = vmatprep.subr.mxu0 0.0
    %5093 = vmatpush1.msra.mxu0 0.0
    %5094 = vmatprep.subr.mxu0 0.0
    %5095 = vmatpush1.msra.mxu0 0.0
    %5096 = vmatprep.subr.mxu0 0.0
    %5097 = vmatpush1.msra.mxu0 0.0
    %5098 = vmatprep.subr.mxu0 0.0
    %5099 = vmatpush1.msra.mxu0 0.0
    %5100 = vmatprep.subr.mxu0 0.0
    %5101 = vmatpush1.msra.mxu0 %v3070
    %5102 = vmatprep.subr.mxu0 0.0
    %5103 = vmatpush2.msra.mxu0 0.0
    %5104 = vmatprep.subr.mxu0 0.0
    %5105 = vmatpush2.msra.mxu0 0.0
    %5106 = vmatprep.subr.mxu0 0.0
    %5107 = vmatpush2.msra.mxu0 0.0
    %5108 = vmatprep.subr.mxu0 0.0
    %5109 = vmatpush2.msra.mxu0 0.0
    %5110 = vmatprep.subr.mxu0 0.0
    %5111 = vmatpush2.msra.mxu0 0.0
    %5112 = vmatprep.subr.mxu0 0.0
    %5113 = vmatpush2.msra.mxu0 0.0
    %5114 = vmatprep.subr.mxu0 0.0
    %5115 = vmatpush2.msra.mxu0 0.0
    %5116 = vmatprep.subr.mxu0 0.0
    %5117 = vmatpush2.msra.mxu0 0.0
    %5118 = vmatprep.subr.mxu0 0.0
    %5119 = vmatpush2.msra.mxu0 0.0
    %5120 = vmatprep.subr.mxu0 0.0
    %5121 = vmatpush2.msra.mxu0 0.0
    %5122 = vmatprep.subr.mxu0 0.0
    %5123 = vmatpush2.msra.mxu0 0.0
    %5124 = vmatprep.subr.mxu0 0.0
    %5125 = vmatpush2.msra.mxu0 0.0
    %5126 = vmatprep.subr.mxu0 0.0
    %5127 = vmatpush2.msra.mxu0 0.0
    %5128 = vmatprep.subr.mxu0 0.0
    %5129 = vmatpush2.msra.mxu0 0.0
    %5130 = vmatprep.subr.mxu0 0.0
    %5131 = vmatpush2.msra.mxu0 0.0
    %5132 = vmatprep.subr.mxu0 0.0
    %5133 = vmatpush2.msra.mxu0 0.0
    %5134 = vmatprep.mubr.f32.mxu0 0.0
    %5135 = vmatmul.mubr.f32.gmra.mxu0 %v5066
    %v5136 = vpop.f32.mrf.mxu0
    %v5137 = vadd.f32 0.0, %v5136
    %v5138 = vpop.f32.mrf.mxu0
    %5139 = vmatprep.mubr.f32.mxu0 0.0
    %5140 = vmatmul.mubr.f32.gmra.mxu0 %v5068
    %v5141 = vpop.f32.mrf.mxu0
    %v5142 = vadd.f32 0.0, %v5141
    %v5143 = vpop.f32.mrf.mxu0
    %5144 = vdwg.mxu0
    %v5145 = vadd.f32 %v4582, %v5137
    %v5146 = vadd.f32 %v4587, %v5142
    %5147 = vrot.lane.b32.xlu0 %v3361, 104
    %v5148 = vpop.permute.xlu0 %5147
    %5149 = vrot.lane.b32.xlu0 %v3400, 72
    %v5150 = vpop.permute.xlu0 %5149
    %v5151 = vsel %vm518, %v5148, 0
    %v5153 = vsel %vm518, %v5150, 0
    %5155 = vmatprep.subr.mxu0 0.0
    %5156 = vmatpush1.xpose.msra.mxu0 0.0
    %5157 = vmatprep.subr.mxu0 0.0
    %5158 = vmatpush1.xpose.msra.mxu0 0.0
    %5159 = vmatprep.subr.mxu0 0.0
    %5160 = vmatpush1.xpose.msra.mxu0 0.0
    %5161 = vmatprep.subr.mxu0 0.0
    %5162 = vmatpush1.xpose.msra.mxu0 0.0
    %5163 = vmatprep.subr.mxu0 0.0
    %5164 = vmatpush1.xpose.msra.mxu0 0.0
    %5165 = vmatprep.subr.mxu0 0.0
    %5166 = vmatpush1.xpose.msra.mxu0 0.0
    %5167 = vmatprep.subr.mxu0 0.0
    %5168 = vmatpush1.xpose.msra.mxu0 0.0
    %5169 = vmatprep.subr.mxu0 0.0
    %5170 = vmatpush1.xpose.msra.mxu0 0.0
    %5171 = vmatprep.subr.mxu0 0.0
    %5172 = vmatpush1.xpose.msra.mxu0 0.0
    %5173 = vmatprep.subr.mxu0 0.0
    %5174 = vmatpush1.xpose.msra.mxu0 0.0
    %5175 = vmatprep.subr.mxu0 0.0
    %5176 = vmatpush1.xpose.msra.mxu0 0.0
    %5177 = vmatprep.subr.mxu0 0.0
    %5178 = vmatpush1.xpose.msra.mxu0 0.0
    %5179 = vmatprep.subr.mxu0 0.0
    %5180 = vmatpush1.xpose.msra.mxu0 0.0
    %5181 = vmatprep.subr.mxu0 0.0
    %5182 = vmatpush1.xpose.msra.mxu0 0.0
    %5183 = vmatprep.subr.mxu0 0.0
    %5184 = vmatpush1.xpose.msra.mxu0 0.0
    %5185 = vmatprep.subr.mxu0 0.0
    %5186 = vmatpush1.xpose.msra.mxu0 %v5153
    %5187 = vmatprep.subr.mxu0 0.0
    %5188 = vmatpush2.xpose.msra.mxu0 0.0
    %5189 = vmatprep.subr.mxu0 0.0
    %5190 = vmatpush2.xpose.msra.mxu0 0.0
    %5191 = vmatprep.subr.mxu0 0.0
    %5192 = vmatpush2.xpose.msra.mxu0 0.0
    %5193 = vmatprep.subr.mxu0 0.0
    %5194 = vmatpush2.xpose.msra.mxu0 0.0
    %5195 = vmatprep.subr.mxu0 0.0
    %5196 = vmatpush2.xpose.msra.mxu0 0.0
    %5197 = vmatprep.subr.mxu0 0.0
    %5198 = vmatpush2.xpose.msra.mxu0 0.0
    %5199 = vmatprep.subr.mxu0 0.0
    %5200 = vmatpush2.xpose.msra.mxu0 0.0
    %5201 = vmatprep.subr.mxu0 0.0
    %5202 = vmatpush2.xpose.msra.mxu0 0.0
    %5203 = vmatprep.subr.mxu0 0.0
    %5204 = vmatpush2.xpose.msra.mxu0 0.0
    %5205 = vmatprep.subr.mxu0 0.0
    %5206 = vmatpush2.xpose.msra.mxu0 0.0
    %5207 = vmatprep.subr.mxu0 0.0
    %5208 = vmatpush2.xpose.msra.mxu0 0.0
    %5209 = vmatprep.subr.mxu0 0.0
    %5210 = vmatpush2.xpose.msra.mxu0 0.0
    %5211 = vmatprep.subr.mxu0 0.0
    %5212 = vmatpush2.xpose.msra.mxu0 0.0
    %5213 = vmatprep.subr.mxu0 0.0
    %5214 = vmatpush2.xpose.msra.mxu0 0.0
    %5215 = vmatprep.subr.mxu0 0.0
    %5216 = vmatpush2.xpose.msra.mxu0 0.0
    %5217 = vmatprep.subr.mxu0 0.0
    %5218 = vmatpush2.xpose.msra.mxu0 0.0
    %5219 = vmatprep.mubr.f32.mxu0 0.0
    %5220 = vmatmul.mubr.f32.gmra.mxu0 %v5151
    %v5221 = vpop.f32.mrf.mxu0
    %v5222 = vadd.f32 0.0, %v5221
    %v5223 = vpop.f32.mrf.mxu0
    %5224 = vdwg.mxu0
    %5225 = vrot.lane.b32.xlu0 %v3520, 104
    %v5226 = vpop.permute.xlu0 %5225
    %5227 = vrot.lane.b32.xlu0 %v3559, 72
    %v5228 = vpop.permute.xlu0 %5227
    %v5229 = vsel %vm518, %v5226, 0
    %v5231 = vsel %vm518, %v5228, 0
    %5233 = vmatprep.subr.mxu0 0.0
    %5234 = vmatpush1.xpose.msra.mxu0 0.0
    %5235 = vmatprep.subr.mxu0 0.0
    %5236 = vmatpush1.xpose.msra.mxu0 0.0
    %5237 = vmatprep.subr.mxu0 0.0
    %5238 = vmatpush1.xpose.msra.mxu0 0.0
    %5239 = vmatprep.subr.mxu0 0.0
    %5240 = vmatpush1.xpose.msra.mxu0 0.0
    %5241 = vmatprep.subr.mxu0 0.0
    %5242 = vmatpush1.xpose.msra.mxu0 0.0
    %5243 = vmatprep.subr.mxu0 0.0
    %5244 = vmatpush1.xpose.msra.mxu0 0.0
    %5245 = vmatprep.subr.mxu0 0.0
    %5246 = vmatpush1.xpose.msra.mxu0 0.0
    %5247 = vmatprep.subr.mxu0 0.0
    %5248 = vmatpush1.xpose.msra.mxu0 0.0
    %5249 = vmatprep.subr.mxu0 0.0
    %5250 = vmatpush1.xpose.msra.mxu0 0.0
    %5251 = vmatprep.subr.mxu0 0.0
    %5252 = vmatpush1.xpose.msra.mxu0 0.0
    %5253 = vmatprep.subr.mxu0 0.0
    %5254 = vmatpush1.xpose.msra.mxu0 0.0
    %5255 = vmatprep.subr.mxu0 0.0
    %5256 = vmatpush1.xpose.msra.mxu0 0.0
    %5257 = vmatprep.subr.mxu0 0.0
    %5258 = vmatpush1.xpose.msra.mxu0 0.0
    %5259 = vmatprep.subr.mxu0 0.0
    %5260 = vmatpush1.xpose.msra.mxu0 0.0
    %5261 = vmatprep.subr.mxu0 0.0
    %5262 = vmatpush1.xpose.msra.mxu0 0.0
    %5263 = vmatprep.subr.mxu0 0.0
    %5264 = vmatpush1.xpose.msra.mxu0 %v5231
    %5265 = vmatprep.subr.mxu0 0.0
    %5266 = vmatpush2.xpose.msra.mxu0 0.0
    %5267 = vmatprep.subr.mxu0 0.0
    %5268 = vmatpush2.xpose.msra.mxu0 0.0
    %5269 = vmatprep.subr.mxu0 0.0
    %5270 = vmatpush2.xpose.msra.mxu0 0.0
    %5271 = vmatprep.subr.mxu0 0.0
    %5272 = vmatpush2.xpose.msra.mxu0 0.0
    %5273 = vmatprep.subr.mxu0 0.0
    %5274 = vmatpush2.xpose.msra.mxu0 0.0
    %5275 = vmatprep.subr.mxu0 0.0
    %5276 = vmatpush2.xpose.msra.mxu0 0.0
    %5277 = vmatprep.subr.mxu0 0.0
    %5278 = vmatpush2.xpose.msra.mxu0 0.0
    %5279 = vmatprep.subr.mxu0 0.0
    %5280 = vmatpush2.xpose.msra.mxu0 0.0
    %5281 = vmatprep.subr.mxu0 0.0
    %5282 = vmatpush2.xpose.msra.mxu0 0.0
    %5283 = vmatprep.subr.mxu0 0.0
    %5284 = vmatpush2.xpose.msra.mxu0 0.0
    %5285 = vmatprep.subr.mxu0 0.0
    %5286 = vmatpush2.xpose.msra.mxu0 0.0
    %5287 = vmatprep.subr.mxu0 0.0
    %5288 = vmatpush2.xpose.msra.mxu0 0.0
    %5289 = vmatprep.subr.mxu0 0.0
    %5290 = vmatpush2.xpose.msra.mxu0 0.0
    %5291 = vmatprep.subr.mxu0 0.0
    %5292 = vmatpush2.xpose.msra.mxu0 0.0
    %5293 = vmatprep.subr.mxu0 0.0
    %5294 = vmatpush2.xpose.msra.mxu0 0.0
    %5295 = vmatprep.subr.mxu0 0.0
    %5296 = vmatpush2.xpose.msra.mxu0 0.0
    %5297 = vmatprep.mubr.f32.mxu0 0.0
    %5298 = vmatmul.mubr.f32.gmra.mxu0 %v5229
    %v5299 = vpop.f32.mrf.mxu0
    %v5300 = vadd.f32 0.0, %v5299
    %v5301 = vpop.f32.mrf.mxu0
    %5302 = vdwg.mxu0
    %v5303 = vsel %vm752, %v5222, -inf
    %5304 = vmax.xlane.f32.xlu0 %v5303
    %v5305 = vpop.xlane.xlu0 %5304
    %v5306 = vsel %vm752, %v5300, -inf
    %5307 = vmax.xlane.f32.xlu0 %v5306
    %v5308 = vpop.xlane.xlu0 %5307
    %v5309 = vsub.f32 %v5222, %v5305
    %v5310 = vsub.f32 %v5300, %v5308
    %v5311 = vmul.f32 %v5309, 1.442695
    %v5312 = vpow.pop %v5311
    %v5313 = vmul.f32 %v5310, 1.442695
    %v5314 = vpow.pop %v5313
    %v5315 = vsel %vm752, %v5312, 0.0
    %5316 = vadd.xlane.f32.xlu0 %v5315
    %v5317 = vpop.xlane.xlu0 %5316
    %v5318 = vsel %vm752, %v5314, 0.0
    %5319 = vadd.xlane.f32.xlu0 %v5318
    %v5320 = vpop.xlane.xlu0 %5319
    %v5321 = vrcp.pop %v5317
    %v5322 = vmul.f32 %v5312, %v5321
    %v5323 = vrcp.pop %v5320
    %v5324 = vmul.f32 %v5314, %v5323
    %5325 = vrot.lane.b32.xlu0 %v3400, 40
    %v5326 = vpop.permute.xlu0 %5325
    %v5328 = vsel %vm777, %v5322, 0
    %v5330 = vsel %vm169, %v5326, 0
    %5332 = vmatprep.subr.mxu0 0.0
    %5333 = vmatpush1.msra.mxu0 0.0
    %5334 = vmatprep.subr.mxu0 0.0
    %5335 = vmatpush1.msra.mxu0 0.0
    %5336 = vmatprep.subr.mxu0 0.0
    %5337 = vmatpush1.msra.mxu0 0.0
    %5338 = vmatprep.subr.mxu0 0.0
    %5339 = vmatpush1.msra.mxu0 0.0
    %5340 = vmatprep.subr.mxu0 0.0
    %5341 = vmatpush1.msra.mxu0 0.0
    %5342 = vmatprep.subr.mxu0 0.0
    %5343 = vmatpush1.msra.mxu0 0.0
    %5344 = vmatprep.subr.mxu0 0.0
    %5345 = vmatpush1.msra.mxu0 0.0
    %5346 = vmatprep.subr.mxu0 0.0
    %5347 = vmatpush1.msra.mxu0 0.0
    %5348 = vmatprep.subr.mxu0 0.0
    %5349 = vmatpush1.msra.mxu0 0.0
    %5350 = vmatprep.subr.mxu0 0.0
    %5351 = vmatpush1.msra.mxu0 0.0
    %5352 = vmatprep.subr.mxu0 0.0
    %5353 = vmatpush1.msra.mxu0 0.0
    %5354 = vmatprep.subr.mxu0 0.0
    %5355 = vmatpush1.msra.mxu0 0.0
    %5356 = vmatprep.subr.mxu0 0.0
    %5357 = vmatpush1.msra.mxu0 0.0
    %5358 = vmatprep.subr.mxu0 0.0
    %5359 = vmatpush1.msra.mxu0 0.0
    %5360 = vmatprep.subr.mxu0 0.0
    %5361 = vmatpush1.msra.mxu0 0.0
    %5362 = vmatprep.subr.mxu0 0.0
    %5363 = vmatpush1.msra.mxu0 %v5330
    %5364 = vmatprep.subr.mxu0 0.0
    %5365 = vmatpush2.msra.mxu0 0.0
    %5366 = vmatprep.subr.mxu0 0.0
    %5367 = vmatpush2.msra.mxu0 0.0
    %5368 = vmatprep.subr.mxu0 0.0
    %5369 = vmatpush2.msra.mxu0 0.0
    %5370 = vmatprep.subr.mxu0 0.0
    %5371 = vmatpush2.msra.mxu0 0.0
    %5372 = vmatprep.subr.mxu0 0.0
    %5373 = vmatpush2.msra.mxu0 0.0
    %5374 = vmatprep.subr.mxu0 0.0
    %5375 = vmatpush2.msra.mxu0 0.0
    %5376 = vmatprep.subr.mxu0 0.0
    %5377 = vmatpush2.msra.mxu0 0.0
    %5378 = vmatprep.subr.mxu0 0.0
    %5379 = vmatpush2.msra.mxu0 0.0
    %5380 = vmatprep.subr.mxu0 0.0
    %5381 = vmatpush2.msra.mxu0 0.0
    %5382 = vmatprep.subr.mxu0 0.0
    %5383 = vmatpush2.msra.mxu0 0.0
    %5384 = vmatprep.subr.mxu0 0.0
    %5385 = vmatpush2.msra.mxu0 0.0
    %5386 = vmatprep.subr.mxu0 0.0
    %5387 = vmatpush2.msra.mxu0 0.0
    %5388 = vmatprep.subr.mxu0 0.0
    %5389 = vmatpush2.msra.mxu0 0.0
    %5390 = vmatprep.subr.mxu0 0.0
    %5391 = vmatpush2.msra.mxu0 0.0
    %5392 = vmatprep.subr.mxu0 0.0
    %5393 = vmatpush2.msra.mxu0 0.0
    %5394 = vmatprep.subr.mxu0 0.0
    %5395 = vmatpush2.msra.mxu0 0.0
    %5396 = vmatprep.mubr.f32.mxu0 0.0
    %5397 = vmatmul.mubr.f32.gmra.mxu0 %v5328
    %v5398 = vpop.f32.mrf.mxu0
    %v5399 = vadd.f32 0.0, %v5398
    %v5400 = vpop.f32.mrf.mxu0
    %5401 = vdwg.mxu0
    %5402 = vrot.lane.b32.xlu0 %v3559, 40
    %v5403 = vpop.permute.xlu0 %5402
    %v5405 = vsel %vm777, %v5324, 0
    %v5407 = vsel %vm169, %v5403, 0
    %5409 = vmatprep.subr.mxu0 0.0
    %5410 = vmatpush1.msra.mxu0 0.0
    %5411 = vmatprep.subr.mxu0 0.0
    %5412 = vmatpush1.msra.mxu0 0.0
    %5413 = vmatprep.subr.mxu0 0.0
    %5414 = vmatpush1.msra.mxu0 0.0
    %5415 = vmatprep.subr.mxu0 0.0
    %5416 = vmatpush1.msra.mxu0 0.0
    %5417 = vmatprep.subr.mxu0 0.0
    %5418 = vmatpush1.msra.mxu0 0.0
    %5419 = vmatprep.subr.mxu0 0.0
    %5420 = vmatpush1.msra.mxu0 0.0
    %5421 = vmatprep.subr.mxu0 0.0
    %5422 = vmatpush1.msra.mxu0 0.0
    %5423 = vmatprep.subr.mxu0 0.0
    %5424 = vmatpush1.msra.mxu0 0.0
    %5425 = vmatprep.subr.mxu0 0.0
    %5426 = vmatpush1.msra.mxu0 0.0
    %5427 = vmatprep.subr.mxu0 0.0
    %5428 = vmatpush1.msra.mxu0 0.0
    %5429 = vmatprep.subr.mxu0 0.0
    %5430 = vmatpush1.msra.mxu0 0.0
    %5431 = vmatprep.subr.mxu0 0.0
    %5432 = vmatpush1.msra.mxu0 0.0
    %5433 = vmatprep.subr.mxu0 0.0
    %5434 = vmatpush1.msra.mxu0 0.0
    %5435 = vmatprep.subr.mxu0 0.0
    %5436 = vmatpush1.msra.mxu0 0.0
    %5437 = vmatprep.subr.mxu0 0.0
    %5438 = vmatpush1.msra.mxu0 0.0
    %5439 = vmatprep.subr.mxu0 0.0
    %5440 = vmatpush1.msra.mxu0 %v5407
    %5441 = vmatprep.subr.mxu0 0.0
    %5442 = vmatpush2.msra.mxu0 0.0
    %5443 = vmatprep.subr.mxu0 0.0
    %5444 = vmatpush2.msra.mxu0 0.0
    %5445 = vmatprep.subr.mxu0 0.0
    %5446 = vmatpush2.msra.mxu0 0.0
    %5447 = vmatprep.subr.mxu0 0.0
    %5448 = vmatpush2.msra.mxu0 0.0
    %5449 = vmatprep.subr.mxu0 0.0
    %5450 = vmatpush2.msra.mxu0 0.0
    %5451 = vmatprep.subr.mxu0 0.0
    %5452 = vmatpush2.msra.mxu0 0.0
    %5453 = vmatprep.subr.mxu0 0.0
    %5454 = vmatpush2.msra.mxu0 0.0
    %5455 = vmatprep.subr.mxu0 0.0
    %5456 = vmatpush2.msra.mxu0 0.0
    %5457 = vmatprep.subr.mxu0 0.0
    %5458 = vmatpush2.msra.mxu0 0.0
    %5459 = vmatprep.subr.mxu0 0.0
    %5460 = vmatpush2.msra.mxu0 0.0
    %5461 = vmatprep.subr.mxu0 0.0
    %5462 = vmatpush2.msra.mxu0 0.0
    %5463 = vmatprep.subr.mxu0 0.0
    %5464 = vmatpush2.msra.mxu0 0.0
    %5465 = vmatprep.subr.mxu0 0.0
    %5466 = vmatpush2.msra.mxu0 0.0
    %5467 = vmatprep.subr.mxu0 0.0
    %5468 = vmatpush2.msra.mxu0 0.0
    %5469 = vmatprep.subr.mxu0 0.0
    %5470 = vmatpush2.msra.mxu0 0.0
    %5471 = vmatprep.subr.mxu0 0.0
    %5472 = vmatpush2.msra.mxu0 0.0
    %5473 = vmatprep.mubr.f32.mxu0 0.0
    %5474 = vmatmul.mubr.f32.gmra.mxu0 %v5405
    %v5475 = vpop.f32.mrf.mxu0
    %v5476 = vadd.f32 0.0, %v5475
    %v5477 = vpop.f32.mrf.mxu0
    %5478 = vdwg.mxu0
    %v5481 = vcombine.high %v5399, %v5399
    %v5483 = vunpack.c.l.s4 1966171168
    %v5484 = vunpack.c.0.s8 %v5483
    %v5485 = vlaneseq
    %v5486 = vshrl.u32 %v5485, 7
    %v5487 = vsub.s32 %v5484, %v5486
    %v5488 = vrot.slane %v5399, %v5487
    %v5490 = vunpack.c.l.s4 1966171168
    %v5491 = vunpack.c.0.s8 %v5490
    %v5492 = vlaneseq
    %v5493 = vshrl.u32 %v5492, 7
    %v5494 = vsub.s32 %v5491, %v5493
    %v5495 = vrot.slane %v5481, %v5494
    %v5496 = vcombine.high %v5488, %v5488
    %v5498 = vunpack.c.l.s4 1966171168
    %v5499 = vunpack.c.0.s8 %v5498
    %v5500 = vlaneseq
    %v5501 = vshrl.u32 %v5500, 7
    %v5502 = vsub.s32 %v5499, %v5501
    %v5503 = vrot.slane %v5488, %v5502
    %v5505 = vunpack.c.l.s4 1966171168
    %v5506 = vunpack.c.0.s8 %v5505
    %v5507 = vlaneseq
    %v5508 = vshrl.u32 %v5507, 7
    %v5509 = vsub.s32 %v5506, %v5508
    %v5510 = vrot.slane %v5495, %v5509
    %v5512 = vunpack.c.l.s4 1966171168
    %v5513 = vunpack.c.0.s8 %v5512
    %v5514 = vlaneseq
    %v5515 = vshrl.u32 %v5514, 7
    %v5516 = vsub.s32 %v5513, %v5515
    %v5517 = vrot.slane %v5496, %v5516
    %v5518 = vcombine.high %v5503, %v5503
    %v5519 = vcombine.high %v5517, %v5517
    %v5520 = vcombine.high %v5476, %v5476
    %v5522 = vunpack.c.l.s4 1966171168
    %v5523 = vunpack.c.0.s8 %v5522
    %v5524 = vlaneseq
    %v5525 = vshrl.u32 %v5524, 7
    %v5526 = vsub.s32 %v5523, %v5525
    %v5527 = vrot.slane %v5476, %v5526
    %v5529 = vunpack.c.l.s4 1966171168
    %v5530 = vunpack.c.0.s8 %v5529
    %v5531 = vlaneseq
    %v5532 = vshrl.u32 %v5531, 7
    %v5533 = vsub.s32 %v5530, %v5532
    %v5534 = vrot.slane %v5520, %v5533
    %v5535 = vcombine.high %v5527, %v5527
    %v5537 = vunpack.c.l.s4 1966171168
    %v5538 = vunpack.c.0.s8 %v5537
    %v5539 = vlaneseq
    %v5540 = vshrl.u32 %v5539, 7
    %v5541 = vsub.s32 %v5538, %v5540
    %v5542 = vrot.slane %v5527, %v5541
    %v5544 = vunpack.c.l.s4 1966171168
    %v5545 = vunpack.c.0.s8 %v5544
    %v5546 = vlaneseq
    %v5547 = vshrl.u32 %v5546, 7
    %v5548 = vsub.s32 %v5545, %v5547
    %v5549 = vrot.slane %v5534, %v5548
    %v5551 = vunpack.c.l.s4 1966171168
    %v5552 = vunpack.c.0.s8 %v5551
    %v5553 = vlaneseq
    %v5554 = vshrl.u32 %v5553, 7
    %v5555 = vsub.s32 %v5552, %v5554
    %v5556 = vrot.slane %v5535, %v5555
    %v5557 = vcombine.high %v5542, %v5542
    %v5558 = vcombine.high %v5556, %v5556
    %v5559 = vcombine.low %v5503, %v5517
    %v5560 = vcombine.low %v5518, %v5519
    %v5561 = vcombine.low %v5510, %v5542
    %v5562 = vcombine.low %v5556, %v5557
    %v5564 = vunpack.c.l.s4 1966171168
    %v5565 = vunpack.c.0.s8 %v5564
    %v5566 = vlaneseq
    %v5567 = vshrl.u32 %v5566, 7
    %v5568 = vsub.s32 %v5565, %v5567
    %v5569 = vrot.slane %v5559, %v5568
    %v5571 = vunpack.c.l.s4 1966171168
    %v5572 = vunpack.c.0.s8 %v5571
    %v5573 = vlaneseq
    %v5574 = vshrl.u32 %v5573, 7
    %v5575 = vsub.s32 %v5572, %v5574
    %v5576 = vrot.slane %v5560, %v5575
    %v5578 = vunpack.c.l.s4 1966171168
    %v5579 = vunpack.c.0.s8 %v5578
    %v5580 = vlaneseq
    %v5581 = vshrl.u32 %v5580, 7
    %v5582 = vsub.s32 %v5579, %v5581
    %v5583 = vrot.slane %v5561, %v5582
    %v5585 = vunpack.c.l.s4 1966171168
    %v5586 = vunpack.c.0.s8 %v5585
    %v5587 = vlaneseq
    %v5588 = vshrl.u32 %v5587, 7
    %v5589 = vsub.s32 %v5586, %v5588
    %v5590 = vrot.slane %v5562, %v5589
    %v5591 = vcombine.low %v5569, %v5576
    %v5592 = vcombine.low %v5583, %v5590
    %v5594 = vunpack.c.l.s4 1966171168
    %v5595 = vunpack.c.0.s8 %v5594
    %v5596 = vlaneseq
    %v5597 = vshrl.u32 %v5596, 7
    %v5598 = vsub.s32 %v5595, %v5597
    %v5599 = vrot.slane %v5591, %v5598
    %v5601 = vunpack.c.l.s4 1966171168
    %v5602 = vunpack.c.0.s8 %v5601
    %v5603 = vlaneseq
    %v5604 = vshrl.u32 %v5603, 7
    %v5605 = vsub.s32 %v5602, %v5604
    %v5606 = vrot.slane %v5592, %v5605
    %v5607 = vcombine.low %v5599, %v5606
    %v5608 = vcombine.low %v5558, %v5549
    %v5610 = vunpack.c.l.s4 1966171168
    %v5611 = vunpack.c.0.s8 %v5610
    %v5612 = vlaneseq
    %v5613 = vshrl.u32 %v5612, 7
    %v5614 = vsub.s32 %v5611, %v5613
    %v5615 = vrot.slane %v5608, %v5614
    %v5617 = vunpack.c.l.s4 1966171168
    %v5618 = vunpack.c.0.s8 %v5617
    %v5619 = vlaneseq
    %v5620 = vshrl.u32 %v5619, 7
    %v5621 = vsub.s32 %v5618, %v5620
    %v5622 = vrot.slane %v5615, %v5621
    %v5623 = vsel %vm518, %v5607, 0
    %v5625 = vsel %vm518, %v5622, 0
    %5627 = vmatprep.subr.mxu0 0.0
    %5628 = vmatpush1.msra.mxu0 0.0
    %5629 = vmatprep.subr.mxu0 0.0
    %5630 = vmatpush1.msra.mxu0 0.0
    %5631 = vmatprep.subr.mxu0 0.0
    %5632 = vmatpush1.msra.mxu0 0.0
    %5633 = vmatprep.subr.mxu0 0.0
    %5634 = vmatpush1.msra.mxu0 0.0
    %5635 = vmatprep.subr.mxu0 0.0
    %5636 = vmatpush1.msra.mxu0 0.0
    %5637 = vmatprep.subr.mxu0 0.0
    %5638 = vmatpush1.msra.mxu0 0.0
    %5639 = vmatprep.subr.mxu0 0.0
    %5640 = vmatpush1.msra.mxu0 0.0
    %5641 = vmatprep.subr.mxu0 0.0
    %5642 = vmatpush1.msra.mxu0 0.0
    %5643 = vmatprep.subr.mxu0 0.0
    %5644 = vmatpush1.msra.mxu0 0.0
    %5645 = vmatprep.subr.mxu0 0.0
    %5646 = vmatpush1.msra.mxu0 0.0
    %5647 = vmatprep.subr.mxu0 0.0
    %5648 = vmatpush1.msra.mxu0 0.0
    %5649 = vmatprep.subr.mxu0 0.0
    %5650 = vmatpush1.msra.mxu0 0.0
    %5651 = vmatprep.subr.mxu0 0.0
    %5652 = vmatpush1.msra.mxu0 0.0
    %5653 = vmatprep.subr.mxu0 0.0
    %5654 = vmatpush1.msra.mxu0 0.0
    %5655 = vmatprep.subr.mxu0 0.0
    %5656 = vmatpush1.msra.mxu0 0.0
    %5657 = vmatprep.subr.mxu0 0.0
    %5658 = vmatpush1.msra.mxu0 %v3071
    %5659 = vmatprep.subr.mxu0 0.0
    %5660 = vmatpush2.msra.mxu0 0.0
    %5661 = vmatprep.subr.mxu0 0.0
    %5662 = vmatpush2.msra.mxu0 0.0
    %5663 = vmatprep.subr.mxu0 0.0
    %5664 = vmatpush2.msra.mxu0 0.0
    %5665 = vmatprep.subr.mxu0 0.0
    %5666 = vmatpush2.msra.mxu0 0.0
    %5667 = vmatprep.subr.mxu0 0.0
    %5668 = vmatpush2.msra.mxu0 0.0
    %5669 = vmatprep.subr.mxu0 0.0
    %5670 = vmatpush2.msra.mxu0 0.0
    %5671 = vmatprep.subr.mxu0 0.0
    %5672 = vmatpush2.msra.mxu0 0.0
    %5673 = vmatprep.subr.mxu0 0.0
    %5674 = vmatpush2.msra.mxu0 0.0
    %5675 = vmatprep.subr.mxu0 0.0
    %5676 = vmatpush2.msra.mxu0 0.0
    %5677 = vmatprep.subr.mxu0 0.0
    %5678 = vmatpush2.msra.mxu0 0.0
    %5679 = vmatprep.subr.mxu0 0.0
    %5680 = vmatpush2.msra.mxu0 0.0
    %5681 = vmatprep.subr.mxu0 0.0
    %5682 = vmatpush2.msra.mxu0 0.0
    %5683 = vmatprep.subr.mxu0 0.0
    %5684 = vmatpush2.msra.mxu0 0.0
    %5685 = vmatprep.subr.mxu0 0.0
    %5686 = vmatpush2.msra.mxu0 0.0
    %5687 = vmatprep.subr.mxu0 0.0
    %5688 = vmatpush2.msra.mxu0 0.0
    %5689 = vmatprep.subr.mxu0 0.0
    %5690 = vmatpush2.msra.mxu0 0.0
    %5691 = vmatprep.mubr.f32.mxu0 0.0
    %5692 = vmatmul.mubr.f32.gmra.mxu0 %v5623
    %v5693 = vpop.f32.mrf.mxu0
    %v5694 = vadd.f32 0.0, %v5693
    %v5695 = vpop.f32.mrf.mxu0
    %5696 = vmatprep.mubr.f32.mxu0 0.0
    %5697 = vmatmul.mubr.f32.gmra.mxu0 %v5625
    %v5698 = vpop.f32.mrf.mxu0
    %v5699 = vadd.f32 0.0, %v5698
    %v5700 = vpop.f32.mrf.mxu0
    %5701 = vdwg.mxu0
    %v5702 = vadd.f32 %v5145, %v5694
    %v5703 = vadd.f32 %v5146, %v5699
    %v5704 = vadd.f32 %v3056, %v5702
    %v5705 = vadd.f32 %v3057, %v5703
    %v5707 = vlaneseq
    %v5708 = vshrl.u32 %v5707, 7
    %v5709 = vsub.s32 0, %v5708
    %v5710 = vrot.slane %v3073, %v5709
    %v5712 = vadd.f32 %v5704, %v5710
    %v5713 = vadd.f32 %v5705, %v5710
    %v5714 = vsel %vm212, %v5712, 0.0
    %5715 = vadd.xlane.f32.xlu0 %v5714
    %v5716 = vpop.xlane.xlu0 %5715
    %v5717 = vsel %vm216, %v5713, 0.0
    %5718 = vadd.xlane.f32.xlu0 %v5717
    %v5719 = vpop.xlane.xlu0 %5718
    %v5720 = vmul.f32 %v5716, %v220
    %v5721 = vmul.f32 %v5719, %v220
    %v5722 = vsub.f32 %v5712, %v5720
    %v5723 = vsub.f32 %v5713, %v5721
    %v5724 = vmul.f32 %v5722, %v5722
    %v5725 = vmul.f32 %v5723, %v5723
    %v5726 = vsel %vm212, %v5724, 0.0
    %5727 = vadd.xlane.f32.xlu0 %v5726
    %v5728 = vpop.xlane.xlu0 %5727
    %v5729 = vsel %vm216, %v5725, 0.0
    %5730 = vadd.xlane.f32.xlu0 %v5729
    %v5731 = vpop.xlane.xlu0 %5730
    %v5732 = vmul.f32 %v5728, %v220
    %v5733 = vmul.f32 %v5731, %v220
    %v5734 = vadd.f32 %v5732, 1e-06
    %v5735 = vadd.f32 %v5733, 1e-06
    %v5736 = vrsqrt.pop %v5734
    %v5737 = vrsqrt.pop %v5735
    %v5738 = vmul.f32 %v5722, %v5736
    %v5739 = vmul.f32 %v5723, %v5737
    %v5740 = vlaneseq
    %v5741 = vshrl.u32 %v5740, 7
    %v5742 = vsub.s32 2, %v5741
    %v5743 = vrot.slane %v3059, %v5742
    %v5744 = vmul.f32 %v5738, %v5743
    %v5745 = vmul.f32 %v5739, %v5743
    %v5746 = vlaneseq
    %v5747 = vshrl.u32 %v5746, 7
    %v5748 = vsub.s32 3, %v5747
    %v5749 = vrot.slane %v3059, %v5748
    %v5750 = vadd.f32 %v5744, %v5749
    %v5751 = vadd.f32 %v5745, %v5749
    %v5753 = vlaneseq
    %v5754 = vshrl.u32 %v5753, 7
    %v5755 = vsub.s32 0, %v5754
    %v5756 = vrot.slane %v3080, %v5755
    %v5759 = vsel %vm212, %v5750, 0
    %v5762 = vsel %vm212, %v5751, 0
    %5764 = vmatprep.subr.mxu0 0.0
    %5765 = vmatpush1.msra.mxu0 0.0
    %5766 = vmatprep.subr.mxu0 0.0
    %5767 = vmatpush1.msra.mxu0 0.0
    %5768 = vmatprep.subr.mxu0 0.0
    %5769 = vmatpush1.msra.mxu0 0.0
    %5770 = vmatprep.subr.mxu0 0.0
    %5771 = vmatpush1.msra.mxu0 0.0
    %5772 = vmatprep.subr.mxu0 0.0
    %5773 = vmatpush1.msra.mxu0 0.0
    %5774 = vmatprep.subr.mxu0 0.0
    %5775 = vmatpush1.msra.mxu0 0.0
    %5776 = vmatprep.subr.mxu0 0.0
    %5777 = vmatpush1.msra.mxu0 0.0
    %5778 = vmatprep.subr.mxu0 0.0
    %5779 = vmatpush1.msra.mxu0 0.0
    %5780 = vmatprep.subr.mxu0 0.0
    %5781 = vmatpush1.msra.mxu0 0.0
    %5782 = vmatprep.subr.mxu0 0.0
    %5783 = vmatpush1.msra.mxu0 0.0
    %5784 = vmatprep.subr.mxu0 0.0
    %5785 = vmatpush1.msra.mxu0 0.0
    %5786 = vmatprep.subr.mxu0 0.0
    %5787 = vmatpush1.msra.mxu0 0.0
    %5788 = vmatprep.subr.mxu0 0.0
    %5789 = vmatpush1.msra.mxu0 %v3078
    %5790 = vmatprep.subr.mxu0 0.0
    %5791 = vmatpush1.msra.mxu0 %v3077
    %5792 = vmatprep.subr.mxu0 0.0
    %5793 = vmatpush1.msra.mxu0 %v3076
    %5794 = vmatprep.subr.mxu0 0.0
    %5795 = vmatpush1.msra.mxu0 %v3075
    %5796 = vmatprep.subr.mxu0 0.0
    %5797 = vmatpush2.msra.mxu0 0.0
    %5798 = vmatprep.subr.mxu0 0.0
    %5799 = vmatpush2.msra.mxu0 0.0
    %5800 = vmatprep.subr.mxu0 0.0
    %5801 = vmatpush2.msra.mxu0 0.0
    %5802 = vmatprep.subr.mxu0 0.0
    %5803 = vmatpush2.msra.mxu0 0.0
    %5804 = vmatprep.subr.mxu0 0.0
    %5805 = vmatpush2.msra.mxu0 0.0
    %5806 = vmatprep.subr.mxu0 0.0
    %5807 = vmatpush2.msra.mxu0 0.0
    %5808 = vmatprep.subr.mxu0 0.0
    %5809 = vmatpush2.msra.mxu0 0.0
    %5810 = vmatprep.subr.mxu0 0.0
    %5811 = vmatpush2.msra.mxu0 0.0
    %5812 = vmatprep.subr.mxu0 0.0
    %5813 = vmatpush2.msra.mxu0 0.0
    %5814 = vmatprep.subr.mxu0 0.0
    %5815 = vmatpush2.msra.mxu0 0.0
    %5816 = vmatprep.subr.mxu0 0.0
    %5817 = vmatpush2.msra.mxu0 0.0
    %5818 = vmatprep.subr.mxu0 0.0
    %5819 = vmatpush2.msra.mxu0 0.0
    %5820 = vmatprep.subr.mxu0 0.0
    %5821 = vmatpush2.msra.mxu0 0.0
    %5822 = vmatprep.subr.mxu0 0.0
    %5823 = vmatpush2.msra.mxu0 0.0
    %5824 = vmatprep.subr.mxu0 0.0
    %5825 = vmatpush2.msra.mxu0 0.0
    %5826 = vmatprep.subr.mxu0 0.0
    %5827 = vmatpush2.msra.mxu0 0.0
    %5828 = vmatprep.mubr.f32.mxu0 0.0
    %5829 = vmatmul.mubr.f32.gmra.mxu0 %v5759
    %v5830 = vpop.f32.mrf.mxu0
    %v5831 = vadd.f32 %v5756, %v5830
    %v5832 = vpop.f32.mrf.mxu0
    %5833 = vmatprep.mubr.f32.mxu0 0.0
    %5834 = vmatmul.mubr.f32.gmra.mxu0 %v5762
    %v5835 = vpop.f32.mrf.mxu0
    %v5836 = vadd.f32 %v5756, %v5835
    %v5837 = vpop.f32.mrf.mxu0
    %5838 = vdwg.mxu0
    %v5839 = vmul.f32 %v5831, %v5831
    %v5840 = vmul.f32 %v5836, %v5836
    %v5841 = vmul.f32 %v5831, %v5839
    %v5842 = vmul.f32 %v5836, %v5840
    %v5843 = vmul.f32 %v5841, 0.044715
    %v5844 = vmul.f32 %v5842, 0.044715
    %v5845 = vadd.f32 %v5831, %v5843
    %v5846 = vadd.f32 %v5836, %v5844
    %v5847 = vmul.f32 %v5845, 0.7978846
    %v5848 = vmul.f32 %v5846, 0.7978846
    %v5849 = vtanh.pop %v5847
    %v5850 = vtanh.pop %v5848
    %v5851 = vadd.f32 %v5849, 1.0
    %v5852 = vadd.f32 %v5850, 1.0
    %v5853 = vmul.f32 %v5851, 0.5
    %v5854 = vmul.f32 %v5852, 0.5
    %v5855 = vmul.f32 %v5831, %v5853
    %v5856 = vmul.f32 %v5836, %v5854
    %v5858 = vlaneseq
    %v5859 = vshrl.u32 %v5858, 7
    %v5860 = vsub.s32 0, %v5859
    %v5861 = vrot.slane %v3099, %v5860
    %5863 = vmatprep.subr.mxu0 0.0
    %5864 = vmatpush1.msra.mxu0 %v3097
    %5865 = vmatprep.subr.mxu0 0.0
    %5866 = vmatpush1.msra.mxu0 %v3096
    %5867 = vmatprep.subr.mxu0 0.0
    %5868 = vmatpush1.msra.mxu0 %v3095
    %5869 = vmatprep.subr.mxu0 0.0
    %5870 = vmatpush1.msra.mxu0 %v3094
    %5871 = vmatprep.subr.mxu0 0.0
    %5872 = vmatpush1.msra.mxu0 %v3093
    %5873 = vmatprep.subr.mxu0 0.0
    %5874 = vmatpush1.msra.mxu0 %v3092
    %5875 = vmatprep.subr.mxu0 0.0
    %5876 = vmatpush1.msra.mxu0 %v3091
    %5877 = vmatprep.subr.mxu0 0.0
    %5878 = vmatpush1.msra.mxu0 %v3090
    %5879 = vmatprep.subr.mxu0 0.0
    %5880 = vmatpush1.msra.mxu0 %v3089
    %5881 = vmatprep.subr.mxu0 0.0
    %5882 = vmatpush1.msra.mxu0 %v3088
    %5883 = vmatprep.subr.mxu0 0.0
    %5884 = vmatpush1.msra.mxu0 %v3087
    %5885 = vmatprep.subr.mxu0 0.0
    %5886 = vmatpush1.msra.mxu0 %v3086
    %5887 = vmatprep.subr.mxu0 0.0
    %5888 = vmatpush1.msra.mxu0 %v3085
    %5889 = vmatprep.subr.mxu0 0.0
    %5890 = vmatpush1.msra.mxu0 %v3084
    %5891 = vmatprep.subr.mxu0 0.0
    %5892 = vmatpush1.msra.mxu0 %v3083
    %5893 = vmatprep.subr.mxu0 0.0
    %5894 = vmatpush1.msra.mxu0 %v3082
    %5895 = vmatprep.subr.mxu0 0.0
    %5896 = vmatpush2.msra.mxu0 0.0
    %5897 = vmatprep.subr.mxu0 0.0
    %5898 = vmatpush2.msra.mxu0 0.0
    %5899 = vmatprep.subr.mxu0 0.0
    %5900 = vmatpush2.msra.mxu0 0.0
    %5901 = vmatprep.subr.mxu0 0.0
    %5902 = vmatpush2.msra.mxu0 0.0
    %5903 = vmatprep.subr.mxu0 0.0
    %5904 = vmatpush2.msra.mxu0 0.0
    %5905 = vmatprep.subr.mxu0 0.0
    %5906 = vmatpush2.msra.mxu0 0.0
    %5907 = vmatprep.subr.mxu0 0.0
    %5908 = vmatpush2.msra.mxu0 0.0
    %5909 = vmatprep.subr.mxu0 0.0
    %5910 = vmatpush2.msra.mxu0 0.0
    %5911 = vmatprep.subr.mxu0 0.0
    %5912 = vmatpush2.msra.mxu0 0.0
    %5913 = vmatprep.subr.mxu0 0.0
    %5914 = vmatpush2.msra.mxu0 0.0
    %5915 = vmatprep.subr.mxu0 0.0
    %5916 = vmatpush2.msra.mxu0 0.0
    %5917 = vmatprep.subr.mxu0 0.0
    %5918 = vmatpush2.msra.mxu0 0.0
    %5919 = vmatprep.subr.mxu0 0.0
    %5920 = vmatpush2.msra.mxu0 0.0
    %5921 = vmatprep.subr.mxu0 0.0
    %5922 = vmatpush2.msra.mxu0 0.0
    %5923 = vmatprep.subr.mxu0 0.0
    %5924 = vmatpush2.msra.mxu0 0.0
    %5925 = vmatprep.subr.mxu0 0.0
    %5926 = vmatpush2.msra.mxu0 0.0
    %5927 = vmatprep.mubr.f32.mxu0 0.0
    %5928 = vmatmul.mubr.f32.gmra.mxu0 %v5855
    %v5929 = vpop.f32.mrf.mxu0
    %v5930 = vadd.f32 %v5861, %v5929
    %v5931 = vpop.f32.mrf.mxu0
    %5932 = vmatprep.mubr.f32.mxu0 0.0
    %5933 = vmatmul.mubr.f32.gmra.mxu0 %v5856
    %v5934 = vpop.f32.mrf.mxu0
    %v5935 = vpop.f32.mrf.mxu0
    %5936 = vdwg.mxu0
    %v5937 = vadd.f32 %v5712, %v5930
    %v5939 = vrot.slane %v5937, 4
    %v5941 = vsel %vm167, %v5937, %v5939
    %v5942 = vld [vmem:[%s13] sm:$0x3]
    %v5943 = vsel %vm216, %v5941, 0.0
    %5944 = vadd.xlane.f32.xlu0 %v5943
    %v5945 = vpop.xlane.xlu0 %5944
    %v5946 = vmul.f32 %v5945, %v220
    %v5947 = vsub.f32 %v5941, %v5946
    %v5948 = vmul.f32 %v5947, %v5947
    %v5949 = vsel %vm216, %v5948, 0.0
    %5950 = vadd.xlane.f32.xlu0 %v5949
    %v5951 = vpop.xlane.xlu0 %5950
    %v5952 = vmul.f32 %v5951, %v220
    %v5953 = vadd.f32 %v5952, 1e-06
    %v5954 = vrsqrt.pop %v5953
    %v5955 = vmul.f32 %v5947, %v5954
    %v5956 = vlaneseq
    %v5957 = vshrl.u32 %v5956, 7
    %v5958 = vsub.s32 0, %v5957
    %v5959 = vrot.slane %v5942, %v5958
    %v5960 = vmul.f32 %v5955, %v5959
    %v5961 = vlaneseq
    %v5962 = vshrl.u32 %v5961, 7
    %v5963 = vsub.s32 1, %v5962
    %v5964 = vrot.slane %v5942, %v5963
    %v5965 = vadd.f32 %v5960, %v5964
    %v5966 = vmul.f32 %v5965, %v5965
    %v5967 = vsel %vm216, %v5966, 0.0
    %5968 = vadd.xlane.f32.xlu0 %v5967
    %v5969 = vpop.xlane.xlu0 %5968
    %v5970 = vrsqrt.pop %v5969
    %v5971 = vmul.f32 %v5965, %v5970
    %5972 = vst.msk [vmem:[#allocation2] sm:$0x3] %vm216, %v5971
    %v5973 = vld [vmem:[%s14] sm:$0xff]
    %v5975 = vsel %vm212, %v5971, 0
    %v5978 = vsel %vm212, %v5973, 0
    %5980 = vmatprep.subr.mxu0 0.0
    %5981 = vmatpush1.xpose.msra.mxu0 0.0
    %5982 = vmatprep.subr.mxu0 0.0
    %5983 = vmatpush1.xpose.msra.mxu0 0.0
    %5984 = vmatprep.subr.mxu0 0.0
    %5985 = vmatpush1.xpose.msra.mxu0 0.0
    %5986 = vmatprep.subr.mxu0 0.0
    %5987 = vmatpush1.xpose.msra.mxu0 0.0
    %5988 = vmatprep.subr.mxu0 0.0
    %5989 = vmatpush1.xpose.msra.mxu0 0.0
    %5990 = vmatprep.subr.mxu0 0.0
    %5991 = vmatpush1.xpose.msra.mxu0 0.0
    %5992 = vmatprep.subr.mxu0 0.0
    %5993 = vmatpush1.xpose.msra.mxu0 0.0
    %5994 = vmatprep.subr.mxu0 0.0
    %5995 = vmatpush1.xpose.msra.mxu0 0.0
    %5996 = vmatprep.subr.mxu0 0.0
    %5997 = vmatpush1.xpose.msra.mxu0 0.0
    %5998 = vmatprep.subr.mxu0 0.0
    %5999 = vmatpush1.xpose.msra.mxu0 0.0
    %6000 = vmatprep.subr.mxu0 0.0
    %6001 = vmatpush1.xpose.msra.mxu0 0.0
    %6002 = vmatprep.subr.mxu0 0.0
    %6003 = vmatpush1.xpose.msra.mxu0 0.0
    %6004 = vmatprep.subr.mxu0 0.0
    %6005 = vmatpush1.xpose.msra.mxu0 0.0
    %6006 = vmatprep.subr.mxu0 0.0
    %6007 = vmatpush1.xpose.msra.mxu0 0.0
    %6008 = vmatprep.subr.mxu0 0.0
    %6009 = vmatpush1.xpose.msra.mxu0 0.0
    %6010 = vmatprep.subr.mxu0 0.0
    %6011 = vmatpush1.xpose.msra.mxu0 %v5978
    %6012 = vmatprep.subr.mxu0 0.0
    %6013 = vmatpush2.xpose.msra.mxu0 0.0
    %6014 = vmatprep.subr.mxu0 0.0
    %6015 = vmatpush2.xpose.msra.mxu0 0.0
    %6016 = vmatprep.subr.mxu0 0.0
    %6017 = vmatpush2.xpose.msra.mxu0 0.0
    %6018 = vmatprep.subr.mxu0 0.0
    %6019 = vmatpush2.xpose.msra.mxu0 0.0
    %6020 = vmatprep.subr.mxu0 0.0
    %6021 = vmatpush2.xpose.msra.mxu0 0.0
    %6022 = vmatprep.subr.mxu0 0.0
    %6023 = vmatpush2.xpose.msra.mxu0 0.0
    %6024 = vmatprep.subr.mxu0 0.0
    %6025 = vmatpush2.xpose.msra.mxu0 0.0
    %6026 = vmatprep.subr.mxu0 0.0
    %6027 = vmatpush2.xpose.msra.mxu0 0.0
    %6028 = vmatprep.subr.mxu0 0.0
    %6029 = vmatpush2.xpose.msra.mxu0 0.0
    %6030 = vmatprep.subr.mxu0 0.0
    %6031 = vmatpush2.xpose.msra.mxu0 0.0
    %6032 = vmatprep.subr.mxu0 0.0
    %6033 = vmatpush2.xpose.msra.mxu0 0.0
    %6034 = vmatprep.subr.mxu0 0.0
    %6035 = vmatpush2.xpose.msra.mxu0 0.0
    %6036 = vmatprep.subr.mxu0 0.0
    %6037 = vmatpush2.xpose.msra.mxu0 0.0
    %6038 = vmatprep.subr.mxu0 0.0
    %6039 = vmatpush2.xpose.msra.mxu0 0.0
    %6040 = vmatprep.subr.mxu0 0.0
    %6041 = vmatpush2.xpose.msra.mxu0 0.0
    %6042 = vmatprep.subr.mxu0 0.0
    %6043 = vmatpush2.xpose.msra.mxu0 0.0
    %6044 = vmatprep.mubr.f32.mxu0 0.0
    %6045 = vmatmul.mubr.f32.gmra.mxu0 %v5975
    %v6046 = vpop.f32.mrf.mxu0
    %v6047 = vadd.f32 0.0, %v6046
    %v6048 = vpop.f32.mrf.mxu0
    %6049 = vdwg.mxu0
    %vm6050 = vcmask 58368
    %6051 = vst.msk [vmem:[#allocation4] sm:$0x3] %vm6050, %v6047
    // Predicated region
    $region62: #{tpu_custom_call.1} parent=1 // pred_check
      _
    $region63: #{tpu_custom_call.1} parent=1 // pred_check_branch
      %6053 = sbr.rel (0) target = $region65
    $region64: #{tpu_custom_call.1} parent=1 // pred_region
      %s6055 = ssub.s32 32, 32
      %6056 = vsyncadd [#allocation3], %s6055
      %s6058 = sshll.u32 [#allocation2], 4
      %s6059 = int_to_ptr.vmem [resolvable:$true] %s6058
      %6061 = dma.vmem_to_hbm [thread:$0]  %s6059, 32, %s15, [#allocation3]
    $region65: #{tpu_custom_call.1} parent=1 // pred_fallthru
      _
    // Predicated region
    $region66: #{tpu_custom_call.1} parent=1 // pred_check
      _
    $region67: #{tpu_custom_call.1} parent=1 // pred_check_branch
      %6063 = sbr.rel (0) target = $region69
    $region68: #{tpu_custom_call.1} parent=1 // pred_region
      %s6065 = ssub.s32 32, 32
      %6066 = vsyncadd [#allocation5], %s6065
      %s6068 = sshll.u32 [#allocation4], 4
      %s6069 = int_to_ptr.vmem [resolvable:$true] %s6068
      %6071 = dma.vmem_to_hbm [thread:$0]  %s6069, 32, %s16, [#allocation5]
    $region69: #{tpu_custom_call.1} parent=1 // pred_fallthru
      _
    // Predicated region
    $region70: #{tpu_custom_call.1} parent=1 // pred_check
      _
    $region71: #{tpu_custom_call.1} parent=1 // pred_check_branch
      %6073 = sbr.rel (0) target = $region73
    $region72: #{tpu_custom_call.1} parent=1 // pred_region
      %6074 = dma.done [#allocation3], 32
    $region73: #{tpu_custom_call.1} parent=1 // pred_fallthru
      _
    // Predicated region
    $region74: #{tpu_custom_call.1} parent=1 // pred_check
      _
    $region75: #{tpu_custom_call.1} parent=1 // pred_check_branch
      %6076 = sbr.rel (0) target = $region77
    $region76: #{tpu_custom_call.1} parent=1 // pred_region
      %6077 = dma.done [#allocation5], 32
    $region77: #{tpu_custom_call.1} parent=1 // pred_fallthru
      _
    %6078 = vsyncpa [#allocation3], 1
    %6079 = vsyncpa [#allocation5], 1

</llo_original>
